<compile_context>
chip_gen: v6e
topology: v6e:2x2x1
jax: 0.10.0
libtpu: 0.0.40
codegen_flags: <defaults>
</compile_context>

<pallas_src>
import random

import jax
import jax.numpy as jnp
from jax import lax
from jax.experimental import pallas as pl
from jax.experimental.pallas import tpu as pltpu

# ------------------------- model hyper-params (small) -------------------------
HID = 32          # hidden_dim
NLAYERS = 2       # n_layers
ENC_EMB = 32      # encoder_embedding_dim
DEC_EMB = 32      # decoder_embedding_dim
SRC_VOCAB = 64
TRG_VOCAB = 32    # output_dim (len(TRG.vocab))
VPAD = 128        # lane-dense padded output vocab width


# ----------------------------- fused Pallas kernel ----------------------------
def _lstm_cell(gates, c):
    """PyTorch gate order i, f, g, o on a (Bp, 4H) gates slab.

    One wide sigmoid over the whole slab + one tanh on the g slice (+ tanh(c)):
    3 EUP pushes per cell instead of 6 tiny ones.
    """
    H = HID
    sig = jax.nn.sigmoid(gates)
    i = sig[:, 0 * H:1 * H]
    f = sig[:, 1 * H:2 * H]
    o = sig[:, 3 * H:4 * H]
    g = jnp.tanh(gates[:, 2 * H:3 * H])
    c_new = f * c + i * g
    h_new = o * jnp.tanh(c_new)
    return h_new, c_new


def seq2seq_kernel(tf_ref, src_x_ref, trg_in_ref,
                   ewih1_ref, ewhh1_ref, eb1_ref,
                   ewih2_ref, ewhh2_ref, eb2_ref,
                   dwih1_ref, dwhh1_ref, db1_ref,
                   dwih2_ref, dwhh2_ref, db2_ref,
                   demb_ref, fcw_ref, fcb_ref,
                   out_ref,
                   gx1_ref, gxd_ref, h2s_ref, gin_ref):
    """Entire Seq2Seq forward in one kernel invocation.

    tf_ref     : SMEM (T,) int32 per-step teacher-force flags (1 / 0)
    src_x_ref  : (S*Bp, E)  f32 time-major embedded src (flattened)
    trg_in_ref : (T*Bp, E)  f32 teacher-forced decoder inputs (step t uses trg[t-1])
    e*_ref     : encoder LSTM weights, Wih/Whh pre-transposed to (in, 4H)
    d*_ref     : decoder LSTM weights (separate Wih / Whh, no concat)
    demb_ref   : (VPAD, E)  decoder embedding table (vocab-padded, greedy feedback)
    fcw_ref    : (H, VPAD)  fc_out weight (lane-dense padded)
    fcb_ref    : (1, VPAD)  fc_out bias, pad lanes = -1e30
    out_ref    : (T*Bp, VPAD) f32 predictions (one lane-dense store)
    scratch    : gx1 (S*Bp,4H), gxd (T*Bp,4H), h2s (T*Bp,H), gin (Bp,4H)
    """
    Bp = gin_ref.shape[0]
    S = gx1_ref.shape[0] // Bp
    T = gxd_ref.shape[0] // Bp
    VP = out_ref.shape[1]
    f32 = jnp.float32

    zeros = jnp.zeros((Bp, HID), f32)

    # ---- batched input projections: single MXU passes, parked in VMEM scratch ----
    gx1_ref[...] = (jnp.dot(src_x_ref[...], ewih1_ref[...],
                            preferred_element_type=f32) + eb1_ref[...])
    gxd_ref[...] = (jnp.dot(trg_in_ref[...], dwih1_ref[...],
                            preferred_element_type=f32) + db1_ref[...])

    # --------------- encoder: the two layers interleaved per timestep -------------
    ewhh1 = ewhh1_ref[...]
    ewih2 = ewih2_ref[...]
    ewhh2 = ewhh2_ref[...]
    eb2 = eb2_ref[...]
    h1, c1, h2, c2 = zeros, zeros, zeros, zeros
    for t in range(S):                                     # unrolled
        g = gx1_ref[t * Bp:(t + 1) * Bp, :] + jnp.dot(
            h1, ewhh1, preferred_element_type=f32)
        h1, c1 = _lstm_cell(g, c1)
        g = (jnp.dot(h1, ewih2, preferred_element_type=f32)
             + jnp.dot(h2, ewhh2, preferred_element_type=f32) + eb2)
        h2, c2 = _lstm_cell(g, c2)

    # --------------------------------- decoder ------------------------------------
    dwih1 = dwih1_ref[...]
    dwhh1 = dwhh1_ref[...]
    db1 = db1_ref[...]
    dwih2 = dwih2_ref[...]
    dwhh2 = dwhh2_ref[...]
    db2 = db2_ref[...]
    demb = demb_ref[...]
    fcw = fcw_ref[...]
    fcb = fcb_ref[...]
    ids = lax.broadcasted_iota(jnp.int32, (Bp, VP), 1)     # hoisted out of the loop

    gin_ref[...] = gxd_ref[0:Bp, :]                        # step 0 input = emb(trg[:,0])
    hd1, cd1, hd2, cd2 = h1, c1, h2, c2
    for t in range(T):                                     # unrolled decode loop
        g = gin_ref[...] + jnp.dot(hd1, dwhh1, preferred_element_type=f32)
        hd1, cd1 = _lstm_cell(g, cd1)
        g = (jnp.dot(hd1, dwih2, preferred_element_type=f32)
             + jnp.dot(hd2, dwhh2, preferred_element_type=f32) + db2)
        hd2, cd2 = _lstm_cell(g, cd2)
        h2s_ref[t * Bp:(t + 1) * Bp, :] = hd2              # fc_out batched after loop

        if t + 1 < T:                                      # prepare next step's input
            teacher = tf_ref[t] == 1
            hd2_t = hd2

            @pl.when(teacher)
            def _():
                gin_ref[...] = gxd_ref[(t + 1) * Bp:(t + 2) * Bp, :]

            @pl.when(jnp.logical_not(teacher))
            def _():
                # greedy feedback only computed when actually needed (tf == 0)
                pred = jnp.dot(hd2_t, fcw, preferred_element_type=f32) + fcb
                mx = jnp.max(pred, axis=1, keepdims=True)
                top1 = jnp.min(jnp.where(pred == mx, ids, VP),
                               axis=1, keepdims=True)      # first-max (torch.argmax)
                onehot = (ids == top1).astype(f32)
                x_model = jnp.dot(onehot, demb, preferred_element_type=f32)
                gin_ref[...] = (jnp.dot(x_model, dwih1,
                                        preferred_element_type=f32) + db1)

    # one (T*Bp,H)x(H,VPAD) fc_out matmul + single lane-dense (unmasked) store
    out_ref[...] = jnp.dot(h2s_ref[...], fcw, preferred_element_type=f32) + fcb


# --------------------------- parameter construction --------------------------
def init_params(key):
    ks = jax.random.split(key, 24)
    bound = 1.0 / (HID ** 0.5)

    def u(k, shape):
        return jax.random.uniform(k, shape, jnp.float32, -bound, bound)

    params = {
        # encoder tok_embedding (stands in for truncated frozen BERT embeddings)
        "enc_emb": jax.random.normal(ks[0], (SRC_VOCAB, ENC_EMB), jnp.float32),
        # decoder embedding
        "dec_emb": jax.random.normal(ks[1], (TRG_VOCAB, DEC_EMB), jnp.float32),
    }

    idx = 2
    for name, in0 in (("enc_lstm", ENC_EMB), ("dec_lstm", DEC_EMB)):
        layers = []
        for l in range(NLAYERS):
            in_dim = in0 if l == 0 else HID
            wih_t = u(ks[idx], (in_dim, 4 * HID)); idx += 1
            whh_t = u(ks[idx], (HID, 4 * HID)); idx += 1
            b = u(ks[idx], (1, 4 * HID)) + u(ks[idx + 1], (1, 4 * HID)); idx += 2
            layers.append((wih_t, whh_t, b))
        params[name] = layers

    params["fc_w_t"] = u(ks[idx], (HID, TRG_VOCAB)); idx += 1
    params["fc_b"] = u(ks[idx], (1, TRG_VOCAB)); idx += 1
    return params


# ------------------------------ model forward ---------------------------------
def _pad_batch(x, Bp):
    return jnp.pad(x, ((0, 0), (0, Bp - x.shape[1]), (0, 0)))


@jax.jit
def _seq2seq_jit(params, src, trg, tf_flags):
    B, S = src.shape
    T = trg.shape[1]
    Bp = max(8, ((B + 7) // 8) * 8)                      # pad batch to sublane width

    # token -> embedding lookups (XLA glue under jit), time-major, batch-padded
    src_x = jnp.transpose(jnp.take(params["enc_emb"], src, axis=0), (1, 0, 2))
    src_x = _pad_batch(src_x.astype(jnp.float32), Bp).reshape(S * Bp, ENC_EMB)

    # teacher-forced decoder inputs: step 0 uses trg[:,0]; step t uses trg[:,t-1]
    trg_in_idx = jnp.concatenate([trg[:, :1], trg[:, :-1]], axis=1)
    trg_in = jnp.transpose(jnp.take(params["dec_emb"], trg_in_idx, axis=0), (1, 0, 2))
    trg_in = _pad_batch(trg_in.astype(jnp.float32), Bp).reshape(T * Bp, DEC_EMB)

    (ewih1, ewhh1, eb1), (ewih2, ewhh2, eb2) = params["enc_lstm"]
    (dwih1, dwhh1, db1), (dwih2, dwhh2, db2) = params["dec_lstm"]

    # lane-dense fc_out / greedy-feedback tables (pad vocab to 128 lanes;
    # pad bias lanes to -1e30 so argmax never selects a padding lane)
    fcw_p = jnp.pad(params["fc_w_t"], ((0, 0), (0, VPAD - TRG_VOCAB)))
    fcb_p = jnp.pad(params["fc_b"], ((0, 0), (0, VPAD - TRG_VOCAB)),
                    constant_values=-1e30)
    demb_p = jnp.pad(params["dec_emb"], ((0, VPAD - TRG_VOCAB), (0, 0)))

    in_specs = ([pl.BlockSpec(memory_space=pltpu.MemorySpace.SMEM)]
                + [pl.BlockSpec(memory_space=pltpu.MemorySpace.VMEM)] * 17)

    out = pl.pallas_call(
        seq2seq_kernel,
        out_shape=jax.ShapeDtypeStruct((T * Bp, VPAD), jnp.float32),
        in_specs=in_specs,
        out_specs=pl.BlockSpec(memory_space=pltpu.MemorySpace.VMEM),
        scratch_shapes=[
            pltpu.VMEM((S * Bp, 4 * HID), jnp.float32),   # encoder L1 input proj
            pltpu.VMEM((T * Bp, 4 * HID), jnp.float32),   # decoder L1 teacher proj
            pltpu.VMEM((T * Bp, HID), jnp.float32),       # stashed hd2 per step
            pltpu.VMEM((Bp, 4 * HID), jnp.float32),       # next-step input gates
        ],
    )(tf_flags.astype(jnp.int32), src_x, trg_in,
      ewih1, ewhh1, eb1, ewih2, ewhh2, eb2,
      dwih1, dwhh1, db1, dwih2, dwhh2, db2,
      demb_p, fcw_p, fcb_p)

    out = out.reshape(T, Bp, VPAD)[:, :B, :TRG_VOCAB]
    return jnp.transpose(out, (1, 0, 2))                 # (B, T, TRG_VOCAB)


def seq2seq_forward(params, src, trg, teacher_forcing_ratio):
    trg_len = trg.shape[1]
    # host-side per-step teacher-force decisions (same RNG usage as the PyTorch loop),
    # hoisted to a data array so the fused kernel stays jitted and branch-free
    flags = jnp.asarray(
        [1 if random.random() < teacher_forcing_ratio else 0
         for _ in range(trg_len)],
        dtype=jnp.int32)
    return _seq2seq_jit(params, src, trg, flags)


# ------------------------- pure-JAX reference (check) --------------------------
def _ref_lstm_layer(x, h, c, wih_t, whh_t, b):
    H = h.shape[-1]
    ys = []
    for t in range(x.shape[0]):
        g = x[t] @ wih_t + h @ whh_t + b
        i = jax.nn.sigmoid(g[:, :H]); f = jax.nn.sigmoid(g[:, H:2 * H])
        gg = jnp.tanh(g[:, 2 * H:3 * H]); o = jax.nn.sigmoid(g[:, 3 * H:])
        c = f * c + i * gg
        h = o * jnp.tanh(c)
        ys.append(h)
    return jnp.stack(ys, 0), h, c


def seq2seq_forward_ref(params, src, trg, tf_flags):
    B, trg_len = trg.shape
    x = jnp.transpose(jnp.take(params["enc_emb"], src, axis=0), (1, 0, 2))
    hs, cs = [], []
    for l in range(NLAYERS):
        wih_t, whh_t, b = params["enc_lstm"][l]
        x, hT, cT = _ref_lstm_layer(x, jnp.zeros((B, HID)), jnp.zeros((B, HID)),
                                    wih_t, whh_t, b)
        hs.append(hT); cs.append(cT)
    hidden, cell = jnp.stack(hs, 0), jnp.stack(cs, 0)
    inp = trg[:, 0]
    outs = []
    for t in range(trg_len):
        x = jnp.take(params["dec_emb"], inp, axis=0)[None]
        nh, nc = [], []
        for l in range(NLAYERS):
            wih_t, whh_t, b = params["dec_lstm"][l]
            x, hT, cT = _ref_lstm_layer(x, hidden[l], cell[l], wih_t, whh_t, b)
            nh.append(hT); nc.append(cT)
        hidden, cell = jnp.stack(nh, 0), jnp.stack(nc, 0)
        pred = x[0] @ params["fc_w_t"] + params["fc_b"]
        outs.append(pred)
        inp = trg[:, t] if tf_flags[t] else jnp.argmax(pred, axis=1)
    return jnp.stack(outs, axis=1)


# ----------------------------------- main --------------------------------------
if __name__ == "__main__":
    key = jax.random.PRNGKey(0)
    pkey, skey, tkey = jax.random.split(key, 3)
    params = init_params(pkey)

    B, SRC_LEN, TRG_LEN = 2, 8, 8
    src = jax.random.randint(skey, (B, SRC_LEN), 0, SRC_VOCAB, dtype=jnp.int32)
    trg = jax.random.randint(tkey, (B, TRG_LEN), 0, TRG_VOCAB, dtype=jnp.int32)
    teacher_forcing_ratio = 0.5   # exercises both teacher-forced and greedy paths

    random.seed(0)
    outputs = jax.block_until_ready(
        seq2seq_forward(params, src, trg, teacher_forcing_ratio))
    assert outputs.shape == (B, TRG_LEN, TRG_VOCAB)

    random.seed(0)
    flags = [1 if random.random() < teacher_forcing_ratio else 0
             for _ in range(TRG_LEN)]
    ref = jax.block_until_ready(seq2seq_forward_ref(params, src, trg, flags))
    assert jnp.allclose(outputs, ref, rtol=2e-2, atol=2e-2), "mismatch vs reference"

    print("KERNEL_OK")
</pallas_src>

<mosaic_0001>
module attributes {stable_mosaic.version = 11 : i64} {
  func.func @seq2seq_kernel(%arg0: memref<8xi32, #tpu.memory_space<smem>>, %arg1: memref<64x32xf32, #tpu.memory_space<vmem>>, %arg2: memref<64x32xf32, #tpu.memory_space<vmem>>, %arg3: memref<32x128xf32, #tpu.memory_space<vmem>>, %arg4: memref<32x128xf32, #tpu.memory_space<vmem>>, %arg5: memref<1x128xf32, #tpu.memory_space<vmem>>, %arg6: memref<32x128xf32, #tpu.memory_space<vmem>>, %arg7: memref<32x128xf32, #tpu.memory_space<vmem>>, %arg8: memref<1x128xf32, #tpu.memory_space<vmem>>, %arg9: memref<32x128xf32, #tpu.memory_space<vmem>>, %arg10: memref<32x128xf32, #tpu.memory_space<vmem>>, %arg11: memref<1x128xf32, #tpu.memory_space<vmem>>, %arg12: memref<32x128xf32, #tpu.memory_space<vmem>>, %arg13: memref<32x128xf32, #tpu.memory_space<vmem>>, %arg14: memref<1x128xf32, #tpu.memory_space<vmem>>, %arg15: memref<128x32xf32, #tpu.memory_space<vmem>>, %arg16: memref<32x128xf32, #tpu.memory_space<vmem>>, %arg17: memref<1x128xf32, #tpu.memory_space<vmem>>, %arg18: memref<64x128xf32, #tpu.memory_space<vmem>>, %arg19: memref<64x128xf32, #tpu.memory_space<vmem>>, %arg20: memref<64x128xf32, #tpu.memory_space<vmem>>, %arg21: memref<64x32xf32, #tpu.memory_space<vmem>>, %arg22: memref<8x128xf32, #tpu.memory_space<vmem>>) attributes {dimension_semantics = [], scalar_prefetch = 0 : i64, scratch_operands = 4 : i64, tpu.core_type = #tpu.core_type<tc>} {
    %cst = arith.constant 0.000000e+00 : f32
    %0 = vector.broadcast %cst : f32 to vector<8x32xf32>
    %c0 = arith.constant 0 : index
    %c0_0 = arith.constant 0 : index
    %1 = vector.load %arg1[%c0, %c0_0] : memref<64x32xf32, #tpu.memory_space<vmem>>, vector<64x32xf32>
    %c0_1 = arith.constant 0 : index
    %c0_2 = arith.constant 0 : index
    %2 = vector.load %arg3[%c0_1, %c0_2] : memref<32x128xf32, #tpu.memory_space<vmem>>, vector<32x128xf32>
    %cst_3 = arith.constant dense<0.000000e+00> : vector<64x128xf32>
    %3 = tpu.matmul %1, %2, %cst_3 {dimension_numbers = #tpu.dot_dimension_numbers<[1], [0], [0], [1], [0, 0, 1, 1], [], []>} : vector<64x32xf32>, vector<32x128xf32>, vector<64x128xf32> -> vector<64x128xf32>
    %c0_4 = arith.constant 0 : index
    %c0_5 = arith.constant 0 : index
    %4 = vector.load %arg5[%c0_4, %c0_5] : memref<1x128xf32, #tpu.memory_space<vmem>>, vector<1x128xf32>
    %5 = vector.broadcast %4 : vector<1x128xf32> to vector<64x128xf32>
    %6 = arith.addf %3, %5 : vector<64x128xf32>
    %c0_6 = arith.constant 0 : index
    %c0_7 = arith.constant 0 : index
    %7 = vector.load %arg19[%c0_6, %c0_7] : memref<64x128xf32, #tpu.memory_space<vmem>>, vector<64x128xf32>
    tpu.vector_store %arg19[%c0_6, %c0_7], %6 {strides = array<i32>} : memref<64x128xf32, #tpu.memory_space<vmem>>, vector<64x128xf32>,
    %c0_8 = arith.constant 0 : index
    %c0_9 = arith.constant 0 : index
    %8 = vector.load %arg2[%c0_8, %c0_9] : memref<64x32xf32, #tpu.memory_space<vmem>>, vector<64x32xf32>
    %c0_10 = arith.constant 0 : index
    %c0_11 = arith.constant 0 : index
    %9 = vector.load %arg9[%c0_10, %c0_11] : memref<32x128xf32, #tpu.memory_space<vmem>>, vector<32x128xf32>
    %cst_12 = arith.constant dense<0.000000e+00> : vector<64x128xf32>
    %10 = tpu.matmul %8, %9, %cst_12 {dimension_numbers = #tpu.dot_dimension_numbers<[1], [0], [0], [1], [0, 0, 1, 1], [], []>} : vector<64x32xf32>, vector<32x128xf32>, vector<64x128xf32> -> vector<64x128xf32>
    %c0_13 = arith.constant 0 : index
    %c0_14 = arith.constant 0 : index
    %11 = vector.load %arg11[%c0_13, %c0_14] : memref<1x128xf32, #tpu.memory_space<vmem>>, vector<1x128xf32>
    %12 = vector.broadcast %11 : vector<1x128xf32> to vector<64x128xf32>
    %13 = arith.addf %10, %12 : vector<64x128xf32>
    %c0_15 = arith.constant 0 : index
    %c0_16 = arith.constant 0 : index
    %14 = vector.load %arg20[%c0_15, %c0_16] : memref<64x128xf32, #tpu.memory_space<vmem>>, vector<64x128xf32>
    tpu.vector_store %arg20[%c0_15, %c0_16], %13 {strides = array<i32>} : memref<64x128xf32, #tpu.memory_space<vmem>>, vector<64x128xf32>,
    %c0_17 = arith.constant 0 : index
    %c0_18 = arith.constant 0 : index
    %15 = vector.load %arg4[%c0_17, %c0_18] : memref<32x128xf32, #tpu.memory_space<vmem>>, vector<32x128xf32>
    %c0_19 = arith.constant 0 : index
    %c0_20 = arith.constant 0 : index
    %16 = vector.load %arg6[%c0_19, %c0_20] : memref<32x128xf32, #tpu.memory_space<vmem>>, vector<32x128xf32>
    %c0_21 = arith.constant 0 : index
    %c0_22 = arith.constant 0 : index
    %17 = vector.load %arg7[%c0_21, %c0_22] : memref<32x128xf32, #tpu.memory_space<vmem>>, vector<32x128xf32>
    %c0_23 = arith.constant 0 : index
    %c0_24 = arith.constant 0 : index
    %18 = vector.load %arg8[%c0_23, %c0_24] : memref<1x128xf32, #tpu.memory_space<vmem>>, vector<1x128xf32>
    %c0_25 = arith.constant 0 : index
    %c0_26 = arith.constant 0 : index
    %19 = vector.load %arg19[%c0_25, %c0_26] : memref<64x128xf32, #tpu.memory_space<vmem>>, vector<8x128xf32>
    %cst_27 = arith.constant dense<0.000000e+00> : vector<8x128xf32>
    %20 = tpu.matmul %0, %15, %cst_27 {dimension_numbers = #tpu.dot_dimension_numbers<[1], [0], [0], [1], [0, 0, 1, 1], [], []>} : vector<8x32xf32>, vector<32x128xf32>, vector<8x128xf32> -> vector<8x128xf32>
    %21 = arith.addf %19, %20 : vector<8x128xf32>
    %22 = arith.negf %21 : vector<8x128xf32>
    %23 = math.exp %22 : vector<8x128xf32>
    %cst_28 = arith.constant 1.000000e+00 : f32
    %24 = vector.broadcast %cst_28 : f32 to vector<8x128xf32>
    %25 = arith.addf %24, %23 : vector<8x128xf32>
    %26 = arith.divf %24, %25 : vector<8x128xf32>
    %27 = vector.extract_strided_slice %26 {offsets = [0, 0], sizes = [8, 32], strides = [1, 1]} : vector<8x128xf32> to vector<8x32xf32>
    %28 = vector.extract_strided_slice %26 {offsets = [0, 32], sizes = [8, 32], strides = [1, 1]} : vector<8x128xf32> to vector<8x32xf32>
    %29 = vector.extract_strided_slice %26 {offsets = [0, 96], sizes = [8, 32], strides = [1, 1]} : vector<8x128xf32> to vector<8x32xf32>
    %30 = vector.extract_strided_slice %21 {offsets = [0, 64], sizes = [8, 32], strides = [1, 1]} : vector<8x128xf32> to vector<8x32xf32>
    %31 = math.tanh %30 : vector<8x32xf32>
    %32 = arith.mulf %28, %0 : vector<8x32xf32>
    %33 = arith.mulf %27, %31 : vector<8x32xf32>
    %34 = arith.addf %32, %33 : vector<8x32xf32>
    %35 = math.tanh %34 : vector<8x32xf32>
    %36 = arith.mulf %29, %35 : vector<8x32xf32>
    %cst_29 = arith.constant dense<0.000000e+00> : vector<8x128xf32>
    %37 = tpu.matmul %36, %16, %cst_29 {dimension_numbers = #tpu.dot_dimension_numbers<[1], [0], [0], [1], [0, 0, 1, 1], [], []>} : vector<8x32xf32>, vector<32x128xf32>, vector<8x128xf32> -> vector<8x128xf32>
    %cst_30 = arith.constant dense<0.000000e+00> : vector<8x128xf32>
    %38 = tpu.matmul %0, %17, %cst_30 {dimension_numbers = #tpu.dot_dimension_numbers<[1], [0], [0], [1], [0, 0, 1, 1], [], []>} : vector<8x32xf32>, vector<32x128xf32>, vector<8x128xf32> -> vector<8x128xf32>
    %39 = arith.addf %37, %38 : vector<8x128xf32>
    %40 = vector.broadcast %18 : vector<1x128xf32> to vector<8x128xf32>
    %41 = arith.addf %39, %40 : vector<8x128xf32>
    %42 = arith.negf %41 : vector<8x128xf32>
    %43 = math.exp %42 : vector<8x128xf32>
    %cst_31 = arith.constant 1.000000e+00 : f32
    %44 = vector.broadcast %cst_31 : f32 to vector<8x128xf32>
    %45 = arith.addf %44, %43 : vector<8x128xf32>
    %46 = arith.divf %44, %45 : vector<8x128xf32>
    %47 = vector.extract_strided_slice %46 {offsets = [0, 0], sizes = [8, 32], strides = [1, 1]} : vector<8x128xf32> to vector<8x32xf32>
    %48 = vector.extract_strided_slice %46 {offsets = [0, 32], sizes = [8, 32], strides = [1, 1]} : vector<8x128xf32> to vector<8x32xf32>
    %49 = vector.extract_strided_slice %46 {offsets = [0, 96], sizes = [8, 32], strides = [1, 1]} : vector<8x128xf32> to vector<8x32xf32>
    %50 = vector.extract_strided_slice %41 {offsets = [0, 64], sizes = [8, 32], strides = [1, 1]} : vector<8x128xf32> to vector<8x32xf32>
    %51 = math.tanh %50 : vector<8x32xf32>
    %52 = arith.mulf %48, %0 : vector<8x32xf32>
    %53 = arith.mulf %47, %51 : vector<8x32xf32>
    %54 = arith.addf %52, %53 : vector<8x32xf32>
    %55 = math.tanh %54 : vector<8x32xf32>
    %56 = arith.mulf %49, %55 : vector<8x32xf32>
    %c8 = arith.constant 8 : index
    %c0_32 = arith.constant 0 : index
    %57 = vector.load %arg19[%c8, %c0_32] : memref<64x128xf32, #tpu.memory_space<vmem>>, vector<8x128xf32>
    %cst_33 = arith.constant dense<0.000000e+00> : vector<8x128xf32>
    %58 = tpu.matmul %36, %15, %cst_33 {dimension_numbers = #tpu.dot_dimension_numbers<[1], [0], [0], [1], [0, 0, 1, 1], [], []>} : vector<8x32xf32>, vector<32x128xf32>, vector<8x128xf32> -> vector<8x128xf32>
    %59 = arith.addf %57, %58 : vector<8x128xf32>
    %60 = arith.negf %59 : vector<8x128xf32>
    %61 = math.exp %60 : vector<8x128xf32>
    %cst_34 = arith.constant 1.000000e+00 : f32
    %62 = vector.broadcast %cst_34 : f32 to vector<8x128xf32>
    %63 = arith.addf %62, %61 : vector<8x128xf32>
    %64 = arith.divf %62, %63 : vector<8x128xf32>
    %65 = vector.extract_strided_slice %64 {offsets = [0, 0], sizes = [8, 32], strides = [1, 1]} : vector<8x128xf32> to vector<8x32xf32>
    %66 = vector.extract_strided_slice %64 {offsets = [0, 32], sizes = [8, 32], strides = [1, 1]} : vector<8x128xf32> to vector<8x32xf32>
    %67 = vector.extract_strided_slice %64 {offsets = [0, 96], sizes = [8, 32], strides = [1, 1]} : vector<8x128xf32> to vector<8x32xf32>
    %68 = vector.extract_strided_slice %59 {offsets = [0, 64], sizes = [8, 32], strides = [1, 1]} : vector<8x128xf32> to vector<8x32xf32>
    %69 = math.tanh %68 : vector<8x32xf32>
    %70 = arith.mulf %66, %34 : vector<8x32xf32>
    %71 = arith.mulf %65, %69 : vector<8x32xf32>
    %72 = arith.addf %70, %71 : vector<8x32xf32>
    %73 = math.tanh %72 : vector<8x32xf32>
    %74 = arith.mulf %67, %73 : vector<8x32xf32>
    %cst_35 = arith.constant dense<0.000000e+00> : vector<8x128xf32>
    %75 = tpu.matmul %74, %16, %cst_35 {dimension_numbers = #tpu.dot_dimension_numbers<[1], [0], [0], [1], [0, 0, 1, 1], [], []>} : vector<8x32xf32>, vector<32x128xf32>, vector<8x128xf32> -> vector<8x128xf32>
    %cst_36 = arith.constant dense<0.000000e+00> : vector<8x128xf32>
    %76 = tpu.matmul %56, %17, %cst_36 {dimension_numbers = #tpu.dot_dimension_numbers<[1], [0], [0], [1], [0, 0, 1, 1], [], []>} : vector<8x32xf32>, vector<32x128xf32>, vector<8x128xf32> -> vector<8x128xf32>
    %77 = arith.addf %75, %76 : vector<8x128xf32>
    %78 = vector.broadcast %18 : vector<1x128xf32> to vector<8x128xf32>
    %79 = arith.addf %77, %78 : vector<8x128xf32>
    %80 = arith.negf %79 : vector<8x128xf32>
    %81 = math.exp %80 : vector<8x128xf32>
    %cst_37 = arith.constant 1.000000e+00 : f32
    %82 = vector.broadcast %cst_37 : f32 to vector<8x128xf32>
    %83 = arith.addf %82, %81 : vector<8x128xf32>
    %84 = arith.divf %82, %83 : vector<8x128xf32>
    %85 = vector.extract_strided_slice %84 {offsets = [0, 0], sizes = [8, 32], strides = [1, 1]} : vector<8x128xf32> to vector<8x32xf32>
    %86 = vector.extract_strided_slice %84 {offsets = [0, 32], sizes = [8, 32], strides = [1, 1]} : vector<8x128xf32> to vector<8x32xf32>
    %87 = vector.extract_strided_slice %84 {offsets = [0, 96], sizes = [8, 32], strides = [1, 1]} : vector<8x128xf32> to vector<8x32xf32>
    %88 = vector.extract_strided_slice %79 {offsets = [0, 64], sizes = [8, 32], strides = [1, 1]} : vector<8x128xf32> to vector<8x32xf32>
    %89 = math.tanh %88 : vector<8x32xf32>
    %90 = arith.mulf %86, %54 : vector<8x32xf32>
    %91 = arith.mulf %85, %89 : vector<8x32xf32>
    %92 = arith.addf %90, %91 : vector<8x32xf32>
    %93 = math.tanh %92 : vector<8x32xf32>
    %94 = arith.mulf %87, %93 : vector<8x32xf32>
    %c16 = arith.constant 16 : index
    %c0_38 = arith.constant 0 : index
    %95 = vector.load %arg19[%c16, %c0_38] : memref<64x128xf32, #tpu.memory_space<vmem>>, vector<8x128xf32>
    %cst_39 = arith.constant dense<0.000000e+00> : vector<8x128xf32>
    %96 = tpu.matmul %74, %15, %cst_39 {dimension_numbers = #tpu.dot_dimension_numbers<[1], [0], [0], [1], [0, 0, 1, 1], [], []>} : vector<8x32xf32>, vector<32x128xf32>, vector<8x128xf32> -> vector<8x128xf32>
    %97 = arith.addf %95, %96 : vector<8x128xf32>
    %98 = arith.negf %97 : vector<8x128xf32>
    %99 = math.exp %98 : vector<8x128xf32>
    %cst_40 = arith.constant 1.000000e+00 : f32
    %100 = vector.broadcast %cst_40 : f32 to vector<8x128xf32>
    %101 = arith.addf %100, %99 : vector<8x128xf32>
    %102 = arith.divf %100, %101 : vector<8x128xf32>
    %103 = vector.extract_strided_slice %102 {offsets = [0, 0], sizes = [8, 32], strides = [1, 1]} : vector<8x128xf32> to vector<8x32xf32>
    %104 = vector.extract_strided_slice %102 {offsets = [0, 32], sizes = [8, 32], strides = [1, 1]} : vector<8x128xf32> to vector<8x32xf32>
    %105 = vector.extract_strided_slice %102 {offsets = [0, 96], sizes = [8, 32], strides = [1, 1]} : vector<8x128xf32> to vector<8x32xf32>
    %106 = vector.extract_strided_slice %97 {offsets = [0, 64], sizes = [8, 32], strides = [1, 1]} : vector<8x128xf32> to vector<8x32xf32>
    %107 = math.tanh %106 : vector<8x32xf32>
    %108 = arith.mulf %104, %72 : vector<8x32xf32>
    %109 = arith.mulf %103, %107 : vector<8x32xf32>
    %110 = arith.addf %108, %109 : vector<8x32xf32>
    %111 = math.tanh %110 : vector<8x32xf32>
    %112 = arith.mulf %105, %111 : vector<8x32xf32>
    %cst_41 = arith.constant dense<0.000000e+00> : vector<8x128xf32>
    %113 = tpu.matmul %112, %16, %cst_41 {dimension_numbers = #tpu.dot_dimension_numbers<[1], [0], [0], [1], [0, 0, 1, 1], [], []>} : vector<8x32xf32>, vector<32x128xf32>, vector<8x128xf32> -> vector<8x128xf32>
    %cst_42 = arith.constant dense<0.000000e+00> : vector<8x128xf32>
    %114 = tpu.matmul %94, %17, %cst_42 {dimension_numbers = #tpu.dot_dimension_numbers<[1], [0], [0], [1], [0, 0, 1, 1], [], []>} : vector<8x32xf32>, vector<32x128xf32>, vector<8x128xf32> -> vector<8x128xf32>
    %115 = arith.addf %113, %114 : vector<8x128xf32>
    %116 = vector.broadcast %18 : vector<1x128xf32> to vector<8x128xf32>
    %117 = arith.addf %115, %116 : vector<8x128xf32>
    %118 = arith.negf %117 : vector<8x128xf32>
    %119 = math.exp %118 : vector<8x128xf32>
    %cst_43 = arith.constant 1.000000e+00 : f32
    %120 = vector.broadcast %cst_43 : f32 to vector<8x128xf32>
    %121 = arith.addf %120, %119 : vector<8x128xf32>
    %122 = arith.divf %120, %121 : vector<8x128xf32>
    %123 = vector.extract_strided_slice %122 {offsets = [0, 0], sizes = [8, 32], strides = [1, 1]} : vector<8x128xf32> to vector<8x32xf32>
    %124 = vector.extract_strided_slice %122 {offsets = [0, 32], sizes = [8, 32], strides = [1, 1]} : vector<8x128xf32> to vector<8x32xf32>
    %125 = vector.extract_strided_slice %122 {offsets = [0, 96], sizes = [8, 32], strides = [1, 1]} : vector<8x128xf32> to vector<8x32xf32>
    %126 = vector.extract_strided_slice %117 {offsets = [0, 64], sizes = [8, 32], strides = [1, 1]} : vector<8x128xf32> to vector<8x32xf32>
    %127 = math.tanh %126 : vector<8x32xf32>
    %128 = arith.mulf %124, %92 : vector<8x32xf32>
    %129 = arith.mulf %123, %127 : vector<8x32xf32>
    %130 = arith.addf %128, %129 : vector<8x32xf32>
    %131 = math.tanh %130 : vector<8x32xf32>
    %132 = arith.mulf %125, %131 : vector<8x32xf32>
    %c24 = arith.constant 24 : index
    %c0_44 = arith.constant 0 : index
    %133 = vector.load %arg19[%c24, %c0_44] : memref<64x128xf32, #tpu.memory_space<vmem>>, vector<8x128xf32>
    %cst_45 = arith.constant dense<0.000000e+00> : vector<8x128xf32>
    %134 = tpu.matmul %112, %15, %cst_45 {dimension_numbers = #tpu.dot_dimension_numbers<[1], [0], [0], [1], [0, 0, 1, 1], [], []>} : vector<8x32xf32>, vector<32x128xf32>, vector<8x128xf32> -> vector<8x128xf32>
    %135 = arith.addf %133, %134 : vector<8x128xf32>
    %136 = arith.negf %135 : vector<8x128xf32>
    %137 = math.exp %136 : vector<8x128xf32>
    %cst_46 = arith.constant 1.000000e+00 : f32
    %138 = vector.broadcast %cst_46 : f32 to vector<8x128xf32>
    %139 = arith.addf %138, %137 : vector<8x128xf32>
    %140 = arith.divf %138, %139 : vector<8x128xf32>
    %141 = vector.extract_strided_slice %140 {offsets = [0, 0], sizes = [8, 32], strides = [1, 1]} : vector<8x128xf32> to vector<8x32xf32>
    %142 = vector.extract_strided_slice %140 {offsets = [0, 32], sizes = [8, 32], strides = [1, 1]} : vector<8x128xf32> to vector<8x32xf32>
    %143 = vector.extract_strided_slice %140 {offsets = [0, 96], sizes = [8, 32], strides = [1, 1]} : vector<8x128xf32> to vector<8x32xf32>
    %144 = vector.extract_strided_slice %135 {offsets = [0, 64], sizes = [8, 32], strides = [1, 1]} : vector<8x128xf32> to vector<8x32xf32>
    %145 = math.tanh %144 : vector<8x32xf32>
    %146 = arith.mulf %142, %110 : vector<8x32xf32>
    %147 = arith.mulf %141, %145 : vector<8x32xf32>
    %148 = arith.addf %146, %147 : vector<8x32xf32>
    %149 = math.tanh %148 : vector<8x32xf32>
    %150 = arith.mulf %143, %149 : vector<8x32xf32>
    %cst_47 = arith.constant dense<0.000000e+00> : vector<8x128xf32>
    %151 = tpu.matmul %150, %16, %cst_47 {dimension_numbers = #tpu.dot_dimension_numbers<[1], [0], [0], [1], [0, 0, 1, 1], [], []>} : vector<8x32xf32>, vector<32x128xf32>, vector<8x128xf32> -> vector<8x128xf32>
    %cst_48 = arith.constant dense<0.000000e+00> : vector<8x128xf32>
    %152 = tpu.matmul %132, %17, %cst_48 {dimension_numbers = #tpu.dot_dimension_numbers<[1], [0], [0], [1], [0, 0, 1, 1], [], []>} : vector<8x32xf32>, vector<32x128xf32>, vector<8x128xf32> -> vector<8x128xf32>
    %153 = arith.addf %151, %152 : vector<8x128xf32>
    %154 = vector.broadcast %18 : vector<1x128xf32> to vector<8x128xf32>
    %155 = arith.addf %153, %154 : vector<8x128xf32>
    %156 = arith.negf %155 : vector<8x128xf32>
    %157 = math.exp %156 : vector<8x128xf32>
    %cst_49 = arith.constant 1.000000e+00 : f32
    %158 = vector.broadcast %cst_49 : f32 to vector<8x128xf32>
    %159 = arith.addf %158, %157 : vector<8x128xf32>
    %160 = arith.divf %158, %159 : vector<8x128xf32>
    %161 = vector.extract_strided_slice %160 {offsets = [0, 0], sizes = [8, 32], strides = [1, 1]} : vector<8x128xf32> to vector<8x32xf32>
    %162 = vector.extract_strided_slice %160 {offsets = [0, 32], sizes = [8, 32], strides = [1, 1]} : vector<8x128xf32> to vector<8x32xf32>
    %163 = vector.extract_strided_slice %160 {offsets = [0, 96], sizes = [8, 32], strides = [1, 1]} : vector<8x128xf32> to vector<8x32xf32>
    %164 = vector.extract_strided_slice %155 {offsets = [0, 64], sizes = [8, 32], strides = [1, 1]} : vector<8x128xf32> to vector<8x32xf32>
    %165 = math.tanh %164 : vector<8x32xf32>
    %166 = arith.mulf %162, %130 : vector<8x32xf32>
    %167 = arith.mulf %161, %165 : vector<8x32xf32>
    %168 = arith.addf %166, %167 : vector<8x32xf32>
    %169 = math.tanh %168 : vector<8x32xf32>
    %170 = arith.mulf %163, %169 : vector<8x32xf32>
    %c32 = arith.constant 32 : index
    %c0_50 = arith.constant 0 : index
    %171 = vector.load %arg19[%c32, %c0_50] : memref<64x128xf32, #tpu.memory_space<vmem>>, vector<8x128xf32>
    %cst_51 = arith.constant dense<0.000000e+00> : vector<8x128xf32>
    %172 = tpu.matmul %150, %15, %cst_51 {dimension_numbers = #tpu.dot_dimension_numbers<[1], [0], [0], [1], [0, 0, 1, 1], [], []>} : vector<8x32xf32>, vector<32x128xf32>, vector<8x128xf32> -> vector<8x128xf32>
    %173 = arith.addf %171, %172 : vector<8x128xf32>
    %174 = arith.negf %173 : vector<8x128xf32>
    %175 = math.exp %174 : vector<8x128xf32>
    %cst_52 = arith.constant 1.000000e+00 : f32
    %176 = vector.broadcast %cst_52 : f32 to vector<8x128xf32>
    %177 = arith.addf %176, %175 : vector<8x128xf32>
    %178 = arith.divf %176, %177 : vector<8x128xf32>
    %179 = vector.extract_strided_slice %178 {offsets = [0, 0], sizes = [8, 32], strides = [1, 1]} : vector<8x128xf32> to vector<8x32xf32>
    %180 = vector.extract_strided_slice %178 {offsets = [0, 32], sizes = [8, 32], strides = [1, 1]} : vector<8x128xf32> to vector<8x32xf32>
    %181 = vector.extract_strided_slice %178 {offsets = [0, 96], sizes = [8, 32], strides = [1, 1]} : vector<8x128xf32> to vector<8x32xf32>
    %182 = vector.extract_strided_slice %173 {offsets = [0, 64], sizes = [8, 32], strides = [1, 1]} : vector<8x128xf32> to vector<8x32xf32>
    %183 = math.tanh %182 : vector<8x32xf32>
    %184 = arith.mulf %180, %148 : vector<8x32xf32>
    %185 = arith.mulf %179, %183 : vector<8x32xf32>
    %186 = arith.addf %184, %185 : vector<8x32xf32>
    %187 = math.tanh %186 : vector<8x32xf32>
    %188 = arith.mulf %181, %187 : vector<8x32xf32>
    %cst_53 = arith.constant dense<0.000000e+00> : vector<8x128xf32>
    %189 = tpu.matmul %188, %16, %cst_53 {dimension_numbers = #tpu.dot_dimension_numbers<[1], [0], [0], [1], [0, 0, 1, 1], [], []>} : vector<8x32xf32>, vector<32x128xf32>, vector<8x128xf32> -> vector<8x128xf32>
    %cst_54 = arith.constant dense<0.000000e+00> : vector<8x128xf32>
    %190 = tpu.matmul %170, %17, %cst_54 {dimension_numbers = #tpu.dot_dimension_numbers<[1], [0], [0], [1], [0, 0, 1, 1], [], []>} : vector<8x32xf32>, vector<32x128xf32>, vector<8x128xf32> -> vector<8x128xf32>
    %191 = arith.addf %189, %190 : vector<8x128xf32>
    %192 = vector.broadcast %18 : vector<1x128xf32> to vector<8x128xf32>
    %193 = arith.addf %191, %192 : vector<8x128xf32>
    %194 = arith.negf %193 : vector<8x128xf32>
    %195 = math.exp %194 : vector<8x128xf32>
    %cst_55 = arith.constant 1.000000e+00 : f32
    %196 = vector.broadcast %cst_55 : f32 to vector<8x128xf32>
    %197 = arith.addf %196, %195 : vector<8x128xf32>
    %198 = arith.divf %196, %197 : vector<8x128xf32>
    %199 = vector.extract_strided_slice %198 {offsets = [0, 0], sizes = [8, 32], strides = [1, 1]} : vector<8x128xf32> to vector<8x32xf32>
    %200 = vector.extract_strided_slice %198 {offsets = [0, 32], sizes = [8, 32], strides = [1, 1]} : vector<8x128xf32> to vector<8x32xf32>
    %201 = vector.extract_strided_slice %198 {offsets = [0, 96], sizes = [8, 32], strides = [1, 1]} : vector<8x128xf32> to vector<8x32xf32>
    %202 = vector.extract_strided_slice %193 {offsets = [0, 64], sizes = [8, 32], strides = [1, 1]} : vector<8x128xf32> to vector<8x32xf32>
    %203 = math.tanh %202 : vector<8x32xf32>
    %204 = arith.mulf %200, %168 : vector<8x32xf32>
    %205 = arith.mulf %199, %203 : vector<8x32xf32>
    %206 = arith.addf %204, %205 : vector<8x32xf32>
    %207 = math.tanh %206 : vector<8x32xf32>
    %208 = arith.mulf %201, %207 : vector<8x32xf32>
    %c40 = arith.constant 40 : index
    %c0_56 = arith.constant 0 : index
    %209 = vector.load %arg19[%c40, %c0_56] : memref<64x128xf32, #tpu.memory_space<vmem>>, vector<8x128xf32>
    %cst_57 = arith.constant dense<0.000000e+00> : vector<8x128xf32>
    %210 = tpu.matmul %188, %15, %cst_57 {dimension_numbers = #tpu.dot_dimension_numbers<[1], [0], [0], [1], [0, 0, 1, 1], [], []>} : vector<8x32xf32>, vector<32x128xf32>, vector<8x128xf32> -> vector<8x128xf32>
    %211 = arith.addf %209, %210 : vector<8x128xf32>
    %212 = arith.negf %211 : vector<8x128xf32>
    %213 = math.exp %212 : vector<8x128xf32>
    %cst_58 = arith.constant 1.000000e+00 : f32
    %214 = vector.broadcast %cst_58 : f32 to vector<8x128xf32>
    %215 = arith.addf %214, %213 : vector<8x128xf32>
    %216 = arith.divf %214, %215 : vector<8x128xf32>
    %217 = vector.extract_strided_slice %216 {offsets = [0, 0], sizes = [8, 32], strides = [1, 1]} : vector<8x128xf32> to vector<8x32xf32>
    %218 = vector.extract_strided_slice %216 {offsets = [0, 32], sizes = [8, 32], strides = [1, 1]} : vector<8x128xf32> to vector<8x32xf32>
    %219 = vector.extract_strided_slice %216 {offsets = [0, 96], sizes = [8, 32], strides = [1, 1]} : vector<8x128xf32> to vector<8x32xf32>
    %220 = vector.extract_strided_slice %211 {offsets = [0, 64], sizes = [8, 32], strides = [1, 1]} : vector<8x128xf32> to vector<8x32xf32>
    %221 = math.tanh %220 : vector<8x32xf32>
    %222 = arith.mulf %218, %186 : vector<8x32xf32>
    %223 = arith.mulf %217, %221 : vector<8x32xf32>
    %224 = arith.addf %222, %223 : vector<8x32xf32>
    %225 = math.tanh %224 : vector<8x32xf32>
    %226 = arith.mulf %219, %225 : vector<8x32xf32>
    %cst_59 = arith.constant dense<0.000000e+00> : vector<8x128xf32>
    %227 = tpu.matmul %226, %16, %cst_59 {dimension_numbers = #tpu.dot_dimension_numbers<[1], [0], [0], [1], [0, 0, 1, 1], [], []>} : vector<8x32xf32>, vector<32x128xf32>, vector<8x128xf32> -> vector<8x128xf32>
    %cst_60 = arith.constant dense<0.000000e+00> : vector<8x128xf32>
    %228 = tpu.matmul %208, %17, %cst_60 {dimension_numbers = #tpu.dot_dimension_numbers<[1], [0], [0], [1], [0, 0, 1, 1], [], []>} : vector<8x32xf32>, vector<32x128xf32>, vector<8x128xf32> -> vector<8x128xf32>
    %229 = arith.addf %227, %228 : vector<8x128xf32>
    %230 = vector.broadcast %18 : vector<1x128xf32> to vector<8x128xf32>
    %231 = arith.addf %229, %230 : vector<8x128xf32>
    %232 = arith.negf %231 : vector<8x128xf32>
    %233 = math.exp %232 : vector<8x128xf32>
    %cst_61 = arith.constant 1.000000e+00 : f32
    %234 = vector.broadcast %cst_61 : f32 to vector<8x128xf32>
    %235 = arith.addf %234, %233 : vector<8x128xf32>
    %236 = arith.divf %234, %235 : vector<8x128xf32>
    %237 = vector.extract_strided_slice %236 {offsets = [0, 0], sizes = [8, 32], strides = [1, 1]} : vector<8x128xf32> to vector<8x32xf32>
    %238 = vector.extract_strided_slice %236 {offsets = [0, 32], sizes = [8, 32], strides = [1, 1]} : vector<8x128xf32> to vector<8x32xf32>
    %239 = vector.extract_strided_slice %236 {offsets = [0, 96], sizes = [8, 32], strides = [1, 1]} : vector<8x128xf32> to vector<8x32xf32>
    %240 = vector.extract_strided_slice %231 {offsets = [0, 64], sizes = [8, 32], strides = [1, 1]} : vector<8x128xf32> to vector<8x32xf32>
    %241 = math.tanh %240 : vector<8x32xf32>
    %242 = arith.mulf %238, %206 : vector<8x32xf32>
    %243 = arith.mulf %237, %241 : vector<8x32xf32>
    %244 = arith.addf %242, %243 : vector<8x32xf32>
    %245 = math.tanh %244 : vector<8x32xf32>
    %246 = arith.mulf %239, %245 : vector<8x32xf32>
    %c48 = arith.constant 48 : index
    %c0_62 = arith.constant 0 : index
    %247 = vector.load %arg19[%c48, %c0_62] : memref<64x128xf32, #tpu.memory_space<vmem>>, vector<8x128xf32>
    %cst_63 = arith.constant dense<0.000000e+00> : vector<8x128xf32>
    %248 = tpu.matmul %226, %15, %cst_63 {dimension_numbers = #tpu.dot_dimension_numbers<[1], [0], [0], [1], [0, 0, 1, 1], [], []>} : vector<8x32xf32>, vector<32x128xf32>, vector<8x128xf32> -> vector<8x128xf32>
    %249 = arith.addf %247, %248 : vector<8x128xf32>
    %250 = arith.negf %249 : vector<8x128xf32>
    %251 = math.exp %250 : vector<8x128xf32>
    %cst_64 = arith.constant 1.000000e+00 : f32
    %252 = vector.broadcast %cst_64 : f32 to vector<8x128xf32>
    %253 = arith.addf %252, %251 : vector<8x128xf32>
    %254 = arith.divf %252, %253 : vector<8x128xf32>
    %255 = vector.extract_strided_slice %254 {offsets = [0, 0], sizes = [8, 32], strides = [1, 1]} : vector<8x128xf32> to vector<8x32xf32>
    %256 = vector.extract_strided_slice %254 {offsets = [0, 32], sizes = [8, 32], strides = [1, 1]} : vector<8x128xf32> to vector<8x32xf32>
    %257 = vector.extract_strided_slice %254 {offsets = [0, 96], sizes = [8, 32], strides = [1, 1]} : vector<8x128xf32> to vector<8x32xf32>
    %258 = vector.extract_strided_slice %249 {offsets = [0, 64], sizes = [8, 32], strides = [1, 1]} : vector<8x128xf32> to vector<8x32xf32>
    %259 = math.tanh %258 : vector<8x32xf32>
    %260 = arith.mulf %256, %224 : vector<8x32xf32>
    %261 = arith.mulf %255, %259 : vector<8x32xf32>
    %262 = arith.addf %260, %261 : vector<8x32xf32>
    %263 = math.tanh %262 : vector<8x32xf32>
    %264 = arith.mulf %257, %263 : vector<8x32xf32>
    %cst_65 = arith.constant dense<0.000000e+00> : vector<8x128xf32>
    %265 = tpu.matmul %264, %16, %cst_65 {dimension_numbers = #tpu.dot_dimension_numbers<[1], [0], [0], [1], [0, 0, 1, 1], [], []>} : vector<8x32xf32>, vector<32x128xf32>, vector<8x128xf32> -> vector<8x128xf32>
    %cst_66 = arith.constant dense<0.000000e+00> : vector<8x128xf32>
    %266 = tpu.matmul %246, %17, %cst_66 {dimension_numbers = #tpu.dot_dimension_numbers<[1], [0], [0], [1], [0, 0, 1, 1], [], []>} : vector<8x32xf32>, vector<32x128xf32>, vector<8x128xf32> -> vector<8x128xf32>
    %267 = arith.addf %265, %266 : vector<8x128xf32>
    %268 = vector.broadcast %18 : vector<1x128xf32> to vector<8x128xf32>
    %269 = arith.addf %267, %268 : vector<8x128xf32>
    %270 = arith.negf %269 : vector<8x128xf32>
    %271 = math.exp %270 : vector<8x128xf32>
    %cst_67 = arith.constant 1.000000e+00 : f32
    %272 = vector.broadcast %cst_67 : f32 to vector<8x128xf32>
    %273 = arith.addf %272, %271 : vector<8x128xf32>
    %274 = arith.divf %272, %273 : vector<8x128xf32>
    %275 = vector.extract_strided_slice %274 {offsets = [0, 0], sizes = [8, 32], strides = [1, 1]} : vector<8x128xf32> to vector<8x32xf32>
    %276 = vector.extract_strided_slice %274 {offsets = [0, 32], sizes = [8, 32], strides = [1, 1]} : vector<8x128xf32> to vector<8x32xf32>
    %277 = vector.extract_strided_slice %274 {offsets = [0, 96], sizes = [8, 32], strides = [1, 1]} : vector<8x128xf32> to vector<8x32xf32>
    %278 = vector.extract_strided_slice %269 {offsets = [0, 64], sizes = [8, 32], strides = [1, 1]} : vector<8x128xf32> to vector<8x32xf32>
    %279 = math.tanh %278 : vector<8x32xf32>
    %280 = arith.mulf %276, %244 : vector<8x32xf32>
    %281 = arith.mulf %275, %279 : vector<8x32xf32>
    %282 = arith.addf %280, %281 : vector<8x32xf32>
    %283 = math.tanh %282 : vector<8x32xf32>
    %284 = arith.mulf %277, %283 : vector<8x32xf32>
    %c56 = arith.constant 56 : index
    %c0_68 = arith.constant 0 : index
    %285 = vector.load %arg19[%c56, %c0_68] : memref<64x128xf32, #tpu.memory_space<vmem>>, vector<8x128xf32>
    %cst_69 = arith.constant dense<0.000000e+00> : vector<8x128xf32>
    %286 = tpu.matmul %264, %15, %cst_69 {dimension_numbers = #tpu.dot_dimension_numbers<[1], [0], [0], [1], [0, 0, 1, 1], [], []>} : vector<8x32xf32>, vector<32x128xf32>, vector<8x128xf32> -> vector<8x128xf32>
    %287 = arith.addf %285, %286 : vector<8x128xf32>
    %288 = arith.negf %287 : vector<8x128xf32>
    %289 = math.exp %288 : vector<8x128xf32>
    %cst_70 = arith.constant 1.000000e+00 : f32
    %290 = vector.broadcast %cst_70 : f32 to vector<8x128xf32>
    %291 = arith.addf %290, %289 : vector<8x128xf32>
    %292 = arith.divf %290, %291 : vector<8x128xf32>
    %293 = vector.extract_strided_slice %292 {offsets = [0, 0], sizes = [8, 32], strides = [1, 1]} : vector<8x128xf32> to vector<8x32xf32>
    %294 = vector.extract_strided_slice %292 {offsets = [0, 32], sizes = [8, 32], strides = [1, 1]} : vector<8x128xf32> to vector<8x32xf32>
    %295 = vector.extract_strided_slice %292 {offsets = [0, 96], sizes = [8, 32], strides = [1, 1]} : vector<8x128xf32> to vector<8x32xf32>
    %296 = vector.extract_strided_slice %287 {offsets = [0, 64], sizes = [8, 32], strides = [1, 1]} : vector<8x128xf32> to vector<8x32xf32>
    %297 = math.tanh %296 : vector<8x32xf32>
    %298 = arith.mulf %294, %262 : vector<8x32xf32>
    %299 = arith.mulf %293, %297 : vector<8x32xf32>
    %300 = arith.addf %298, %299 : vector<8x32xf32>
    %301 = math.tanh %300 : vector<8x32xf32>
    %302 = arith.mulf %295, %301 : vector<8x32xf32>
    %cst_71 = arith.constant dense<0.000000e+00> : vector<8x128xf32>
    %303 = tpu.matmul %302, %16, %cst_71 {dimension_numbers = #tpu.dot_dimension_numbers<[1], [0], [0], [1], [0, 0, 1, 1], [], []>} : vector<8x32xf32>, vector<32x128xf32>, vector<8x128xf32> -> vector<8x128xf32>
    %cst_72 = arith.constant dense<0.000000e+00> : vector<8x128xf32>
    %304 = tpu.matmul %284, %17, %cst_72 {dimension_numbers = #tpu.dot_dimension_numbers<[1], [0], [0], [1], [0, 0, 1, 1], [], []>} : vector<8x32xf32>, vector<32x128xf32>, vector<8x128xf32> -> vector<8x128xf32>
    %305 = arith.addf %303, %304 : vector<8x128xf32>
    %306 = vector.broadcast %18 : vector<1x128xf32> to vector<8x128xf32>
    %307 = arith.addf %305, %306 : vector<8x128xf32>
    %308 = arith.negf %307 : vector<8x128xf32>
    %309 = math.exp %308 : vector<8x128xf32>
    %cst_73 = arith.constant 1.000000e+00 : f32
    %310 = vector.broadcast %cst_73 : f32 to vector<8x128xf32>
    %311 = arith.addf %310, %309 : vector<8x128xf32>
    %312 = arith.divf %310, %311 : vector<8x128xf32>
    %313 = vector.extract_strided_slice %312 {offsets = [0, 0], sizes = [8, 32], strides = [1, 1]} : vector<8x128xf32> to vector<8x32xf32>
    %314 = vector.extract_strided_slice %312 {offsets = [0, 32], sizes = [8, 32], strides = [1, 1]} : vector<8x128xf32> to vector<8x32xf32>
    %315 = vector.extract_strided_slice %312 {offsets = [0, 96], sizes = [8, 32], strides = [1, 1]} : vector<8x128xf32> to vector<8x32xf32>
    %316 = vector.extract_strided_slice %307 {offsets = [0, 64], sizes = [8, 32], strides = [1, 1]} : vector<8x128xf32> to vector<8x32xf32>
    %317 = math.tanh %316 : vector<8x32xf32>
    %318 = arith.mulf %314, %282 : vector<8x32xf32>
    %319 = arith.mulf %313, %317 : vector<8x32xf32>
    %320 = arith.addf %318, %319 : vector<8x32xf32>
    %321 = math.tanh %320 : vector<8x32xf32>
    %322 = arith.mulf %315, %321 : vector<8x32xf32>
    %c0_74 = arith.constant 0 : index
    %c0_75 = arith.constant 0 : index
    %323 = vector.load %arg9[%c0_74, %c0_75] : memref<32x128xf32, #tpu.memory_space<vmem>>, vector<32x128xf32>
    %c0_76 = arith.constant 0 : index
    %c0_77 = arith.constant 0 : index
    %324 = vector.load %arg10[%c0_76, %c0_77] : memref<32x128xf32, #tpu.memory_space<vmem>>, vector<32x128xf32>
    %c0_78 = arith.constant 0 : index
    %c0_79 = arith.constant 0 : index
    %325 = vector.load %arg11[%c0_78, %c0_79] : memref<1x128xf32, #tpu.memory_space<vmem>>, vector<1x128xf32>
    %c0_80 = arith.constant 0 : index
    %c0_81 = arith.constant 0 : index
    %326 = vector.load %arg12[%c0_80, %c0_81] : memref<32x128xf32, #tpu.memory_space<vmem>>, vector<32x128xf32>
    %c0_82 = arith.constant 0 : index
    %c0_83 = arith.constant 0 : index
    %327 = vector.load %arg13[%c0_82, %c0_83] : memref<32x128xf32, #tpu.memory_space<vmem>>, vector<32x128xf32>
    %c0_84 = arith.constant 0 : index
    %c0_85 = arith.constant 0 : index
    %328 = vector.load %arg14[%c0_84, %c0_85] : memref<1x128xf32, #tpu.memory_space<vmem>>, vector<1x128xf32>
    %c0_86 = arith.constant 0 : index
    %c0_87 = arith.constant 0 : index
    %329 = vector.load %arg15[%c0_86, %c0_87] : memref<128x32xf32, #tpu.memory_space<vmem>>, vector<128x32xf32>
    %c0_88 = arith.constant 0 : index
    %c0_89 = arith.constant 0 : index
    %330 = vector.load %arg16[%c0_88, %c0_89] : memref<32x128xf32, #tpu.memory_space<vmem>>, vector<32x128xf32>
    %c0_90 = arith.constant 0 : index
    %c0_91 = arith.constant 0 : index
    %331 = vector.load %arg17[%c0_90, %c0_91] : memref<1x128xf32, #tpu.memory_space<vmem>>, vector<1x128xf32>
    %332 = tpu.iota {dimensions = array<i32: 1>} : vector<8x128xi32>
    %c0_92 = arith.constant 0 : index
    %c0_93 = arith.constant 0 : index
    %333 = vector.load %arg20[%c0_92, %c0_93] : memref<64x128xf32, #tpu.memory_space<vmem>>, vector<8x128xf32>
    %c0_94 = arith.constant 0 : index
    %c0_95 = arith.constant 0 : index
    %334 = vector.load %arg22[%c0_94, %c0_95] : memref<8x128xf32, #tpu.memory_space<vmem>>, vector<8x128xf32>
    tpu.vector_store %arg22[%c0_94, %c0_95], %333 {strides = array<i32>} : memref<8x128xf32, #tpu.memory_space<vmem>>, vector<8x128xf32>,
    %c0_96 = arith.constant 0 : index
    %c0_97 = arith.constant 0 : index
    %335 = vector.load %arg22[%c0_96, %c0_97] : memref<8x128xf32, #tpu.memory_space<vmem>>, vector<8x128xf32>
    %cst_98 = arith.constant dense<0.000000e+00> : vector<8x128xf32>
    %336 = tpu.matmul %302, %324, %cst_98 {dimension_numbers = #tpu.dot_dimension_numbers<[1], [0], [0], [1], [0, 0, 1, 1], [], []>} : vector<8x32xf32>, vector<32x128xf32>, vector<8x128xf32> -> vector<8x128xf32>
    %337 = arith.addf %335, %336 : vector<8x128xf32>
    %338 = arith.negf %337 : vector<8x128xf32>
    %339 = math.exp %338 : vector<8x128xf32>
    %cst_99 = arith.constant 1.000000e+00 : f32
    %340 = vector.broadcast %cst_99 : f32 to vector<8x128xf32>
    %341 = arith.addf %340, %339 : vector<8x128xf32>
    %342 = arith.divf %340, %341 : vector<8x128xf32>
    %343 = vector.extract_strided_slice %342 {offsets = [0, 0], sizes = [8, 32], strides = [1, 1]} : vector<8x128xf32> to vector<8x32xf32>
    %344 = vector.extract_strided_slice %342 {offsets = [0, 32], sizes = [8, 32], strides = [1, 1]} : vector<8x128xf32> to vector<8x32xf32>
    %345 = vector.extract_strided_slice %342 {offsets = [0, 96], sizes = [8, 32], strides = [1, 1]} : vector<8x128xf32> to vector<8x32xf32>
    %346 = vector.extract_strided_slice %337 {offsets = [0, 64], sizes = [8, 32], strides = [1, 1]} : vector<8x128xf32> to vector<8x32xf32>
    %347 = math.tanh %346 : vector<8x32xf32>
    %348 = arith.mulf %344, %300 : vector<8x32xf32>
    %349 = arith.mulf %343, %347 : vector<8x32xf32>
    %350 = arith.addf %348, %349 : vector<8x32xf32>
    %351 = math.tanh %350 : vector<8x32xf32>
    %352 = arith.mulf %345, %351 : vector<8x32xf32>
    %cst_100 = arith.constant dense<0.000000e+00> : vector<8x128xf32>
    %353 = tpu.matmul %352, %326, %cst_100 {dimension_numbers = #tpu.dot_dimension_numbers<[1], [0], [0], [1], [0, 0, 1, 1], [], []>} : vector<8x32xf32>, vector<32x128xf32>, vector<8x128xf32> -> vector<8x128xf32>
    %cst_101 = arith.constant dense<0.000000e+00> : vector<8x128xf32>
    %354 = tpu.matmul %322, %327, %cst_101 {dimension_numbers = #tpu.dot_dimension_numbers<[1], [0], [0], [1], [0, 0, 1, 1], [], []>} : vector<8x32xf32>, vector<32x128xf32>, vector<8x128xf32> -> vector<8x128xf32>
    %355 = arith.addf %353, %354 : vector<8x128xf32>
    %356 = vector.broadcast %328 : vector<1x128xf32> to vector<8x128xf32>
    %357 = arith.addf %355, %356 : vector<8x128xf32>
    %358 = arith.negf %357 : vector<8x128xf32>
    %359 = math.exp %358 : vector<8x128xf32>
    %cst_102 = arith.constant 1.000000e+00 : f32
    %360 = vector.broadcast %cst_102 : f32 to vector<8x128xf32>
    %361 = arith.addf %360, %359 : vector<8x128xf32>
    %362 = arith.divf %360, %361 : vector<8x128xf32>
    %363 = vector.extract_strided_slice %362 {offsets = [0, 0], sizes = [8, 32], strides = [1, 1]} : vector<8x128xf32> to vector<8x32xf32>
    %364 = vector.extract_strided_slice %362 {offsets = [0, 32], sizes = [8, 32], strides = [1, 1]} : vector<8x128xf32> to vector<8x32xf32>
    %365 = vector.extract_strided_slice %362 {offsets = [0, 96], sizes = [8, 32], strides = [1, 1]} : vector<8x128xf32> to vector<8x32xf32>
    %366 = vector.extract_strided_slice %357 {offsets = [0, 64], sizes = [8, 32], strides = [1, 1]} : vector<8x128xf32> to vector<8x32xf32>
    %367 = math.tanh %366 : vector<8x32xf32>
    %368 = arith.mulf %364, %320 : vector<8x32xf32>
    %369 = arith.mulf %363, %367 : vector<8x32xf32>
    %370 = arith.addf %368, %369 : vector<8x32xf32>
    %371 = math.tanh %370 : vector<8x32xf32>
    %372 = arith.mulf %365, %371 : vector<8x32xf32>
    %c0_103 = arith.constant 0 : index
    %c0_104 = arith.constant 0 : index
    %373 = vector.load %arg21[%c0_103, %c0_104] : memref<64x32xf32, #tpu.memory_space<vmem>>, vector<8x32xf32>
    tpu.vector_store %arg21[%c0_103, %c0_104], %372 {strides = array<i32>} : memref<64x32xf32, #tpu.memory_space<vmem>>, vector<8x32xf32>,
    %c0_105 = arith.constant 0 : index
    %374 = memref.load %arg0[%c0_105] : memref<8xi32, #tpu.memory_space<smem>>
    %c1_i32 = arith.constant 1 : i32
    %375 = arith.cmpi eq, %374, %c1_i32 : i32
    %376 = arith.extui %375 : i1 to i32
    %c0_i32 = arith.constant 0 : i32
    %377 = arith.cmpi ne, %376, %c0_i32 : i32
    scf.if %377 {
      %c8_199 = arith.constant 8 : index
      %c0_200 = arith.constant 0 : index
      %701 = vector.load %arg20[%c8_199, %c0_200] : memref<64x128xf32, #tpu.memory_space<vmem>>, vector<8x128xf32>
      %c0_201 = arith.constant 0 : index
      %c0_202 = arith.constant 0 : index
      %702 = vector.load %arg22[%c0_201, %c0_202] : memref<8x128xf32, #tpu.memory_space<vmem>>, vector<8x128xf32>
      tpu.vector_store %arg22[%c0_201, %c0_202], %701 {strides = array<i32>} : memref<8x128xf32, #tpu.memory_space<vmem>>, vector<8x128xf32>,
    } else {
    }
    %true = arith.constant true
    %378 = arith.xori %375, %true : i1
    %379 = arith.extui %378 : i1 to i32
    %c0_i32_106 = arith.constant 0 : i32
    %380 = arith.cmpi ne, %379, %c0_i32_106 : i32
    scf.if %380 {
      %cst_199 = arith.constant dense<0.000000e+00> : vector<8x128xf32>
      %701 = tpu.matmul %372, %330, %cst_199 {dimension_numbers = #tpu.dot_dimension_numbers<[1], [0], [0], [1], [0, 0, 1, 1], [], []>} : vector<8x32xf32>, vector<32x128xf32>, vector<8x128xf32> -> vector<8x128xf32>
      %702 = vector.broadcast %331 : vector<1x128xf32> to vector<8x128xf32>
      %703 = arith.addf %701, %702 : vector<8x128xf32>
      %cst_200 = arith.constant dense<0xFF800000> : vector<8xf32>
      %704 = vector.multi_reduction <maximumf>, %703, %cst_200 [1] : vector<8x128xf32> to vector<8xf32>
      %705 = vector.shape_cast %704 : vector<8xf32> to vector<8x1xf32>
      %706 = vector.broadcast %705 : vector<8x1xf32> to vector<8x128xf32>
      %707 = arith.cmpf oeq, %703, %706 : vector<8x128xf32>
      %c128_i32 = arith.constant 128 : i32
      %708 = vector.broadcast %c128_i32 : i32 to vector<8x128xi32>
      %709 = arith.select %707, %332, %708 : vector<8x128xi1>, vector<8x128xi32>
      %cst_201 = arith.constant dense<2147483647> : vector<8xi32>
      %710 = vector.multi_reduction <minsi>, %709, %cst_201 [1] : vector<8x128xi32> to vector<8xi32>
      %711 = vector.shape_cast %710 : vector<8xi32> to vector<8x1xi32>
      %712 = vector.broadcast %711 : vector<8x1xi32> to vector<8x128xi32>
      %713 = arith.cmpi eq, %332, %712 : vector<8x128xi32>
      %714 = arith.extui %713 : vector<8x128xi1> to vector<8x128xi32>
      %715 = arith.sitofp %714 : vector<8x128xi32> to vector<8x128xf32>
      %cst_202 = arith.constant dense<0.000000e+00> : vector<8x32xf32>
      %716 = tpu.matmul %715, %329, %cst_202 {dimension_numbers = #tpu.dot_dimension_numbers<[1], [0], [0], [1], [0, 0, 1, 1], [], []>} : vector<8x128xf32>, vector<128x32xf32>, vector<8x32xf32> -> vector<8x32xf32>
      %cst_203 = arith.constant dense<0.000000e+00> : vector<8x128xf32>
      %717 = tpu.matmul %716, %323, %cst_203 {dimension_numbers = #tpu.dot_dimension_numbers<[1], [0], [0], [1], [0, 0, 1, 1], [], []>} : vector<8x32xf32>, vector<32x128xf32>, vector<8x128xf32> -> vector<8x128xf32>
      %718 = vector.broadcast %325 : vector<1x128xf32> to vector<8x128xf32>
      %719 = arith.addf %717, %718 : vector<8x128xf32>
      %c0_204 = arith.constant 0 : index
      %c0_205 = arith.constant 0 : index
      %720 = vector.load %arg22[%c0_204, %c0_205] : memref<8x128xf32, #tpu.memory_space<vmem>>, vector<8x128xf32>
      tpu.vector_store %arg22[%c0_204, %c0_205], %719 {strides = array<i32>} : memref<8x128xf32, #tpu.memory_space<vmem>>, vector<8x128xf32>,
    } else {
    }
    %c0_107 = arith.constant 0 : index
    %c0_108 = arith.constant 0 : index
    %381 = vector.load %arg22[%c0_107, %c0_108] : memref<8x128xf32, #tpu.memory_space<vmem>>, vector<8x128xf32>
    %cst_109 = arith.constant dense<0.000000e+00> : vector<8x128xf32>
    %382 = tpu.matmul %352, %324, %cst_109 {dimension_numbers = #tpu.dot_dimension_numbers<[1], [0], [0], [1], [0, 0, 1, 1], [], []>} : vector<8x32xf32>, vector<32x128xf32>, vector<8x128xf32> -> vector<8x128xf32>
    %383 = arith.addf %381, %382 : vector<8x128xf32>
    %384 = arith.negf %383 : vector<8x128xf32>
    %385 = math.exp %384 : vector<8x128xf32>
    %cst_110 = arith.constant 1.000000e+00 : f32
    %386 = vector.broadcast %cst_110 : f32 to vector<8x128xf32>
    %387 = arith.addf %386, %385 : vector<8x128xf32>
    %388 = arith.divf %386, %387 : vector<8x128xf32>
    %389 = vector.extract_strided_slice %388 {offsets = [0, 0], sizes = [8, 32], strides = [1, 1]} : vector<8x128xf32> to vector<8x32xf32>
    %390 = vector.extract_strided_slice %388 {offsets = [0, 32], sizes = [8, 32], strides = [1, 1]} : vector<8x128xf32> to vector<8x32xf32>
    %391 = vector.extract_strided_slice %388 {offsets = [0, 96], sizes = [8, 32], strides = [1, 1]} : vector<8x128xf32> to vector<8x32xf32>
    %392 = vector.extract_strided_slice %383 {offsets = [0, 64], sizes = [8, 32], strides = [1, 1]} : vector<8x128xf32> to vector<8x32xf32>
    %393 = math.tanh %392 : vector<8x32xf32>
    %394 = arith.mulf %390, %350 : vector<8x32xf32>
    %395 = arith.mulf %389, %393 : vector<8x32xf32>
    %396 = arith.addf %394, %395 : vector<8x32xf32>
    %397 = math.tanh %396 : vector<8x32xf32>
    %398 = arith.mulf %391, %397 : vector<8x32xf32>
    %cst_111 = arith.constant dense<0.000000e+00> : vector<8x128xf32>
    %399 = tpu.matmul %398, %326, %cst_111 {dimension_numbers = #tpu.dot_dimension_numbers<[1], [0], [0], [1], [0, 0, 1, 1], [], []>} : vector<8x32xf32>, vector<32x128xf32>, vector<8x128xf32> -> vector<8x128xf32>
    %cst_112 = arith.constant dense<0.000000e+00> : vector<8x128xf32>
    %400 = tpu.matmul %372, %327, %cst_112 {dimension_numbers = #tpu.dot_dimension_numbers<[1], [0], [0], [1], [0, 0, 1, 1], [], []>} : vector<8x32xf32>, vector<32x128xf32>, vector<8x128xf32> -> vector<8x128xf32>
    %401 = arith.addf %399, %400 : vector<8x128xf32>
    %402 = vector.broadcast %328 : vector<1x128xf32> to vector<8x128xf32>
    %403 = arith.addf %401, %402 : vector<8x128xf32>
    %404 = arith.negf %403 : vector<8x128xf32>
    %405 = math.exp %404 : vector<8x128xf32>
    %cst_113 = arith.constant 1.000000e+00 : f32
    %406 = vector.broadcast %cst_113 : f32 to vector<8x128xf32>
    %407 = arith.addf %406, %405 : vector<8x128xf32>
    %408 = arith.divf %406, %407 : vector<8x128xf32>
    %409 = vector.extract_strided_slice %408 {offsets = [0, 0], sizes = [8, 32], strides = [1, 1]} : vector<8x128xf32> to vector<8x32xf32>
    %410 = vector.extract_strided_slice %408 {offsets = [0, 32], sizes = [8, 32], strides = [1, 1]} : vector<8x128xf32> to vector<8x32xf32>
    %411 = vector.extract_strided_slice %408 {offsets = [0, 96], sizes = [8, 32], strides = [1, 1]} : vector<8x128xf32> to vector<8x32xf32>
    %412 = vector.extract_strided_slice %403 {offsets = [0, 64], sizes = [8, 32], strides = [1, 1]} : vector<8x128xf32> to vector<8x32xf32>
    %413 = math.tanh %412 : vector<8x32xf32>
    %414 = arith.mulf %410, %370 : vector<8x32xf32>
    %415 = arith.mulf %409, %413 : vector<8x32xf32>
    %416 = arith.addf %414, %415 : vector<8x32xf32>
    %417 = math.tanh %416 : vector<8x32xf32>
    %418 = arith.mulf %411, %417 : vector<8x32xf32>
    %c8_114 = arith.constant 8 : index
    %c0_115 = arith.constant 0 : index
    %419 = vector.load %arg21[%c8_114, %c0_115] : memref<64x32xf32, #tpu.memory_space<vmem>>, vector<8x32xf32>
    tpu.vector_store %arg21[%c8_114, %c0_115], %418 {strides = array<i32>} : memref<64x32xf32, #tpu.memory_space<vmem>>, vector<8x32xf32>,
    %c1 = arith.constant 1 : index
    %420 = memref.load %arg0[%c1] : memref<8xi32, #tpu.memory_space<smem>>
    %c1_i32_116 = arith.constant 1 : i32
    %421 = arith.cmpi eq, %420, %c1_i32_116 : i32
    %422 = arith.extui %421 : i1 to i32
    %c0_i32_117 = arith.constant 0 : i32
    %423 = arith.cmpi ne, %422, %c0_i32_117 : i32
    scf.if %423 {
      %c16_199 = arith.constant 16 : index
      %c0_200 = arith.constant 0 : index
      %701 = vector.load %arg20[%c16_199, %c0_200] : memref<64x128xf32, #tpu.memory_space<vmem>>, vector<8x128xf32>
      %c0_201 = arith.constant 0 : index
      %c0_202 = arith.constant 0 : index
      %702 = vector.load %arg22[%c0_201, %c0_202] : memref<8x128xf32, #tpu.memory_space<vmem>>, vector<8x128xf32>
      tpu.vector_store %arg22[%c0_201, %c0_202], %701 {strides = array<i32>} : memref<8x128xf32, #tpu.memory_space<vmem>>, vector<8x128xf32>,
    } else {
    }
    %true_118 = arith.constant true
    %424 = arith.xori %421, %true_118 : i1
    %425 = arith.extui %424 : i1 to i32
    %c0_i32_119 = arith.constant 0 : i32
    %426 = arith.cmpi ne, %425, %c0_i32_119 : i32
    scf.if %426 {
      %cst_199 = arith.constant dense<0.000000e+00> : vector<8x128xf32>
      %701 = tpu.matmul %418, %330, %cst_199 {dimension_numbers = #tpu.dot_dimension_numbers<[1], [0], [0], [1], [0, 0, 1, 1], [], []>} : vector<8x32xf32>, vector<32x128xf32>, vector<8x128xf32> -> vector<8x128xf32>
      %702 = vector.broadcast %331 : vector<1x128xf32> to vector<8x128xf32>
      %703 = arith.addf %701, %702 : vector<8x128xf32>
      %cst_200 = arith.constant dense<0xFF800000> : vector<8xf32>
      %704 = vector.multi_reduction <maximumf>, %703, %cst_200 [1] : vector<8x128xf32> to vector<8xf32>
      %705 = vector.shape_cast %704 : vector<8xf32> to vector<8x1xf32>
      %706 = vector.broadcast %705 : vector<8x1xf32> to vector<8x128xf32>
      %707 = arith.cmpf oeq, %703, %706 : vector<8x128xf32>
      %c128_i32 = arith.constant 128 : i32
      %708 = vector.broadcast %c128_i32 : i32 to vector<8x128xi32>
      %709 = arith.select %707, %332, %708 : vector<8x128xi1>, vector<8x128xi32>
      %cst_201 = arith.constant dense<2147483647> : vector<8xi32>
      %710 = vector.multi_reduction <minsi>, %709, %cst_201 [1] : vector<8x128xi32> to vector<8xi32>
      %711 = vector.shape_cast %710 : vector<8xi32> to vector<8x1xi32>
      %712 = vector.broadcast %711 : vector<8x1xi32> to vector<8x128xi32>
      %713 = arith.cmpi eq, %332, %712 : vector<8x128xi32>
      %714 = arith.extui %713 : vector<8x128xi1> to vector<8x128xi32>
      %715 = arith.sitofp %714 : vector<8x128xi32> to vector<8x128xf32>
      %cst_202 = arith.constant dense<0.000000e+00> : vector<8x32xf32>
      %716 = tpu.matmul %715, %329, %cst_202 {dimension_numbers = #tpu.dot_dimension_numbers<[1], [0], [0], [1], [0, 0, 1, 1], [], []>} : vector<8x128xf32>, vector<128x32xf32>, vector<8x32xf32> -> vector<8x32xf32>
      %cst_203 = arith.constant dense<0.000000e+00> : vector<8x128xf32>
      %717 = tpu.matmul %716, %323, %cst_203 {dimension_numbers = #tpu.dot_dimension_numbers<[1], [0], [0], [1], [0, 0, 1, 1], [], []>} : vector<8x32xf32>, vector<32x128xf32>, vector<8x128xf32> -> vector<8x128xf32>
      %718 = vector.broadcast %325 : vector<1x128xf32> to vector<8x128xf32>
      %719 = arith.addf %717, %718 : vector<8x128xf32>
      %c0_204 = arith.constant 0 : index
      %c0_205 = arith.constant 0 : index
      %720 = vector.load %arg22[%c0_204, %c0_205] : memref<8x128xf32, #tpu.memory_space<vmem>>, vector<8x128xf32>
      tpu.vector_store %arg22[%c0_204, %c0_205], %719 {strides = array<i32>} : memref<8x128xf32, #tpu.memory_space<vmem>>, vector<8x128xf32>,
    } else {
    }
    %c0_120 = arith.constant 0 : index
    %c0_121 = arith.constant 0 : index
    %427 = vector.load %arg22[%c0_120, %c0_121] : memref<8x128xf32, #tpu.memory_space<vmem>>, vector<8x128xf32>
    %cst_122 = arith.constant dense<0.000000e+00> : vector<8x128xf32>
    %428 = tpu.matmul %398, %324, %cst_122 {dimension_numbers = #tpu.dot_dimension_numbers<[1], [0], [0], [1], [0, 0, 1, 1], [], []>} : vector<8x32xf32>, vector<32x128xf32>, vector<8x128xf32> -> vector<8x128xf32>
    %429 = arith.addf %427, %428 : vector<8x128xf32>
    %430 = arith.negf %429 : vector<8x128xf32>
    %431 = math.exp %430 : vector<8x128xf32>
    %cst_123 = arith.constant 1.000000e+00 : f32
    %432 = vector.broadcast %cst_123 : f32 to vector<8x128xf32>
    %433 = arith.addf %432, %431 : vector<8x128xf32>
    %434 = arith.divf %432, %433 : vector<8x128xf32>
    %435 = vector.extract_strided_slice %434 {offsets = [0, 0], sizes = [8, 32], strides = [1, 1]} : vector<8x128xf32> to vector<8x32xf32>
    %436 = vector.extract_strided_slice %434 {offsets = [0, 32], sizes = [8, 32], strides = [1, 1]} : vector<8x128xf32> to vector<8x32xf32>
    %437 = vector.extract_strided_slice %434 {offsets = [0, 96], sizes = [8, 32], strides = [1, 1]} : vector<8x128xf32> to vector<8x32xf32>
    %438 = vector.extract_strided_slice %429 {offsets = [0, 64], sizes = [8, 32], strides = [1, 1]} : vector<8x128xf32> to vector<8x32xf32>
    %439 = math.tanh %438 : vector<8x32xf32>
    %440 = arith.mulf %436, %396 : vector<8x32xf32>
    %441 = arith.mulf %435, %439 : vector<8x32xf32>
    %442 = arith.addf %440, %441 : vector<8x32xf32>
    %443 = math.tanh %442 : vector<8x32xf32>
    %444 = arith.mulf %437, %443 : vector<8x32xf32>
    %cst_124 = arith.constant dense<0.000000e+00> : vector<8x128xf32>
    %445 = tpu.matmul %444, %326, %cst_124 {dimension_numbers = #tpu.dot_dimension_numbers<[1], [0], [0], [1], [0, 0, 1, 1], [], []>} : vector<8x32xf32>, vector<32x128xf32>, vector<8x128xf32> -> vector<8x128xf32>
    %cst_125 = arith.constant dense<0.000000e+00> : vector<8x128xf32>
    %446 = tpu.matmul %418, %327, %cst_125 {dimension_numbers = #tpu.dot_dimension_numbers<[1], [0], [0], [1], [0, 0, 1, 1], [], []>} : vector<8x32xf32>, vector<32x128xf32>, vector<8x128xf32> -> vector<8x128xf32>
    %447 = arith.addf %445, %446 : vector<8x128xf32>
    %448 = vector.broadcast %328 : vector<1x128xf32> to vector<8x128xf32>
    %449 = arith.addf %447, %448 : vector<8x128xf32>
    %450 = arith.negf %449 : vector<8x128xf32>
    %451 = math.exp %450 : vector<8x128xf32>
    %cst_126 = arith.constant 1.000000e+00 : f32
    %452 = vector.broadcast %cst_126 : f32 to vector<8x128xf32>
    %453 = arith.addf %452, %451 : vector<8x128xf32>
    %454 = arith.divf %452, %453 : vector<8x128xf32>
    %455 = vector.extract_strided_slice %454 {offsets = [0, 0], sizes = [8, 32], strides = [1, 1]} : vector<8x128xf32> to vector<8x32xf32>
    %456 = vector.extract_strided_slice %454 {offsets = [0, 32], sizes = [8, 32], strides = [1, 1]} : vector<8x128xf32> to vector<8x32xf32>
    %457 = vector.extract_strided_slice %454 {offsets = [0, 96], sizes = [8, 32], strides = [1, 1]} : vector<8x128xf32> to vector<8x32xf32>
    %458 = vector.extract_strided_slice %449 {offsets = [0, 64], sizes = [8, 32], strides = [1, 1]} : vector<8x128xf32> to vector<8x32xf32>
    %459 = math.tanh %458 : vector<8x32xf32>
    %460 = arith.mulf %456, %416 : vector<8x32xf32>
    %461 = arith.mulf %455, %459 : vector<8x32xf32>
    %462 = arith.addf %460, %461 : vector<8x32xf32>
    %463 = math.tanh %462 : vector<8x32xf32>
    %464 = arith.mulf %457, %463 : vector<8x32xf32>
    %c16_127 = arith.constant 16 : index
    %c0_128 = arith.constant 0 : index
    %465 = vector.load %arg21[%c16_127, %c0_128] : memref<64x32xf32, #tpu.memory_space<vmem>>, vector<8x32xf32>
    tpu.vector_store %arg21[%c16_127, %c0_128], %464 {strides = array<i32>} : memref<64x32xf32, #tpu.memory_space<vmem>>, vector<8x32xf32>,
    %c2 = arith.constant 2 : index
    %466 = memref.load %arg0[%c2] : memref<8xi32, #tpu.memory_space<smem>>
    %c1_i32_129 = arith.constant 1 : i32
    %467 = arith.cmpi eq, %466, %c1_i32_129 : i32
    %468 = arith.extui %467 : i1 to i32
    %c0_i32_130 = arith.constant 0 : i32
    %469 = arith.cmpi ne, %468, %c0_i32_130 : i32
    scf.if %469 {
      %c24_199 = arith.constant 24 : index
      %c0_200 = arith.constant 0 : index
      %701 = vector.load %arg20[%c24_199, %c0_200] : memref<64x128xf32, #tpu.memory_space<vmem>>, vector<8x128xf32>
      %c0_201 = arith.constant 0 : index
      %c0_202 = arith.constant 0 : index
      %702 = vector.load %arg22[%c0_201, %c0_202] : memref<8x128xf32, #tpu.memory_space<vmem>>, vector<8x128xf32>
      tpu.vector_store %arg22[%c0_201, %c0_202], %701 {strides = array<i32>} : memref<8x128xf32, #tpu.memory_space<vmem>>, vector<8x128xf32>,
    } else {
    }
    %true_131 = arith.constant true
    %470 = arith.xori %467, %true_131 : i1
    %471 = arith.extui %470 : i1 to i32
    %c0_i32_132 = arith.constant 0 : i32
    %472 = arith.cmpi ne, %471, %c0_i32_132 : i32
    scf.if %472 {
      %cst_199 = arith.constant dense<0.000000e+00> : vector<8x128xf32>
      %701 = tpu.matmul %464, %330, %cst_199 {dimension_numbers = #tpu.dot_dimension_numbers<[1], [0], [0], [1], [0, 0, 1, 1], [], []>} : vector<8x32xf32>, vector<32x128xf32>, vector<8x128xf32> -> vector<8x128xf32>
      %702 = vector.broadcast %331 : vector<1x128xf32> to vector<8x128xf32>
      %703 = arith.addf %701, %702 : vector<8x128xf32>
      %cst_200 = arith.constant dense<0xFF800000> : vector<8xf32>
      %704 = vector.multi_reduction <maximumf>, %703, %cst_200 [1] : vector<8x128xf32> to vector<8xf32>
      %705 = vector.shape_cast %704 : vector<8xf32> to vector<8x1xf32>
      %706 = vector.broadcast %705 : vector<8x1xf32> to vector<8x128xf32>
      %707 = arith.cmpf oeq, %703, %706 : vector<8x128xf32>
      %c128_i32 = arith.constant 128 : i32
      %708 = vector.broadcast %c128_i32 : i32 to vector<8x128xi32>
      %709 = arith.select %707, %332, %708 : vector<8x128xi1>, vector<8x128xi32>
      %cst_201 = arith.constant dense<2147483647> : vector<8xi32>
      %710 = vector.multi_reduction <minsi>, %709, %cst_201 [1] : vector<8x128xi32> to vector<8xi32>
      %711 = vector.shape_cast %710 : vector<8xi32> to vector<8x1xi32>
      %712 = vector.broadcast %711 : vector<8x1xi32> to vector<8x128xi32>
      %713 = arith.cmpi eq, %332, %712 : vector<8x128xi32>
      %714 = arith.extui %713 : vector<8x128xi1> to vector<8x128xi32>
      %715 = arith.sitofp %714 : vector<8x128xi32> to vector<8x128xf32>
      %cst_202 = arith.constant dense<0.000000e+00> : vector<8x32xf32>
      %716 = tpu.matmul %715, %329, %cst_202 {dimension_numbers = #tpu.dot_dimension_numbers<[1], [0], [0], [1], [0, 0, 1, 1], [], []>} : vector<8x128xf32>, vector<128x32xf32>, vector<8x32xf32> -> vector<8x32xf32>
      %cst_203 = arith.constant dense<0.000000e+00> : vector<8x128xf32>
      %717 = tpu.matmul %716, %323, %cst_203 {dimension_numbers = #tpu.dot_dimension_numbers<[1], [0], [0], [1], [0, 0, 1, 1], [], []>} : vector<8x32xf32>, vector<32x128xf32>, vector<8x128xf32> -> vector<8x128xf32>
      %718 = vector.broadcast %325 : vector<1x128xf32> to vector<8x128xf32>
      %719 = arith.addf %717, %718 : vector<8x128xf32>
      %c0_204 = arith.constant 0 : index
      %c0_205 = arith.constant 0 : index
      %720 = vector.load %arg22[%c0_204, %c0_205] : memref<8x128xf32, #tpu.memory_space<vmem>>, vector<8x128xf32>
      tpu.vector_store %arg22[%c0_204, %c0_205], %719 {strides = array<i32>} : memref<8x128xf32, #tpu.memory_space<vmem>>, vector<8x128xf32>,
    } else {
    }
    %c0_133 = arith.constant 0 : index
    %c0_134 = arith.constant 0 : index
    %473 = vector.load %arg22[%c0_133, %c0_134] : memref<8x128xf32, #tpu.memory_space<vmem>>, vector<8x128xf32>
    %cst_135 = arith.constant dense<0.000000e+00> : vector<8x128xf32>
    %474 = tpu.matmul %444, %324, %cst_135 {dimension_numbers = #tpu.dot_dimension_numbers<[1], [0], [0], [1], [0, 0, 1, 1], [], []>} : vector<8x32xf32>, vector<32x128xf32>, vector<8x128xf32> -> vector<8x128xf32>
    %475 = arith.addf %473, %474 : vector<8x128xf32>
    %476 = arith.negf %475 : vector<8x128xf32>
    %477 = math.exp %476 : vector<8x128xf32>
    %cst_136 = arith.constant 1.000000e+00 : f32
    %478 = vector.broadcast %cst_136 : f32 to vector<8x128xf32>
    %479 = arith.addf %478, %477 : vector<8x128xf32>
    %480 = arith.divf %478, %479 : vector<8x128xf32>
    %481 = vector.extract_strided_slice %480 {offsets = [0, 0], sizes = [8, 32], strides = [1, 1]} : vector<8x128xf32> to vector<8x32xf32>
    %482 = vector.extract_strided_slice %480 {offsets = [0, 32], sizes = [8, 32], strides = [1, 1]} : vector<8x128xf32> to vector<8x32xf32>
    %483 = vector.extract_strided_slice %480 {offsets = [0, 96], sizes = [8, 32], strides = [1, 1]} : vector<8x128xf32> to vector<8x32xf32>
    %484 = vector.extract_strided_slice %475 {offsets = [0, 64], sizes = [8, 32], strides = [1, 1]} : vector<8x128xf32> to vector<8x32xf32>
    %485 = math.tanh %484 : vector<8x32xf32>
    %486 = arith.mulf %482, %442 : vector<8x32xf32>
    %487 = arith.mulf %481, %485 : vector<8x32xf32>
    %488 = arith.addf %486, %487 : vector<8x32xf32>
    %489 = math.tanh %488 : vector<8x32xf32>
    %490 = arith.mulf %483, %489 : vector<8x32xf32>
    %cst_137 = arith.constant dense<0.000000e+00> : vector<8x128xf32>
    %491 = tpu.matmul %490, %326, %cst_137 {dimension_numbers = #tpu.dot_dimension_numbers<[1], [0], [0], [1], [0, 0, 1, 1], [], []>} : vector<8x32xf32>, vector<32x128xf32>, vector<8x128xf32> -> vector<8x128xf32>
    %cst_138 = arith.constant dense<0.000000e+00> : vector<8x128xf32>
    %492 = tpu.matmul %464, %327, %cst_138 {dimension_numbers = #tpu.dot_dimension_numbers<[1], [0], [0], [1], [0, 0, 1, 1], [], []>} : vector<8x32xf32>, vector<32x128xf32>, vector<8x128xf32> -> vector<8x128xf32>
    %493 = arith.addf %491, %492 : vector<8x128xf32>
    %494 = vector.broadcast %328 : vector<1x128xf32> to vector<8x128xf32>
    %495 = arith.addf %493, %494 : vector<8x128xf32>
    %496 = arith.negf %495 : vector<8x128xf32>
    %497 = math.exp %496 : vector<8x128xf32>
    %cst_139 = arith.constant 1.000000e+00 : f32
    %498 = vector.broadcast %cst_139 : f32 to vector<8x128xf32>
    %499 = arith.addf %498, %497 : vector<8x128xf32>
    %500 = arith.divf %498, %499 : vector<8x128xf32>
    %501 = vector.extract_strided_slice %500 {offsets = [0, 0], sizes = [8, 32], strides = [1, 1]} : vector<8x128xf32> to vector<8x32xf32>
    %502 = vector.extract_strided_slice %500 {offsets = [0, 32], sizes = [8, 32], strides = [1, 1]} : vector<8x128xf32> to vector<8x32xf32>
    %503 = vector.extract_strided_slice %500 {offsets = [0, 96], sizes = [8, 32], strides = [1, 1]} : vector<8x128xf32> to vector<8x32xf32>
    %504 = vector.extract_strided_slice %495 {offsets = [0, 64], sizes = [8, 32], strides = [1, 1]} : vector<8x128xf32> to vector<8x32xf32>
    %505 = math.tanh %504 : vector<8x32xf32>
    %506 = arith.mulf %502, %462 : vector<8x32xf32>
    %507 = arith.mulf %501, %505 : vector<8x32xf32>
    %508 = arith.addf %506, %507 : vector<8x32xf32>
    %509 = math.tanh %508 : vector<8x32xf32>
    %510 = arith.mulf %503, %509 : vector<8x32xf32>
    %c24_140 = arith.constant 24 : index
    %c0_141 = arith.constant 0 : index
    %511 = vector.load %arg21[%c24_140, %c0_141] : memref<64x32xf32, #tpu.memory_space<vmem>>, vector<8x32xf32>
    tpu.vector_store %arg21[%c24_140, %c0_141], %510 {strides = array<i32>} : memref<64x32xf32, #tpu.memory_space<vmem>>, vector<8x32xf32>,
    %c3 = arith.constant 3 : index
    %512 = memref.load %arg0[%c3] : memref<8xi32, #tpu.memory_space<smem>>
    %c1_i32_142 = arith.constant 1 : i32
    %513 = arith.cmpi eq, %512, %c1_i32_142 : i32
    %514 = arith.extui %513 : i1 to i32
    %c0_i32_143 = arith.constant 0 : i32
    %515 = arith.cmpi ne, %514, %c0_i32_143 : i32
    scf.if %515 {
      %c32_199 = arith.constant 32 : index
      %c0_200 = arith.constant 0 : index
      %701 = vector.load %arg20[%c32_199, %c0_200] : memref<64x128xf32, #tpu.memory_space<vmem>>, vector<8x128xf32>
      %c0_201 = arith.constant 0 : index
      %c0_202 = arith.constant 0 : index
      %702 = vector.load %arg22[%c0_201, %c0_202] : memref<8x128xf32, #tpu.memory_space<vmem>>, vector<8x128xf32>
      tpu.vector_store %arg22[%c0_201, %c0_202], %701 {strides = array<i32>} : memref<8x128xf32, #tpu.memory_space<vmem>>, vector<8x128xf32>,
    } else {
    }
    %true_144 = arith.constant true
    %516 = arith.xori %513, %true_144 : i1
    %517 = arith.extui %516 : i1 to i32
    %c0_i32_145 = arith.constant 0 : i32
    %518 = arith.cmpi ne, %517, %c0_i32_145 : i32
    scf.if %518 {
      %cst_199 = arith.constant dense<0.000000e+00> : vector<8x128xf32>
      %701 = tpu.matmul %510, %330, %cst_199 {dimension_numbers = #tpu.dot_dimension_numbers<[1], [0], [0], [1], [0, 0, 1, 1], [], []>} : vector<8x32xf32>, vector<32x128xf32>, vector<8x128xf32> -> vector<8x128xf32>
      %702 = vector.broadcast %331 : vector<1x128xf32> to vector<8x128xf32>
      %703 = arith.addf %701, %702 : vector<8x128xf32>
      %cst_200 = arith.constant dense<0xFF800000> : vector<8xf32>
      %704 = vector.multi_reduction <maximumf>, %703, %cst_200 [1] : vector<8x128xf32> to vector<8xf32>
      %705 = vector.shape_cast %704 : vector<8xf32> to vector<8x1xf32>
      %706 = vector.broadcast %705 : vector<8x1xf32> to vector<8x128xf32>
      %707 = arith.cmpf oeq, %703, %706 : vector<8x128xf32>
      %c128_i32 = arith.constant 128 : i32
      %708 = vector.broadcast %c128_i32 : i32 to vector<8x128xi32>
      %709 = arith.select %707, %332, %708 : vector<8x128xi1>, vector<8x128xi32>
      %cst_201 = arith.constant dense<2147483647> : vector<8xi32>
      %710 = vector.multi_reduction <minsi>, %709, %cst_201 [1] : vector<8x128xi32> to vector<8xi32>
      %711 = vector.shape_cast %710 : vector<8xi32> to vector<8x1xi32>
      %712 = vector.broadcast %711 : vector<8x1xi32> to vector<8x128xi32>
      %713 = arith.cmpi eq, %332, %712 : vector<8x128xi32>
      %714 = arith.extui %713 : vector<8x128xi1> to vector<8x128xi32>
      %715 = arith.sitofp %714 : vector<8x128xi32> to vector<8x128xf32>
      %cst_202 = arith.constant dense<0.000000e+00> : vector<8x32xf32>
      %716 = tpu.matmul %715, %329, %cst_202 {dimension_numbers = #tpu.dot_dimension_numbers<[1], [0], [0], [1], [0, 0, 1, 1], [], []>} : vector<8x128xf32>, vector<128x32xf32>, vector<8x32xf32> -> vector<8x32xf32>
      %cst_203 = arith.constant dense<0.000000e+00> : vector<8x128xf32>
      %717 = tpu.matmul %716, %323, %cst_203 {dimension_numbers = #tpu.dot_dimension_numbers<[1], [0], [0], [1], [0, 0, 1, 1], [], []>} : vector<8x32xf32>, vector<32x128xf32>, vector<8x128xf32> -> vector<8x128xf32>
      %718 = vector.broadcast %325 : vector<1x128xf32> to vector<8x128xf32>
      %719 = arith.addf %717, %718 : vector<8x128xf32>
      %c0_204 = arith.constant 0 : index
      %c0_205 = arith.constant 0 : index
      %720 = vector.load %arg22[%c0_204, %c0_205] : memref<8x128xf32, #tpu.memory_space<vmem>>, vector<8x128xf32>
      tpu.vector_store %arg22[%c0_204, %c0_205], %719 {strides = array<i32>} : memref<8x128xf32, #tpu.memory_space<vmem>>, vector<8x128xf32>,
    } else {
    }
    %c0_146 = arith.constant 0 : index
    %c0_147 = arith.constant 0 : index
    %519 = vector.load %arg22[%c0_146, %c0_147] : memref<8x128xf32, #tpu.memory_space<vmem>>, vector<8x128xf32>
    %cst_148 = arith.constant dense<0.000000e+00> : vector<8x128xf32>
    %520 = tpu.matmul %490, %324, %cst_148 {dimension_numbers = #tpu.dot_dimension_numbers<[1], [0], [0], [1], [0, 0, 1, 1], [], []>} : vector<8x32xf32>, vector<32x128xf32>, vector<8x128xf32> -> vector<8x128xf32>
    %521 = arith.addf %519, %520 : vector<8x128xf32>
    %522 = arith.negf %521 : vector<8x128xf32>
    %523 = math.exp %522 : vector<8x128xf32>
    %cst_149 = arith.constant 1.000000e+00 : f32
    %524 = vector.broadcast %cst_149 : f32 to vector<8x128xf32>
    %525 = arith.addf %524, %523 : vector<8x128xf32>
    %526 = arith.divf %524, %525 : vector<8x128xf32>
    %527 = vector.extract_strided_slice %526 {offsets = [0, 0], sizes = [8, 32], strides = [1, 1]} : vector<8x128xf32> to vector<8x32xf32>
    %528 = vector.extract_strided_slice %526 {offsets = [0, 32], sizes = [8, 32], strides = [1, 1]} : vector<8x128xf32> to vector<8x32xf32>
    %529 = vector.extract_strided_slice %526 {offsets = [0, 96], sizes = [8, 32], strides = [1, 1]} : vector<8x128xf32> to vector<8x32xf32>
    %530 = vector.extract_strided_slice %521 {offsets = [0, 64], sizes = [8, 32], strides = [1, 1]} : vector<8x128xf32> to vector<8x32xf32>
    %531 = math.tanh %530 : vector<8x32xf32>
    %532 = arith.mulf %528, %488 : vector<8x32xf32>
    %533 = arith.mulf %527, %531 : vector<8x32xf32>
    %534 = arith.addf %532, %533 : vector<8x32xf32>
    %535 = math.tanh %534 : vector<8x32xf32>
    %536 = arith.mulf %529, %535 : vector<8x32xf32>
    %cst_150 = arith.constant dense<0.000000e+00> : vector<8x128xf32>
    %537 = tpu.matmul %536, %326, %cst_150 {dimension_numbers = #tpu.dot_dimension_numbers<[1], [0], [0], [1], [0, 0, 1, 1], [], []>} : vector<8x32xf32>, vector<32x128xf32>, vector<8x128xf32> -> vector<8x128xf32>
    %cst_151 = arith.constant dense<0.000000e+00> : vector<8x128xf32>
    %538 = tpu.matmul %510, %327, %cst_151 {dimension_numbers = #tpu.dot_dimension_numbers<[1], [0], [0], [1], [0, 0, 1, 1], [], []>} : vector<8x32xf32>, vector<32x128xf32>, vector<8x128xf32> -> vector<8x128xf32>
    %539 = arith.addf %537, %538 : vector<8x128xf32>
    %540 = vector.broadcast %328 : vector<1x128xf32> to vector<8x128xf32>
    %541 = arith.addf %539, %540 : vector<8x128xf32>
    %542 = arith.negf %541 : vector<8x128xf32>
    %543 = math.exp %542 : vector<8x128xf32>
    %cst_152 = arith.constant 1.000000e+00 : f32
    %544 = vector.broadcast %cst_152 : f32 to vector<8x128xf32>
    %545 = arith.addf %544, %543 : vector<8x128xf32>
    %546 = arith.divf %544, %545 : vector<8x128xf32>
    %547 = vector.extract_strided_slice %546 {offsets = [0, 0], sizes = [8, 32], strides = [1, 1]} : vector<8x128xf32> to vector<8x32xf32>
    %548 = vector.extract_strided_slice %546 {offsets = [0, 32], sizes = [8, 32], strides = [1, 1]} : vector<8x128xf32> to vector<8x32xf32>
    %549 = vector.extract_strided_slice %546 {offsets = [0, 96], sizes = [8, 32], strides = [1, 1]} : vector<8x128xf32> to vector<8x32xf32>
    %550 = vector.extract_strided_slice %541 {offsets = [0, 64], sizes = [8, 32], strides = [1, 1]} : vector<8x128xf32> to vector<8x32xf32>
    %551 = math.tanh %550 : vector<8x32xf32>
    %552 = arith.mulf %548, %508 : vector<8x32xf32>
    %553 = arith.mulf %547, %551 : vector<8x32xf32>
    %554 = arith.addf %552, %553 : vector<8x32xf32>
    %555 = math.tanh %554 : vector<8x32xf32>
    %556 = arith.mulf %549, %555 : vector<8x32xf32>
    %c32_153 = arith.constant 32 : index
    %c0_154 = arith.constant 0 : index
    %557 = vector.load %arg21[%c32_153, %c0_154] : memref<64x32xf32, #tpu.memory_space<vmem>>, vector<8x32xf32>
    tpu.vector_store %arg21[%c32_153, %c0_154], %556 {strides = array<i32>} : memref<64x32xf32, #tpu.memory_space<vmem>>, vector<8x32xf32>,
    %c4 = arith.constant 4 : index
    %558 = memref.load %arg0[%c4] : memref<8xi32, #tpu.memory_space<smem>>
    %c1_i32_155 = arith.constant 1 : i32
    %559 = arith.cmpi eq, %558, %c1_i32_155 : i32
    %560 = arith.extui %559 : i1 to i32
    %c0_i32_156 = arith.constant 0 : i32
    %561 = arith.cmpi ne, %560, %c0_i32_156 : i32
    scf.if %561 {
      %c40_199 = arith.constant 40 : index
      %c0_200 = arith.constant 0 : index
      %701 = vector.load %arg20[%c40_199, %c0_200] : memref<64x128xf32, #tpu.memory_space<vmem>>, vector<8x128xf32>
      %c0_201 = arith.constant 0 : index
      %c0_202 = arith.constant 0 : index
      %702 = vector.load %arg22[%c0_201, %c0_202] : memref<8x128xf32, #tpu.memory_space<vmem>>, vector<8x128xf32>
      tpu.vector_store %arg22[%c0_201, %c0_202], %701 {strides = array<i32>} : memref<8x128xf32, #tpu.memory_space<vmem>>, vector<8x128xf32>,
    } else {
    }
    %true_157 = arith.constant true
    %562 = arith.xori %559, %true_157 : i1
    %563 = arith.extui %562 : i1 to i32
    %c0_i32_158 = arith.constant 0 : i32
    %564 = arith.cmpi ne, %563, %c0_i32_158 : i32
    scf.if %564 {
      %cst_199 = arith.constant dense<0.000000e+00> : vector<8x128xf32>
      %701 = tpu.matmul %556, %330, %cst_199 {dimension_numbers = #tpu.dot_dimension_numbers<[1], [0], [0], [1], [0, 0, 1, 1], [], []>} : vector<8x32xf32>, vector<32x128xf32>, vector<8x128xf32> -> vector<8x128xf32>
      %702 = vector.broadcast %331 : vector<1x128xf32> to vector<8x128xf32>
      %703 = arith.addf %701, %702 : vector<8x128xf32>
      %cst_200 = arith.constant dense<0xFF800000> : vector<8xf32>
      %704 = vector.multi_reduction <maximumf>, %703, %cst_200 [1] : vector<8x128xf32> to vector<8xf32>
      %705 = vector.shape_cast %704 : vector<8xf32> to vector<8x1xf32>
      %706 = vector.broadcast %705 : vector<8x1xf32> to vector<8x128xf32>
      %707 = arith.cmpf oeq, %703, %706 : vector<8x128xf32>
      %c128_i32 = arith.constant 128 : i32
      %708 = vector.broadcast %c128_i32 : i32 to vector<8x128xi32>
      %709 = arith.select %707, %332, %708 : vector<8x128xi1>, vector<8x128xi32>
      %cst_201 = arith.constant dense<2147483647> : vector<8xi32>
      %710 = vector.multi_reduction <minsi>, %709, %cst_201 [1] : vector<8x128xi32> to vector<8xi32>
      %711 = vector.shape_cast %710 : vector<8xi32> to vector<8x1xi32>
      %712 = vector.broadcast %711 : vector<8x1xi32> to vector<8x128xi32>
      %713 = arith.cmpi eq, %332, %712 : vector<8x128xi32>
      %714 = arith.extui %713 : vector<8x128xi1> to vector<8x128xi32>
      %715 = arith.sitofp %714 : vector<8x128xi32> to vector<8x128xf32>
      %cst_202 = arith.constant dense<0.000000e+00> : vector<8x32xf32>
      %716 = tpu.matmul %715, %329, %cst_202 {dimension_numbers = #tpu.dot_dimension_numbers<[1], [0], [0], [1], [0, 0, 1, 1], [], []>} : vector<8x128xf32>, vector<128x32xf32>, vector<8x32xf32> -> vector<8x32xf32>
      %cst_203 = arith.constant dense<0.000000e+00> : vector<8x128xf32>
      %717 = tpu.matmul %716, %323, %cst_203 {dimension_numbers = #tpu.dot_dimension_numbers<[1], [0], [0], [1], [0, 0, 1, 1], [], []>} : vector<8x32xf32>, vector<32x128xf32>, vector<8x128xf32> -> vector<8x128xf32>
      %718 = vector.broadcast %325 : vector<1x128xf32> to vector<8x128xf32>
      %719 = arith.addf %717, %718 : vector<8x128xf32>
      %c0_204 = arith.constant 0 : index
      %c0_205 = arith.constant 0 : index
      %720 = vector.load %arg22[%c0_204, %c0_205] : memref<8x128xf32, #tpu.memory_space<vmem>>, vector<8x128xf32>
      tpu.vector_store %arg22[%c0_204, %c0_205], %719 {strides = array<i32>} : memref<8x128xf32, #tpu.memory_space<vmem>>, vector<8x128xf32>,
    } else {
    }
    %c0_159 = arith.constant 0 : index
    %c0_160 = arith.constant 0 : index
    %565 = vector.load %arg22[%c0_159, %c0_160] : memref<8x128xf32, #tpu.memory_space<vmem>>, vector<8x128xf32>
    %cst_161 = arith.constant dense<0.000000e+00> : vector<8x128xf32>
    %566 = tpu.matmul %536, %324, %cst_161 {dimension_numbers = #tpu.dot_dimension_numbers<[1], [0], [0], [1], [0, 0, 1, 1], [], []>} : vector<8x32xf32>, vector<32x128xf32>, vector<8x128xf32> -> vector<8x128xf32>
    %567 = arith.addf %565, %566 : vector<8x128xf32>
    %568 = arith.negf %567 : vector<8x128xf32>
    %569 = math.exp %568 : vector<8x128xf32>
    %cst_162 = arith.constant 1.000000e+00 : f32
    %570 = vector.broadcast %cst_162 : f32 to vector<8x128xf32>
    %571 = arith.addf %570, %569 : vector<8x128xf32>
    %572 = arith.divf %570, %571 : vector<8x128xf32>
    %573 = vector.extract_strided_slice %572 {offsets = [0, 0], sizes = [8, 32], strides = [1, 1]} : vector<8x128xf32> to vector<8x32xf32>
    %574 = vector.extract_strided_slice %572 {offsets = [0, 32], sizes = [8, 32], strides = [1, 1]} : vector<8x128xf32> to vector<8x32xf32>
    %575 = vector.extract_strided_slice %572 {offsets = [0, 96], sizes = [8, 32], strides = [1, 1]} : vector<8x128xf32> to vector<8x32xf32>
    %576 = vector.extract_strided_slice %567 {offsets = [0, 64], sizes = [8, 32], strides = [1, 1]} : vector<8x128xf32> to vector<8x32xf32>
    %577 = math.tanh %576 : vector<8x32xf32>
    %578 = arith.mulf %574, %534 : vector<8x32xf32>
    %579 = arith.mulf %573, %577 : vector<8x32xf32>
    %580 = arith.addf %578, %579 : vector<8x32xf32>
    %581 = math.tanh %580 : vector<8x32xf32>
    %582 = arith.mulf %575, %581 : vector<8x32xf32>
    %cst_163 = arith.constant dense<0.000000e+00> : vector<8x128xf32>
    %583 = tpu.matmul %582, %326, %cst_163 {dimension_numbers = #tpu.dot_dimension_numbers<[1], [0], [0], [1], [0, 0, 1, 1], [], []>} : vector<8x32xf32>, vector<32x128xf32>, vector<8x128xf32> -> vector<8x128xf32>
    %cst_164 = arith.constant dense<0.000000e+00> : vector<8x128xf32>
    %584 = tpu.matmul %556, %327, %cst_164 {dimension_numbers = #tpu.dot_dimension_numbers<[1], [0], [0], [1], [0, 0, 1, 1], [], []>} : vector<8x32xf32>, vector<32x128xf32>, vector<8x128xf32> -> vector<8x128xf32>
    %585 = arith.addf %583, %584 : vector<8x128xf32>
    %586 = vector.broadcast %328 : vector<1x128xf32> to vector<8x128xf32>
    %587 = arith.addf %585, %586 : vector<8x128xf32>
    %588 = arith.negf %587 : vector<8x128xf32>
    %589 = math.exp %588 : vector<8x128xf32>
    %cst_165 = arith.constant 1.000000e+00 : f32
    %590 = vector.broadcast %cst_165 : f32 to vector<8x128xf32>
    %591 = arith.addf %590, %589 : vector<8x128xf32>
    %592 = arith.divf %590, %591 : vector<8x128xf32>
    %593 = vector.extract_strided_slice %592 {offsets = [0, 0], sizes = [8, 32], strides = [1, 1]} : vector<8x128xf32> to vector<8x32xf32>
    %594 = vector.extract_strided_slice %592 {offsets = [0, 32], sizes = [8, 32], strides = [1, 1]} : vector<8x128xf32> to vector<8x32xf32>
    %595 = vector.extract_strided_slice %592 {offsets = [0, 96], sizes = [8, 32], strides = [1, 1]} : vector<8x128xf32> to vector<8x32xf32>
    %596 = vector.extract_strided_slice %587 {offsets = [0, 64], sizes = [8, 32], strides = [1, 1]} : vector<8x128xf32> to vector<8x32xf32>
    %597 = math.tanh %596 : vector<8x32xf32>
    %598 = arith.mulf %594, %554 : vector<8x32xf32>
    %599 = arith.mulf %593, %597 : vector<8x32xf32>
    %600 = arith.addf %598, %599 : vector<8x32xf32>
    %601 = math.tanh %600 : vector<8x32xf32>
    %602 = arith.mulf %595, %601 : vector<8x32xf32>
    %c40_166 = arith.constant 40 : index
    %c0_167 = arith.constant 0 : index
    %603 = vector.load %arg21[%c40_166, %c0_167] : memref<64x32xf32, #tpu.memory_space<vmem>>, vector<8x32xf32>
    tpu.vector_store %arg21[%c40_166, %c0_167], %602 {strides = array<i32>} : memref<64x32xf32, #tpu.memory_space<vmem>>, vector<8x32xf32>,
    %c5 = arith.constant 5 : index
    %604 = memref.load %arg0[%c5] : memref<8xi32, #tpu.memory_space<smem>>
    %c1_i32_168 = arith.constant 1 : i32
    %605 = arith.cmpi eq, %604, %c1_i32_168 : i32
    %606 = arith.extui %605 : i1 to i32
    %c0_i32_169 = arith.constant 0 : i32
    %607 = arith.cmpi ne, %606, %c0_i32_169 : i32
    scf.if %607 {
      %c48_199 = arith.constant 48 : index
      %c0_200 = arith.constant 0 : index
      %701 = vector.load %arg20[%c48_199, %c0_200] : memref<64x128xf32, #tpu.memory_space<vmem>>, vector<8x128xf32>
      %c0_201 = arith.constant 0 : index
      %c0_202 = arith.constant 0 : index
      %702 = vector.load %arg22[%c0_201, %c0_202] : memref<8x128xf32, #tpu.memory_space<vmem>>, vector<8x128xf32>
      tpu.vector_store %arg22[%c0_201, %c0_202], %701 {strides = array<i32>} : memref<8x128xf32, #tpu.memory_space<vmem>>, vector<8x128xf32>,
    } else {
    }
    %true_170 = arith.constant true
    %608 = arith.xori %605, %true_170 : i1
    %609 = arith.extui %608 : i1 to i32
    %c0_i32_171 = arith.constant 0 : i32
    %610 = arith.cmpi ne, %609, %c0_i32_171 : i32
    scf.if %610 {
      %cst_199 = arith.constant dense<0.000000e+00> : vector<8x128xf32>
      %701 = tpu.matmul %602, %330, %cst_199 {dimension_numbers = #tpu.dot_dimension_numbers<[1], [0], [0], [1], [0, 0, 1, 1], [], []>} : vector<8x32xf32>, vector<32x128xf32>, vector<8x128xf32> -> vector<8x128xf32>
      %702 = vector.broadcast %331 : vector<1x128xf32> to vector<8x128xf32>
      %703 = arith.addf %701, %702 : vector<8x128xf32>
      %cst_200 = arith.constant dense<0xFF800000> : vector<8xf32>
      %704 = vector.multi_reduction <maximumf>, %703, %cst_200 [1] : vector<8x128xf32> to vector<8xf32>
      %705 = vector.shape_cast %704 : vector<8xf32> to vector<8x1xf32>
      %706 = vector.broadcast %705 : vector<8x1xf32> to vector<8x128xf32>
      %707 = arith.cmpf oeq, %703, %706 : vector<8x128xf32>
      %c128_i32 = arith.constant 128 : i32
      %708 = vector.broadcast %c128_i32 : i32 to vector<8x128xi32>
      %709 = arith.select %707, %332, %708 : vector<8x128xi1>, vector<8x128xi32>
      %cst_201 = arith.constant dense<2147483647> : vector<8xi32>
      %710 = vector.multi_reduction <minsi>, %709, %cst_201 [1] : vector<8x128xi32> to vector<8xi32>
      %711 = vector.shape_cast %710 : vector<8xi32> to vector<8x1xi32>
      %712 = vector.broadcast %711 : vector<8x1xi32> to vector<8x128xi32>
      %713 = arith.cmpi eq, %332, %712 : vector<8x128xi32>
      %714 = arith.extui %713 : vector<8x128xi1> to vector<8x128xi32>
      %715 = arith.sitofp %714 : vector<8x128xi32> to vector<8x128xf32>
      %cst_202 = arith.constant dense<0.000000e+00> : vector<8x32xf32>
      %716 = tpu.matmul %715, %329, %cst_202 {dimension_numbers = #tpu.dot_dimension_numbers<[1], [0], [0], [1], [0, 0, 1, 1], [], []>} : vector<8x128xf32>, vector<128x32xf32>, vector<8x32xf32> -> vector<8x32xf32>
      %cst_203 = arith.constant dense<0.000000e+00> : vector<8x128xf32>
      %717 = tpu.matmul %716, %323, %cst_203 {dimension_numbers = #tpu.dot_dimension_numbers<[1], [0], [0], [1], [0, 0, 1, 1], [], []>} : vector<8x32xf32>, vector<32x128xf32>, vector<8x128xf32> -> vector<8x128xf32>
      %718 = vector.broadcast %325 : vector<1x128xf32> to vector<8x128xf32>
      %719 = arith.addf %717, %718 : vector<8x128xf32>
      %c0_204 = arith.constant 0 : index
      %c0_205 = arith.constant 0 : index
      %720 = vector.load %arg22[%c0_204, %c0_205] : memref<8x128xf32, #tpu.memory_space<vmem>>, vector<8x128xf32>
      tpu.vector_store %arg22[%c0_204, %c0_205], %719 {strides = array<i32>} : memref<8x128xf32, #tpu.memory_space<vmem>>, vector<8x128xf32>,
    } else {
    }
    %c0_172 = arith.constant 0 : index
    %c0_173 = arith.constant 0 : index
    %611 = vector.load %arg22[%c0_172, %c0_173] : memref<8x128xf32, #tpu.memory_space<vmem>>, vector<8x128xf32>
    %cst_174 = arith.constant dense<0.000000e+00> : vector<8x128xf32>
    %612 = tpu.matmul %582, %324, %cst_174 {dimension_numbers = #tpu.dot_dimension_numbers<[1], [0], [0], [1], [0, 0, 1, 1], [], []>} : vector<8x32xf32>, vector<32x128xf32>, vector<8x128xf32> -> vector<8x128xf32>
    %613 = arith.addf %611, %612 : vector<8x128xf32>
    %614 = arith.negf %613 : vector<8x128xf32>
    %615 = math.exp %614 : vector<8x128xf32>
    %cst_175 = arith.constant 1.000000e+00 : f32
    %616 = vector.broadcast %cst_175 : f32 to vector<8x128xf32>
    %617 = arith.addf %616, %615 : vector<8x128xf32>
    %618 = arith.divf %616, %617 : vector<8x128xf32>
    %619 = vector.extract_strided_slice %618 {offsets = [0, 0], sizes = [8, 32], strides = [1, 1]} : vector<8x128xf32> to vector<8x32xf32>
    %620 = vector.extract_strided_slice %618 {offsets = [0, 32], sizes = [8, 32], strides = [1, 1]} : vector<8x128xf32> to vector<8x32xf32>
    %621 = vector.extract_strided_slice %618 {offsets = [0, 96], sizes = [8, 32], strides = [1, 1]} : vector<8x128xf32> to vector<8x32xf32>
    %622 = vector.extract_strided_slice %613 {offsets = [0, 64], sizes = [8, 32], strides = [1, 1]} : vector<8x128xf32> to vector<8x32xf32>
    %623 = math.tanh %622 : vector<8x32xf32>
    %624 = arith.mulf %620, %580 : vector<8x32xf32>
    %625 = arith.mulf %619, %623 : vector<8x32xf32>
    %626 = arith.addf %624, %625 : vector<8x32xf32>
    %627 = math.tanh %626 : vector<8x32xf32>
    %628 = arith.mulf %621, %627 : vector<8x32xf32>
    %cst_176 = arith.constant dense<0.000000e+00> : vector<8x128xf32>
    %629 = tpu.matmul %628, %326, %cst_176 {dimension_numbers = #tpu.dot_dimension_numbers<[1], [0], [0], [1], [0, 0, 1, 1], [], []>} : vector<8x32xf32>, vector<32x128xf32>, vector<8x128xf32> -> vector<8x128xf32>
    %cst_177 = arith.constant dense<0.000000e+00> : vector<8x128xf32>
    %630 = tpu.matmul %602, %327, %cst_177 {dimension_numbers = #tpu.dot_dimension_numbers<[1], [0], [0], [1], [0, 0, 1, 1], [], []>} : vector<8x32xf32>, vector<32x128xf32>, vector<8x128xf32> -> vector<8x128xf32>
    %631 = arith.addf %629, %630 : vector<8x128xf32>
    %632 = vector.broadcast %328 : vector<1x128xf32> to vector<8x128xf32>
    %633 = arith.addf %631, %632 : vector<8x128xf32>
    %634 = arith.negf %633 : vector<8x128xf32>
    %635 = math.exp %634 : vector<8x128xf32>
    %cst_178 = arith.constant 1.000000e+00 : f32
    %636 = vector.broadcast %cst_178 : f32 to vector<8x128xf32>
    %637 = arith.addf %636, %635 : vector<8x128xf32>
    %638 = arith.divf %636, %637 : vector<8x128xf32>
    %639 = vector.extract_strided_slice %638 {offsets = [0, 0], sizes = [8, 32], strides = [1, 1]} : vector<8x128xf32> to vector<8x32xf32>
    %640 = vector.extract_strided_slice %638 {offsets = [0, 32], sizes = [8, 32], strides = [1, 1]} : vector<8x128xf32> to vector<8x32xf32>
    %641 = vector.extract_strided_slice %638 {offsets = [0, 96], sizes = [8, 32], strides = [1, 1]} : vector<8x128xf32> to vector<8x32xf32>
    %642 = vector.extract_strided_slice %633 {offsets = [0, 64], sizes = [8, 32], strides = [1, 1]} : vector<8x128xf32> to vector<8x32xf32>
    %643 = math.tanh %642 : vector<8x32xf32>
    %644 = arith.mulf %640, %600 : vector<8x32xf32>
    %645 = arith.mulf %639, %643 : vector<8x32xf32>
    %646 = arith.addf %644, %645 : vector<8x32xf32>
    %647 = math.tanh %646 : vector<8x32xf32>
    %648 = arith.mulf %641, %647 : vector<8x32xf32>
    %c48_179 = arith.constant 48 : index
    %c0_180 = arith.constant 0 : index
    %649 = vector.load %arg21[%c48_179, %c0_180] : memref<64x32xf32, #tpu.memory_space<vmem>>, vector<8x32xf32>
    tpu.vector_store %arg21[%c48_179, %c0_180], %648 {strides = array<i32>} : memref<64x32xf32, #tpu.memory_space<vmem>>, vector<8x32xf32>,
    %c6 = arith.constant 6 : index
    %650 = memref.load %arg0[%c6] : memref<8xi32, #tpu.memory_space<smem>>
    %c1_i32_181 = arith.constant 1 : i32
    %651 = arith.cmpi eq, %650, %c1_i32_181 : i32
    %652 = arith.extui %651 : i1 to i32
    %c0_i32_182 = arith.constant 0 : i32
    %653 = arith.cmpi ne, %652, %c0_i32_182 : i32
    scf.if %653 {
      %c56_199 = arith.constant 56 : index
      %c0_200 = arith.constant 0 : index
      %701 = vector.load %arg20[%c56_199, %c0_200] : memref<64x128xf32, #tpu.memory_space<vmem>>, vector<8x128xf32>
      %c0_201 = arith.constant 0 : index
      %c0_202 = arith.constant 0 : index
      %702 = vector.load %arg22[%c0_201, %c0_202] : memref<8x128xf32, #tpu.memory_space<vmem>>, vector<8x128xf32>
      tpu.vector_store %arg22[%c0_201, %c0_202], %701 {strides = array<i32>} : memref<8x128xf32, #tpu.memory_space<vmem>>, vector<8x128xf32>,
    } else {
    }
    %true_183 = arith.constant true
    %654 = arith.xori %651, %true_183 : i1
    %655 = arith.extui %654 : i1 to i32
    %c0_i32_184 = arith.constant 0 : i32
    %656 = arith.cmpi ne, %655, %c0_i32_184 : i32
    scf.if %656 {
      %cst_199 = arith.constant dense<0.000000e+00> : vector<8x128xf32>
      %701 = tpu.matmul %648, %330, %cst_199 {dimension_numbers = #tpu.dot_dimension_numbers<[1], [0], [0], [1], [0, 0, 1, 1], [], []>} : vector<8x32xf32>, vector<32x128xf32>, vector<8x128xf32> -> vector<8x128xf32>
      %702 = vector.broadcast %331 : vector<1x128xf32> to vector<8x128xf32>
      %703 = arith.addf %701, %702 : vector<8x128xf32>
      %cst_200 = arith.constant dense<0xFF800000> : vector<8xf32>
      %704 = vector.multi_reduction <maximumf>, %703, %cst_200 [1] : vector<8x128xf32> to vector<8xf32>
      %705 = vector.shape_cast %704 : vector<8xf32> to vector<8x1xf32>
      %706 = vector.broadcast %705 : vector<8x1xf32> to vector<8x128xf32>
      %707 = arith.cmpf oeq, %703, %706 : vector<8x128xf32>
      %c128_i32 = arith.constant 128 : i32
      %708 = vector.broadcast %c128_i32 : i32 to vector<8x128xi32>
      %709 = arith.select %707, %332, %708 : vector<8x128xi1>, vector<8x128xi32>
      %cst_201 = arith.constant dense<2147483647> : vector<8xi32>
      %710 = vector.multi_reduction <minsi>, %709, %cst_201 [1] : vector<8x128xi32> to vector<8xi32>
      %711 = vector.shape_cast %710 : vector<8xi32> to vector<8x1xi32>
      %712 = vector.broadcast %711 : vector<8x1xi32> to vector<8x128xi32>
      %713 = arith.cmpi eq, %332, %712 : vector<8x128xi32>
      %714 = arith.extui %713 : vector<8x128xi1> to vector<8x128xi32>
      %715 = arith.sitofp %714 : vector<8x128xi32> to vector<8x128xf32>
      %cst_202 = arith.constant dense<0.000000e+00> : vector<8x32xf32>
      %716 = tpu.matmul %715, %329, %cst_202 {dimension_numbers = #tpu.dot_dimension_numbers<[1], [0], [0], [1], [0, 0, 1, 1], [], []>} : vector<8x128xf32>, vector<128x32xf32>, vector<8x32xf32> -> vector<8x32xf32>
      %cst_203 = arith.constant dense<0.000000e+00> : vector<8x128xf32>
      %717 = tpu.matmul %716, %323, %cst_203 {dimension_numbers = #tpu.dot_dimension_numbers<[1], [0], [0], [1], [0, 0, 1, 1], [], []>} : vector<8x32xf32>, vector<32x128xf32>, vector<8x128xf32> -> vector<8x128xf32>
      %718 = vector.broadcast %325 : vector<1x128xf32> to vector<8x128xf32>
      %719 = arith.addf %717, %718 : vector<8x128xf32>
      %c0_204 = arith.constant 0 : index
      %c0_205 = arith.constant 0 : index
      %720 = vector.load %arg22[%c0_204, %c0_205] : memref<8x128xf32, #tpu.memory_space<vmem>>, vector<8x128xf32>
      tpu.vector_store %arg22[%c0_204, %c0_205], %719 {strides = array<i32>} : memref<8x128xf32, #tpu.memory_space<vmem>>, vector<8x128xf32>,
    } else {
    }
    %c0_185 = arith.constant 0 : index
    %c0_186 = arith.constant 0 : index
    %657 = vector.load %arg22[%c0_185, %c0_186] : memref<8x128xf32, #tpu.memory_space<vmem>>, vector<8x128xf32>
    %cst_187 = arith.constant dense<0.000000e+00> : vector<8x128xf32>
    %658 = tpu.matmul %628, %324, %cst_187 {dimension_numbers = #tpu.dot_dimension_numbers<[1], [0], [0], [1], [0, 0, 1, 1], [], []>} : vector<8x32xf32>, vector<32x128xf32>, vector<8x128xf32> -> vector<8x128xf32>
    %659 = arith.addf %657, %658 : vector<8x128xf32>
    %660 = arith.negf %659 : vector<8x128xf32>
    %661 = math.exp %660 : vector<8x128xf32>
    %cst_188 = arith.constant 1.000000e+00 : f32
    %662 = vector.broadcast %cst_188 : f32 to vector<8x128xf32>
    %663 = arith.addf %662, %661 : vector<8x128xf32>
    %664 = arith.divf %662, %663 : vector<8x128xf32>
    %665 = vector.extract_strided_slice %664 {offsets = [0, 0], sizes = [8, 32], strides = [1, 1]} : vector<8x128xf32> to vector<8x32xf32>
    %666 = vector.extract_strided_slice %664 {offsets = [0, 32], sizes = [8, 32], strides = [1, 1]} : vector<8x128xf32> to vector<8x32xf32>
    %667 = vector.extract_strided_slice %664 {offsets = [0, 96], sizes = [8, 32], strides = [1, 1]} : vector<8x128xf32> to vector<8x32xf32>
    %668 = vector.extract_strided_slice %659 {offsets = [0, 64], sizes = [8, 32], strides = [1, 1]} : vector<8x128xf32> to vector<8x32xf32>
    %669 = math.tanh %668 : vector<8x32xf32>
    %670 = arith.mulf %666, %626 : vector<8x32xf32>
    %671 = arith.mulf %665, %669 : vector<8x32xf32>
    %672 = arith.addf %670, %671 : vector<8x32xf32>
    %673 = math.tanh %672 : vector<8x32xf32>
    %674 = arith.mulf %667, %673 : vector<8x32xf32>
    %cst_189 = arith.constant dense<0.000000e+00> : vector<8x128xf32>
    %675 = tpu.matmul %674, %326, %cst_189 {dimension_numbers = #tpu.dot_dimension_numbers<[1], [0], [0], [1], [0, 0, 1, 1], [], []>} : vector<8x32xf32>, vector<32x128xf32>, vector<8x128xf32> -> vector<8x128xf32>
    %cst_190 = arith.constant dense<0.000000e+00> : vector<8x128xf32>
    %676 = tpu.matmul %648, %327, %cst_190 {dimension_numbers = #tpu.dot_dimension_numbers<[1], [0], [0], [1], [0, 0, 1, 1], [], []>} : vector<8x32xf32>, vector<32x128xf32>, vector<8x128xf32> -> vector<8x128xf32>
    %677 = arith.addf %675, %676 : vector<8x128xf32>
    %678 = vector.broadcast %328 : vector<1x128xf32> to vector<8x128xf32>
    %679 = arith.addf %677, %678 : vector<8x128xf32>
    %680 = arith.negf %679 : vector<8x128xf32>
    %681 = math.exp %680 : vector<8x128xf32>
    %cst_191 = arith.constant 1.000000e+00 : f32
    %682 = vector.broadcast %cst_191 : f32 to vector<8x128xf32>
    %683 = arith.addf %682, %681 : vector<8x128xf32>
    %684 = arith.divf %682, %683 : vector<8x128xf32>
    %685 = vector.extract_strided_slice %684 {offsets = [0, 0], sizes = [8, 32], strides = [1, 1]} : vector<8x128xf32> to vector<8x32xf32>
    %686 = vector.extract_strided_slice %684 {offsets = [0, 32], sizes = [8, 32], strides = [1, 1]} : vector<8x128xf32> to vector<8x32xf32>
    %687 = vector.extract_strided_slice %684 {offsets = [0, 96], sizes = [8, 32], strides = [1, 1]} : vector<8x128xf32> to vector<8x32xf32>
    %688 = vector.extract_strided_slice %679 {offsets = [0, 64], sizes = [8, 32], strides = [1, 1]} : vector<8x128xf32> to vector<8x32xf32>
    %689 = math.tanh %688 : vector<8x32xf32>
    %690 = arith.mulf %686, %646 : vector<8x32xf32>
    %691 = arith.mulf %685, %689 : vector<8x32xf32>
    %692 = arith.addf %690, %691 : vector<8x32xf32>
    %693 = math.tanh %692 : vector<8x32xf32>
    %694 = arith.mulf %687, %693 : vector<8x32xf32>
    %c56_192 = arith.constant 56 : index
    %c0_193 = arith.constant 0 : index
    %695 = vector.load %arg21[%c56_192, %c0_193] : memref<64x32xf32, #tpu.memory_space<vmem>>, vector<8x32xf32>
    tpu.vector_store %arg21[%c56_192, %c0_193], %694 {strides = array<i32>} : memref<64x32xf32, #tpu.memory_space<vmem>>, vector<8x32xf32>,
    %c0_194 = arith.constant 0 : index
    %c0_195 = arith.constant 0 : index
    %696 = vector.load %arg21[%c0_194, %c0_195] : memref<64x32xf32, #tpu.memory_space<vmem>>, vector<64x32xf32>
    %cst_196 = arith.constant dense<0.000000e+00> : vector<64x128xf32>
    %697 = tpu.matmul %696, %330, %cst_196 {dimension_numbers = #tpu.dot_dimension_numbers<[1], [0], [0], [1], [0, 0, 1, 1], [], []>} : vector<64x32xf32>, vector<32x128xf32>, vector<64x128xf32> -> vector<64x128xf32>
    %698 = vector.broadcast %331 : vector<1x128xf32> to vector<64x128xf32>
    %699 = arith.addf %697, %698 : vector<64x128xf32>
    %c0_197 = arith.constant 0 : index
    %c0_198 = arith.constant 0 : index
    %700 = vector.load %arg18[%c0_197, %c0_198] : memref<64x128xf32, #tpu.memory_space<vmem>>, vector<64x128xf32>
    tpu.vector_store %arg18[%c0_197, %c0_198], %699 {strides = array<i32>} : memref<64x128xf32, #tpu.memory_space<vmem>>, vector<64x128xf32>,
    return
  }
}

</mosaic_0001>

<llo_original>
// kernel: _seq2seq_jit.1
$region0: #{_seq2seq_jit.1}
  #allocation0 [shape = 'u32[]', space=smem, size = 0x4, offset = 0x4, fixed_abs, tag = 'smem constant byte address 0x4 - core index']
  #allocation1 [shape = 'u32[144,128]{1,0:T(1,128)}', space=vmem, size = 0x12000, scoped, tag = 'internal scratch']
  #allocation2 [shape = 'f32[64,128]{1,0:T(8,128)}', space=vmem, size = 0x8000, scoped, tag = 'scratch operand']
  #allocation3 [shape = 'f32[64,128]{1,0:T(8,128)}', space=vmem, size = 0x8000, scoped, tag = 'scratch operand']
  #allocation4 [shape = 'f32[64,32]{1,0:T(8,128)}', space=vmem, size = 0x8000, scoped, tag = 'scratch operand']
  #allocation5 [shape = 'f32[8,128]{1,0:T(8,128)}', space=vmem, size = 0x1000, scoped, tag = 'scratch operand']
  %s0 = inlined_call_operand.vmem [shape: s32[8], index: 0, kind: input, shape index: {}]
  %s1 = inlined_call_operand.vmem [shape: f32[64,32], index: 1, kind: input, shape index: {}]
  %s2 = inlined_call_operand.vmem [shape: f32[64,32], index: 2, kind: input, shape index: {}]
  %s3 = inlined_call_operand.vmem [shape: f32[32,128], index: 3, kind: input, shape index: {}]
  %s4 = inlined_call_operand.vmem [shape: f32[32,128], index: 4, kind: input, shape index: {}]
  %s5 = inlined_call_operand.vmem [shape: f32[1,128], index: 5, kind: input, shape index: {}]
  %s6 = inlined_call_operand.vmem [shape: f32[32,128], index: 6, kind: input, shape index: {}]
  %s7 = inlined_call_operand.vmem [shape: f32[32,128], index: 7, kind: input, shape index: {}]
  %s8 = inlined_call_operand.vmem [shape: f32[1,128], index: 8, kind: input, shape index: {}]
  %s9 = inlined_call_operand.vmem [shape: f32[32,128], index: 9, kind: input, shape index: {}]
  %s10 = inlined_call_operand.vmem [shape: f32[32,128], index: 10, kind: input, shape index: {}]
  %s11 = inlined_call_operand.vmem [shape: f32[1,128], index: 11, kind: input, shape index: {}]
  %s12 = inlined_call_operand.vmem [shape: f32[32,128], index: 12, kind: input, shape index: {}]
  %s13 = inlined_call_operand.vmem [shape: f32[32,128], index: 13, kind: input, shape index: {}]
  %s14 = inlined_call_operand.vmem [shape: f32[1,128], index: 14, kind: input, shape index: {}]
  %s15 = inlined_call_operand.vmem [shape: f32[128,32], index: 15, kind: input, shape index: {}]
  %s16 = inlined_call_operand.vmem [shape: f32[32,128], index: 16, kind: input, shape index: {}]
  %s17 = inlined_call_operand.vmem [shape: f32[1,128], index: 17, kind: input, shape index: {}]
  %s18 = inlined_call_operand.vmem [shape: f32[64,128], index: 18, kind: output, shape index: {}]
  %s19 = sld [smem:[#allocation0]]
  $region142: #{_seq2seq_jit.1} parent=0
    _
  %s21 = ssub.s32 1, %s19
  %s22 = scalar_select 0, %s21, %s19
  $region1: #{_seq2seq_jit.1} parent=0
    #allocation6 [shape = 'u8[512]{0}', space=smem, size = 0x200, scoped, tag = 'input window, operand 0, single buffered']
    #allocation7 [shape = 's32[1]{0}', space=sflag, size = 0x4, scoped, tag = 'scoped memory for _seq2seq_jit.1']
    %23 = vsyncpa [#allocation7], 0
    // Predicated region
    $region2: #{_seq2seq_jit.1} parent=1 // pred_check
      _
    $region3: #{_seq2seq_jit.1} parent=1 // pred_check_branch
      %25 = sbr.rel (0) target = $region5
    $region4: #{_seq2seq_jit.1} parent=1 // pred_region
      %s27 = ssub.s32 16, 16
      %28 = vsyncadd [#allocation7], %s27
      %s30 = sshll.u32 %s0, 4
      %s31 = int_to_ptr.vmem [resolvable:$true] %s30
      %33 = dma.vmem_to_smem %s31, 16, [#allocation6], [#allocation7]
    $region5: #{_seq2seq_jit.1} parent=1 // pred_fallthru
      _
    // Predicated region
    $region6: #{_seq2seq_jit.1} parent=1 // pred_check
      _
    $region7: #{_seq2seq_jit.1} parent=1 // pred_check_branch
      %35 = sbr.rel (0) target = $region9
    $region8: #{_seq2seq_jit.1} parent=1 // pred_region
      _
    $region9: #{_seq2seq_jit.1} parent=1 // pred_fallthru
      _
    // Predicated region
    $region10: #{_seq2seq_jit.1} parent=1 // pred_check
      _
    $region11: #{_seq2seq_jit.1} parent=1 // pred_check_branch
      %37 = sbr.rel (0) target = $region13
    $region12: #{_seq2seq_jit.1} parent=1 // pred_region
      _
    $region13: #{_seq2seq_jit.1} parent=1 // pred_fallthru
      _
    // Predicated region
    $region14: #{_seq2seq_jit.1} parent=1 // pred_check
      _
    $region15: #{_seq2seq_jit.1} parent=1 // pred_check_branch
      %39 = sbr.rel (0) target = $region17
    $region16: #{_seq2seq_jit.1} parent=1 // pred_region
      _
    $region17: #{_seq2seq_jit.1} parent=1 // pred_fallthru
      _
    // Predicated region
    $region18: #{_seq2seq_jit.1} parent=1 // pred_check
      _
    $region19: #{_seq2seq_jit.1} parent=1 // pred_check_branch
      %41 = sbr.rel (0) target = $region21
    $region20: #{_seq2seq_jit.1} parent=1 // pred_region
      _
    $region21: #{_seq2seq_jit.1} parent=1 // pred_fallthru
      _
    // Predicated region
    $region22: #{_seq2seq_jit.1} parent=1 // pred_check
      _
    $region23: #{_seq2seq_jit.1} parent=1 // pred_check_branch
      %43 = sbr.rel (0) target = $region25
    $region24: #{_seq2seq_jit.1} parent=1 // pred_region
      _
    $region25: #{_seq2seq_jit.1} parent=1 // pred_fallthru
      _
    // Predicated region
    $region26: #{_seq2seq_jit.1} parent=1 // pred_check
      _
    $region27: #{_seq2seq_jit.1} parent=1 // pred_check_branch
      %45 = sbr.rel (0) target = $region29
    $region28: #{_seq2seq_jit.1} parent=1 // pred_region
      _
    $region29: #{_seq2seq_jit.1} parent=1 // pred_fallthru
      _
    // Predicated region
    $region30: #{_seq2seq_jit.1} parent=1 // pred_check
      _
    $region31: #{_seq2seq_jit.1} parent=1 // pred_check_branch
      %47 = sbr.rel (0) target = $region33
    $region32: #{_seq2seq_jit.1} parent=1 // pred_region
      _
    $region33: #{_seq2seq_jit.1} parent=1 // pred_fallthru
      _
    // Predicated region
    $region34: #{_seq2seq_jit.1} parent=1 // pred_check
      _
    $region35: #{_seq2seq_jit.1} parent=1 // pred_check_branch
      %49 = sbr.rel (0) target = $region37
    $region36: #{_seq2seq_jit.1} parent=1 // pred_region
      _
    $region37: #{_seq2seq_jit.1} parent=1 // pred_fallthru
      _
    // Predicated region
    $region38: #{_seq2seq_jit.1} parent=1 // pred_check
      _
    $region39: #{_seq2seq_jit.1} parent=1 // pred_check_branch
      %51 = sbr.rel (0) target = $region41
    $region40: #{_seq2seq_jit.1} parent=1 // pred_region
      _
    $region41: #{_seq2seq_jit.1} parent=1 // pred_fallthru
      _
    // Predicated region
    $region42: #{_seq2seq_jit.1} parent=1 // pred_check
      _
    $region43: #{_seq2seq_jit.1} parent=1 // pred_check_branch
      %53 = sbr.rel (0) target = $region45
    $region44: #{_seq2seq_jit.1} parent=1 // pred_region
      _
    $region45: #{_seq2seq_jit.1} parent=1 // pred_fallthru
      _
    // Predicated region
    $region46: #{_seq2seq_jit.1} parent=1 // pred_check
      _
    $region47: #{_seq2seq_jit.1} parent=1 // pred_check_branch
      %55 = sbr.rel (0) target = $region49
    $region48: #{_seq2seq_jit.1} parent=1 // pred_region
      _
    $region49: #{_seq2seq_jit.1} parent=1 // pred_fallthru
      _
    // Predicated region
    $region50: #{_seq2seq_jit.1} parent=1 // pred_check
      _
    $region51: #{_seq2seq_jit.1} parent=1 // pred_check_branch
      %57 = sbr.rel (0) target = $region53
    $region52: #{_seq2seq_jit.1} parent=1 // pred_region
      _
    $region53: #{_seq2seq_jit.1} parent=1 // pred_fallthru
      _
    // Predicated region
    $region54: #{_seq2seq_jit.1} parent=1 // pred_check
      _
    $region55: #{_seq2seq_jit.1} parent=1 // pred_check_branch
      %59 = sbr.rel (0) target = $region57
    $region56: #{_seq2seq_jit.1} parent=1 // pred_region
      _
    $region57: #{_seq2seq_jit.1} parent=1 // pred_fallthru
      _
    // Predicated region
    $region58: #{_seq2seq_jit.1} parent=1 // pred_check
      _
    $region59: #{_seq2seq_jit.1} parent=1 // pred_check_branch
      %61 = sbr.rel (0) target = $region61
    $region60: #{_seq2seq_jit.1} parent=1 // pred_region
      _
    $region61: #{_seq2seq_jit.1} parent=1 // pred_fallthru
      _
    // Predicated region
    $region62: #{_seq2seq_jit.1} parent=1 // pred_check
      _
    $region63: #{_seq2seq_jit.1} parent=1 // pred_check_branch
      %63 = sbr.rel (0) target = $region65
    $region64: #{_seq2seq_jit.1} parent=1 // pred_region
      _
    $region65: #{_seq2seq_jit.1} parent=1 // pred_fallthru
      _
    // Predicated region
    $region66: #{_seq2seq_jit.1} parent=1 // pred_check
      _
    $region67: #{_seq2seq_jit.1} parent=1 // pred_check_branch
      %65 = sbr.rel (0) target = $region69
    $region68: #{_seq2seq_jit.1} parent=1 // pred_region
      _
    $region69: #{_seq2seq_jit.1} parent=1 // pred_fallthru
      _
    // Predicated region
    $region70: #{_seq2seq_jit.1} parent=1 // pred_check
      _
    $region71: #{_seq2seq_jit.1} parent=1 // pred_check_branch
      %67 = sbr.rel (0) target = $region73
    $region72: #{_seq2seq_jit.1} parent=1 // pred_region
      _
    $region73: #{_seq2seq_jit.1} parent=1 // pred_fallthru
      _
    // Predicated region
    $region74: #{_seq2seq_jit.1} parent=1 // pred_check
      _
    $region75: #{_seq2seq_jit.1} parent=1 // pred_check_branch
      %69 = sbr.rel (0) target = $region77
    $region76: #{_seq2seq_jit.1} parent=1 // pred_region
      %70 = dma.done [#allocation7], 16
    $region77: #{_seq2seq_jit.1} parent=1 // pred_fallthru
      _
    %71 = sfence
    %v72 = vld [vmem:[%s1] sm:$0xff]
    %v73 = vld [vmem:[%s1 + $0x8] sm:$0xff]
    %v74 = vld [vmem:[%s1 + $0x10] sm:$0xff]
    %v75 = vld [vmem:[%s1 + $0x18] sm:$0xff]
    %v76 = vld [vmem:[%s1 + $0x20] sm:$0xff]
    %v77 = vld [vmem:[%s1 + $0x28] sm:$0xff]
    %v78 = vld [vmem:[%s1 + $0x30] sm:$0xff]
    %v79 = vld [vmem:[%s1 + $0x38] sm:$0xff]
    %v80 = vld [vmem:[%s3] sm:$0xff]
    %v81 = vld [vmem:[%s3 + $0x8] sm:$0xff]
    %v82 = vld [vmem:[%s3 + $0x10] sm:$0xff]
    %v83 = vld [vmem:[%s3 + $0x18] sm:$0xff]
    %v84 = vld [vmem:[%s5] sm:$0x1]
    %v86 = vlaneseq
    %v87 = vshrl.u32 %v86, 7
    %v88 = vsub.s32 0, %v87
    %v89 = vrot.slane %v84, %v88
    %vm91 = vcmask 261120
    %v93 = vsel %vm91, %v72, 0
    %v96 = vsel %vm91, %v73, 0
    %v99 = vsel %vm91, %v74, 0
    %v102 = vsel %vm91, %v75, 0
    %v105 = vsel %vm91, %v76, 0
    %v108 = vsel %vm91, %v77, 0
    %v111 = vsel %vm91, %v78, 0
    %v114 = vsel %vm91, %v79, 0
    %116 = vmatprep.subr.mxu0 0.0
    %117 = vmatpush1.msra.mxu0 0.0
    %118 = vmatprep.subr.mxu0 0.0
    %119 = vmatpush1.msra.mxu0 0.0
    %120 = vmatprep.subr.mxu0 0.0
    %121 = vmatpush1.msra.mxu0 0.0
    %122 = vmatprep.subr.mxu0 0.0
    %123 = vmatpush1.msra.mxu0 0.0
    %124 = vmatprep.subr.mxu0 0.0
    %125 = vmatpush1.msra.mxu0 0.0
    %126 = vmatprep.subr.mxu0 0.0
    %127 = vmatpush1.msra.mxu0 0.0
    %128 = vmatprep.subr.mxu0 0.0
    %129 = vmatpush1.msra.mxu0 0.0
    %130 = vmatprep.subr.mxu0 0.0
    %131 = vmatpush1.msra.mxu0 0.0
    %132 = vmatprep.subr.mxu0 0.0
    %133 = vmatpush1.msra.mxu0 0.0
    %134 = vmatprep.subr.mxu0 0.0
    %135 = vmatpush1.msra.mxu0 0.0
    %136 = vmatprep.subr.mxu0 0.0
    %137 = vmatpush1.msra.mxu0 0.0
    %138 = vmatprep.subr.mxu0 0.0
    %139 = vmatpush1.msra.mxu0 0.0
    %140 = vmatprep.subr.mxu0 0.0
    %141 = vmatpush1.msra.mxu0 %v83
    %142 = vmatprep.subr.mxu0 0.0
    %143 = vmatpush1.msra.mxu0 %v82
    %144 = vmatprep.subr.mxu0 0.0
    %145 = vmatpush1.msra.mxu0 %v81
    %146 = vmatprep.subr.mxu0 0.0
    %147 = vmatpush1.msra.mxu0 %v80
    %148 = vmatprep.subr.mxu0 0.0
    %149 = vmatpush2.msra.mxu0 0.0
    %150 = vmatprep.subr.mxu0 0.0
    %151 = vmatpush2.msra.mxu0 0.0
    %152 = vmatprep.subr.mxu0 0.0
    %153 = vmatpush2.msra.mxu0 0.0
    %154 = vmatprep.subr.mxu0 0.0
    %155 = vmatpush2.msra.mxu0 0.0
    %156 = vmatprep.subr.mxu0 0.0
    %157 = vmatpush2.msra.mxu0 0.0
    %158 = vmatprep.subr.mxu0 0.0
    %159 = vmatpush2.msra.mxu0 0.0
    %160 = vmatprep.subr.mxu0 0.0
    %161 = vmatpush2.msra.mxu0 0.0
    %162 = vmatprep.subr.mxu0 0.0
    %163 = vmatpush2.msra.mxu0 0.0
    %164 = vmatprep.subr.mxu0 0.0
    %165 = vmatpush2.msra.mxu0 0.0
    %166 = vmatprep.subr.mxu0 0.0
    %167 = vmatpush2.msra.mxu0 0.0
    %168 = vmatprep.subr.mxu0 0.0
    %169 = vmatpush2.msra.mxu0 0.0
    %170 = vmatprep.subr.mxu0 0.0
    %171 = vmatpush2.msra.mxu0 0.0
    %172 = vmatprep.subr.mxu0 0.0
    %173 = vmatpush2.msra.mxu0 0.0
    %174 = vmatprep.subr.mxu0 0.0
    %175 = vmatpush2.msra.mxu0 0.0
    %176 = vmatprep.subr.mxu0 0.0
    %177 = vmatpush2.msra.mxu0 0.0
    %178 = vmatprep.subr.mxu0 0.0
    %179 = vmatpush2.msra.mxu0 0.0
    %180 = vmatprep.mubr.f32.mxu0 0.0
    %181 = vmatmul.mubr.f32.gmra.mxu0 %v93
    %v182 = vpop.f32.mrf.mxu0
    %v183 = vadd.f32 %v89, %v182
    %v184 = vpop.f32.mrf.mxu0
    %185 = vmatprep.mubr.f32.mxu0 0.0
    %186 = vmatmul.mubr.f32.gmra.mxu0 %v96
    %v187 = vpop.f32.mrf.mxu0
    %v188 = vadd.f32 %v89, %v187
    %v189 = vpop.f32.mrf.mxu0
    %190 = vmatprep.mubr.f32.mxu0 0.0
    %191 = vmatmul.mubr.f32.gmra.mxu0 %v99
    %v192 = vpop.f32.mrf.mxu0
    %v193 = vadd.f32 %v89, %v192
    %v194 = vpop.f32.mrf.mxu0
    %195 = vmatprep.mubr.f32.mxu0 0.0
    %196 = vmatmul.mubr.f32.gmra.mxu0 %v102
    %v197 = vpop.f32.mrf.mxu0
    %v198 = vadd.f32 %v89, %v197
    %v199 = vpop.f32.mrf.mxu0
    %200 = vmatprep.mubr.f32.mxu0 0.0
    %201 = vmatmul.mubr.f32.gmra.mxu0 %v105
    %v202 = vpop.f32.mrf.mxu0
    %v203 = vadd.f32 %v89, %v202
    %v204 = vpop.f32.mrf.mxu0
    %205 = vmatprep.mubr.f32.mxu0 0.0
    %206 = vmatmul.mubr.f32.gmra.mxu0 %v108
    %v207 = vpop.f32.mrf.mxu0
    %v208 = vadd.f32 %v89, %v207
    %v209 = vpop.f32.mrf.mxu0
    %210 = vmatprep.mubr.f32.mxu0 0.0
    %211 = vmatmul.mubr.f32.gmra.mxu0 %v111
    %v212 = vpop.f32.mrf.mxu0
    %v213 = vadd.f32 %v89, %v212
    %v214 = vpop.f32.mrf.mxu0
    %215 = vmatprep.mubr.f32.mxu0 0.0
    %216 = vmatmul.mubr.f32.gmra.mxu0 %v114
    %v217 = vpop.f32.mrf.mxu0
    %v218 = vadd.f32 %v89, %v217
    %v219 = vpop.f32.mrf.mxu0
    %220 = vdwg.mxu0
    %221 = vst [vmem:[#allocation2] sm:$0xff] %v183
    %222 = vst [vmem:[#allocation2 + $0x8] sm:$0xff] %v188
    %223 = vst [vmem:[#allocation2 + $0x10] sm:$0xff] %v193
    %224 = vst [vmem:[#allocation2 + $0x18] sm:$0xff] %v198
    %225 = vst [vmem:[#allocation2 + $0x20] sm:$0xff] %v203
    %226 = vst [vmem:[#allocation2 + $0x28] sm:$0xff] %v208
    %227 = vst [vmem:[#allocation2 + $0x30] sm:$0xff] %v213
    %228 = vst [vmem:[#allocation2 + $0x38] sm:$0xff] %v218
    %v229 = vld [vmem:[%s2] sm:$0xff]
    %v230 = vld [vmem:[%s2 + $0x8] sm:$0xff]
    %v231 = vld [vmem:[%s2 + $0x10] sm:$0xff]
    %v232 = vld [vmem:[%s2 + $0x18] sm:$0xff]
    %v233 = vld [vmem:[%s2 + $0x20] sm:$0xff]
    %v234 = vld [vmem:[%s2 + $0x28] sm:$0xff]
    %v235 = vld [vmem:[%s2 + $0x30] sm:$0xff]
    %v236 = vld [vmem:[%s2 + $0x38] sm:$0xff]
    %v237 = vld [vmem:[%s9] sm:$0xff]
    %v238 = vld [vmem:[%s9 + $0x8] sm:$0xff]
    %v239 = vld [vmem:[%s9 + $0x10] sm:$0xff]
    %v240 = vld [vmem:[%s9 + $0x18] sm:$0xff]
    %v241 = vld [vmem:[%s11] sm:$0x1]
    %v243 = vlaneseq
    %v244 = vshrl.u32 %v243, 7
    %v245 = vsub.s32 0, %v244
    %v246 = vrot.slane %v241, %v245
    %v249 = vsel %vm91, %v229, 0
    %v252 = vsel %vm91, %v230, 0
    %v255 = vsel %vm91, %v231, 0
    %v258 = vsel %vm91, %v232, 0
    %v261 = vsel %vm91, %v233, 0
    %v264 = vsel %vm91, %v234, 0
    %v267 = vsel %vm91, %v235, 0
    %v270 = vsel %vm91, %v236, 0
    %272 = vmatprep.subr.mxu0 0.0
    %273 = vmatpush1.msra.mxu0 0.0
    %274 = vmatprep.subr.mxu0 0.0
    %275 = vmatpush1.msra.mxu0 0.0
    %276 = vmatprep.subr.mxu0 0.0
    %277 = vmatpush1.msra.mxu0 0.0
    %278 = vmatprep.subr.mxu0 0.0
    %279 = vmatpush1.msra.mxu0 0.0
    %280 = vmatprep.subr.mxu0 0.0
    %281 = vmatpush1.msra.mxu0 0.0
    %282 = vmatprep.subr.mxu0 0.0
    %283 = vmatpush1.msra.mxu0 0.0
    %284 = vmatprep.subr.mxu0 0.0
    %285 = vmatpush1.msra.mxu0 0.0
    %286 = vmatprep.subr.mxu0 0.0
    %287 = vmatpush1.msra.mxu0 0.0
    %288 = vmatprep.subr.mxu0 0.0
    %289 = vmatpush1.msra.mxu0 0.0
    %290 = vmatprep.subr.mxu0 0.0
    %291 = vmatpush1.msra.mxu0 0.0
    %292 = vmatprep.subr.mxu0 0.0
    %293 = vmatpush1.msra.mxu0 0.0
    %294 = vmatprep.subr.mxu0 0.0
    %295 = vmatpush1.msra.mxu0 0.0
    %296 = vmatprep.subr.mxu0 0.0
    %297 = vmatpush1.msra.mxu0 %v240
    %298 = vmatprep.subr.mxu0 0.0
    %299 = vmatpush1.msra.mxu0 %v239
    %300 = vmatprep.subr.mxu0 0.0
    %301 = vmatpush1.msra.mxu0 %v238
    %302 = vmatprep.subr.mxu0 0.0
    %303 = vmatpush1.msra.mxu0 %v237
    %304 = vmatprep.subr.mxu0 0.0
    %305 = vmatpush2.msra.mxu0 0.0
    %306 = vmatprep.subr.mxu0 0.0
    %307 = vmatpush2.msra.mxu0 0.0
    %308 = vmatprep.subr.mxu0 0.0
    %309 = vmatpush2.msra.mxu0 0.0
    %310 = vmatprep.subr.mxu0 0.0
    %311 = vmatpush2.msra.mxu0 0.0
    %312 = vmatprep.subr.mxu0 0.0
    %313 = vmatpush2.msra.mxu0 0.0
    %314 = vmatprep.subr.mxu0 0.0
    %315 = vmatpush2.msra.mxu0 0.0
    %316 = vmatprep.subr.mxu0 0.0
    %317 = vmatpush2.msra.mxu0 0.0
    %318 = vmatprep.subr.mxu0 0.0
    %319 = vmatpush2.msra.mxu0 0.0
    %320 = vmatprep.subr.mxu0 0.0
    %321 = vmatpush2.msra.mxu0 0.0
    %322 = vmatprep.subr.mxu0 0.0
    %323 = vmatpush2.msra.mxu0 0.0
    %324 = vmatprep.subr.mxu0 0.0
    %325 = vmatpush2.msra.mxu0 0.0
    %326 = vmatprep.subr.mxu0 0.0
    %327 = vmatpush2.msra.mxu0 0.0
    %328 = vmatprep.subr.mxu0 0.0
    %329 = vmatpush2.msra.mxu0 0.0
    %330 = vmatprep.subr.mxu0 0.0
    %331 = vmatpush2.msra.mxu0 0.0
    %332 = vmatprep.subr.mxu0 0.0
    %333 = vmatpush2.msra.mxu0 0.0
    %334 = vmatprep.subr.mxu0 0.0
    %335 = vmatpush2.msra.mxu0 0.0
    %336 = vmatprep.mubr.f32.mxu0 0.0
    %337 = vmatmul.mubr.f32.gmra.mxu0 %v249
    %v338 = vpop.f32.mrf.mxu0
    %v339 = vadd.f32 %v246, %v338
    %v340 = vpop.f32.mrf.mxu0
    %341 = vmatprep.mubr.f32.mxu0 0.0
    %342 = vmatmul.mubr.f32.gmra.mxu0 %v252
    %v343 = vpop.f32.mrf.mxu0
    %v344 = vadd.f32 %v246, %v343
    %v345 = vpop.f32.mrf.mxu0
    %346 = vmatprep.mubr.f32.mxu0 0.0
    %347 = vmatmul.mubr.f32.gmra.mxu0 %v255
    %v348 = vpop.f32.mrf.mxu0
    %v349 = vadd.f32 %v246, %v348
    %v350 = vpop.f32.mrf.mxu0
    %351 = vmatprep.mubr.f32.mxu0 0.0
    %352 = vmatmul.mubr.f32.gmra.mxu0 %v258
    %v353 = vpop.f32.mrf.mxu0
    %v354 = vadd.f32 %v246, %v353
    %v355 = vpop.f32.mrf.mxu0
    %356 = vmatprep.mubr.f32.mxu0 0.0
    %357 = vmatmul.mubr.f32.gmra.mxu0 %v261
    %v358 = vpop.f32.mrf.mxu0
    %v359 = vadd.f32 %v246, %v358
    %v360 = vpop.f32.mrf.mxu0
    %361 = vmatprep.mubr.f32.mxu0 0.0
    %362 = vmatmul.mubr.f32.gmra.mxu0 %v264
    %v363 = vpop.f32.mrf.mxu0
    %v364 = vadd.f32 %v246, %v363
    %v365 = vpop.f32.mrf.mxu0
    %366 = vmatprep.mubr.f32.mxu0 0.0
    %367 = vmatmul.mubr.f32.gmra.mxu0 %v267
    %v368 = vpop.f32.mrf.mxu0
    %v369 = vadd.f32 %v246, %v368
    %v370 = vpop.f32.mrf.mxu0
    %371 = vmatprep.mubr.f32.mxu0 0.0
    %372 = vmatmul.mubr.f32.gmra.mxu0 %v270
    %v373 = vpop.f32.mrf.mxu0
    %v374 = vadd.f32 %v246, %v373
    %v375 = vpop.f32.mrf.mxu0
    %376 = vdwg.mxu0
    %377 = vst [vmem:[#allocation3] sm:$0xff] %v339
    %378 = vst [vmem:[#allocation3 + $0x8] sm:$0xff] %v344
    %379 = vst [vmem:[#allocation3 + $0x10] sm:$0xff] %v349
    %380 = vst [vmem:[#allocation3 + $0x18] sm:$0xff] %v354
    %381 = vst [vmem:[#allocation3 + $0x20] sm:$0xff] %v359
    %382 = vst [vmem:[#allocation3 + $0x28] sm:$0xff] %v364
    %383 = vst [vmem:[#allocation3 + $0x30] sm:$0xff] %v369
    %384 = vst [vmem:[#allocation3 + $0x38] sm:$0xff] %v374
    %v385 = vld [vmem:[%s4] sm:$0xff]
    %v386 = vld [vmem:[%s4 + $0x8] sm:$0xff]
    %v387 = vld [vmem:[%s4 + $0x10] sm:$0xff]
    %v388 = vld [vmem:[%s4 + $0x18] sm:$0xff]
    %v389 = vld [vmem:[%s6] sm:$0xff]
    %v390 = vld [vmem:[%s6 + $0x8] sm:$0xff]
    %v391 = vld [vmem:[%s6 + $0x10] sm:$0xff]
    %v392 = vld [vmem:[%s6 + $0x18] sm:$0xff]
    %v393 = vld [vmem:[%s7] sm:$0xff]
    %v394 = vld [vmem:[%s7 + $0x8] sm:$0xff]
    %v395 = vld [vmem:[%s7 + $0x10] sm:$0xff]
    %v396 = vld [vmem:[%s7 + $0x18] sm:$0xff]
    %v397 = vld [vmem:[%s8] sm:$0x1]
    %v398 = vld [vmem:[#allocation2] sm:$0xff]
    %v400 = vsel %vm91, 0.0, 0
    %402 = vmatprep.subr.mxu0 0.0
    %403 = vmatpush1.msra.mxu0 0.0
    %404 = vmatprep.subr.mxu0 0.0
    %405 = vmatpush1.msra.mxu0 0.0
    %406 = vmatprep.subr.mxu0 0.0
    %407 = vmatpush1.msra.mxu0 0.0
    %408 = vmatprep.subr.mxu0 0.0
    %409 = vmatpush1.msra.mxu0 0.0
    %410 = vmatprep.subr.mxu0 0.0
    %411 = vmatpush1.msra.mxu0 0.0
    %412 = vmatprep.subr.mxu0 0.0
    %413 = vmatpush1.msra.mxu0 0.0
    %414 = vmatprep.subr.mxu0 0.0
    %415 = vmatpush1.msra.mxu0 0.0
    %416 = vmatprep.subr.mxu0 0.0
    %417 = vmatpush1.msra.mxu0 0.0
    %418 = vmatprep.subr.mxu0 0.0
    %419 = vmatpush1.msra.mxu0 0.0
    %420 = vmatprep.subr.mxu0 0.0
    %421 = vmatpush1.msra.mxu0 0.0
    %422 = vmatprep.subr.mxu0 0.0
    %423 = vmatpush1.msra.mxu0 0.0
    %424 = vmatprep.subr.mxu0 0.0
    %425 = vmatpush1.msra.mxu0 0.0
    %426 = vmatprep.subr.mxu0 0.0
    %427 = vmatpush1.msra.mxu0 %v388
    %428 = vmatprep.subr.mxu0 0.0
    %429 = vmatpush1.msra.mxu0 %v387
    %430 = vmatprep.subr.mxu0 0.0
    %431 = vmatpush1.msra.mxu0 %v386
    %432 = vmatprep.subr.mxu0 0.0
    %433 = vmatpush1.msra.mxu0 %v385
    %434 = vmatprep.subr.mxu0 0.0
    %435 = vmatpush2.msra.mxu0 0.0
    %436 = vmatprep.subr.mxu0 0.0
    %437 = vmatpush2.msra.mxu0 0.0
    %438 = vmatprep.subr.mxu0 0.0
    %439 = vmatpush2.msra.mxu0 0.0
    %440 = vmatprep.subr.mxu0 0.0
    %441 = vmatpush2.msra.mxu0 0.0
    %442 = vmatprep.subr.mxu0 0.0
    %443 = vmatpush2.msra.mxu0 0.0
    %444 = vmatprep.subr.mxu0 0.0
    %445 = vmatpush2.msra.mxu0 0.0
    %446 = vmatprep.subr.mxu0 0.0
    %447 = vmatpush2.msra.mxu0 0.0
    %448 = vmatprep.subr.mxu0 0.0
    %449 = vmatpush2.msra.mxu0 0.0
    %450 = vmatprep.subr.mxu0 0.0
    %451 = vmatpush2.msra.mxu0 0.0
    %452 = vmatprep.subr.mxu0 0.0
    %453 = vmatpush2.msra.mxu0 0.0
    %454 = vmatprep.subr.mxu0 0.0
    %455 = vmatpush2.msra.mxu0 0.0
    %456 = vmatprep.subr.mxu0 0.0
    %457 = vmatpush2.msra.mxu0 0.0
    %458 = vmatprep.subr.mxu0 0.0
    %459 = vmatpush2.msra.mxu0 0.0
    %460 = vmatprep.subr.mxu0 0.0
    %461 = vmatpush2.msra.mxu0 0.0
    %462 = vmatprep.subr.mxu0 0.0
    %463 = vmatpush2.msra.mxu0 0.0
    %464 = vmatprep.subr.mxu0 0.0
    %465 = vmatpush2.msra.mxu0 0.0
    %466 = vmatprep.mubr.f32.mxu0 0.0
    %467 = vmatmul.mubr.f32.gmra.mxu0 %v400
    %v468 = vpop.f32.mrf.mxu0
    %v469 = vadd.f32 0.0, %v468
    %v470 = vpop.f32.mrf.mxu0
    %471 = vdwg.mxu0
    %v472 = vadd.f32 %v398, %v469
    %v473 = vxor.u32 %v472, 2147483648
    %v474 = vmul.f32 %v473, 1.442695
    %v475 = vpow.pop %v474
    %v476 = vadd.f32 %v475, 1.0
    %v477 = vrcp.pop %v476
    %v478 = vmul.f32 1.0, %v477
    %v479 = vtanh.pop %v472
    %v480 = vmul.f32 %v478, 0.0
    %482 = vrot.lane.b32.xlu0 %v479, 64
    %v483 = vpop.permute.xlu0 %482
    %v485 = vmul.f32 %v478, %v483
    %487 = vrot.lane.b32.xlu0 %v485, 32
    %v488 = vpop.permute.xlu0 %487
    %v490 = vadd.f32 %v480, %v488
    %v491 = vtanh.pop %v490
    %493 = vrot.lane.b32.xlu0 %v491, 64
    %v494 = vpop.permute.xlu0 %493
    %v496 = vmul.f32 %v478, %v494
    %497 = vmatprep.subr.mxu0 0.0
    %498 = vmatpush1.msra.mxu0 0.0
    %499 = vmatprep.subr.mxu0 0.0
    %500 = vmatpush1.msra.mxu0 0.0
    %501 = vmatprep.subr.mxu0 0.0
    %502 = vmatpush1.msra.mxu0 0.0
    %503 = vmatprep.subr.mxu0 0.0
    %504 = vmatpush1.msra.mxu0 0.0
    %505 = vmatprep.subr.mxu0 0.0
    %506 = vmatpush1.msra.mxu0 0.0
    %507 = vmatprep.subr.mxu0 0.0
    %508 = vmatpush1.msra.mxu0 0.0
    %509 = vmatprep.subr.mxu0 0.0
    %510 = vmatpush1.msra.mxu0 0.0
    %511 = vmatprep.subr.mxu0 0.0
    %512 = vmatpush1.msra.mxu0 0.0
    %513 = vmatprep.subr.mxu0 0.0
    %514 = vmatpush1.msra.mxu0 0.0
    %515 = vmatprep.subr.mxu0 0.0
    %516 = vmatpush1.msra.mxu0 0.0
    %517 = vmatprep.subr.mxu0 0.0
    %518 = vmatpush1.msra.mxu0 0.0
    %519 = vmatprep.subr.mxu0 0.0
    %520 = vmatpush1.msra.mxu0 0.0
    %521 = vmatprep.subr.mxu0 0.0
    %522 = vmatpush1.msra.mxu0 %v396
    %523 = vmatprep.subr.mxu0 0.0
    %524 = vmatpush1.msra.mxu0 %v395
    %525 = vmatprep.subr.mxu0 0.0
    %526 = vmatpush1.msra.mxu0 %v394
    %527 = vmatprep.subr.mxu0 0.0
    %528 = vmatpush1.msra.mxu0 %v393
    %529 = vmatprep.subr.mxu0 0.0
    %530 = vmatpush2.msra.mxu0 0.0
    %531 = vmatprep.subr.mxu0 0.0
    %532 = vmatpush2.msra.mxu0 0.0
    %533 = vmatprep.subr.mxu0 0.0
    %534 = vmatpush2.msra.mxu0 0.0
    %535 = vmatprep.subr.mxu0 0.0
    %536 = vmatpush2.msra.mxu0 0.0
    %537 = vmatprep.subr.mxu0 0.0
    %538 = vmatpush2.msra.mxu0 0.0
    %539 = vmatprep.subr.mxu0 0.0
    %540 = vmatpush2.msra.mxu0 0.0
    %541 = vmatprep.subr.mxu0 0.0
    %542 = vmatpush2.msra.mxu0 0.0
    %543 = vmatprep.subr.mxu0 0.0
    %544 = vmatpush2.msra.mxu0 0.0
    %545 = vmatprep.subr.mxu0 0.0
    %546 = vmatpush2.msra.mxu0 0.0
    %547 = vmatprep.subr.mxu0 0.0
    %548 = vmatpush2.msra.mxu0 0.0
    %549 = vmatprep.subr.mxu0 0.0
    %550 = vmatpush2.msra.mxu0 0.0
    %551 = vmatprep.subr.mxu0 0.0
    %552 = vmatpush2.msra.mxu0 0.0
    %553 = vmatprep.subr.mxu0 0.0
    %554 = vmatpush2.msra.mxu0 0.0
    %555 = vmatprep.subr.mxu0 0.0
    %556 = vmatpush2.msra.mxu0 0.0
    %557 = vmatprep.subr.mxu0 0.0
    %558 = vmatpush2.msra.mxu0 0.0
    %559 = vmatprep.subr.mxu0 0.0
    %560 = vmatpush2.msra.mxu0 0.0
    %561 = vmatprep.mubr.f32.mxu0 0.0
    %562 = vmatmul.mubr.f32.gmra.mxu0 %v400
    %v563 = vpop.f32.mrf.mxu0
    %v564 = vadd.f32 0.0, %v563
    %v565 = vpop.f32.mrf.mxu0
    %566 = vdwg.mxu0
    %568 = vrot.lane.b32.xlu0 %v496, 32
    %v569 = vpop.permute.xlu0 %568
    %v570 = vsel %vm91, %v569, 0
    %572 = vmatprep.subr.mxu0 0.0
    %573 = vmatpush1.msra.mxu0 0.0
    %574 = vmatprep.subr.mxu0 0.0
    %575 = vmatpush1.msra.mxu0 0.0
    %576 = vmatprep.subr.mxu0 0.0
    %577 = vmatpush1.msra.mxu0 0.0
    %578 = vmatprep.subr.mxu0 0.0
    %579 = vmatpush1.msra.mxu0 0.0
    %580 = vmatprep.subr.mxu0 0.0
    %581 = vmatpush1.msra.mxu0 0.0
    %582 = vmatprep.subr.mxu0 0.0
    %583 = vmatpush1.msra.mxu0 0.0
    %584 = vmatprep.subr.mxu0 0.0
    %585 = vmatpush1.msra.mxu0 0.0
    %586 = vmatprep.subr.mxu0 0.0
    %587 = vmatpush1.msra.mxu0 0.0
    %588 = vmatprep.subr.mxu0 0.0
    %589 = vmatpush1.msra.mxu0 0.0
    %590 = vmatprep.subr.mxu0 0.0
    %591 = vmatpush1.msra.mxu0 0.0
    %592 = vmatprep.subr.mxu0 0.0
    %593 = vmatpush1.msra.mxu0 0.0
    %594 = vmatprep.subr.mxu0 0.0
    %595 = vmatpush1.msra.mxu0 0.0
    %596 = vmatprep.subr.mxu0 0.0
    %597 = vmatpush1.msra.mxu0 %v392
    %598 = vmatprep.subr.mxu0 0.0
    %599 = vmatpush1.msra.mxu0 %v391
    %600 = vmatprep.subr.mxu0 0.0
    %601 = vmatpush1.msra.mxu0 %v390
    %602 = vmatprep.subr.mxu0 0.0
    %603 = vmatpush1.msra.mxu0 %v389
    %604 = vmatprep.subr.mxu0 0.0
    %605 = vmatpush2.msra.mxu0 0.0
    %606 = vmatprep.subr.mxu0 0.0
    %607 = vmatpush2.msra.mxu0 0.0
    %608 = vmatprep.subr.mxu0 0.0
    %609 = vmatpush2.msra.mxu0 0.0
    %610 = vmatprep.subr.mxu0 0.0
    %611 = vmatpush2.msra.mxu0 0.0
    %612 = vmatprep.subr.mxu0 0.0
    %613 = vmatpush2.msra.mxu0 0.0
    %614 = vmatprep.subr.mxu0 0.0
    %615 = vmatpush2.msra.mxu0 0.0
    %616 = vmatprep.subr.mxu0 0.0
    %617 = vmatpush2.msra.mxu0 0.0
    %618 = vmatprep.subr.mxu0 0.0
    %619 = vmatpush2.msra.mxu0 0.0
    %620 = vmatprep.subr.mxu0 0.0
    %621 = vmatpush2.msra.mxu0 0.0
    %622 = vmatprep.subr.mxu0 0.0
    %623 = vmatpush2.msra.mxu0 0.0
    %624 = vmatprep.subr.mxu0 0.0
    %625 = vmatpush2.msra.mxu0 0.0
    %626 = vmatprep.subr.mxu0 0.0
    %627 = vmatpush2.msra.mxu0 0.0
    %628 = vmatprep.subr.mxu0 0.0
    %629 = vmatpush2.msra.mxu0 0.0
    %630 = vmatprep.subr.mxu0 0.0
    %631 = vmatpush2.msra.mxu0 0.0
    %632 = vmatprep.subr.mxu0 0.0
    %633 = vmatpush2.msra.mxu0 0.0
    %634 = vmatprep.subr.mxu0 0.0
    %635 = vmatpush2.msra.mxu0 0.0
    %636 = vmatprep.mubr.f32.mxu0 0.0
    %637 = vmatmul.mubr.f32.gmra.mxu0 %v570
    %v638 = vpop.f32.mrf.mxu0
    %v639 = vadd.f32 %v564, %v638
    %v640 = vpop.f32.mrf.mxu0
    %641 = vdwg.mxu0
    %v643 = vlaneseq
    %v644 = vshrl.u32 %v643, 7
    %v645 = vsub.s32 0, %v644
    %v646 = vrot.slane %v397, %v645
    %v648 = vadd.f32 %v639, %v646
    %v649 = vxor.u32 %v648, 2147483648
    %v650 = vmul.f32 %v649, 1.442695
    %v651 = vpow.pop %v650
    %v652 = vadd.f32 %v651, 1.0
    %v653 = vrcp.pop %v652
    %v654 = vmul.f32 1.0, %v653
    %v655 = vtanh.pop %v648
    %v656 = vmul.f32 %v654, 0.0
    %658 = vrot.lane.b32.xlu0 %v655, 64
    %v659 = vpop.permute.xlu0 %658
    %v661 = vmul.f32 %v654, %v659
    %663 = vrot.lane.b32.xlu0 %v661, 32
    %v664 = vpop.permute.xlu0 %663
    %v666 = vadd.f32 %v656, %v664
    %v667 = vtanh.pop %v666
    %669 = vrot.lane.b32.xlu0 %v667, 64
    %v670 = vpop.permute.xlu0 %669
    %v672 = vmul.f32 %v654, %v670
    %v673 = vld [vmem:[#allocation2 + $0x8] sm:$0xff]
    %674 = vmatprep.subr.mxu0 0.0
    %675 = vmatpush1.msra.mxu0 0.0
    %676 = vmatprep.subr.mxu0 0.0
    %677 = vmatpush1.msra.mxu0 0.0
    %678 = vmatprep.subr.mxu0 0.0
    %679 = vmatpush1.msra.mxu0 0.0
    %680 = vmatprep.subr.mxu0 0.0
    %681 = vmatpush1.msra.mxu0 0.0
    %682 = vmatprep.subr.mxu0 0.0
    %683 = vmatpush1.msra.mxu0 0.0
    %684 = vmatprep.subr.mxu0 0.0
    %685 = vmatpush1.msra.mxu0 0.0
    %686 = vmatprep.subr.mxu0 0.0
    %687 = vmatpush1.msra.mxu0 0.0
    %688 = vmatprep.subr.mxu0 0.0
    %689 = vmatpush1.msra.mxu0 0.0
    %690 = vmatprep.subr.mxu0 0.0
    %691 = vmatpush1.msra.mxu0 0.0
    %692 = vmatprep.subr.mxu0 0.0
    %693 = vmatpush1.msra.mxu0 0.0
    %694 = vmatprep.subr.mxu0 0.0
    %695 = vmatpush1.msra.mxu0 0.0
    %696 = vmatprep.subr.mxu0 0.0
    %697 = vmatpush1.msra.mxu0 0.0
    %698 = vmatprep.subr.mxu0 0.0
    %699 = vmatpush1.msra.mxu0 %v388
    %700 = vmatprep.subr.mxu0 0.0
    %701 = vmatpush1.msra.mxu0 %v387
    %702 = vmatprep.subr.mxu0 0.0
    %703 = vmatpush1.msra.mxu0 %v386
    %704 = vmatprep.subr.mxu0 0.0
    %705 = vmatpush1.msra.mxu0 %v385
    %706 = vmatprep.subr.mxu0 0.0
    %707 = vmatpush2.msra.mxu0 0.0
    %708 = vmatprep.subr.mxu0 0.0
    %709 = vmatpush2.msra.mxu0 0.0
    %710 = vmatprep.subr.mxu0 0.0
    %711 = vmatpush2.msra.mxu0 0.0
    %712 = vmatprep.subr.mxu0 0.0
    %713 = vmatpush2.msra.mxu0 0.0
    %714 = vmatprep.subr.mxu0 0.0
    %715 = vmatpush2.msra.mxu0 0.0
    %716 = vmatprep.subr.mxu0 0.0
    %717 = vmatpush2.msra.mxu0 0.0
    %718 = vmatprep.subr.mxu0 0.0
    %719 = vmatpush2.msra.mxu0 0.0
    %720 = vmatprep.subr.mxu0 0.0
    %721 = vmatpush2.msra.mxu0 0.0
    %722 = vmatprep.subr.mxu0 0.0
    %723 = vmatpush2.msra.mxu0 0.0
    %724 = vmatprep.subr.mxu0 0.0
    %725 = vmatpush2.msra.mxu0 0.0
    %726 = vmatprep.subr.mxu0 0.0
    %727 = vmatpush2.msra.mxu0 0.0
    %728 = vmatprep.subr.mxu0 0.0
    %729 = vmatpush2.msra.mxu0 0.0
    %730 = vmatprep.subr.mxu0 0.0
    %731 = vmatpush2.msra.mxu0 0.0
    %732 = vmatprep.subr.mxu0 0.0
    %733 = vmatpush2.msra.mxu0 0.0
    %734 = vmatprep.subr.mxu0 0.0
    %735 = vmatpush2.msra.mxu0 0.0
    %736 = vmatprep.subr.mxu0 0.0
    %737 = vmatpush2.msra.mxu0 0.0
    %738 = vmatprep.mubr.f32.mxu0 0.0
    %739 = vmatmul.mubr.f32.gmra.mxu0 %v570
    %v740 = vpop.f32.mrf.mxu0
    %v741 = vadd.f32 0.0, %v740
    %v742 = vpop.f32.mrf.mxu0
    %743 = vdwg.mxu0
    %v744 = vadd.f32 %v673, %v741
    %v745 = vxor.u32 %v744, 2147483648
    %v746 = vmul.f32 %v745, 1.442695
    %v747 = vpow.pop %v746
    %v748 = vadd.f32 %v747, 1.0
    %v749 = vrcp.pop %v748
    %v750 = vmul.f32 1.0, %v749
    %v751 = vtanh.pop %v744
    %v752 = vmul.f32 %v750, %v490
    %754 = vrot.lane.b32.xlu0 %v751, 64
    %v755 = vpop.permute.xlu0 %754
    %v757 = vmul.f32 %v750, %v755
    %759 = vrot.lane.b32.xlu0 %v757, 32
    %v760 = vpop.permute.xlu0 %759
    %v762 = vadd.f32 %v752, %v760
    %v763 = vtanh.pop %v762
    %765 = vrot.lane.b32.xlu0 %v763, 64
    %v766 = vpop.permute.xlu0 %765
    %v768 = vmul.f32 %v750, %v766
    %770 = vrot.lane.b32.xlu0 %v672, 32
    %v771 = vpop.permute.xlu0 %770
    %v772 = vsel %vm91, %v771, 0
    %774 = vmatprep.subr.mxu0 0.0
    %775 = vmatpush1.msra.mxu0 0.0
    %776 = vmatprep.subr.mxu0 0.0
    %777 = vmatpush1.msra.mxu0 0.0
    %778 = vmatprep.subr.mxu0 0.0
    %779 = vmatpush1.msra.mxu0 0.0
    %780 = vmatprep.subr.mxu0 0.0
    %781 = vmatpush1.msra.mxu0 0.0
    %782 = vmatprep.subr.mxu0 0.0
    %783 = vmatpush1.msra.mxu0 0.0
    %784 = vmatprep.subr.mxu0 0.0
    %785 = vmatpush1.msra.mxu0 0.0
    %786 = vmatprep.subr.mxu0 0.0
    %787 = vmatpush1.msra.mxu0 0.0
    %788 = vmatprep.subr.mxu0 0.0
    %789 = vmatpush1.msra.mxu0 0.0
    %790 = vmatprep.subr.mxu0 0.0
    %791 = vmatpush1.msra.mxu0 0.0
    %792 = vmatprep.subr.mxu0 0.0
    %793 = vmatpush1.msra.mxu0 0.0
    %794 = vmatprep.subr.mxu0 0.0
    %795 = vmatpush1.msra.mxu0 0.0
    %796 = vmatprep.subr.mxu0 0.0
    %797 = vmatpush1.msra.mxu0 0.0
    %798 = vmatprep.subr.mxu0 0.0
    %799 = vmatpush1.msra.mxu0 %v396
    %800 = vmatprep.subr.mxu0 0.0
    %801 = vmatpush1.msra.mxu0 %v395
    %802 = vmatprep.subr.mxu0 0.0
    %803 = vmatpush1.msra.mxu0 %v394
    %804 = vmatprep.subr.mxu0 0.0
    %805 = vmatpush1.msra.mxu0 %v393
    %806 = vmatprep.subr.mxu0 0.0
    %807 = vmatpush2.msra.mxu0 0.0
    %808 = vmatprep.subr.mxu0 0.0
    %809 = vmatpush2.msra.mxu0 0.0
    %810 = vmatprep.subr.mxu0 0.0
    %811 = vmatpush2.msra.mxu0 0.0
    %812 = vmatprep.subr.mxu0 0.0
    %813 = vmatpush2.msra.mxu0 0.0
    %814 = vmatprep.subr.mxu0 0.0
    %815 = vmatpush2.msra.mxu0 0.0
    %816 = vmatprep.subr.mxu0 0.0
    %817 = vmatpush2.msra.mxu0 0.0
    %818 = vmatprep.subr.mxu0 0.0
    %819 = vmatpush2.msra.mxu0 0.0
    %820 = vmatprep.subr.mxu0 0.0
    %821 = vmatpush2.msra.mxu0 0.0
    %822 = vmatprep.subr.mxu0 0.0
    %823 = vmatpush2.msra.mxu0 0.0
    %824 = vmatprep.subr.mxu0 0.0
    %825 = vmatpush2.msra.mxu0 0.0
    %826 = vmatprep.subr.mxu0 0.0
    %827 = vmatpush2.msra.mxu0 0.0
    %828 = vmatprep.subr.mxu0 0.0
    %829 = vmatpush2.msra.mxu0 0.0
    %830 = vmatprep.subr.mxu0 0.0
    %831 = vmatpush2.msra.mxu0 0.0
    %832 = vmatprep.subr.mxu0 0.0
    %833 = vmatpush2.msra.mxu0 0.0
    %834 = vmatprep.subr.mxu0 0.0
    %835 = vmatpush2.msra.mxu0 0.0
    %836 = vmatprep.subr.mxu0 0.0
    %837 = vmatpush2.msra.mxu0 0.0
    %838 = vmatprep.mubr.f32.mxu0 0.0
    %839 = vmatmul.mubr.f32.gmra.mxu0 %v772
    %v840 = vpop.f32.mrf.mxu0
    %v841 = vadd.f32 0.0, %v840
    %v842 = vpop.f32.mrf.mxu0
    %843 = vdwg.mxu0
    %845 = vrot.lane.b32.xlu0 %v768, 32
    %v846 = vpop.permute.xlu0 %845
    %v847 = vsel %vm91, %v846, 0
    %849 = vmatprep.subr.mxu0 0.0
    %850 = vmatpush1.msra.mxu0 0.0
    %851 = vmatprep.subr.mxu0 0.0
    %852 = vmatpush1.msra.mxu0 0.0
    %853 = vmatprep.subr.mxu0 0.0
    %854 = vmatpush1.msra.mxu0 0.0
    %855 = vmatprep.subr.mxu0 0.0
    %856 = vmatpush1.msra.mxu0 0.0
    %857 = vmatprep.subr.mxu0 0.0
    %858 = vmatpush1.msra.mxu0 0.0
    %859 = vmatprep.subr.mxu0 0.0
    %860 = vmatpush1.msra.mxu0 0.0
    %861 = vmatprep.subr.mxu0 0.0
    %862 = vmatpush1.msra.mxu0 0.0
    %863 = vmatprep.subr.mxu0 0.0
    %864 = vmatpush1.msra.mxu0 0.0
    %865 = vmatprep.subr.mxu0 0.0
    %866 = vmatpush1.msra.mxu0 0.0
    %867 = vmatprep.subr.mxu0 0.0
    %868 = vmatpush1.msra.mxu0 0.0
    %869 = vmatprep.subr.mxu0 0.0
    %870 = vmatpush1.msra.mxu0 0.0
    %871 = vmatprep.subr.mxu0 0.0
    %872 = vmatpush1.msra.mxu0 0.0
    %873 = vmatprep.subr.mxu0 0.0
    %874 = vmatpush1.msra.mxu0 %v392
    %875 = vmatprep.subr.mxu0 0.0
    %876 = vmatpush1.msra.mxu0 %v391
    %877 = vmatprep.subr.mxu0 0.0
    %878 = vmatpush1.msra.mxu0 %v390
    %879 = vmatprep.subr.mxu0 0.0
    %880 = vmatpush1.msra.mxu0 %v389
    %881 = vmatprep.subr.mxu0 0.0
    %882 = vmatpush2.msra.mxu0 0.0
    %883 = vmatprep.subr.mxu0 0.0
    %884 = vmatpush2.msra.mxu0 0.0
    %885 = vmatprep.subr.mxu0 0.0
    %886 = vmatpush2.msra.mxu0 0.0
    %887 = vmatprep.subr.mxu0 0.0
    %888 = vmatpush2.msra.mxu0 0.0
    %889 = vmatprep.subr.mxu0 0.0
    %890 = vmatpush2.msra.mxu0 0.0
    %891 = vmatprep.subr.mxu0 0.0
    %892 = vmatpush2.msra.mxu0 0.0
    %893 = vmatprep.subr.mxu0 0.0
    %894 = vmatpush2.msra.mxu0 0.0
    %895 = vmatprep.subr.mxu0 0.0
    %896 = vmatpush2.msra.mxu0 0.0
    %897 = vmatprep.subr.mxu0 0.0
    %898 = vmatpush2.msra.mxu0 0.0
    %899 = vmatprep.subr.mxu0 0.0
    %900 = vmatpush2.msra.mxu0 0.0
    %901 = vmatprep.subr.mxu0 0.0
    %902 = vmatpush2.msra.mxu0 0.0
    %903 = vmatprep.subr.mxu0 0.0
    %904 = vmatpush2.msra.mxu0 0.0
    %905 = vmatprep.subr.mxu0 0.0
    %906 = vmatpush2.msra.mxu0 0.0
    %907 = vmatprep.subr.mxu0 0.0
    %908 = vmatpush2.msra.mxu0 0.0
    %909 = vmatprep.subr.mxu0 0.0
    %910 = vmatpush2.msra.mxu0 0.0
    %911 = vmatprep.subr.mxu0 0.0
    %912 = vmatpush2.msra.mxu0 0.0
    %913 = vmatprep.mubr.f32.mxu0 0.0
    %914 = vmatmul.mubr.f32.gmra.mxu0 %v847
    %v915 = vpop.f32.mrf.mxu0
    %v916 = vadd.f32 %v841, %v915
    %v917 = vpop.f32.mrf.mxu0
    %918 = vdwg.mxu0
    %v919 = vadd.f32 %v916, %v646
    %v920 = vxor.u32 %v919, 2147483648
    %v921 = vmul.f32 %v920, 1.442695
    %v922 = vpow.pop %v921
    %v923 = vadd.f32 %v922, 1.0
    %v924 = vrcp.pop %v923
    %v925 = vmul.f32 1.0, %v924
    %v926 = vtanh.pop %v919
    %v927 = vmul.f32 %v925, %v666
    %929 = vrot.lane.b32.xlu0 %v926, 64
    %v930 = vpop.permute.xlu0 %929
    %v932 = vmul.f32 %v925, %v930
    %934 = vrot.lane.b32.xlu0 %v932, 32
    %v935 = vpop.permute.xlu0 %934
    %v937 = vadd.f32 %v927, %v935
    %v938 = vtanh.pop %v937
    %940 = vrot.lane.b32.xlu0 %v938, 64
    %v941 = vpop.permute.xlu0 %940
    %v943 = vmul.f32 %v925, %v941
    %v944 = vld [vmem:[#allocation2 + $0x10] sm:$0xff]
    %945 = vmatprep.subr.mxu0 0.0
    %946 = vmatpush1.msra.mxu0 0.0
    %947 = vmatprep.subr.mxu0 0.0
    %948 = vmatpush1.msra.mxu0 0.0
    %949 = vmatprep.subr.mxu0 0.0
    %950 = vmatpush1.msra.mxu0 0.0
    %951 = vmatprep.subr.mxu0 0.0
    %952 = vmatpush1.msra.mxu0 0.0
    %953 = vmatprep.subr.mxu0 0.0
    %954 = vmatpush1.msra.mxu0 0.0
    %955 = vmatprep.subr.mxu0 0.0
    %956 = vmatpush1.msra.mxu0 0.0
    %957 = vmatprep.subr.mxu0 0.0
    %958 = vmatpush1.msra.mxu0 0.0
    %959 = vmatprep.subr.mxu0 0.0
    %960 = vmatpush1.msra.mxu0 0.0
    %961 = vmatprep.subr.mxu0 0.0
    %962 = vmatpush1.msra.mxu0 0.0
    %963 = vmatprep.subr.mxu0 0.0
    %964 = vmatpush1.msra.mxu0 0.0
    %965 = vmatprep.subr.mxu0 0.0
    %966 = vmatpush1.msra.mxu0 0.0
    %967 = vmatprep.subr.mxu0 0.0
    %968 = vmatpush1.msra.mxu0 0.0
    %969 = vmatprep.subr.mxu0 0.0
    %970 = vmatpush1.msra.mxu0 %v388
    %971 = vmatprep.subr.mxu0 0.0
    %972 = vmatpush1.msra.mxu0 %v387
    %973 = vmatprep.subr.mxu0 0.0
    %974 = vmatpush1.msra.mxu0 %v386
    %975 = vmatprep.subr.mxu0 0.0
    %976 = vmatpush1.msra.mxu0 %v385
    %977 = vmatprep.subr.mxu0 0.0
    %978 = vmatpush2.msra.mxu0 0.0
    %979 = vmatprep.subr.mxu0 0.0
    %980 = vmatpush2.msra.mxu0 0.0
    %981 = vmatprep.subr.mxu0 0.0
    %982 = vmatpush2.msra.mxu0 0.0
    %983 = vmatprep.subr.mxu0 0.0
    %984 = vmatpush2.msra.mxu0 0.0
    %985 = vmatprep.subr.mxu0 0.0
    %986 = vmatpush2.msra.mxu0 0.0
    %987 = vmatprep.subr.mxu0 0.0
    %988 = vmatpush2.msra.mxu0 0.0
    %989 = vmatprep.subr.mxu0 0.0
    %990 = vmatpush2.msra.mxu0 0.0
    %991 = vmatprep.subr.mxu0 0.0
    %992 = vmatpush2.msra.mxu0 0.0
    %993 = vmatprep.subr.mxu0 0.0
    %994 = vmatpush2.msra.mxu0 0.0
    %995 = vmatprep.subr.mxu0 0.0
    %996 = vmatpush2.msra.mxu0 0.0
    %997 = vmatprep.subr.mxu0 0.0
    %998 = vmatpush2.msra.mxu0 0.0
    %999 = vmatprep.subr.mxu0 0.0
    %1000 = vmatpush2.msra.mxu0 0.0
    %1001 = vmatprep.subr.mxu0 0.0
    %1002 = vmatpush2.msra.mxu0 0.0
    %1003 = vmatprep.subr.mxu0 0.0
    %1004 = vmatpush2.msra.mxu0 0.0
    %1005 = vmatprep.subr.mxu0 0.0
    %1006 = vmatpush2.msra.mxu0 0.0
    %1007 = vmatprep.subr.mxu0 0.0
    %1008 = vmatpush2.msra.mxu0 0.0
    %1009 = vmatprep.mubr.f32.mxu0 0.0
    %1010 = vmatmul.mubr.f32.gmra.mxu0 %v847
    %v1011 = vpop.f32.mrf.mxu0
    %v1012 = vadd.f32 0.0, %v1011
    %v1013 = vpop.f32.mrf.mxu0
    %1014 = vdwg.mxu0
    %v1015 = vadd.f32 %v944, %v1012
    %v1016 = vxor.u32 %v1015, 2147483648
    %v1017 = vmul.f32 %v1016, 1.442695
    %v1018 = vpow.pop %v1017
    %v1019 = vadd.f32 %v1018, 1.0
    %v1020 = vrcp.pop %v1019
    %v1021 = vmul.f32 1.0, %v1020
    %v1022 = vtanh.pop %v1015
    %v1023 = vmul.f32 %v1021, %v762
    %1025 = vrot.lane.b32.xlu0 %v1022, 64
    %v1026 = vpop.permute.xlu0 %1025
    %v1028 = vmul.f32 %v1021, %v1026
    %1030 = vrot.lane.b32.xlu0 %v1028, 32
    %v1031 = vpop.permute.xlu0 %1030
    %v1033 = vadd.f32 %v1023, %v1031
    %v1034 = vtanh.pop %v1033
    %1036 = vrot.lane.b32.xlu0 %v1034, 64
    %v1037 = vpop.permute.xlu0 %1036
    %v1039 = vmul.f32 %v1021, %v1037
    %1041 = vrot.lane.b32.xlu0 %v943, 32
    %v1042 = vpop.permute.xlu0 %1041
    %v1043 = vsel %vm91, %v1042, 0
    %1045 = vmatprep.subr.mxu0 0.0
    %1046 = vmatpush1.msra.mxu0 0.0
    %1047 = vmatprep.subr.mxu0 0.0
    %1048 = vmatpush1.msra.mxu0 0.0
    %1049 = vmatprep.subr.mxu0 0.0
    %1050 = vmatpush1.msra.mxu0 0.0
    %1051 = vmatprep.subr.mxu0 0.0
    %1052 = vmatpush1.msra.mxu0 0.0
    %1053 = vmatprep.subr.mxu0 0.0
    %1054 = vmatpush1.msra.mxu0 0.0
    %1055 = vmatprep.subr.mxu0 0.0
    %1056 = vmatpush1.msra.mxu0 0.0
    %1057 = vmatprep.subr.mxu0 0.0
    %1058 = vmatpush1.msra.mxu0 0.0
    %1059 = vmatprep.subr.mxu0 0.0
    %1060 = vmatpush1.msra.mxu0 0.0
    %1061 = vmatprep.subr.mxu0 0.0
    %1062 = vmatpush1.msra.mxu0 0.0
    %1063 = vmatprep.subr.mxu0 0.0
    %1064 = vmatpush1.msra.mxu0 0.0
    %1065 = vmatprep.subr.mxu0 0.0
    %1066 = vmatpush1.msra.mxu0 0.0
    %1067 = vmatprep.subr.mxu0 0.0
    %1068 = vmatpush1.msra.mxu0 0.0
    %1069 = vmatprep.subr.mxu0 0.0
    %1070 = vmatpush1.msra.mxu0 %v396
    %1071 = vmatprep.subr.mxu0 0.0
    %1072 = vmatpush1.msra.mxu0 %v395
    %1073 = vmatprep.subr.mxu0 0.0
    %1074 = vmatpush1.msra.mxu0 %v394
    %1075 = vmatprep.subr.mxu0 0.0
    %1076 = vmatpush1.msra.mxu0 %v393
    %1077 = vmatprep.subr.mxu0 0.0
    %1078 = vmatpush2.msra.mxu0 0.0
    %1079 = vmatprep.subr.mxu0 0.0
    %1080 = vmatpush2.msra.mxu0 0.0
    %1081 = vmatprep.subr.mxu0 0.0
    %1082 = vmatpush2.msra.mxu0 0.0
    %1083 = vmatprep.subr.mxu0 0.0
    %1084 = vmatpush2.msra.mxu0 0.0
    %1085 = vmatprep.subr.mxu0 0.0
    %1086 = vmatpush2.msra.mxu0 0.0
    %1087 = vmatprep.subr.mxu0 0.0
    %1088 = vmatpush2.msra.mxu0 0.0
    %1089 = vmatprep.subr.mxu0 0.0
    %1090 = vmatpush2.msra.mxu0 0.0
    %1091 = vmatprep.subr.mxu0 0.0
    %1092 = vmatpush2.msra.mxu0 0.0
    %1093 = vmatprep.subr.mxu0 0.0
    %1094 = vmatpush2.msra.mxu0 0.0
    %1095 = vmatprep.subr.mxu0 0.0
    %1096 = vmatpush2.msra.mxu0 0.0
    %1097 = vmatprep.subr.mxu0 0.0
    %1098 = vmatpush2.msra.mxu0 0.0
    %1099 = vmatprep.subr.mxu0 0.0
    %1100 = vmatpush2.msra.mxu0 0.0
    %1101 = vmatprep.subr.mxu0 0.0
    %1102 = vmatpush2.msra.mxu0 0.0
    %1103 = vmatprep.subr.mxu0 0.0
    %1104 = vmatpush2.msra.mxu0 0.0
    %1105 = vmatprep.subr.mxu0 0.0
    %1106 = vmatpush2.msra.mxu0 0.0
    %1107 = vmatprep.subr.mxu0 0.0
    %1108 = vmatpush2.msra.mxu0 0.0
    %1109 = vmatprep.mubr.f32.mxu0 0.0
    %1110 = vmatmul.mubr.f32.gmra.mxu0 %v1043
    %v1111 = vpop.f32.mrf.mxu0
    %v1112 = vadd.f32 0.0, %v1111
    %v1113 = vpop.f32.mrf.mxu0
    %1114 = vdwg.mxu0
    %1116 = vrot.lane.b32.xlu0 %v1039, 32
    %v1117 = vpop.permute.xlu0 %1116
    %v1118 = vsel %vm91, %v1117, 0
    %1120 = vmatprep.subr.mxu0 0.0
    %1121 = vmatpush1.msra.mxu0 0.0
    %1122 = vmatprep.subr.mxu0 0.0
    %1123 = vmatpush1.msra.mxu0 0.0
    %1124 = vmatprep.subr.mxu0 0.0
    %1125 = vmatpush1.msra.mxu0 0.0
    %1126 = vmatprep.subr.mxu0 0.0
    %1127 = vmatpush1.msra.mxu0 0.0
    %1128 = vmatprep.subr.mxu0 0.0
    %1129 = vmatpush1.msra.mxu0 0.0
    %1130 = vmatprep.subr.mxu0 0.0
    %1131 = vmatpush1.msra.mxu0 0.0
    %1132 = vmatprep.subr.mxu0 0.0
    %1133 = vmatpush1.msra.mxu0 0.0
    %1134 = vmatprep.subr.mxu0 0.0
    %1135 = vmatpush1.msra.mxu0 0.0
    %1136 = vmatprep.subr.mxu0 0.0
    %1137 = vmatpush1.msra.mxu0 0.0
    %1138 = vmatprep.subr.mxu0 0.0
    %1139 = vmatpush1.msra.mxu0 0.0
    %1140 = vmatprep.subr.mxu0 0.0
    %1141 = vmatpush1.msra.mxu0 0.0
    %1142 = vmatprep.subr.mxu0 0.0
    %1143 = vmatpush1.msra.mxu0 0.0
    %1144 = vmatprep.subr.mxu0 0.0
    %1145 = vmatpush1.msra.mxu0 %v392
    %1146 = vmatprep.subr.mxu0 0.0
    %1147 = vmatpush1.msra.mxu0 %v391
    %1148 = vmatprep.subr.mxu0 0.0
    %1149 = vmatpush1.msra.mxu0 %v390
    %1150 = vmatprep.subr.mxu0 0.0
    %1151 = vmatpush1.msra.mxu0 %v389
    %1152 = vmatprep.subr.mxu0 0.0
    %1153 = vmatpush2.msra.mxu0 0.0
    %1154 = vmatprep.subr.mxu0 0.0
    %1155 = vmatpush2.msra.mxu0 0.0
    %1156 = vmatprep.subr.mxu0 0.0
    %1157 = vmatpush2.msra.mxu0 0.0
    %1158 = vmatprep.subr.mxu0 0.0
    %1159 = vmatpush2.msra.mxu0 0.0
    %1160 = vmatprep.subr.mxu0 0.0
    %1161 = vmatpush2.msra.mxu0 0.0
    %1162 = vmatprep.subr.mxu0 0.0
    %1163 = vmatpush2.msra.mxu0 0.0
    %1164 = vmatprep.subr.mxu0 0.0
    %1165 = vmatpush2.msra.mxu0 0.0
    %1166 = vmatprep.subr.mxu0 0.0
    %1167 = vmatpush2.msra.mxu0 0.0
    %1168 = vmatprep.subr.mxu0 0.0
    %1169 = vmatpush2.msra.mxu0 0.0
    %1170 = vmatprep.subr.mxu0 0.0
    %1171 = vmatpush2.msra.mxu0 0.0
    %1172 = vmatprep.subr.mxu0 0.0
    %1173 = vmatpush2.msra.mxu0 0.0
    %1174 = vmatprep.subr.mxu0 0.0
    %1175 = vmatpush2.msra.mxu0 0.0
    %1176 = vmatprep.subr.mxu0 0.0
    %1177 = vmatpush2.msra.mxu0 0.0
    %1178 = vmatprep.subr.mxu0 0.0
    %1179 = vmatpush2.msra.mxu0 0.0
    %1180 = vmatprep.subr.mxu0 0.0
    %1181 = vmatpush2.msra.mxu0 0.0
    %1182 = vmatprep.subr.mxu0 0.0
    %1183 = vmatpush2.msra.mxu0 0.0
    %1184 = vmatprep.mubr.f32.mxu0 0.0
    %1185 = vmatmul.mubr.f32.gmra.mxu0 %v1118
    %v1186 = vpop.f32.mrf.mxu0
    %v1187 = vadd.f32 %v1112, %v1186
    %v1188 = vpop.f32.mrf.mxu0
    %1189 = vdwg.mxu0
    %v1190 = vadd.f32 %v1187, %v646
    %v1191 = vxor.u32 %v1190, 2147483648
    %v1192 = vmul.f32 %v1191, 1.442695
    %v1193 = vpow.pop %v1192
    %v1194 = vadd.f32 %v1193, 1.0
    %v1195 = vrcp.pop %v1194
    %v1196 = vmul.f32 1.0, %v1195
    %v1197 = vtanh.pop %v1190
    %v1198 = vmul.f32 %v1196, %v937
    %1200 = vrot.lane.b32.xlu0 %v1197, 64
    %v1201 = vpop.permute.xlu0 %1200
    %v1203 = vmul.f32 %v1196, %v1201
    %1205 = vrot.lane.b32.xlu0 %v1203, 32
    %v1206 = vpop.permute.xlu0 %1205
    %v1208 = vadd.f32 %v1198, %v1206
    %v1209 = vtanh.pop %v1208
    %1211 = vrot.lane.b32.xlu0 %v1209, 64
    %v1212 = vpop.permute.xlu0 %1211
    %v1214 = vmul.f32 %v1196, %v1212
    %v1215 = vld [vmem:[#allocation2 + $0x18] sm:$0xff]
    %1216 = vmatprep.subr.mxu0 0.0
    %1217 = vmatpush1.msra.mxu0 0.0
    %1218 = vmatprep.subr.mxu0 0.0
    %1219 = vmatpush1.msra.mxu0 0.0
    %1220 = vmatprep.subr.mxu0 0.0
    %1221 = vmatpush1.msra.mxu0 0.0
    %1222 = vmatprep.subr.mxu0 0.0
    %1223 = vmatpush1.msra.mxu0 0.0
    %1224 = vmatprep.subr.mxu0 0.0
    %1225 = vmatpush1.msra.mxu0 0.0
    %1226 = vmatprep.subr.mxu0 0.0
    %1227 = vmatpush1.msra.mxu0 0.0
    %1228 = vmatprep.subr.mxu0 0.0
    %1229 = vmatpush1.msra.mxu0 0.0
    %1230 = vmatprep.subr.mxu0 0.0
    %1231 = vmatpush1.msra.mxu0 0.0
    %1232 = vmatprep.subr.mxu0 0.0
    %1233 = vmatpush1.msra.mxu0 0.0
    %1234 = vmatprep.subr.mxu0 0.0
    %1235 = vmatpush1.msra.mxu0 0.0
    %1236 = vmatprep.subr.mxu0 0.0
    %1237 = vmatpush1.msra.mxu0 0.0
    %1238 = vmatprep.subr.mxu0 0.0
    %1239 = vmatpush1.msra.mxu0 0.0
    %1240 = vmatprep.subr.mxu0 0.0
    %1241 = vmatpush1.msra.mxu0 %v388
    %1242 = vmatprep.subr.mxu0 0.0
    %1243 = vmatpush1.msra.mxu0 %v387
    %1244 = vmatprep.subr.mxu0 0.0
    %1245 = vmatpush1.msra.mxu0 %v386
    %1246 = vmatprep.subr.mxu0 0.0
    %1247 = vmatpush1.msra.mxu0 %v385
    %1248 = vmatprep.subr.mxu0 0.0
    %1249 = vmatpush2.msra.mxu0 0.0
    %1250 = vmatprep.subr.mxu0 0.0
    %1251 = vmatpush2.msra.mxu0 0.0
    %1252 = vmatprep.subr.mxu0 0.0
    %1253 = vmatpush2.msra.mxu0 0.0
    %1254 = vmatprep.subr.mxu0 0.0
    %1255 = vmatpush2.msra.mxu0 0.0
    %1256 = vmatprep.subr.mxu0 0.0
    %1257 = vmatpush2.msra.mxu0 0.0
    %1258 = vmatprep.subr.mxu0 0.0
    %1259 = vmatpush2.msra.mxu0 0.0
    %1260 = vmatprep.subr.mxu0 0.0
    %1261 = vmatpush2.msra.mxu0 0.0
    %1262 = vmatprep.subr.mxu0 0.0
    %1263 = vmatpush2.msra.mxu0 0.0
    %1264 = vmatprep.subr.mxu0 0.0
    %1265 = vmatpush2.msra.mxu0 0.0
    %1266 = vmatprep.subr.mxu0 0.0
    %1267 = vmatpush2.msra.mxu0 0.0
    %1268 = vmatprep.subr.mxu0 0.0
    %1269 = vmatpush2.msra.mxu0 0.0
    %1270 = vmatprep.subr.mxu0 0.0
    %1271 = vmatpush2.msra.mxu0 0.0
    %1272 = vmatprep.subr.mxu0 0.0
    %1273 = vmatpush2.msra.mxu0 0.0
    %1274 = vmatprep.subr.mxu0 0.0
    %1275 = vmatpush2.msra.mxu0 0.0
    %1276 = vmatprep.subr.mxu0 0.0
    %1277 = vmatpush2.msra.mxu0 0.0
    %1278 = vmatprep.subr.mxu0 0.0
    %1279 = vmatpush2.msra.mxu0 0.0
    %1280 = vmatprep.mubr.f32.mxu0 0.0
    %1281 = vmatmul.mubr.f32.gmra.mxu0 %v1118
    %v1282 = vpop.f32.mrf.mxu0
    %v1283 = vadd.f32 0.0, %v1282
    %v1284 = vpop.f32.mrf.mxu0
    %1285 = vdwg.mxu0
    %v1286 = vadd.f32 %v1215, %v1283
    %v1287 = vxor.u32 %v1286, 2147483648
    %v1288 = vmul.f32 %v1287, 1.442695
    %v1289 = vpow.pop %v1288
    %v1290 = vadd.f32 %v1289, 1.0
    %v1291 = vrcp.pop %v1290
    %v1292 = vmul.f32 1.0, %v1291
    %v1293 = vtanh.pop %v1286
    %v1294 = vmul.f32 %v1292, %v1033
    %1296 = vrot.lane.b32.xlu0 %v1293, 64
    %v1297 = vpop.permute.xlu0 %1296
    %v1299 = vmul.f32 %v1292, %v1297
    %1301 = vrot.lane.b32.xlu0 %v1299, 32
    %v1302 = vpop.permute.xlu0 %1301
    %v1304 = vadd.f32 %v1294, %v1302
    %v1305 = vtanh.pop %v1304
    %1307 = vrot.lane.b32.xlu0 %v1305, 64
    %v1308 = vpop.permute.xlu0 %1307
    %v1310 = vmul.f32 %v1292, %v1308
    %1312 = vrot.lane.b32.xlu0 %v1214, 32
    %v1313 = vpop.permute.xlu0 %1312
    %v1314 = vsel %vm91, %v1313, 0
    %1316 = vmatprep.subr.mxu0 0.0
    %1317 = vmatpush1.msra.mxu0 0.0
    %1318 = vmatprep.subr.mxu0 0.0
    %1319 = vmatpush1.msra.mxu0 0.0
    %1320 = vmatprep.subr.mxu0 0.0
    %1321 = vmatpush1.msra.mxu0 0.0
    %1322 = vmatprep.subr.mxu0 0.0
    %1323 = vmatpush1.msra.mxu0 0.0
    %1324 = vmatprep.subr.mxu0 0.0
    %1325 = vmatpush1.msra.mxu0 0.0
    %1326 = vmatprep.subr.mxu0 0.0
    %1327 = vmatpush1.msra.mxu0 0.0
    %1328 = vmatprep.subr.mxu0 0.0
    %1329 = vmatpush1.msra.mxu0 0.0
    %1330 = vmatprep.subr.mxu0 0.0
    %1331 = vmatpush1.msra.mxu0 0.0
    %1332 = vmatprep.subr.mxu0 0.0
    %1333 = vmatpush1.msra.mxu0 0.0
    %1334 = vmatprep.subr.mxu0 0.0
    %1335 = vmatpush1.msra.mxu0 0.0
    %1336 = vmatprep.subr.mxu0 0.0
    %1337 = vmatpush1.msra.mxu0 0.0
    %1338 = vmatprep.subr.mxu0 0.0
    %1339 = vmatpush1.msra.mxu0 0.0
    %1340 = vmatprep.subr.mxu0 0.0
    %1341 = vmatpush1.msra.mxu0 %v396
    %1342 = vmatprep.subr.mxu0 0.0
    %1343 = vmatpush1.msra.mxu0 %v395
    %1344 = vmatprep.subr.mxu0 0.0
    %1345 = vmatpush1.msra.mxu0 %v394
    %1346 = vmatprep.subr.mxu0 0.0
    %1347 = vmatpush1.msra.mxu0 %v393
    %1348 = vmatprep.subr.mxu0 0.0
    %1349 = vmatpush2.msra.mxu0 0.0
    %1350 = vmatprep.subr.mxu0 0.0
    %1351 = vmatpush2.msra.mxu0 0.0
    %1352 = vmatprep.subr.mxu0 0.0
    %1353 = vmatpush2.msra.mxu0 0.0
    %1354 = vmatprep.subr.mxu0 0.0
    %1355 = vmatpush2.msra.mxu0 0.0
    %1356 = vmatprep.subr.mxu0 0.0
    %1357 = vmatpush2.msra.mxu0 0.0
    %1358 = vmatprep.subr.mxu0 0.0
    %1359 = vmatpush2.msra.mxu0 0.0
    %1360 = vmatprep.subr.mxu0 0.0
    %1361 = vmatpush2.msra.mxu0 0.0
    %1362 = vmatprep.subr.mxu0 0.0
    %1363 = vmatpush2.msra.mxu0 0.0
    %1364 = vmatprep.subr.mxu0 0.0
    %1365 = vmatpush2.msra.mxu0 0.0
    %1366 = vmatprep.subr.mxu0 0.0
    %1367 = vmatpush2.msra.mxu0 0.0
    %1368 = vmatprep.subr.mxu0 0.0
    %1369 = vmatpush2.msra.mxu0 0.0
    %1370 = vmatprep.subr.mxu0 0.0
    %1371 = vmatpush2.msra.mxu0 0.0
    %1372 = vmatprep.subr.mxu0 0.0
    %1373 = vmatpush2.msra.mxu0 0.0
    %1374 = vmatprep.subr.mxu0 0.0
    %1375 = vmatpush2.msra.mxu0 0.0
    %1376 = vmatprep.subr.mxu0 0.0
    %1377 = vmatpush2.msra.mxu0 0.0
    %1378 = vmatprep.subr.mxu0 0.0
    %1379 = vmatpush2.msra.mxu0 0.0
    %1380 = vmatprep.mubr.f32.mxu0 0.0
    %1381 = vmatmul.mubr.f32.gmra.mxu0 %v1314
    %v1382 = vpop.f32.mrf.mxu0
    %v1383 = vadd.f32 0.0, %v1382
    %v1384 = vpop.f32.mrf.mxu0
    %1385 = vdwg.mxu0
    %1387 = vrot.lane.b32.xlu0 %v1310, 32
    %v1388 = vpop.permute.xlu0 %1387
    %v1389 = vsel %vm91, %v1388, 0
    %1391 = vmatprep.subr.mxu0 0.0
    %1392 = vmatpush1.msra.mxu0 0.0
    %1393 = vmatprep.subr.mxu0 0.0
    %1394 = vmatpush1.msra.mxu0 0.0
    %1395 = vmatprep.subr.mxu0 0.0
    %1396 = vmatpush1.msra.mxu0 0.0
    %1397 = vmatprep.subr.mxu0 0.0
    %1398 = vmatpush1.msra.mxu0 0.0
    %1399 = vmatprep.subr.mxu0 0.0
    %1400 = vmatpush1.msra.mxu0 0.0
    %1401 = vmatprep.subr.mxu0 0.0
    %1402 = vmatpush1.msra.mxu0 0.0
    %1403 = vmatprep.subr.mxu0 0.0
    %1404 = vmatpush1.msra.mxu0 0.0
    %1405 = vmatprep.subr.mxu0 0.0
    %1406 = vmatpush1.msra.mxu0 0.0
    %1407 = vmatprep.subr.mxu0 0.0
    %1408 = vmatpush1.msra.mxu0 0.0
    %1409 = vmatprep.subr.mxu0 0.0
    %1410 = vmatpush1.msra.mxu0 0.0
    %1411 = vmatprep.subr.mxu0 0.0
    %1412 = vmatpush1.msra.mxu0 0.0
    %1413 = vmatprep.subr.mxu0 0.0
    %1414 = vmatpush1.msra.mxu0 0.0
    %1415 = vmatprep.subr.mxu0 0.0
    %1416 = vmatpush1.msra.mxu0 %v392
    %1417 = vmatprep.subr.mxu0 0.0
    %1418 = vmatpush1.msra.mxu0 %v391
    %1419 = vmatprep.subr.mxu0 0.0
    %1420 = vmatpush1.msra.mxu0 %v390
    %1421 = vmatprep.subr.mxu0 0.0
    %1422 = vmatpush1.msra.mxu0 %v389
    %1423 = vmatprep.subr.mxu0 0.0
    %1424 = vmatpush2.msra.mxu0 0.0
    %1425 = vmatprep.subr.mxu0 0.0
    %1426 = vmatpush2.msra.mxu0 0.0
    %1427 = vmatprep.subr.mxu0 0.0
    %1428 = vmatpush2.msra.mxu0 0.0
    %1429 = vmatprep.subr.mxu0 0.0
    %1430 = vmatpush2.msra.mxu0 0.0
    %1431 = vmatprep.subr.mxu0 0.0
    %1432 = vmatpush2.msra.mxu0 0.0
    %1433 = vmatprep.subr.mxu0 0.0
    %1434 = vmatpush2.msra.mxu0 0.0
    %1435 = vmatprep.subr.mxu0 0.0
    %1436 = vmatpush2.msra.mxu0 0.0
    %1437 = vmatprep.subr.mxu0 0.0
    %1438 = vmatpush2.msra.mxu0 0.0
    %1439 = vmatprep.subr.mxu0 0.0
    %1440 = vmatpush2.msra.mxu0 0.0
    %1441 = vmatprep.subr.mxu0 0.0
    %1442 = vmatpush2.msra.mxu0 0.0
    %1443 = vmatprep.subr.mxu0 0.0
    %1444 = vmatpush2.msra.mxu0 0.0
    %1445 = vmatprep.subr.mxu0 0.0
    %1446 = vmatpush2.msra.mxu0 0.0
    %1447 = vmatprep.subr.mxu0 0.0
    %1448 = vmatpush2.msra.mxu0 0.0
    %1449 = vmatprep.subr.mxu0 0.0
    %1450 = vmatpush2.msra.mxu0 0.0
    %1451 = vmatprep.subr.mxu0 0.0
    %1452 = vmatpush2.msra.mxu0 0.0
    %1453 = vmatprep.subr.mxu0 0.0
    %1454 = vmatpush2.msra.mxu0 0.0
    %1455 = vmatprep.mubr.f32.mxu0 0.0
    %1456 = vmatmul.mubr.f32.gmra.mxu0 %v1389
    %v1457 = vpop.f32.mrf.mxu0
    %v1458 = vadd.f32 %v1383, %v1457
    %v1459 = vpop.f32.mrf.mxu0
    %1460 = vdwg.mxu0
    %v1461 = vadd.f32 %v1458, %v646
    %v1462 = vxor.u32 %v1461, 2147483648
    %v1463 = vmul.f32 %v1462, 1.442695
    %v1464 = vpow.pop %v1463
    %v1465 = vadd.f32 %v1464, 1.0
    %v1466 = vrcp.pop %v1465
    %v1467 = vmul.f32 1.0, %v1466
    %v1468 = vtanh.pop %v1461
    %v1469 = vmul.f32 %v1467, %v1208
    %1471 = vrot.lane.b32.xlu0 %v1468, 64
    %v1472 = vpop.permute.xlu0 %1471
    %v1474 = vmul.f32 %v1467, %v1472
    %1476 = vrot.lane.b32.xlu0 %v1474, 32
    %v1477 = vpop.permute.xlu0 %1476
    %v1479 = vadd.f32 %v1469, %v1477
    %v1480 = vtanh.pop %v1479
    %1482 = vrot.lane.b32.xlu0 %v1480, 64
    %v1483 = vpop.permute.xlu0 %1482
    %v1485 = vmul.f32 %v1467, %v1483
    %v1486 = vld [vmem:[#allocation2 + $0x20] sm:$0xff]
    %1487 = vmatprep.subr.mxu0 0.0
    %1488 = vmatpush1.msra.mxu0 0.0
    %1489 = vmatprep.subr.mxu0 0.0
    %1490 = vmatpush1.msra.mxu0 0.0
    %1491 = vmatprep.subr.mxu0 0.0
    %1492 = vmatpush1.msra.mxu0 0.0
    %1493 = vmatprep.subr.mxu0 0.0
    %1494 = vmatpush1.msra.mxu0 0.0
    %1495 = vmatprep.subr.mxu0 0.0
    %1496 = vmatpush1.msra.mxu0 0.0
    %1497 = vmatprep.subr.mxu0 0.0
    %1498 = vmatpush1.msra.mxu0 0.0
    %1499 = vmatprep.subr.mxu0 0.0
    %1500 = vmatpush1.msra.mxu0 0.0
    %1501 = vmatprep.subr.mxu0 0.0
    %1502 = vmatpush1.msra.mxu0 0.0
    %1503 = vmatprep.subr.mxu0 0.0
    %1504 = vmatpush1.msra.mxu0 0.0
    %1505 = vmatprep.subr.mxu0 0.0
    %1506 = vmatpush1.msra.mxu0 0.0
    %1507 = vmatprep.subr.mxu0 0.0
    %1508 = vmatpush1.msra.mxu0 0.0
    %1509 = vmatprep.subr.mxu0 0.0
    %1510 = vmatpush1.msra.mxu0 0.0
    %1511 = vmatprep.subr.mxu0 0.0
    %1512 = vmatpush1.msra.mxu0 %v388
    %1513 = vmatprep.subr.mxu0 0.0
    %1514 = vmatpush1.msra.mxu0 %v387
    %1515 = vmatprep.subr.mxu0 0.0
    %1516 = vmatpush1.msra.mxu0 %v386
    %1517 = vmatprep.subr.mxu0 0.0
    %1518 = vmatpush1.msra.mxu0 %v385
    %1519 = vmatprep.subr.mxu0 0.0
    %1520 = vmatpush2.msra.mxu0 0.0
    %1521 = vmatprep.subr.mxu0 0.0
    %1522 = vmatpush2.msra.mxu0 0.0
    %1523 = vmatprep.subr.mxu0 0.0
    %1524 = vmatpush2.msra.mxu0 0.0
    %1525 = vmatprep.subr.mxu0 0.0
    %1526 = vmatpush2.msra.mxu0 0.0
    %1527 = vmatprep.subr.mxu0 0.0
    %1528 = vmatpush2.msra.mxu0 0.0
    %1529 = vmatprep.subr.mxu0 0.0
    %1530 = vmatpush2.msra.mxu0 0.0
    %1531 = vmatprep.subr.mxu0 0.0
    %1532 = vmatpush2.msra.mxu0 0.0
    %1533 = vmatprep.subr.mxu0 0.0
    %1534 = vmatpush2.msra.mxu0 0.0
    %1535 = vmatprep.subr.mxu0 0.0
    %1536 = vmatpush2.msra.mxu0 0.0
    %1537 = vmatprep.subr.mxu0 0.0
    %1538 = vmatpush2.msra.mxu0 0.0
    %1539 = vmatprep.subr.mxu0 0.0
    %1540 = vmatpush2.msra.mxu0 0.0
    %1541 = vmatprep.subr.mxu0 0.0
    %1542 = vmatpush2.msra.mxu0 0.0
    %1543 = vmatprep.subr.mxu0 0.0
    %1544 = vmatpush2.msra.mxu0 0.0
    %1545 = vmatprep.subr.mxu0 0.0
    %1546 = vmatpush2.msra.mxu0 0.0
    %1547 = vmatprep.subr.mxu0 0.0
    %1548 = vmatpush2.msra.mxu0 0.0
    %1549 = vmatprep.subr.mxu0 0.0
    %1550 = vmatpush2.msra.mxu0 0.0
    %1551 = vmatprep.mubr.f32.mxu0 0.0
    %1552 = vmatmul.mubr.f32.gmra.mxu0 %v1389
    %v1553 = vpop.f32.mrf.mxu0
    %v1554 = vadd.f32 0.0, %v1553
    %v1555 = vpop.f32.mrf.mxu0
    %1556 = vdwg.mxu0
    %v1557 = vadd.f32 %v1486, %v1554
    %v1558 = vxor.u32 %v1557, 2147483648
    %v1559 = vmul.f32 %v1558, 1.442695
    %v1560 = vpow.pop %v1559
    %v1561 = vadd.f32 %v1560, 1.0
    %v1562 = vrcp.pop %v1561
    %v1563 = vmul.f32 1.0, %v1562
    %v1564 = vtanh.pop %v1557
    %v1565 = vmul.f32 %v1563, %v1304
    %1567 = vrot.lane.b32.xlu0 %v1564, 64
    %v1568 = vpop.permute.xlu0 %1567
    %v1570 = vmul.f32 %v1563, %v1568
    %1572 = vrot.lane.b32.xlu0 %v1570, 32
    %v1573 = vpop.permute.xlu0 %1572
    %v1575 = vadd.f32 %v1565, %v1573
    %v1576 = vtanh.pop %v1575
    %1578 = vrot.lane.b32.xlu0 %v1576, 64
    %v1579 = vpop.permute.xlu0 %1578
    %v1581 = vmul.f32 %v1563, %v1579
    %1583 = vrot.lane.b32.xlu0 %v1485, 32
    %v1584 = vpop.permute.xlu0 %1583
    %v1585 = vsel %vm91, %v1584, 0
    %1587 = vmatprep.subr.mxu0 0.0
    %1588 = vmatpush1.msra.mxu0 0.0
    %1589 = vmatprep.subr.mxu0 0.0
    %1590 = vmatpush1.msra.mxu0 0.0
    %1591 = vmatprep.subr.mxu0 0.0
    %1592 = vmatpush1.msra.mxu0 0.0
    %1593 = vmatprep.subr.mxu0 0.0
    %1594 = vmatpush1.msra.mxu0 0.0
    %1595 = vmatprep.subr.mxu0 0.0
    %1596 = vmatpush1.msra.mxu0 0.0
    %1597 = vmatprep.subr.mxu0 0.0
    %1598 = vmatpush1.msra.mxu0 0.0
    %1599 = vmatprep.subr.mxu0 0.0
    %1600 = vmatpush1.msra.mxu0 0.0
    %1601 = vmatprep.subr.mxu0 0.0
    %1602 = vmatpush1.msra.mxu0 0.0
    %1603 = vmatprep.subr.mxu0 0.0
    %1604 = vmatpush1.msra.mxu0 0.0
    %1605 = vmatprep.subr.mxu0 0.0
    %1606 = vmatpush1.msra.mxu0 0.0
    %1607 = vmatprep.subr.mxu0 0.0
    %1608 = vmatpush1.msra.mxu0 0.0
    %1609 = vmatprep.subr.mxu0 0.0
    %1610 = vmatpush1.msra.mxu0 0.0
    %1611 = vmatprep.subr.mxu0 0.0
    %1612 = vmatpush1.msra.mxu0 %v396
    %1613 = vmatprep.subr.mxu0 0.0
    %1614 = vmatpush1.msra.mxu0 %v395
    %1615 = vmatprep.subr.mxu0 0.0
    %1616 = vmatpush1.msra.mxu0 %v394
    %1617 = vmatprep.subr.mxu0 0.0
    %1618 = vmatpush1.msra.mxu0 %v393
    %1619 = vmatprep.subr.mxu0 0.0
    %1620 = vmatpush2.msra.mxu0 0.0
    %1621 = vmatprep.subr.mxu0 0.0
    %1622 = vmatpush2.msra.mxu0 0.0
    %1623 = vmatprep.subr.mxu0 0.0
    %1624 = vmatpush2.msra.mxu0 0.0
    %1625 = vmatprep.subr.mxu0 0.0
    %1626 = vmatpush2.msra.mxu0 0.0
    %1627 = vmatprep.subr.mxu0 0.0
    %1628 = vmatpush2.msra.mxu0 0.0
    %1629 = vmatprep.subr.mxu0 0.0
    %1630 = vmatpush2.msra.mxu0 0.0
    %1631 = vmatprep.subr.mxu0 0.0
    %1632 = vmatpush2.msra.mxu0 0.0
    %1633 = vmatprep.subr.mxu0 0.0
    %1634 = vmatpush2.msra.mxu0 0.0
    %1635 = vmatprep.subr.mxu0 0.0
    %1636 = vmatpush2.msra.mxu0 0.0
    %1637 = vmatprep.subr.mxu0 0.0
    %1638 = vmatpush2.msra.mxu0 0.0
    %1639 = vmatprep.subr.mxu0 0.0
    %1640 = vmatpush2.msra.mxu0 0.0
    %1641 = vmatprep.subr.mxu0 0.0
    %1642 = vmatpush2.msra.mxu0 0.0
    %1643 = vmatprep.subr.mxu0 0.0
    %1644 = vmatpush2.msra.mxu0 0.0
    %1645 = vmatprep.subr.mxu0 0.0
    %1646 = vmatpush2.msra.mxu0 0.0
    %1647 = vmatprep.subr.mxu0 0.0
    %1648 = vmatpush2.msra.mxu0 0.0
    %1649 = vmatprep.subr.mxu0 0.0
    %1650 = vmatpush2.msra.mxu0 0.0
    %1651 = vmatprep.mubr.f32.mxu0 0.0
    %1652 = vmatmul.mubr.f32.gmra.mxu0 %v1585
    %v1653 = vpop.f32.mrf.mxu0
    %v1654 = vadd.f32 0.0, %v1653
    %v1655 = vpop.f32.mrf.mxu0
    %1656 = vdwg.mxu0
    %1658 = vrot.lane.b32.xlu0 %v1581, 32
    %v1659 = vpop.permute.xlu0 %1658
    %v1660 = vsel %vm91, %v1659, 0
    %1662 = vmatprep.subr.mxu0 0.0
    %1663 = vmatpush1.msra.mxu0 0.0
    %1664 = vmatprep.subr.mxu0 0.0
    %1665 = vmatpush1.msra.mxu0 0.0
    %1666 = vmatprep.subr.mxu0 0.0
    %1667 = vmatpush1.msra.mxu0 0.0
    %1668 = vmatprep.subr.mxu0 0.0
    %1669 = vmatpush1.msra.mxu0 0.0
    %1670 = vmatprep.subr.mxu0 0.0
    %1671 = vmatpush1.msra.mxu0 0.0
    %1672 = vmatprep.subr.mxu0 0.0
    %1673 = vmatpush1.msra.mxu0 0.0
    %1674 = vmatprep.subr.mxu0 0.0
    %1675 = vmatpush1.msra.mxu0 0.0
    %1676 = vmatprep.subr.mxu0 0.0
    %1677 = vmatpush1.msra.mxu0 0.0
    %1678 = vmatprep.subr.mxu0 0.0
    %1679 = vmatpush1.msra.mxu0 0.0
    %1680 = vmatprep.subr.mxu0 0.0
    %1681 = vmatpush1.msra.mxu0 0.0
    %1682 = vmatprep.subr.mxu0 0.0
    %1683 = vmatpush1.msra.mxu0 0.0
    %1684 = vmatprep.subr.mxu0 0.0
    %1685 = vmatpush1.msra.mxu0 0.0
    %1686 = vmatprep.subr.mxu0 0.0
    %1687 = vmatpush1.msra.mxu0 %v392
    %1688 = vmatprep.subr.mxu0 0.0
    %1689 = vmatpush1.msra.mxu0 %v391
    %1690 = vmatprep.subr.mxu0 0.0
    %1691 = vmatpush1.msra.mxu0 %v390
    %1692 = vmatprep.subr.mxu0 0.0
    %1693 = vmatpush1.msra.mxu0 %v389
    %1694 = vmatprep.subr.mxu0 0.0
    %1695 = vmatpush2.msra.mxu0 0.0
    %1696 = vmatprep.subr.mxu0 0.0
    %1697 = vmatpush2.msra.mxu0 0.0
    %1698 = vmatprep.subr.mxu0 0.0
    %1699 = vmatpush2.msra.mxu0 0.0
    %1700 = vmatprep.subr.mxu0 0.0
    %1701 = vmatpush2.msra.mxu0 0.0
    %1702 = vmatprep.subr.mxu0 0.0
    %1703 = vmatpush2.msra.mxu0 0.0
    %1704 = vmatprep.subr.mxu0 0.0
    %1705 = vmatpush2.msra.mxu0 0.0
    %1706 = vmatprep.subr.mxu0 0.0
    %1707 = vmatpush2.msra.mxu0 0.0
    %1708 = vmatprep.subr.mxu0 0.0
    %1709 = vmatpush2.msra.mxu0 0.0
    %1710 = vmatprep.subr.mxu0 0.0
    %1711 = vmatpush2.msra.mxu0 0.0
    %1712 = vmatprep.subr.mxu0 0.0
    %1713 = vmatpush2.msra.mxu0 0.0
    %1714 = vmatprep.subr.mxu0 0.0
    %1715 = vmatpush2.msra.mxu0 0.0
    %1716 = vmatprep.subr.mxu0 0.0
    %1717 = vmatpush2.msra.mxu0 0.0
    %1718 = vmatprep.subr.mxu0 0.0
    %1719 = vmatpush2.msra.mxu0 0.0
    %1720 = vmatprep.subr.mxu0 0.0
    %1721 = vmatpush2.msra.mxu0 0.0
    %1722 = vmatprep.subr.mxu0 0.0
    %1723 = vmatpush2.msra.mxu0 0.0
    %1724 = vmatprep.subr.mxu0 0.0
    %1725 = vmatpush2.msra.mxu0 0.0
    %1726 = vmatprep.mubr.f32.mxu0 0.0
    %1727 = vmatmul.mubr.f32.gmra.mxu0 %v1660
    %v1728 = vpop.f32.mrf.mxu0
    %v1729 = vadd.f32 %v1654, %v1728
    %v1730 = vpop.f32.mrf.mxu0
    %1731 = vdwg.mxu0
    %v1732 = vadd.f32 %v1729, %v646
    %v1733 = vxor.u32 %v1732, 2147483648
    %v1734 = vmul.f32 %v1733, 1.442695
    %v1735 = vpow.pop %v1734
    %v1736 = vadd.f32 %v1735, 1.0
    %v1737 = vrcp.pop %v1736
    %v1738 = vmul.f32 1.0, %v1737
    %v1739 = vtanh.pop %v1732
    %v1740 = vmul.f32 %v1738, %v1479
    %1742 = vrot.lane.b32.xlu0 %v1739, 64
    %v1743 = vpop.permute.xlu0 %1742
    %v1745 = vmul.f32 %v1738, %v1743
    %1747 = vrot.lane.b32.xlu0 %v1745, 32
    %v1748 = vpop.permute.xlu0 %1747
    %v1750 = vadd.f32 %v1740, %v1748
    %v1751 = vtanh.pop %v1750
    %1753 = vrot.lane.b32.xlu0 %v1751, 64
    %v1754 = vpop.permute.xlu0 %1753
    %v1756 = vmul.f32 %v1738, %v1754
    %v1757 = vld [vmem:[#allocation2 + $0x28] sm:$0xff]
    %1758 = vmatprep.subr.mxu0 0.0
    %1759 = vmatpush1.msra.mxu0 0.0
    %1760 = vmatprep.subr.mxu0 0.0
    %1761 = vmatpush1.msra.mxu0 0.0
    %1762 = vmatprep.subr.mxu0 0.0
    %1763 = vmatpush1.msra.mxu0 0.0
    %1764 = vmatprep.subr.mxu0 0.0
    %1765 = vmatpush1.msra.mxu0 0.0
    %1766 = vmatprep.subr.mxu0 0.0
    %1767 = vmatpush1.msra.mxu0 0.0
    %1768 = vmatprep.subr.mxu0 0.0
    %1769 = vmatpush1.msra.mxu0 0.0
    %1770 = vmatprep.subr.mxu0 0.0
    %1771 = vmatpush1.msra.mxu0 0.0
    %1772 = vmatprep.subr.mxu0 0.0
    %1773 = vmatpush1.msra.mxu0 0.0
    %1774 = vmatprep.subr.mxu0 0.0
    %1775 = vmatpush1.msra.mxu0 0.0
    %1776 = vmatprep.subr.mxu0 0.0
    %1777 = vmatpush1.msra.mxu0 0.0
    %1778 = vmatprep.subr.mxu0 0.0
    %1779 = vmatpush1.msra.mxu0 0.0
    %1780 = vmatprep.subr.mxu0 0.0
    %1781 = vmatpush1.msra.mxu0 0.0
    %1782 = vmatprep.subr.mxu0 0.0
    %1783 = vmatpush1.msra.mxu0 %v388
    %1784 = vmatprep.subr.mxu0 0.0
    %1785 = vmatpush1.msra.mxu0 %v387
    %1786 = vmatprep.subr.mxu0 0.0
    %1787 = vmatpush1.msra.mxu0 %v386
    %1788 = vmatprep.subr.mxu0 0.0
    %1789 = vmatpush1.msra.mxu0 %v385
    %1790 = vmatprep.subr.mxu0 0.0
    %1791 = vmatpush2.msra.mxu0 0.0
    %1792 = vmatprep.subr.mxu0 0.0
    %1793 = vmatpush2.msra.mxu0 0.0
    %1794 = vmatprep.subr.mxu0 0.0
    %1795 = vmatpush2.msra.mxu0 0.0
    %1796 = vmatprep.subr.mxu0 0.0
    %1797 = vmatpush2.msra.mxu0 0.0
    %1798 = vmatprep.subr.mxu0 0.0
    %1799 = vmatpush2.msra.mxu0 0.0
    %1800 = vmatprep.subr.mxu0 0.0
    %1801 = vmatpush2.msra.mxu0 0.0
    %1802 = vmatprep.subr.mxu0 0.0
    %1803 = vmatpush2.msra.mxu0 0.0
    %1804 = vmatprep.subr.mxu0 0.0
    %1805 = vmatpush2.msra.mxu0 0.0
    %1806 = vmatprep.subr.mxu0 0.0
    %1807 = vmatpush2.msra.mxu0 0.0
    %1808 = vmatprep.subr.mxu0 0.0
    %1809 = vmatpush2.msra.mxu0 0.0
    %1810 = vmatprep.subr.mxu0 0.0
    %1811 = vmatpush2.msra.mxu0 0.0
    %1812 = vmatprep.subr.mxu0 0.0
    %1813 = vmatpush2.msra.mxu0 0.0
    %1814 = vmatprep.subr.mxu0 0.0
    %1815 = vmatpush2.msra.mxu0 0.0
    %1816 = vmatprep.subr.mxu0 0.0
    %1817 = vmatpush2.msra.mxu0 0.0
    %1818 = vmatprep.subr.mxu0 0.0
    %1819 = vmatpush2.msra.mxu0 0.0
    %1820 = vmatprep.subr.mxu0 0.0
    %1821 = vmatpush2.msra.mxu0 0.0
    %1822 = vmatprep.mubr.f32.mxu0 0.0
    %1823 = vmatmul.mubr.f32.gmra.mxu0 %v1660
    %v1824 = vpop.f32.mrf.mxu0
    %v1825 = vadd.f32 0.0, %v1824
    %v1826 = vpop.f32.mrf.mxu0
    %1827 = vdwg.mxu0
    %v1828 = vadd.f32 %v1757, %v1825
    %v1829 = vxor.u32 %v1828, 2147483648
    %v1830 = vmul.f32 %v1829, 1.442695
    %v1831 = vpow.pop %v1830
    %v1832 = vadd.f32 %v1831, 1.0
    %v1833 = vrcp.pop %v1832
    %v1834 = vmul.f32 1.0, %v1833
    %v1835 = vtanh.pop %v1828
    %v1836 = vmul.f32 %v1834, %v1575
    %1838 = vrot.lane.b32.xlu0 %v1835, 64
    %v1839 = vpop.permute.xlu0 %1838
    %v1841 = vmul.f32 %v1834, %v1839
    %1843 = vrot.lane.b32.xlu0 %v1841, 32
    %v1844 = vpop.permute.xlu0 %1843
    %v1846 = vadd.f32 %v1836, %v1844
    %v1847 = vtanh.pop %v1846
    %1849 = vrot.lane.b32.xlu0 %v1847, 64
    %v1850 = vpop.permute.xlu0 %1849
    %v1852 = vmul.f32 %v1834, %v1850
    %1854 = vrot.lane.b32.xlu0 %v1756, 32
    %v1855 = vpop.permute.xlu0 %1854
    %v1856 = vsel %vm91, %v1855, 0
    %1858 = vmatprep.subr.mxu0 0.0
    %1859 = vmatpush1.msra.mxu0 0.0
    %1860 = vmatprep.subr.mxu0 0.0
    %1861 = vmatpush1.msra.mxu0 0.0
    %1862 = vmatprep.subr.mxu0 0.0
    %1863 = vmatpush1.msra.mxu0 0.0
    %1864 = vmatprep.subr.mxu0 0.0
    %1865 = vmatpush1.msra.mxu0 0.0
    %1866 = vmatprep.subr.mxu0 0.0
    %1867 = vmatpush1.msra.mxu0 0.0
    %1868 = vmatprep.subr.mxu0 0.0
    %1869 = vmatpush1.msra.mxu0 0.0
    %1870 = vmatprep.subr.mxu0 0.0
    %1871 = vmatpush1.msra.mxu0 0.0
    %1872 = vmatprep.subr.mxu0 0.0
    %1873 = vmatpush1.msra.mxu0 0.0
    %1874 = vmatprep.subr.mxu0 0.0
    %1875 = vmatpush1.msra.mxu0 0.0
    %1876 = vmatprep.subr.mxu0 0.0
    %1877 = vmatpush1.msra.mxu0 0.0
    %1878 = vmatprep.subr.mxu0 0.0
    %1879 = vmatpush1.msra.mxu0 0.0
    %1880 = vmatprep.subr.mxu0 0.0
    %1881 = vmatpush1.msra.mxu0 0.0
    %1882 = vmatprep.subr.mxu0 0.0
    %1883 = vmatpush1.msra.mxu0 %v396
    %1884 = vmatprep.subr.mxu0 0.0
    %1885 = vmatpush1.msra.mxu0 %v395
    %1886 = vmatprep.subr.mxu0 0.0
    %1887 = vmatpush1.msra.mxu0 %v394
    %1888 = vmatprep.subr.mxu0 0.0
    %1889 = vmatpush1.msra.mxu0 %v393
    %1890 = vmatprep.subr.mxu0 0.0
    %1891 = vmatpush2.msra.mxu0 0.0
    %1892 = vmatprep.subr.mxu0 0.0
    %1893 = vmatpush2.msra.mxu0 0.0
    %1894 = vmatprep.subr.mxu0 0.0
    %1895 = vmatpush2.msra.mxu0 0.0
    %1896 = vmatprep.subr.mxu0 0.0
    %1897 = vmatpush2.msra.mxu0 0.0
    %1898 = vmatprep.subr.mxu0 0.0
    %1899 = vmatpush2.msra.mxu0 0.0
    %1900 = vmatprep.subr.mxu0 0.0
    %1901 = vmatpush2.msra.mxu0 0.0
    %1902 = vmatprep.subr.mxu0 0.0
    %1903 = vmatpush2.msra.mxu0 0.0
    %1904 = vmatprep.subr.mxu0 0.0
    %1905 = vmatpush2.msra.mxu0 0.0
    %1906 = vmatprep.subr.mxu0 0.0
    %1907 = vmatpush2.msra.mxu0 0.0
    %1908 = vmatprep.subr.mxu0 0.0
    %1909 = vmatpush2.msra.mxu0 0.0
    %1910 = vmatprep.subr.mxu0 0.0
    %1911 = vmatpush2.msra.mxu0 0.0
    %1912 = vmatprep.subr.mxu0 0.0
    %1913 = vmatpush2.msra.mxu0 0.0
    %1914 = vmatprep.subr.mxu0 0.0
    %1915 = vmatpush2.msra.mxu0 0.0
    %1916 = vmatprep.subr.mxu0 0.0
    %1917 = vmatpush2.msra.mxu0 0.0
    %1918 = vmatprep.subr.mxu0 0.0
    %1919 = vmatpush2.msra.mxu0 0.0
    %1920 = vmatprep.subr.mxu0 0.0
    %1921 = vmatpush2.msra.mxu0 0.0
    %1922 = vmatprep.mubr.f32.mxu0 0.0
    %1923 = vmatmul.mubr.f32.gmra.mxu0 %v1856
    %v1924 = vpop.f32.mrf.mxu0
    %v1925 = vadd.f32 0.0, %v1924
    %v1926 = vpop.f32.mrf.mxu0
    %1927 = vdwg.mxu0
    %1929 = vrot.lane.b32.xlu0 %v1852, 32
    %v1930 = vpop.permute.xlu0 %1929
    %v1931 = vsel %vm91, %v1930, 0
    %1933 = vmatprep.subr.mxu0 0.0
    %1934 = vmatpush1.msra.mxu0 0.0
    %1935 = vmatprep.subr.mxu0 0.0
    %1936 = vmatpush1.msra.mxu0 0.0
    %1937 = vmatprep.subr.mxu0 0.0
    %1938 = vmatpush1.msra.mxu0 0.0
    %1939 = vmatprep.subr.mxu0 0.0
    %1940 = vmatpush1.msra.mxu0 0.0
    %1941 = vmatprep.subr.mxu0 0.0
    %1942 = vmatpush1.msra.mxu0 0.0
    %1943 = vmatprep.subr.mxu0 0.0
    %1944 = vmatpush1.msra.mxu0 0.0
    %1945 = vmatprep.subr.mxu0 0.0
    %1946 = vmatpush1.msra.mxu0 0.0
    %1947 = vmatprep.subr.mxu0 0.0
    %1948 = vmatpush1.msra.mxu0 0.0
    %1949 = vmatprep.subr.mxu0 0.0
    %1950 = vmatpush1.msra.mxu0 0.0
    %1951 = vmatprep.subr.mxu0 0.0
    %1952 = vmatpush1.msra.mxu0 0.0
    %1953 = vmatprep.subr.mxu0 0.0
    %1954 = vmatpush1.msra.mxu0 0.0
    %1955 = vmatprep.subr.mxu0 0.0
    %1956 = vmatpush1.msra.mxu0 0.0
    %1957 = vmatprep.subr.mxu0 0.0
    %1958 = vmatpush1.msra.mxu0 %v392
    %1959 = vmatprep.subr.mxu0 0.0
    %1960 = vmatpush1.msra.mxu0 %v391
    %1961 = vmatprep.subr.mxu0 0.0
    %1962 = vmatpush1.msra.mxu0 %v390
    %1963 = vmatprep.subr.mxu0 0.0
    %1964 = vmatpush1.msra.mxu0 %v389
    %1965 = vmatprep.subr.mxu0 0.0
    %1966 = vmatpush2.msra.mxu0 0.0
    %1967 = vmatprep.subr.mxu0 0.0
    %1968 = vmatpush2.msra.mxu0 0.0
    %1969 = vmatprep.subr.mxu0 0.0
    %1970 = vmatpush2.msra.mxu0 0.0
    %1971 = vmatprep.subr.mxu0 0.0
    %1972 = vmatpush2.msra.mxu0 0.0
    %1973 = vmatprep.subr.mxu0 0.0
    %1974 = vmatpush2.msra.mxu0 0.0
    %1975 = vmatprep.subr.mxu0 0.0
    %1976 = vmatpush2.msra.mxu0 0.0
    %1977 = vmatprep.subr.mxu0 0.0
    %1978 = vmatpush2.msra.mxu0 0.0
    %1979 = vmatprep.subr.mxu0 0.0
    %1980 = vmatpush2.msra.mxu0 0.0
    %1981 = vmatprep.subr.mxu0 0.0
    %1982 = vmatpush2.msra.mxu0 0.0
    %1983 = vmatprep.subr.mxu0 0.0
    %1984 = vmatpush2.msra.mxu0 0.0
    %1985 = vmatprep.subr.mxu0 0.0
    %1986 = vmatpush2.msra.mxu0 0.0
    %1987 = vmatprep.subr.mxu0 0.0
    %1988 = vmatpush2.msra.mxu0 0.0
    %1989 = vmatprep.subr.mxu0 0.0
    %1990 = vmatpush2.msra.mxu0 0.0
    %1991 = vmatprep.subr.mxu0 0.0
    %1992 = vmatpush2.msra.mxu0 0.0
    %1993 = vmatprep.subr.mxu0 0.0
    %1994 = vmatpush2.msra.mxu0 0.0
    %1995 = vmatprep.subr.mxu0 0.0
    %1996 = vmatpush2.msra.mxu0 0.0
    %1997 = vmatprep.mubr.f32.mxu0 0.0
    %1998 = vmatmul.mubr.f32.gmra.mxu0 %v1931
    %v1999 = vpop.f32.mrf.mxu0
    %v2000 = vadd.f32 %v1925, %v1999
    %v2001 = vpop.f32.mrf.mxu0
    %2002 = vdwg.mxu0
    %v2003 = vadd.f32 %v2000, %v646
    %v2004 = vxor.u32 %v2003, 2147483648
    %v2005 = vmul.f32 %v2004, 1.442695
    %v2006 = vpow.pop %v2005
    %v2007 = vadd.f32 %v2006, 1.0
    %v2008 = vrcp.pop %v2007
    %v2009 = vmul.f32 1.0, %v2008
    %v2010 = vtanh.pop %v2003
    %v2011 = vmul.f32 %v2009, %v1750
    %2013 = vrot.lane.b32.xlu0 %v2010, 64
    %v2014 = vpop.permute.xlu0 %2013
    %v2016 = vmul.f32 %v2009, %v2014
    %2018 = vrot.lane.b32.xlu0 %v2016, 32
    %v2019 = vpop.permute.xlu0 %2018
    %v2021 = vadd.f32 %v2011, %v2019
    %v2022 = vtanh.pop %v2021
    %2024 = vrot.lane.b32.xlu0 %v2022, 64
    %v2025 = vpop.permute.xlu0 %2024
    %v2027 = vmul.f32 %v2009, %v2025
    %v2028 = vld [vmem:[#allocation2 + $0x30] sm:$0xff]
    %2029 = vmatprep.subr.mxu0 0.0
    %2030 = vmatpush1.msra.mxu0 0.0
    %2031 = vmatprep.subr.mxu0 0.0
    %2032 = vmatpush1.msra.mxu0 0.0
    %2033 = vmatprep.subr.mxu0 0.0
    %2034 = vmatpush1.msra.mxu0 0.0
    %2035 = vmatprep.subr.mxu0 0.0
    %2036 = vmatpush1.msra.mxu0 0.0
    %2037 = vmatprep.subr.mxu0 0.0
    %2038 = vmatpush1.msra.mxu0 0.0
    %2039 = vmatprep.subr.mxu0 0.0
    %2040 = vmatpush1.msra.mxu0 0.0
    %2041 = vmatprep.subr.mxu0 0.0
    %2042 = vmatpush1.msra.mxu0 0.0
    %2043 = vmatprep.subr.mxu0 0.0
    %2044 = vmatpush1.msra.mxu0 0.0
    %2045 = vmatprep.subr.mxu0 0.0
    %2046 = vmatpush1.msra.mxu0 0.0
    %2047 = vmatprep.subr.mxu0 0.0
    %2048 = vmatpush1.msra.mxu0 0.0
    %2049 = vmatprep.subr.mxu0 0.0
    %2050 = vmatpush1.msra.mxu0 0.0
    %2051 = vmatprep.subr.mxu0 0.0
    %2052 = vmatpush1.msra.mxu0 0.0
    %2053 = vmatprep.subr.mxu0 0.0
    %2054 = vmatpush1.msra.mxu0 %v388
    %2055 = vmatprep.subr.mxu0 0.0
    %2056 = vmatpush1.msra.mxu0 %v387
    %2057 = vmatprep.subr.mxu0 0.0
    %2058 = vmatpush1.msra.mxu0 %v386
    %2059 = vmatprep.subr.mxu0 0.0
    %2060 = vmatpush1.msra.mxu0 %v385
    %2061 = vmatprep.subr.mxu0 0.0
    %2062 = vmatpush2.msra.mxu0 0.0
    %2063 = vmatprep.subr.mxu0 0.0
    %2064 = vmatpush2.msra.mxu0 0.0
    %2065 = vmatprep.subr.mxu0 0.0
    %2066 = vmatpush2.msra.mxu0 0.0
    %2067 = vmatprep.subr.mxu0 0.0
    %2068 = vmatpush2.msra.mxu0 0.0
    %2069 = vmatprep.subr.mxu0 0.0
    %2070 = vmatpush2.msra.mxu0 0.0
    %2071 = vmatprep.subr.mxu0 0.0
    %2072 = vmatpush2.msra.mxu0 0.0
    %2073 = vmatprep.subr.mxu0 0.0
    %2074 = vmatpush2.msra.mxu0 0.0
    %2075 = vmatprep.subr.mxu0 0.0
    %2076 = vmatpush2.msra.mxu0 0.0
    %2077 = vmatprep.subr.mxu0 0.0
    %2078 = vmatpush2.msra.mxu0 0.0
    %2079 = vmatprep.subr.mxu0 0.0
    %2080 = vmatpush2.msra.mxu0 0.0
    %2081 = vmatprep.subr.mxu0 0.0
    %2082 = vmatpush2.msra.mxu0 0.0
    %2083 = vmatprep.subr.mxu0 0.0
    %2084 = vmatpush2.msra.mxu0 0.0
    %2085 = vmatprep.subr.mxu0 0.0
    %2086 = vmatpush2.msra.mxu0 0.0
    %2087 = vmatprep.subr.mxu0 0.0
    %2088 = vmatpush2.msra.mxu0 0.0
    %2089 = vmatprep.subr.mxu0 0.0
    %2090 = vmatpush2.msra.mxu0 0.0
    %2091 = vmatprep.subr.mxu0 0.0
    %2092 = vmatpush2.msra.mxu0 0.0
    %2093 = vmatprep.mubr.f32.mxu0 0.0
    %2094 = vmatmul.mubr.f32.gmra.mxu0 %v1931
    %v2095 = vpop.f32.mrf.mxu0
    %v2096 = vadd.f32 0.0, %v2095
    %v2097 = vpop.f32.mrf.mxu0
    %2098 = vdwg.mxu0
    %v2099 = vadd.f32 %v2028, %v2096
    %v2100 = vxor.u32 %v2099, 2147483648
    %v2101 = vmul.f32 %v2100, 1.442695
    %v2102 = vpow.pop %v2101
    %v2103 = vadd.f32 %v2102, 1.0
    %v2104 = vrcp.pop %v2103
    %v2105 = vmul.f32 1.0, %v2104
    %v2106 = vtanh.pop %v2099
    %v2107 = vmul.f32 %v2105, %v1846
    %2109 = vrot.lane.b32.xlu0 %v2106, 64
    %v2110 = vpop.permute.xlu0 %2109
    %v2112 = vmul.f32 %v2105, %v2110
    %2114 = vrot.lane.b32.xlu0 %v2112, 32
    %v2115 = vpop.permute.xlu0 %2114
    %v2117 = vadd.f32 %v2107, %v2115
    %v2118 = vtanh.pop %v2117
    %2120 = vrot.lane.b32.xlu0 %v2118, 64
    %v2121 = vpop.permute.xlu0 %2120
    %v2123 = vmul.f32 %v2105, %v2121
    %2125 = vrot.lane.b32.xlu0 %v2027, 32
    %v2126 = vpop.permute.xlu0 %2125
    %v2127 = vsel %vm91, %v2126, 0
    %2129 = vmatprep.subr.mxu0 0.0
    %2130 = vmatpush1.msra.mxu0 0.0
    %2131 = vmatprep.subr.mxu0 0.0
    %2132 = vmatpush1.msra.mxu0 0.0
    %2133 = vmatprep.subr.mxu0 0.0
    %2134 = vmatpush1.msra.mxu0 0.0
    %2135 = vmatprep.subr.mxu0 0.0
    %2136 = vmatpush1.msra.mxu0 0.0
    %2137 = vmatprep.subr.mxu0 0.0
    %2138 = vmatpush1.msra.mxu0 0.0
    %2139 = vmatprep.subr.mxu0 0.0
    %2140 = vmatpush1.msra.mxu0 0.0
    %2141 = vmatprep.subr.mxu0 0.0
    %2142 = vmatpush1.msra.mxu0 0.0
    %2143 = vmatprep.subr.mxu0 0.0
    %2144 = vmatpush1.msra.mxu0 0.0
    %2145 = vmatprep.subr.mxu0 0.0
    %2146 = vmatpush1.msra.mxu0 0.0
    %2147 = vmatprep.subr.mxu0 0.0
    %2148 = vmatpush1.msra.mxu0 0.0
    %2149 = vmatprep.subr.mxu0 0.0
    %2150 = vmatpush1.msra.mxu0 0.0
    %2151 = vmatprep.subr.mxu0 0.0
    %2152 = vmatpush1.msra.mxu0 0.0
    %2153 = vmatprep.subr.mxu0 0.0
    %2154 = vmatpush1.msra.mxu0 %v396
    %2155 = vmatprep.subr.mxu0 0.0
    %2156 = vmatpush1.msra.mxu0 %v395
    %2157 = vmatprep.subr.mxu0 0.0
    %2158 = vmatpush1.msra.mxu0 %v394
    %2159 = vmatprep.subr.mxu0 0.0
    %2160 = vmatpush1.msra.mxu0 %v393
    %2161 = vmatprep.subr.mxu0 0.0
    %2162 = vmatpush2.msra.mxu0 0.0
    %2163 = vmatprep.subr.mxu0 0.0
    %2164 = vmatpush2.msra.mxu0 0.0
    %2165 = vmatprep.subr.mxu0 0.0
    %2166 = vmatpush2.msra.mxu0 0.0
    %2167 = vmatprep.subr.mxu0 0.0
    %2168 = vmatpush2.msra.mxu0 0.0
    %2169 = vmatprep.subr.mxu0 0.0
    %2170 = vmatpush2.msra.mxu0 0.0
    %2171 = vmatprep.subr.mxu0 0.0
    %2172 = vmatpush2.msra.mxu0 0.0
    %2173 = vmatprep.subr.mxu0 0.0
    %2174 = vmatpush2.msra.mxu0 0.0
    %2175 = vmatprep.subr.mxu0 0.0
    %2176 = vmatpush2.msra.mxu0 0.0
    %2177 = vmatprep.subr.mxu0 0.0
    %2178 = vmatpush2.msra.mxu0 0.0
    %2179 = vmatprep.subr.mxu0 0.0
    %2180 = vmatpush2.msra.mxu0 0.0
    %2181 = vmatprep.subr.mxu0 0.0
    %2182 = vmatpush2.msra.mxu0 0.0
    %2183 = vmatprep.subr.mxu0 0.0
    %2184 = vmatpush2.msra.mxu0 0.0
    %2185 = vmatprep.subr.mxu0 0.0
    %2186 = vmatpush2.msra.mxu0 0.0
    %2187 = vmatprep.subr.mxu0 0.0
    %2188 = vmatpush2.msra.mxu0 0.0
    %2189 = vmatprep.subr.mxu0 0.0
    %2190 = vmatpush2.msra.mxu0 0.0
    %2191 = vmatprep.subr.mxu0 0.0
    %2192 = vmatpush2.msra.mxu0 0.0
    %2193 = vmatprep.mubr.f32.mxu0 0.0
    %2194 = vmatmul.mubr.f32.gmra.mxu0 %v2127
    %v2195 = vpop.f32.mrf.mxu0
    %v2196 = vadd.f32 0.0, %v2195
    %v2197 = vpop.f32.mrf.mxu0
    %2198 = vdwg.mxu0
    %2200 = vrot.lane.b32.xlu0 %v2123, 32
    %v2201 = vpop.permute.xlu0 %2200
    %v2202 = vsel %vm91, %v2201, 0
    %2204 = vmatprep.subr.mxu0 0.0
    %2205 = vmatpush1.msra.mxu0 0.0
    %2206 = vmatprep.subr.mxu0 0.0
    %2207 = vmatpush1.msra.mxu0 0.0
    %2208 = vmatprep.subr.mxu0 0.0
    %2209 = vmatpush1.msra.mxu0 0.0
    %2210 = vmatprep.subr.mxu0 0.0
    %2211 = vmatpush1.msra.mxu0 0.0
    %2212 = vmatprep.subr.mxu0 0.0
    %2213 = vmatpush1.msra.mxu0 0.0
    %2214 = vmatprep.subr.mxu0 0.0
    %2215 = vmatpush1.msra.mxu0 0.0
    %2216 = vmatprep.subr.mxu0 0.0
    %2217 = vmatpush1.msra.mxu0 0.0
    %2218 = vmatprep.subr.mxu0 0.0
    %2219 = vmatpush1.msra.mxu0 0.0
    %2220 = vmatprep.subr.mxu0 0.0
    %2221 = vmatpush1.msra.mxu0 0.0
    %2222 = vmatprep.subr.mxu0 0.0
    %2223 = vmatpush1.msra.mxu0 0.0
    %2224 = vmatprep.subr.mxu0 0.0
    %2225 = vmatpush1.msra.mxu0 0.0
    %2226 = vmatprep.subr.mxu0 0.0
    %2227 = vmatpush1.msra.mxu0 0.0
    %2228 = vmatprep.subr.mxu0 0.0
    %2229 = vmatpush1.msra.mxu0 %v392
    %2230 = vmatprep.subr.mxu0 0.0
    %2231 = vmatpush1.msra.mxu0 %v391
    %2232 = vmatprep.subr.mxu0 0.0
    %2233 = vmatpush1.msra.mxu0 %v390
    %2234 = vmatprep.subr.mxu0 0.0
    %2235 = vmatpush1.msra.mxu0 %v389
    %2236 = vmatprep.subr.mxu0 0.0
    %2237 = vmatpush2.msra.mxu0 0.0
    %2238 = vmatprep.subr.mxu0 0.0
    %2239 = vmatpush2.msra.mxu0 0.0
    %2240 = vmatprep.subr.mxu0 0.0
    %2241 = vmatpush2.msra.mxu0 0.0
    %2242 = vmatprep.subr.mxu0 0.0
    %2243 = vmatpush2.msra.mxu0 0.0
    %2244 = vmatprep.subr.mxu0 0.0
    %2245 = vmatpush2.msra.mxu0 0.0
    %2246 = vmatprep.subr.mxu0 0.0
    %2247 = vmatpush2.msra.mxu0 0.0
    %2248 = vmatprep.subr.mxu0 0.0
    %2249 = vmatpush2.msra.mxu0 0.0
    %2250 = vmatprep.subr.mxu0 0.0
    %2251 = vmatpush2.msra.mxu0 0.0
    %2252 = vmatprep.subr.mxu0 0.0
    %2253 = vmatpush2.msra.mxu0 0.0
    %2254 = vmatprep.subr.mxu0 0.0
    %2255 = vmatpush2.msra.mxu0 0.0
    %2256 = vmatprep.subr.mxu0 0.0
    %2257 = vmatpush2.msra.mxu0 0.0
    %2258 = vmatprep.subr.mxu0 0.0
    %2259 = vmatpush2.msra.mxu0 0.0
    %2260 = vmatprep.subr.mxu0 0.0
    %2261 = vmatpush2.msra.mxu0 0.0
    %2262 = vmatprep.subr.mxu0 0.0
    %2263 = vmatpush2.msra.mxu0 0.0
    %2264 = vmatprep.subr.mxu0 0.0
    %2265 = vmatpush2.msra.mxu0 0.0
    %2266 = vmatprep.subr.mxu0 0.0
    %2267 = vmatpush2.msra.mxu0 0.0
    %2268 = vmatprep.mubr.f32.mxu0 0.0
    %2269 = vmatmul.mubr.f32.gmra.mxu0 %v2202
    %v2270 = vpop.f32.mrf.mxu0
    %v2271 = vadd.f32 %v2196, %v2270
    %v2272 = vpop.f32.mrf.mxu0
    %2273 = vdwg.mxu0
    %v2274 = vadd.f32 %v2271, %v646
    %v2275 = vxor.u32 %v2274, 2147483648
    %v2276 = vmul.f32 %v2275, 1.442695
    %v2277 = vpow.pop %v2276
    %v2278 = vadd.f32 %v2277, 1.0
    %v2279 = vrcp.pop %v2278
    %v2280 = vmul.f32 1.0, %v2279
    %v2281 = vtanh.pop %v2274
    %v2282 = vmul.f32 %v2280, %v2021
    %2284 = vrot.lane.b32.xlu0 %v2281, 64
    %v2285 = vpop.permute.xlu0 %2284
    %v2287 = vmul.f32 %v2280, %v2285
    %2289 = vrot.lane.b32.xlu0 %v2287, 32
    %v2290 = vpop.permute.xlu0 %2289
    %v2292 = vadd.f32 %v2282, %v2290
    %v2293 = vtanh.pop %v2292
    %2295 = vrot.lane.b32.xlu0 %v2293, 64
    %v2296 = vpop.permute.xlu0 %2295
    %v2298 = vmul.f32 %v2280, %v2296
    %v2299 = vld [vmem:[#allocation2 + $0x38] sm:$0xff]
    %2300 = vmatprep.subr.mxu0 0.0
    %2301 = vmatpush1.msra.mxu0 0.0
    %2302 = vmatprep.subr.mxu0 0.0
    %2303 = vmatpush1.msra.mxu0 0.0
    %2304 = vmatprep.subr.mxu0 0.0
    %2305 = vmatpush1.msra.mxu0 0.0
    %2306 = vmatprep.subr.mxu0 0.0
    %2307 = vmatpush1.msra.mxu0 0.0
    %2308 = vmatprep.subr.mxu0 0.0
    %2309 = vmatpush1.msra.mxu0 0.0
    %2310 = vmatprep.subr.mxu0 0.0
    %2311 = vmatpush1.msra.mxu0 0.0
    %2312 = vmatprep.subr.mxu0 0.0
    %2313 = vmatpush1.msra.mxu0 0.0
    %2314 = vmatprep.subr.mxu0 0.0
    %2315 = vmatpush1.msra.mxu0 0.0
    %2316 = vmatprep.subr.mxu0 0.0
    %2317 = vmatpush1.msra.mxu0 0.0
    %2318 = vmatprep.subr.mxu0 0.0
    %2319 = vmatpush1.msra.mxu0 0.0
    %2320 = vmatprep.subr.mxu0 0.0
    %2321 = vmatpush1.msra.mxu0 0.0
    %2322 = vmatprep.subr.mxu0 0.0
    %2323 = vmatpush1.msra.mxu0 0.0
    %2324 = vmatprep.subr.mxu0 0.0
    %2325 = vmatpush1.msra.mxu0 %v388
    %2326 = vmatprep.subr.mxu0 0.0
    %2327 = vmatpush1.msra.mxu0 %v387
    %2328 = vmatprep.subr.mxu0 0.0
    %2329 = vmatpush1.msra.mxu0 %v386
    %2330 = vmatprep.subr.mxu0 0.0
    %2331 = vmatpush1.msra.mxu0 %v385
    %2332 = vmatprep.subr.mxu0 0.0
    %2333 = vmatpush2.msra.mxu0 0.0
    %2334 = vmatprep.subr.mxu0 0.0
    %2335 = vmatpush2.msra.mxu0 0.0
    %2336 = vmatprep.subr.mxu0 0.0
    %2337 = vmatpush2.msra.mxu0 0.0
    %2338 = vmatprep.subr.mxu0 0.0
    %2339 = vmatpush2.msra.mxu0 0.0
    %2340 = vmatprep.subr.mxu0 0.0
    %2341 = vmatpush2.msra.mxu0 0.0
    %2342 = vmatprep.subr.mxu0 0.0
    %2343 = vmatpush2.msra.mxu0 0.0
    %2344 = vmatprep.subr.mxu0 0.0
    %2345 = vmatpush2.msra.mxu0 0.0
    %2346 = vmatprep.subr.mxu0 0.0
    %2347 = vmatpush2.msra.mxu0 0.0
    %2348 = vmatprep.subr.mxu0 0.0
    %2349 = vmatpush2.msra.mxu0 0.0
    %2350 = vmatprep.subr.mxu0 0.0
    %2351 = vmatpush2.msra.mxu0 0.0
    %2352 = vmatprep.subr.mxu0 0.0
    %2353 = vmatpush2.msra.mxu0 0.0
    %2354 = vmatprep.subr.mxu0 0.0
    %2355 = vmatpush2.msra.mxu0 0.0
    %2356 = vmatprep.subr.mxu0 0.0
    %2357 = vmatpush2.msra.mxu0 0.0
    %2358 = vmatprep.subr.mxu0 0.0
    %2359 = vmatpush2.msra.mxu0 0.0
    %2360 = vmatprep.subr.mxu0 0.0
    %2361 = vmatpush2.msra.mxu0 0.0
    %2362 = vmatprep.subr.mxu0 0.0
    %2363 = vmatpush2.msra.mxu0 0.0
    %2364 = vmatprep.mubr.f32.mxu0 0.0
    %2365 = vmatmul.mubr.f32.gmra.mxu0 %v2202
    %v2366 = vpop.f32.mrf.mxu0
    %v2367 = vadd.f32 0.0, %v2366
    %v2368 = vpop.f32.mrf.mxu0
    %2369 = vdwg.mxu0
    %v2370 = vadd.f32 %v2299, %v2367
    %v2371 = vxor.u32 %v2370, 2147483648
    %v2372 = vmul.f32 %v2371, 1.442695
    %v2373 = vpow.pop %v2372
    %v2374 = vadd.f32 %v2373, 1.0
    %v2375 = vrcp.pop %v2374
    %v2376 = vmul.f32 1.0, %v2375
    %v2377 = vtanh.pop %v2370
    %v2378 = vmul.f32 %v2376, %v2117
    %2380 = vrot.lane.b32.xlu0 %v2377, 64
    %v2381 = vpop.permute.xlu0 %2380
    %v2383 = vmul.f32 %v2376, %v2381
    %2385 = vrot.lane.b32.xlu0 %v2383, 32
    %v2386 = vpop.permute.xlu0 %2385
    %v2388 = vadd.f32 %v2378, %v2386
    %v2389 = vtanh.pop %v2388
    %2391 = vrot.lane.b32.xlu0 %v2389, 64
    %v2392 = vpop.permute.xlu0 %2391
    %v2394 = vmul.f32 %v2376, %v2392
    %2396 = vrot.lane.b32.xlu0 %v2298, 32
    %v2397 = vpop.permute.xlu0 %2396
    %v2398 = vsel %vm91, %v2397, 0
    %2400 = vmatprep.subr.mxu0 0.0
    %2401 = vmatpush1.msra.mxu0 0.0
    %2402 = vmatprep.subr.mxu0 0.0
    %2403 = vmatpush1.msra.mxu0 0.0
    %2404 = vmatprep.subr.mxu0 0.0
    %2405 = vmatpush1.msra.mxu0 0.0
    %2406 = vmatprep.subr.mxu0 0.0
    %2407 = vmatpush1.msra.mxu0 0.0
    %2408 = vmatprep.subr.mxu0 0.0
    %2409 = vmatpush1.msra.mxu0 0.0
    %2410 = vmatprep.subr.mxu0 0.0
    %2411 = vmatpush1.msra.mxu0 0.0
    %2412 = vmatprep.subr.mxu0 0.0
    %2413 = vmatpush1.msra.mxu0 0.0
    %2414 = vmatprep.subr.mxu0 0.0
    %2415 = vmatpush1.msra.mxu0 0.0
    %2416 = vmatprep.subr.mxu0 0.0
    %2417 = vmatpush1.msra.mxu0 0.0
    %2418 = vmatprep.subr.mxu0 0.0
    %2419 = vmatpush1.msra.mxu0 0.0
    %2420 = vmatprep.subr.mxu0 0.0
    %2421 = vmatpush1.msra.mxu0 0.0
    %2422 = vmatprep.subr.mxu0 0.0
    %2423 = vmatpush1.msra.mxu0 0.0
    %2424 = vmatprep.subr.mxu0 0.0
    %2425 = vmatpush1.msra.mxu0 %v396
    %2426 = vmatprep.subr.mxu0 0.0
    %2427 = vmatpush1.msra.mxu0 %v395
    %2428 = vmatprep.subr.mxu0 0.0
    %2429 = vmatpush1.msra.mxu0 %v394
    %2430 = vmatprep.subr.mxu0 0.0
    %2431 = vmatpush1.msra.mxu0 %v393
    %2432 = vmatprep.subr.mxu0 0.0
    %2433 = vmatpush2.msra.mxu0 0.0
    %2434 = vmatprep.subr.mxu0 0.0
    %2435 = vmatpush2.msra.mxu0 0.0
    %2436 = vmatprep.subr.mxu0 0.0
    %2437 = vmatpush2.msra.mxu0 0.0
    %2438 = vmatprep.subr.mxu0 0.0
    %2439 = vmatpush2.msra.mxu0 0.0
    %2440 = vmatprep.subr.mxu0 0.0
    %2441 = vmatpush2.msra.mxu0 0.0
    %2442 = vmatprep.subr.mxu0 0.0
    %2443 = vmatpush2.msra.mxu0 0.0
    %2444 = vmatprep.subr.mxu0 0.0
    %2445 = vmatpush2.msra.mxu0 0.0
    %2446 = vmatprep.subr.mxu0 0.0
    %2447 = vmatpush2.msra.mxu0 0.0
    %2448 = vmatprep.subr.mxu0 0.0
    %2449 = vmatpush2.msra.mxu0 0.0
    %2450 = vmatprep.subr.mxu0 0.0
    %2451 = vmatpush2.msra.mxu0 0.0
    %2452 = vmatprep.subr.mxu0 0.0
    %2453 = vmatpush2.msra.mxu0 0.0
    %2454 = vmatprep.subr.mxu0 0.0
    %2455 = vmatpush2.msra.mxu0 0.0
    %2456 = vmatprep.subr.mxu0 0.0
    %2457 = vmatpush2.msra.mxu0 0.0
    %2458 = vmatprep.subr.mxu0 0.0
    %2459 = vmatpush2.msra.mxu0 0.0
    %2460 = vmatprep.subr.mxu0 0.0
    %2461 = vmatpush2.msra.mxu0 0.0
    %2462 = vmatprep.subr.mxu0 0.0
    %2463 = vmatpush2.msra.mxu0 0.0
    %2464 = vmatprep.mubr.f32.mxu0 0.0
    %2465 = vmatmul.mubr.f32.gmra.mxu0 %v2398
    %v2466 = vpop.f32.mrf.mxu0
    %v2467 = vadd.f32 0.0, %v2466
    %v2468 = vpop.f32.mrf.mxu0
    %2469 = vdwg.mxu0
    %2471 = vrot.lane.b32.xlu0 %v2394, 32
    %v2472 = vpop.permute.xlu0 %2471
    %v2473 = vsel %vm91, %v2472, 0
    %2475 = vmatprep.subr.mxu0 0.0
    %2476 = vmatpush1.msra.mxu0 0.0
    %2477 = vmatprep.subr.mxu0 0.0
    %2478 = vmatpush1.msra.mxu0 0.0
    %2479 = vmatprep.subr.mxu0 0.0
    %2480 = vmatpush1.msra.mxu0 0.0
    %2481 = vmatprep.subr.mxu0 0.0
    %2482 = vmatpush1.msra.mxu0 0.0
    %2483 = vmatprep.subr.mxu0 0.0
    %2484 = vmatpush1.msra.mxu0 0.0
    %2485 = vmatprep.subr.mxu0 0.0
    %2486 = vmatpush1.msra.mxu0 0.0
    %2487 = vmatprep.subr.mxu0 0.0
    %2488 = vmatpush1.msra.mxu0 0.0
    %2489 = vmatprep.subr.mxu0 0.0
    %2490 = vmatpush1.msra.mxu0 0.0
    %2491 = vmatprep.subr.mxu0 0.0
    %2492 = vmatpush1.msra.mxu0 0.0
    %2493 = vmatprep.subr.mxu0 0.0
    %2494 = vmatpush1.msra.mxu0 0.0
    %2495 = vmatprep.subr.mxu0 0.0
    %2496 = vmatpush1.msra.mxu0 0.0
    %2497 = vmatprep.subr.mxu0 0.0
    %2498 = vmatpush1.msra.mxu0 0.0
    %2499 = vmatprep.subr.mxu0 0.0
    %2500 = vmatpush1.msra.mxu0 %v392
    %2501 = vmatprep.subr.mxu0 0.0
    %2502 = vmatpush1.msra.mxu0 %v391
    %2503 = vmatprep.subr.mxu0 0.0
    %2504 = vmatpush1.msra.mxu0 %v390
    %2505 = vmatprep.subr.mxu0 0.0
    %2506 = vmatpush1.msra.mxu0 %v389
    %2507 = vmatprep.subr.mxu0 0.0
    %2508 = vmatpush2.msra.mxu0 0.0
    %2509 = vmatprep.subr.mxu0 0.0
    %2510 = vmatpush2.msra.mxu0 0.0
    %2511 = vmatprep.subr.mxu0 0.0
    %2512 = vmatpush2.msra.mxu0 0.0
    %2513 = vmatprep.subr.mxu0 0.0
    %2514 = vmatpush2.msra.mxu0 0.0
    %2515 = vmatprep.subr.mxu0 0.0
    %2516 = vmatpush2.msra.mxu0 0.0
    %2517 = vmatprep.subr.mxu0 0.0
    %2518 = vmatpush2.msra.mxu0 0.0
    %2519 = vmatprep.subr.mxu0 0.0
    %2520 = vmatpush2.msra.mxu0 0.0
    %2521 = vmatprep.subr.mxu0 0.0
    %2522 = vmatpush2.msra.mxu0 0.0
    %2523 = vmatprep.subr.mxu0 0.0
    %2524 = vmatpush2.msra.mxu0 0.0
    %2525 = vmatprep.subr.mxu0 0.0
    %2526 = vmatpush2.msra.mxu0 0.0
    %2527 = vmatprep.subr.mxu0 0.0
    %2528 = vmatpush2.msra.mxu0 0.0
    %2529 = vmatprep.subr.mxu0 0.0
    %2530 = vmatpush2.msra.mxu0 0.0
    %2531 = vmatprep.subr.mxu0 0.0
    %2532 = vmatpush2.msra.mxu0 0.0
    %2533 = vmatprep.subr.mxu0 0.0
    %2534 = vmatpush2.msra.mxu0 0.0
    %2535 = vmatprep.subr.mxu0 0.0
    %2536 = vmatpush2.msra.mxu0 0.0
    %2537 = vmatprep.subr.mxu0 0.0
    %2538 = vmatpush2.msra.mxu0 0.0
    %2539 = vmatprep.mubr.f32.mxu0 0.0
    %2540 = vmatmul.mubr.f32.gmra.mxu0 %v2473
    %v2541 = vpop.f32.mrf.mxu0
    %v2542 = vadd.f32 %v2467, %v2541
    %v2543 = vpop.f32.mrf.mxu0
    %2544 = vdwg.mxu0
    %v2545 = vadd.f32 %v2542, %v646
    %v2546 = vxor.u32 %v2545, 2147483648
    %v2547 = vmul.f32 %v2546, 1.442695
    %v2548 = vpow.pop %v2547
    %v2549 = vadd.f32 %v2548, 1.0
    %v2550 = vrcp.pop %v2549
    %v2551 = vmul.f32 1.0, %v2550
    %v2552 = vtanh.pop %v2545
    %v2553 = vmul.f32 %v2551, %v2292
    %2555 = vrot.lane.b32.xlu0 %v2552, 64
    %v2556 = vpop.permute.xlu0 %2555
    %v2558 = vmul.f32 %v2551, %v2556
    %2560 = vrot.lane.b32.xlu0 %v2558, 32
    %v2561 = vpop.permute.xlu0 %2560
    %v2563 = vadd.f32 %v2553, %v2561
    %v2564 = vtanh.pop %v2563
    %2566 = vrot.lane.b32.xlu0 %v2564, 64
    %v2567 = vpop.permute.xlu0 %2566
    %v2569 = vmul.f32 %v2551, %v2567
    %v2570 = vld [vmem:[%s9] sm:$0xff]
    %v2571 = vld [vmem:[%s9 + $0x8] sm:$0xff]
    %v2572 = vld [vmem:[%s9 + $0x10] sm:$0xff]
    %v2573 = vld [vmem:[%s9 + $0x18] sm:$0xff]
    %v2574 = vld [vmem:[%s10] sm:$0xff]
    %v2575 = vld [vmem:[%s10 + $0x8] sm:$0xff]
    %v2576 = vld [vmem:[%s10 + $0x10] sm:$0xff]
    %v2577 = vld [vmem:[%s10 + $0x18] sm:$0xff]
    %v2578 = vld [vmem:[%s11] sm:$0x1]
    %v2579 = vld [vmem:[%s12] sm:$0xff]
    %v2580 = vld [vmem:[%s12 + $0x8] sm:$0xff]
    %v2581 = vld [vmem:[%s12 + $0x10] sm:$0xff]
    %v2582 = vld [vmem:[%s12 + $0x18] sm:$0xff]
    %v2583 = vld [vmem:[%s13] sm:$0xff]
    %v2584 = vld [vmem:[%s13 + $0x8] sm:$0xff]
    %v2585 = vld [vmem:[%s13 + $0x10] sm:$0xff]
    %v2586 = vld [vmem:[%s13 + $0x18] sm:$0xff]
    %v2587 = vld [vmem:[%s14] sm:$0x1]
    %v2588 = vld [vmem:[%s15] sm:$0xff]
    %v2589 = vld [vmem:[%s15 + $0x8] sm:$0xff]
    %v2590 = vld [vmem:[%s15 + $0x10] sm:$0xff]
    %v2591 = vld [vmem:[%s15 + $0x18] sm:$0xff]
    %v2592 = vld [vmem:[%s15 + $0x20] sm:$0xff]
    %v2593 = vld [vmem:[%s15 + $0x28] sm:$0xff]
    %v2594 = vld [vmem:[%s15 + $0x30] sm:$0xff]
    %v2595 = vld [vmem:[%s15 + $0x38] sm:$0xff]
    %v2596 = vld [vmem:[%s15 + $0x40] sm:$0xff]
    %v2597 = vld [vmem:[%s15 + $0x48] sm:$0xff]
    %v2598 = vld [vmem:[%s15 + $0x50] sm:$0xff]
    %v2599 = vld [vmem:[%s15 + $0x58] sm:$0xff]
    %v2600 = vld [vmem:[%s15 + $0x60] sm:$0xff]
    %v2601 = vld [vmem:[%s15 + $0x68] sm:$0xff]
    %v2602 = vld [vmem:[%s15 + $0x70] sm:$0xff]
    %v2603 = vld [vmem:[%s15 + $0x78] sm:$0xff]
    %v2604 = vld [vmem:[%s16] sm:$0xff]
    %v2605 = vld [vmem:[%s16 + $0x8] sm:$0xff]
    %v2606 = vld [vmem:[%s16 + $0x10] sm:$0xff]
    %v2607 = vld [vmem:[%s16 + $0x18] sm:$0xff]
    %v2608 = vld [vmem:[%s17] sm:$0x1]
    %v2609 = vlaneseq
    %v2610 = vand.u32 %v2609, 127
    %v2611 = vld [vmem:[#allocation3] sm:$0xff]
    %2612 = vst [vmem:[#allocation5] sm:$0xff] %v2611
    %v2613 = vld [vmem:[#allocation5] sm:$0xff]
    %2614 = vmatprep.subr.mxu0 0.0
    %2615 = vmatpush1.msra.mxu0 0.0
    %2616 = vmatprep.subr.mxu0 0.0
    %2617 = vmatpush1.msra.mxu0 0.0
    %2618 = vmatprep.subr.mxu0 0.0
    %2619 = vmatpush1.msra.mxu0 0.0
    %2620 = vmatprep.subr.mxu0 0.0
    %2621 = vmatpush1.msra.mxu0 0.0
    %2622 = vmatprep.subr.mxu0 0.0
    %2623 = vmatpush1.msra.mxu0 0.0
    %2624 = vmatprep.subr.mxu0 0.0
    %2625 = vmatpush1.msra.mxu0 0.0
    %2626 = vmatprep.subr.mxu0 0.0
    %2627 = vmatpush1.msra.mxu0 0.0
    %2628 = vmatprep.subr.mxu0 0.0
    %2629 = vmatpush1.msra.mxu0 0.0
    %2630 = vmatprep.subr.mxu0 0.0
    %2631 = vmatpush1.msra.mxu0 0.0
    %2632 = vmatprep.subr.mxu0 0.0
    %2633 = vmatpush1.msra.mxu0 0.0
    %2634 = vmatprep.subr.mxu0 0.0
    %2635 = vmatpush1.msra.mxu0 0.0
    %2636 = vmatprep.subr.mxu0 0.0
    %2637 = vmatpush1.msra.mxu0 0.0
    %2638 = vmatprep.subr.mxu0 0.0
    %2639 = vmatpush1.msra.mxu0 %v2577
    %2640 = vmatprep.subr.mxu0 0.0
    %2641 = vmatpush1.msra.mxu0 %v2576
    %2642 = vmatprep.subr.mxu0 0.0
    %2643 = vmatpush1.msra.mxu0 %v2575
    %2644 = vmatprep.subr.mxu0 0.0
    %2645 = vmatpush1.msra.mxu0 %v2574
    %2646 = vmatprep.subr.mxu0 0.0
    %2647 = vmatpush2.msra.mxu0 0.0
    %2648 = vmatprep.subr.mxu0 0.0
    %2649 = vmatpush2.msra.mxu0 0.0
    %2650 = vmatprep.subr.mxu0 0.0
    %2651 = vmatpush2.msra.mxu0 0.0
    %2652 = vmatprep.subr.mxu0 0.0
    %2653 = vmatpush2.msra.mxu0 0.0
    %2654 = vmatprep.subr.mxu0 0.0
    %2655 = vmatpush2.msra.mxu0 0.0
    %2656 = vmatprep.subr.mxu0 0.0
    %2657 = vmatpush2.msra.mxu0 0.0
    %2658 = vmatprep.subr.mxu0 0.0
    %2659 = vmatpush2.msra.mxu0 0.0
    %2660 = vmatprep.subr.mxu0 0.0
    %2661 = vmatpush2.msra.mxu0 0.0
    %2662 = vmatprep.subr.mxu0 0.0
    %2663 = vmatpush2.msra.mxu0 0.0
    %2664 = vmatprep.subr.mxu0 0.0
    %2665 = vmatpush2.msra.mxu0 0.0
    %2666 = vmatprep.subr.mxu0 0.0
    %2667 = vmatpush2.msra.mxu0 0.0
    %2668 = vmatprep.subr.mxu0 0.0
    %2669 = vmatpush2.msra.mxu0 0.0
    %2670 = vmatprep.subr.mxu0 0.0
    %2671 = vmatpush2.msra.mxu0 0.0
    %2672 = vmatprep.subr.mxu0 0.0
    %2673 = vmatpush2.msra.mxu0 0.0
    %2674 = vmatprep.subr.mxu0 0.0
    %2675 = vmatpush2.msra.mxu0 0.0
    %2676 = vmatprep.subr.mxu0 0.0
    %2677 = vmatpush2.msra.mxu0 0.0
    %2678 = vmatprep.mubr.f32.mxu0 0.0
    %2679 = vmatmul.mubr.f32.gmra.mxu0 %v2473
    %v2680 = vpop.f32.mrf.mxu0
    %v2681 = vadd.f32 0.0, %v2680
    %v2682 = vpop.f32.mrf.mxu0
    %2683 = vdwg.mxu0
    %v2684 = vadd.f32 %v2613, %v2681
    %v2685 = vxor.u32 %v2684, 2147483648
    %v2686 = vmul.f32 %v2685, 1.442695
    %v2687 = vpow.pop %v2686
    %v2688 = vadd.f32 %v2687, 1.0
    %v2689 = vrcp.pop %v2688
    %v2690 = vmul.f32 1.0, %v2689
    %v2691 = vtanh.pop %v2684
    %v2692 = vmul.f32 %v2690, %v2388
    %2694 = vrot.lane.b32.xlu0 %v2691, 64
    %v2695 = vpop.permute.xlu0 %2694
    %v2697 = vmul.f32 %v2690, %v2695
    %2699 = vrot.lane.b32.xlu0 %v2697, 32
    %v2700 = vpop.permute.xlu0 %2699
    %v2702 = vadd.f32 %v2692, %v2700
    %v2703 = vtanh.pop %v2702
    %2705 = vrot.lane.b32.xlu0 %v2703, 64
    %v2706 = vpop.permute.xlu0 %2705
    %v2708 = vmul.f32 %v2690, %v2706
    %2710 = vrot.lane.b32.xlu0 %v2569, 32
    %v2711 = vpop.permute.xlu0 %2710
    %v2712 = vsel %vm91, %v2711, 0
    %2714 = vmatprep.subr.mxu0 0.0
    %2715 = vmatpush1.msra.mxu0 0.0
    %2716 = vmatprep.subr.mxu0 0.0
    %2717 = vmatpush1.msra.mxu0 0.0
    %2718 = vmatprep.subr.mxu0 0.0
    %2719 = vmatpush1.msra.mxu0 0.0
    %2720 = vmatprep.subr.mxu0 0.0
    %2721 = vmatpush1.msra.mxu0 0.0
    %2722 = vmatprep.subr.mxu0 0.0
    %2723 = vmatpush1.msra.mxu0 0.0
    %2724 = vmatprep.subr.mxu0 0.0
    %2725 = vmatpush1.msra.mxu0 0.0
    %2726 = vmatprep.subr.mxu0 0.0
    %2727 = vmatpush1.msra.mxu0 0.0
    %2728 = vmatprep.subr.mxu0 0.0
    %2729 = vmatpush1.msra.mxu0 0.0
    %2730 = vmatprep.subr.mxu0 0.0
    %2731 = vmatpush1.msra.mxu0 0.0
    %2732 = vmatprep.subr.mxu0 0.0
    %2733 = vmatpush1.msra.mxu0 0.0
    %2734 = vmatprep.subr.mxu0 0.0
    %2735 = vmatpush1.msra.mxu0 0.0
    %2736 = vmatprep.subr.mxu0 0.0
    %2737 = vmatpush1.msra.mxu0 0.0
    %2738 = vmatprep.subr.mxu0 0.0
    %2739 = vmatpush1.msra.mxu0 %v2586
    %2740 = vmatprep.subr.mxu0 0.0
    %2741 = vmatpush1.msra.mxu0 %v2585
    %2742 = vmatprep.subr.mxu0 0.0
    %2743 = vmatpush1.msra.mxu0 %v2584
    %2744 = vmatprep.subr.mxu0 0.0
    %2745 = vmatpush1.msra.mxu0 %v2583
    %2746 = vmatprep.subr.mxu0 0.0
    %2747 = vmatpush2.msra.mxu0 0.0
    %2748 = vmatprep.subr.mxu0 0.0
    %2749 = vmatpush2.msra.mxu0 0.0
    %2750 = vmatprep.subr.mxu0 0.0
    %2751 = vmatpush2.msra.mxu0 0.0
    %2752 = vmatprep.subr.mxu0 0.0
    %2753 = vmatpush2.msra.mxu0 0.0
    %2754 = vmatprep.subr.mxu0 0.0
    %2755 = vmatpush2.msra.mxu0 0.0
    %2756 = vmatprep.subr.mxu0 0.0
    %2757 = vmatpush2.msra.mxu0 0.0
    %2758 = vmatprep.subr.mxu0 0.0
    %2759 = vmatpush2.msra.mxu0 0.0
    %2760 = vmatprep.subr.mxu0 0.0
    %2761 = vmatpush2.msra.mxu0 0.0
    %2762 = vmatprep.subr.mxu0 0.0
    %2763 = vmatpush2.msra.mxu0 0.0
    %2764 = vmatprep.subr.mxu0 0.0
    %2765 = vmatpush2.msra.mxu0 0.0
    %2766 = vmatprep.subr.mxu0 0.0
    %2767 = vmatpush2.msra.mxu0 0.0
    %2768 = vmatprep.subr.mxu0 0.0
    %2769 = vmatpush2.msra.mxu0 0.0
    %2770 = vmatprep.subr.mxu0 0.0
    %2771 = vmatpush2.msra.mxu0 0.0
    %2772 = vmatprep.subr.mxu0 0.0
    %2773 = vmatpush2.msra.mxu0 0.0
    %2774 = vmatprep.subr.mxu0 0.0
    %2775 = vmatpush2.msra.mxu0 0.0
    %2776 = vmatprep.subr.mxu0 0.0
    %2777 = vmatpush2.msra.mxu0 0.0
    %2778 = vmatprep.mubr.f32.mxu0 0.0
    %2779 = vmatmul.mubr.f32.gmra.mxu0 %v2712
    %v2780 = vpop.f32.mrf.mxu0
    %v2781 = vadd.f32 0.0, %v2780
    %v2782 = vpop.f32.mrf.mxu0
    %2783 = vdwg.mxu0
    %2785 = vrot.lane.b32.xlu0 %v2708, 32
    %v2786 = vpop.permute.xlu0 %2785
    %v2787 = vsel %vm91, %v2786, 0
    %2789 = vmatprep.subr.mxu0 0.0
    %2790 = vmatpush1.msra.mxu0 0.0
    %2791 = vmatprep.subr.mxu0 0.0
    %2792 = vmatpush1.msra.mxu0 0.0
    %2793 = vmatprep.subr.mxu0 0.0
    %2794 = vmatpush1.msra.mxu0 0.0
    %2795 = vmatprep.subr.mxu0 0.0
    %2796 = vmatpush1.msra.mxu0 0.0
    %2797 = vmatprep.subr.mxu0 0.0
    %2798 = vmatpush1.msra.mxu0 0.0
    %2799 = vmatprep.subr.mxu0 0.0
    %2800 = vmatpush1.msra.mxu0 0.0
    %2801 = vmatprep.subr.mxu0 0.0
    %2802 = vmatpush1.msra.mxu0 0.0
    %2803 = vmatprep.subr.mxu0 0.0
    %2804 = vmatpush1.msra.mxu0 0.0
    %2805 = vmatprep.subr.mxu0 0.0
    %2806 = vmatpush1.msra.mxu0 0.0
    %2807 = vmatprep.subr.mxu0 0.0
    %2808 = vmatpush1.msra.mxu0 0.0
    %2809 = vmatprep.subr.mxu0 0.0
    %2810 = vmatpush1.msra.mxu0 0.0
    %2811 = vmatprep.subr.mxu0 0.0
    %2812 = vmatpush1.msra.mxu0 0.0
    %2813 = vmatprep.subr.mxu0 0.0
    %2814 = vmatpush1.msra.mxu0 %v2582
    %2815 = vmatprep.subr.mxu0 0.0
    %2816 = vmatpush1.msra.mxu0 %v2581
    %2817 = vmatprep.subr.mxu0 0.0
    %2818 = vmatpush1.msra.mxu0 %v2580
    %2819 = vmatprep.subr.mxu0 0.0
    %2820 = vmatpush1.msra.mxu0 %v2579
    %2821 = vmatprep.subr.mxu0 0.0
    %2822 = vmatpush2.msra.mxu0 0.0
    %2823 = vmatprep.subr.mxu0 0.0
    %2824 = vmatpush2.msra.mxu0 0.0
    %2825 = vmatprep.subr.mxu0 0.0
    %2826 = vmatpush2.msra.mxu0 0.0
    %2827 = vmatprep.subr.mxu0 0.0
    %2828 = vmatpush2.msra.mxu0 0.0
    %2829 = vmatprep.subr.mxu0 0.0
    %2830 = vmatpush2.msra.mxu0 0.0
    %2831 = vmatprep.subr.mxu0 0.0
    %2832 = vmatpush2.msra.mxu0 0.0
    %2833 = vmatprep.subr.mxu0 0.0
    %2834 = vmatpush2.msra.mxu0 0.0
    %2835 = vmatprep.subr.mxu0 0.0
    %2836 = vmatpush2.msra.mxu0 0.0
    %2837 = vmatprep.subr.mxu0 0.0
    %2838 = vmatpush2.msra.mxu0 0.0
    %2839 = vmatprep.subr.mxu0 0.0
    %2840 = vmatpush2.msra.mxu0 0.0
    %2841 = vmatprep.subr.mxu0 0.0
    %2842 = vmatpush2.msra.mxu0 0.0
    %2843 = vmatprep.subr.mxu0 0.0
    %2844 = vmatpush2.msra.mxu0 0.0
    %2845 = vmatprep.subr.mxu0 0.0
    %2846 = vmatpush2.msra.mxu0 0.0
    %2847 = vmatprep.subr.mxu0 0.0
    %2848 = vmatpush2.msra.mxu0 0.0
    %2849 = vmatprep.subr.mxu0 0.0
    %2850 = vmatpush2.msra.mxu0 0.0
    %2851 = vmatprep.subr.mxu0 0.0
    %2852 = vmatpush2.msra.mxu0 0.0
    %2853 = vmatprep.mubr.f32.mxu0 0.0
    %2854 = vmatmul.mubr.f32.gmra.mxu0 %v2787
    %v2855 = vpop.f32.mrf.mxu0
    %v2856 = vadd.f32 %v2781, %v2855
    %v2857 = vpop.f32.mrf.mxu0
    %2858 = vdwg.mxu0
    %v2860 = vlaneseq
    %v2861 = vshrl.u32 %v2860, 7
    %v2862 = vsub.s32 0, %v2861
    %v2863 = vrot.slane %v2587, %v2862
    %v2865 = vadd.f32 %v2856, %v2863
    %v2866 = vxor.u32 %v2865, 2147483648
    %v2867 = vmul.f32 %v2866, 1.442695
    %v2868 = vpow.pop %v2867
    %v2869 = vadd.f32 %v2868, 1.0
    %v2870 = vrcp.pop %v2869
    %v2871 = vmul.f32 1.0, %v2870
    %v2872 = vtanh.pop %v2865
    %v2873 = vmul.f32 %v2871, %v2563
    %2875 = vrot.lane.b32.xlu0 %v2872, 64
    %v2876 = vpop.permute.xlu0 %2875
    %v2878 = vmul.f32 %v2871, %v2876
    %2880 = vrot.lane.b32.xlu0 %v2878, 32
    %v2881 = vpop.permute.xlu0 %2880
    %v2883 = vadd.f32 %v2873, %v2881
    %v2884 = vtanh.pop %v2883
    %2886 = vrot.lane.b32.xlu0 %v2884, 64
    %v2887 = vpop.permute.xlu0 %2886
    %v2889 = vmul.f32 %v2871, %v2887
    %2891 = vrot.lane.b32.xlu0 %v2889, 32
    %v2892 = vpop.permute.xlu0 %2891
    %2894 = vst.msk [vmem:[#allocation4] sm:$0xff] %vm91, %v2892
    %s2895 = sld [smem:[#allocation6]]
    %p2896 = scmp.eq.s32.totalorder %s2895, 1
    // Predicated region
    $region78: #{_seq2seq_jit.1} parent=1 // pred_check
      %p2897 = pneg %p2896
    $region79: #{_seq2seq_jit.1} parent=1 // pred_check_branch
      %2899 = sbr.rel (%p2897) target = $region81
    $region80: #{_seq2seq_jit.1} parent=1 // pred_region
      %v2900 = vld [vmem:[#allocation3 + $0x8] sm:$0xff]
      %2901 = vst [vmem:[#allocation5] sm:$0xff] %v2900
    $region81: #{_seq2seq_jit.1} parent=1 // pred_fallthru
      _
    %p2902 = scmp.ne.s32.totalorder %s2895, 1
    // Predicated region
    $region82: #{_seq2seq_jit.1} parent=1 // pred_check
      %p2903 = pneg %p2902
    $region83: #{_seq2seq_jit.1} parent=1 // pred_check_branch
      %2905 = sbr.rel (%p2903) target = $region85
    $region84: #{_seq2seq_jit.1} parent=1 // pred_region
      %v2907 = vlaneseq
      %v2908 = vshrl.u32 %v2907, 7
      %v2909 = vsub.s32 0, %v2908
      %v2910 = vrot.slane %v2608, %v2909
      %v2912 = vsel %vm91, %v2892, 0
      %2914 = vmatprep.subr.mxu0 0.0
      %2915 = vmatpush1.msra.mxu0 0.0
      %2916 = vmatprep.subr.mxu0 0.0
      %2917 = vmatpush1.msra.mxu0 0.0
      %2918 = vmatprep.subr.mxu0 0.0
      %2919 = vmatpush1.msra.mxu0 0.0
      %2920 = vmatprep.subr.mxu0 0.0
      %2921 = vmatpush1.msra.mxu0 0.0
      %2922 = vmatprep.subr.mxu0 0.0
      %2923 = vmatpush1.msra.mxu0 0.0
      %2924 = vmatprep.subr.mxu0 0.0
      %2925 = vmatpush1.msra.mxu0 0.0
      %2926 = vmatprep.subr.mxu0 0.0
      %2927 = vmatpush1.msra.mxu0 0.0
      %2928 = vmatprep.subr.mxu0 0.0
      %2929 = vmatpush1.msra.mxu0 0.0
      %2930 = vmatprep.subr.mxu0 0.0
      %2931 = vmatpush1.msra.mxu0 0.0
      %2932 = vmatprep.subr.mxu0 0.0
      %2933 = vmatpush1.msra.mxu0 0.0
      %2934 = vmatprep.subr.mxu0 0.0
      %2935 = vmatpush1.msra.mxu0 0.0
      %2936 = vmatprep.subr.mxu0 0.0
      %2937 = vmatpush1.msra.mxu0 0.0
      %2938 = vmatprep.subr.mxu0 0.0
      %2939 = vmatpush1.msra.mxu0 %v2607
      %2940 = vmatprep.subr.mxu0 0.0
      %2941 = vmatpush1.msra.mxu0 %v2606
      %2942 = vmatprep.subr.mxu0 0.0
      %2943 = vmatpush1.msra.mxu0 %v2605
      %2944 = vmatprep.subr.mxu0 0.0
      %2945 = vmatpush1.msra.mxu0 %v2604
      %2946 = vmatprep.subr.mxu0 0.0
      %2947 = vmatpush2.msra.mxu0 0.0
      %2948 = vmatprep.subr.mxu0 0.0
      %2949 = vmatpush2.msra.mxu0 0.0
      %2950 = vmatprep.subr.mxu0 0.0
      %2951 = vmatpush2.msra.mxu0 0.0
      %2952 = vmatprep.subr.mxu0 0.0
      %2953 = vmatpush2.msra.mxu0 0.0
      %2954 = vmatprep.subr.mxu0 0.0
      %2955 = vmatpush2.msra.mxu0 0.0
      %2956 = vmatprep.subr.mxu0 0.0
      %2957 = vmatpush2.msra.mxu0 0.0
      %2958 = vmatprep.subr.mxu0 0.0
      %2959 = vmatpush2.msra.mxu0 0.0
      %2960 = vmatprep.subr.mxu0 0.0
      %2961 = vmatpush2.msra.mxu0 0.0
      %2962 = vmatprep.subr.mxu0 0.0
      %2963 = vmatpush2.msra.mxu0 0.0
      %2964 = vmatprep.subr.mxu0 0.0
      %2965 = vmatpush2.msra.mxu0 0.0
      %2966 = vmatprep.subr.mxu0 0.0
      %2967 = vmatpush2.msra.mxu0 0.0
      %2968 = vmatprep.subr.mxu0 0.0
      %2969 = vmatpush2.msra.mxu0 0.0
      %2970 = vmatprep.subr.mxu0 0.0
      %2971 = vmatpush2.msra.mxu0 0.0
      %2972 = vmatprep.subr.mxu0 0.0
      %2973 = vmatpush2.msra.mxu0 0.0
      %2974 = vmatprep.subr.mxu0 0.0
      %2975 = vmatpush2.msra.mxu0 0.0
      %2976 = vmatprep.subr.mxu0 0.0
      %2977 = vmatpush2.msra.mxu0 0.0
      %2978 = vmatprep.mubr.f32.mxu0 0.0
      %2979 = vmatmul.mubr.f32.gmra.mxu0 %v2912
      %v2980 = vpop.f32.mrf.mxu0
      %v2981 = vadd.f32 %v2910, %v2980
      %v2982 = vpop.f32.mrf.mxu0
      %2983 = vdwg.mxu0
      %2984 = vmax.xlane.f32.xlu0 %v2981
      %v2985 = vpop.xlane.xlu0 %2984
      %vm2986 = vcmp.eq.f32.partialorder %v2981, %v2985
      %v2987 = vsel %vm2986, %v2610, 128
      %v2988 = vand.u32 %v2987, 65535
      %v2989 = vshra.s32 %v2987, 16
      %v2990 = vcvt.s32.f32 %v2988
      %v2991 = vcvt.s32.f32 %v2989
      %2992 = vmin.xlane.f32.xlu0 %v2991
      %v2993 = vpop.xlane.xlu0 %2992
      %vm2994 = vcmp.eq.f32.partialorder %v2991, %v2993
      %v2995 = vsel %vm2994, %v2990, inf
      %2996 = vmin.xlane.f32.xlu0 %v2995
      %v2997 = vpop.xlane.xlu0 %2996
      %v2998 = vcvt.f32.s32 %v2997
      %v2999 = vcvt.f32.s32 %v2993
      %v3000 = vshll.u32 %v2999, 16
      %v3001 = vadd.s32 %v3000, %v2998
      %vm3002 = vcmp.eq.s32.totalorder %v2610, %v3001
      %v3003 = vsel %vm3002, 1, 0
      %v3004 = vcvt.s32.f32 %v3003
      %3005 = vmatprep.subr.mxu0 0.0
      %3006 = vmatpush1.msra.mxu0 %v2603
      %3007 = vmatprep.subr.mxu0 0.0
      %3008 = vmatpush1.msra.mxu0 %v2602
      %3009 = vmatprep.subr.mxu0 0.0
      %3010 = vmatpush1.msra.mxu0 %v2601
      %3011 = vmatprep.subr.mxu0 0.0
      %3012 = vmatpush1.msra.mxu0 %v2600
      %3013 = vmatprep.subr.mxu0 0.0
      %3014 = vmatpush1.msra.mxu0 %v2599
      %3015 = vmatprep.subr.mxu0 0.0
      %3016 = vmatpush1.msra.mxu0 %v2598
      %3017 = vmatprep.subr.mxu0 0.0
      %3018 = vmatpush1.msra.mxu0 %v2597
      %3019 = vmatprep.subr.mxu0 0.0
      %3020 = vmatpush1.msra.mxu0 %v2596
      %3021 = vmatprep.subr.mxu0 0.0
      %3022 = vmatpush1.msra.mxu0 %v2595
      %3023 = vmatprep.subr.mxu0 0.0
      %3024 = vmatpush1.msra.mxu0 %v2594
      %3025 = vmatprep.subr.mxu0 0.0
      %3026 = vmatpush1.msra.mxu0 %v2593
      %3027 = vmatprep.subr.mxu0 0.0
      %3028 = vmatpush1.msra.mxu0 %v2592
      %3029 = vmatprep.subr.mxu0 0.0
      %3030 = vmatpush1.msra.mxu0 %v2591
      %3031 = vmatprep.subr.mxu0 0.0
      %3032 = vmatpush1.msra.mxu0 %v2590
      %3033 = vmatprep.subr.mxu0 0.0
      %3034 = vmatpush1.msra.mxu0 %v2589
      %3035 = vmatprep.subr.mxu0 0.0
      %3036 = vmatpush1.msra.mxu0 %v2588
      %3037 = vmatprep.subr.mxu0 0.0
      %3038 = vmatpush2.msra.mxu0 0.0
      %3039 = vmatprep.subr.mxu0 0.0
      %3040 = vmatpush2.msra.mxu0 0.0
      %3041 = vmatprep.subr.mxu0 0.0
      %3042 = vmatpush2.msra.mxu0 0.0
      %3043 = vmatprep.subr.mxu0 0.0
      %3044 = vmatpush2.msra.mxu0 0.0
      %3045 = vmatprep.subr.mxu0 0.0
      %3046 = vmatpush2.msra.mxu0 0.0
      %3047 = vmatprep.subr.mxu0 0.0
      %3048 = vmatpush2.msra.mxu0 0.0
      %3049 = vmatprep.subr.mxu0 0.0
      %3050 = vmatpush2.msra.mxu0 0.0
      %3051 = vmatprep.subr.mxu0 0.0
      %3052 = vmatpush2.msra.mxu0 0.0
      %3053 = vmatprep.subr.mxu0 0.0
      %3054 = vmatpush2.msra.mxu0 0.0
      %3055 = vmatprep.subr.mxu0 0.0
      %3056 = vmatpush2.msra.mxu0 0.0
      %3057 = vmatprep.subr.mxu0 0.0
      %3058 = vmatpush2.msra.mxu0 0.0
      %3059 = vmatprep.subr.mxu0 0.0
      %3060 = vmatpush2.msra.mxu0 0.0
      %3061 = vmatprep.subr.mxu0 0.0
      %3062 = vmatpush2.msra.mxu0 0.0
      %3063 = vmatprep.subr.mxu0 0.0
      %3064 = vmatpush2.msra.mxu0 0.0
      %3065 = vmatprep.subr.mxu0 0.0
      %3066 = vmatpush2.msra.mxu0 0.0
      %3067 = vmatprep.subr.mxu0 0.0
      %3068 = vmatpush2.msra.mxu0 0.0
      %3069 = vmatprep.mubr.f32.mxu0 0.0
      %3070 = vmatmul.mubr.f32.gmra.mxu0 %v3004
      %v3071 = vpop.f32.mrf.mxu0
      %v3072 = vadd.f32 0.0, %v3071
      %v3073 = vpop.f32.mrf.mxu0
      %3074 = vdwg.mxu0
      %v3076 = vlaneseq
      %v3077 = vshrl.u32 %v3076, 7
      %v3078 = vsub.s32 0, %v3077
      %v3079 = vrot.slane %v2578, %v3078
      %v3082 = vsel %vm91, %v3072, 0
      %3084 = vmatprep.subr.mxu0 0.0
      %3085 = vmatpush1.msra.mxu0 0.0
      %3086 = vmatprep.subr.mxu0 0.0
      %3087 = vmatpush1.msra.mxu0 0.0
      %3088 = vmatprep.subr.mxu0 0.0
      %3089 = vmatpush1.msra.mxu0 0.0
      %3090 = vmatprep.subr.mxu0 0.0
      %3091 = vmatpush1.msra.mxu0 0.0
      %3092 = vmatprep.subr.mxu0 0.0
      %3093 = vmatpush1.msra.mxu0 0.0
      %3094 = vmatprep.subr.mxu0 0.0
      %3095 = vmatpush1.msra.mxu0 0.0
      %3096 = vmatprep.subr.mxu0 0.0
      %3097 = vmatpush1.msra.mxu0 0.0
      %3098 = vmatprep.subr.mxu0 0.0
      %3099 = vmatpush1.msra.mxu0 0.0
      %3100 = vmatprep.subr.mxu0 0.0
      %3101 = vmatpush1.msra.mxu0 0.0
      %3102 = vmatprep.subr.mxu0 0.0
      %3103 = vmatpush1.msra.mxu0 0.0
      %3104 = vmatprep.subr.mxu0 0.0
      %3105 = vmatpush1.msra.mxu0 0.0
      %3106 = vmatprep.subr.mxu0 0.0
      %3107 = vmatpush1.msra.mxu0 0.0
      %3108 = vmatprep.subr.mxu0 0.0
      %3109 = vmatpush1.msra.mxu0 %v2573
      %3110 = vmatprep.subr.mxu0 0.0
      %3111 = vmatpush1.msra.mxu0 %v2572
      %3112 = vmatprep.subr.mxu0 0.0
      %3113 = vmatpush1.msra.mxu0 %v2571
      %3114 = vmatprep.subr.mxu0 0.0
      %3115 = vmatpush1.msra.mxu0 %v2570
      %3116 = vmatprep.subr.mxu0 0.0
      %3117 = vmatpush2.msra.mxu0 0.0
      %3118 = vmatprep.subr.mxu0 0.0
      %3119 = vmatpush2.msra.mxu0 0.0
      %3120 = vmatprep.subr.mxu0 0.0
      %3121 = vmatpush2.msra.mxu0 0.0
      %3122 = vmatprep.subr.mxu0 0.0
      %3123 = vmatpush2.msra.mxu0 0.0
      %3124 = vmatprep.subr.mxu0 0.0
      %3125 = vmatpush2.msra.mxu0 0.0
      %3126 = vmatprep.subr.mxu0 0.0
      %3127 = vmatpush2.msra.mxu0 0.0
      %3128 = vmatprep.subr.mxu0 0.0
      %3129 = vmatpush2.msra.mxu0 0.0
      %3130 = vmatprep.subr.mxu0 0.0
      %3131 = vmatpush2.msra.mxu0 0.0
      %3132 = vmatprep.subr.mxu0 0.0
      %3133 = vmatpush2.msra.mxu0 0.0
      %3134 = vmatprep.subr.mxu0 0.0
      %3135 = vmatpush2.msra.mxu0 0.0
      %3136 = vmatprep.subr.mxu0 0.0
      %3137 = vmatpush2.msra.mxu0 0.0
      %3138 = vmatprep.subr.mxu0 0.0
      %3139 = vmatpush2.msra.mxu0 0.0
      %3140 = vmatprep.subr.mxu0 0.0
      %3141 = vmatpush2.msra.mxu0 0.0
      %3142 = vmatprep.subr.mxu0 0.0
      %3143 = vmatpush2.msra.mxu0 0.0
      %3144 = vmatprep.subr.mxu0 0.0
      %3145 = vmatpush2.msra.mxu0 0.0
      %3146 = vmatprep.subr.mxu0 0.0
      %3147 = vmatpush2.msra.mxu0 0.0
      %3148 = vmatprep.mubr.f32.mxu0 0.0
      %3149 = vmatmul.mubr.f32.gmra.mxu0 %v3082
      %v3150 = vpop.f32.mrf.mxu0
      %v3151 = vadd.f32 %v3079, %v3150
      %v3152 = vpop.f32.mrf.mxu0
      %3153 = vdwg.mxu0
      %3154 = vst [vmem:[#allocation5] sm:$0xff] %v3151
    $region85: #{_seq2seq_jit.1} parent=1 // pred_fallthru
      _
    %v3155 = vld [vmem:[#allocation5] sm:$0xff]
    %3156 = vmatprep.subr.mxu0 0.0
    %3157 = vmatpush1.msra.mxu0 0.0
    %3158 = vmatprep.subr.mxu0 0.0
    %3159 = vmatpush1.msra.mxu0 0.0
    %3160 = vmatprep.subr.mxu0 0.0
    %3161 = vmatpush1.msra.mxu0 0.0
    %3162 = vmatprep.subr.mxu0 0.0
    %3163 = vmatpush1.msra.mxu0 0.0
    %3164 = vmatprep.subr.mxu0 0.0
    %3165 = vmatpush1.msra.mxu0 0.0
    %3166 = vmatprep.subr.mxu0 0.0
    %3167 = vmatpush1.msra.mxu0 0.0
    %3168 = vmatprep.subr.mxu0 0.0
    %3169 = vmatpush1.msra.mxu0 0.0
    %3170 = vmatprep.subr.mxu0 0.0
    %3171 = vmatpush1.msra.mxu0 0.0
    %3172 = vmatprep.subr.mxu0 0.0
    %3173 = vmatpush1.msra.mxu0 0.0
    %3174 = vmatprep.subr.mxu0 0.0
    %3175 = vmatpush1.msra.mxu0 0.0
    %3176 = vmatprep.subr.mxu0 0.0
    %3177 = vmatpush1.msra.mxu0 0.0
    %3178 = vmatprep.subr.mxu0 0.0
    %3179 = vmatpush1.msra.mxu0 0.0
    %3180 = vmatprep.subr.mxu0 0.0
    %3181 = vmatpush1.msra.mxu0 %v2577
    %3182 = vmatprep.subr.mxu0 0.0
    %3183 = vmatpush1.msra.mxu0 %v2576
    %3184 = vmatprep.subr.mxu0 0.0
    %3185 = vmatpush1.msra.mxu0 %v2575
    %3186 = vmatprep.subr.mxu0 0.0
    %3187 = vmatpush1.msra.mxu0 %v2574
    %3188 = vmatprep.subr.mxu0 0.0
    %3189 = vmatpush2.msra.mxu0 0.0
    %3190 = vmatprep.subr.mxu0 0.0
    %3191 = vmatpush2.msra.mxu0 0.0
    %3192 = vmatprep.subr.mxu0 0.0
    %3193 = vmatpush2.msra.mxu0 0.0
    %3194 = vmatprep.subr.mxu0 0.0
    %3195 = vmatpush2.msra.mxu0 0.0
    %3196 = vmatprep.subr.mxu0 0.0
    %3197 = vmatpush2.msra.mxu0 0.0
    %3198 = vmatprep.subr.mxu0 0.0
    %3199 = vmatpush2.msra.mxu0 0.0
    %3200 = vmatprep.subr.mxu0 0.0
    %3201 = vmatpush2.msra.mxu0 0.0
    %3202 = vmatprep.subr.mxu0 0.0
    %3203 = vmatpush2.msra.mxu0 0.0
    %3204 = vmatprep.subr.mxu0 0.0
    %3205 = vmatpush2.msra.mxu0 0.0
    %3206 = vmatprep.subr.mxu0 0.0
    %3207 = vmatpush2.msra.mxu0 0.0
    %3208 = vmatprep.subr.mxu0 0.0
    %3209 = vmatpush2.msra.mxu0 0.0
    %3210 = vmatprep.subr.mxu0 0.0
    %3211 = vmatpush2.msra.mxu0 0.0
    %3212 = vmatprep.subr.mxu0 0.0
    %3213 = vmatpush2.msra.mxu0 0.0
    %3214 = vmatprep.subr.mxu0 0.0
    %3215 = vmatpush2.msra.mxu0 0.0
    %3216 = vmatprep.subr.mxu0 0.0
    %3217 = vmatpush2.msra.mxu0 0.0
    %3218 = vmatprep.subr.mxu0 0.0
    %3219 = vmatpush2.msra.mxu0 0.0
    %3220 = vmatprep.mubr.f32.mxu0 0.0
    %3221 = vmatmul.mubr.f32.gmra.mxu0 %v2787
    %v3222 = vpop.f32.mrf.mxu0
    %v3223 = vadd.f32 0.0, %v3222
    %v3224 = vpop.f32.mrf.mxu0
    %3225 = vdwg.mxu0
    %v3226 = vadd.f32 %v3155, %v3223
    %v3227 = vxor.u32 %v3226, 2147483648
    %v3228 = vmul.f32 %v3227, 1.442695
    %v3229 = vpow.pop %v3228
    %v3230 = vadd.f32 %v3229, 1.0
    %v3231 = vrcp.pop %v3230
    %v3232 = vmul.f32 1.0, %v3231
    %v3233 = vtanh.pop %v3226
    %v3234 = vmul.f32 %v3232, %v2702
    %3236 = vrot.lane.b32.xlu0 %v3233, 64
    %v3237 = vpop.permute.xlu0 %3236
    %v3239 = vmul.f32 %v3232, %v3237
    %3241 = vrot.lane.b32.xlu0 %v3239, 32
    %v3242 = vpop.permute.xlu0 %3241
    %v3244 = vadd.f32 %v3234, %v3242
    %v3245 = vtanh.pop %v3244
    %3247 = vrot.lane.b32.xlu0 %v3245, 64
    %v3248 = vpop.permute.xlu0 %3247
    %v3250 = vmul.f32 %v3232, %v3248
    %v3251 = vsel %vm91, %v2892, 0
    %3253 = vmatprep.subr.mxu0 0.0
    %3254 = vmatpush1.msra.mxu0 0.0
    %3255 = vmatprep.subr.mxu0 0.0
    %3256 = vmatpush1.msra.mxu0 0.0
    %3257 = vmatprep.subr.mxu0 0.0
    %3258 = vmatpush1.msra.mxu0 0.0
    %3259 = vmatprep.subr.mxu0 0.0
    %3260 = vmatpush1.msra.mxu0 0.0
    %3261 = vmatprep.subr.mxu0 0.0
    %3262 = vmatpush1.msra.mxu0 0.0
    %3263 = vmatprep.subr.mxu0 0.0
    %3264 = vmatpush1.msra.mxu0 0.0
    %3265 = vmatprep.subr.mxu0 0.0
    %3266 = vmatpush1.msra.mxu0 0.0
    %3267 = vmatprep.subr.mxu0 0.0
    %3268 = vmatpush1.msra.mxu0 0.0
    %3269 = vmatprep.subr.mxu0 0.0
    %3270 = vmatpush1.msra.mxu0 0.0
    %3271 = vmatprep.subr.mxu0 0.0
    %3272 = vmatpush1.msra.mxu0 0.0
    %3273 = vmatprep.subr.mxu0 0.0
    %3274 = vmatpush1.msra.mxu0 0.0
    %3275 = vmatprep.subr.mxu0 0.0
    %3276 = vmatpush1.msra.mxu0 0.0
    %3277 = vmatprep.subr.mxu0 0.0
    %3278 = vmatpush1.msra.mxu0 %v2586
    %3279 = vmatprep.subr.mxu0 0.0
    %3280 = vmatpush1.msra.mxu0 %v2585
    %3281 = vmatprep.subr.mxu0 0.0
    %3282 = vmatpush1.msra.mxu0 %v2584
    %3283 = vmatprep.subr.mxu0 0.0
    %3284 = vmatpush1.msra.mxu0 %v2583
    %3285 = vmatprep.subr.mxu0 0.0
    %3286 = vmatpush2.msra.mxu0 0.0
    %3287 = vmatprep.subr.mxu0 0.0
    %3288 = vmatpush2.msra.mxu0 0.0
    %3289 = vmatprep.subr.mxu0 0.0
    %3290 = vmatpush2.msra.mxu0 0.0
    %3291 = vmatprep.subr.mxu0 0.0
    %3292 = vmatpush2.msra.mxu0 0.0
    %3293 = vmatprep.subr.mxu0 0.0
    %3294 = vmatpush2.msra.mxu0 0.0
    %3295 = vmatprep.subr.mxu0 0.0
    %3296 = vmatpush2.msra.mxu0 0.0
    %3297 = vmatprep.subr.mxu0 0.0
    %3298 = vmatpush2.msra.mxu0 0.0
    %3299 = vmatprep.subr.mxu0 0.0
    %3300 = vmatpush2.msra.mxu0 0.0
    %3301 = vmatprep.subr.mxu0 0.0
    %3302 = vmatpush2.msra.mxu0 0.0
    %3303 = vmatprep.subr.mxu0 0.0
    %3304 = vmatpush2.msra.mxu0 0.0
    %3305 = vmatprep.subr.mxu0 0.0
    %3306 = vmatpush2.msra.mxu0 0.0
    %3307 = vmatprep.subr.mxu0 0.0
    %3308 = vmatpush2.msra.mxu0 0.0
    %3309 = vmatprep.subr.mxu0 0.0
    %3310 = vmatpush2.msra.mxu0 0.0
    %3311 = vmatprep.subr.mxu0 0.0
    %3312 = vmatpush2.msra.mxu0 0.0
    %3313 = vmatprep.subr.mxu0 0.0
    %3314 = vmatpush2.msra.mxu0 0.0
    %3315 = vmatprep.subr.mxu0 0.0
    %3316 = vmatpush2.msra.mxu0 0.0
    %3317 = vmatprep.mubr.f32.mxu0 0.0
    %3318 = vmatmul.mubr.f32.gmra.mxu0 %v3251
    %v3319 = vpop.f32.mrf.mxu0
    %v3320 = vadd.f32 0.0, %v3319
    %v3321 = vpop.f32.mrf.mxu0
    %3322 = vdwg.mxu0
    %3324 = vrot.lane.b32.xlu0 %v3250, 32
    %v3325 = vpop.permute.xlu0 %3324
    %v3326 = vsel %vm91, %v3325, 0
    %3328 = vmatprep.subr.mxu0 0.0
    %3329 = vmatpush1.msra.mxu0 0.0
    %3330 = vmatprep.subr.mxu0 0.0
    %3331 = vmatpush1.msra.mxu0 0.0
    %3332 = vmatprep.subr.mxu0 0.0
    %3333 = vmatpush1.msra.mxu0 0.0
    %3334 = vmatprep.subr.mxu0 0.0
    %3335 = vmatpush1.msra.mxu0 0.0
    %3336 = vmatprep.subr.mxu0 0.0
    %3337 = vmatpush1.msra.mxu0 0.0
    %3338 = vmatprep.subr.mxu0 0.0
    %3339 = vmatpush1.msra.mxu0 0.0
    %3340 = vmatprep.subr.mxu0 0.0
    %3341 = vmatpush1.msra.mxu0 0.0
    %3342 = vmatprep.subr.mxu0 0.0
    %3343 = vmatpush1.msra.mxu0 0.0
    %3344 = vmatprep.subr.mxu0 0.0
    %3345 = vmatpush1.msra.mxu0 0.0
    %3346 = vmatprep.subr.mxu0 0.0
    %3347 = vmatpush1.msra.mxu0 0.0
    %3348 = vmatprep.subr.mxu0 0.0
    %3349 = vmatpush1.msra.mxu0 0.0
    %3350 = vmatprep.subr.mxu0 0.0
    %3351 = vmatpush1.msra.mxu0 0.0
    %3352 = vmatprep.subr.mxu0 0.0
    %3353 = vmatpush1.msra.mxu0 %v2582
    %3354 = vmatprep.subr.mxu0 0.0
    %3355 = vmatpush1.msra.mxu0 %v2581
    %3356 = vmatprep.subr.mxu0 0.0
    %3357 = vmatpush1.msra.mxu0 %v2580
    %3358 = vmatprep.subr.mxu0 0.0
    %3359 = vmatpush1.msra.mxu0 %v2579
    %3360 = vmatprep.subr.mxu0 0.0
    %3361 = vmatpush2.msra.mxu0 0.0
    %3362 = vmatprep.subr.mxu0 0.0
    %3363 = vmatpush2.msra.mxu0 0.0
    %3364 = vmatprep.subr.mxu0 0.0
    %3365 = vmatpush2.msra.mxu0 0.0
    %3366 = vmatprep.subr.mxu0 0.0
    %3367 = vmatpush2.msra.mxu0 0.0
    %3368 = vmatprep.subr.mxu0 0.0
    %3369 = vmatpush2.msra.mxu0 0.0
    %3370 = vmatprep.subr.mxu0 0.0
    %3371 = vmatpush2.msra.mxu0 0.0
    %3372 = vmatprep.subr.mxu0 0.0
    %3373 = vmatpush2.msra.mxu0 0.0
    %3374 = vmatprep.subr.mxu0 0.0
    %3375 = vmatpush2.msra.mxu0 0.0
    %3376 = vmatprep.subr.mxu0 0.0
    %3377 = vmatpush2.msra.mxu0 0.0
    %3378 = vmatprep.subr.mxu0 0.0
    %3379 = vmatpush2.msra.mxu0 0.0
    %3380 = vmatprep.subr.mxu0 0.0
    %3381 = vmatpush2.msra.mxu0 0.0
    %3382 = vmatprep.subr.mxu0 0.0
    %3383 = vmatpush2.msra.mxu0 0.0
    %3384 = vmatprep.subr.mxu0 0.0
    %3385 = vmatpush2.msra.mxu0 0.0
    %3386 = vmatprep.subr.mxu0 0.0
    %3387 = vmatpush2.msra.mxu0 0.0
    %3388 = vmatprep.subr.mxu0 0.0
    %3389 = vmatpush2.msra.mxu0 0.0
    %3390 = vmatprep.subr.mxu0 0.0
    %3391 = vmatpush2.msra.mxu0 0.0
    %3392 = vmatprep.mubr.f32.mxu0 0.0
    %3393 = vmatmul.mubr.f32.gmra.mxu0 %v3326
    %v3394 = vpop.f32.mrf.mxu0
    %v3395 = vadd.f32 %v3320, %v3394
    %v3396 = vpop.f32.mrf.mxu0
    %3397 = vdwg.mxu0
    %v3398 = vadd.f32 %v3395, %v2863
    %v3399 = vxor.u32 %v3398, 2147483648
    %v3400 = vmul.f32 %v3399, 1.442695
    %v3401 = vpow.pop %v3400
    %v3402 = vadd.f32 %v3401, 1.0
    %v3403 = vrcp.pop %v3402
    %v3404 = vmul.f32 1.0, %v3403
    %v3405 = vtanh.pop %v3398
    %v3406 = vmul.f32 %v3404, %v2883
    %3408 = vrot.lane.b32.xlu0 %v3405, 64
    %v3409 = vpop.permute.xlu0 %3408
    %v3411 = vmul.f32 %v3404, %v3409
    %3413 = vrot.lane.b32.xlu0 %v3411, 32
    %v3414 = vpop.permute.xlu0 %3413
    %v3416 = vadd.f32 %v3406, %v3414
    %v3417 = vtanh.pop %v3416
    %3419 = vrot.lane.b32.xlu0 %v3417, 64
    %v3420 = vpop.permute.xlu0 %3419
    %v3422 = vmul.f32 %v3404, %v3420
    %3424 = vrot.lane.b32.xlu0 %v3422, 32
    %v3425 = vpop.permute.xlu0 %3424
    %3427 = vst.msk [vmem:[#allocation4 + $0x8] sm:$0xff] %vm91, %v3425
    %s3428 = sld [smem:[#allocation6 + $0x1]]
    %p3429 = scmp.eq.s32.totalorder %s3428, 1
    // Predicated region
    $region86: #{_seq2seq_jit.1} parent=1 // pred_check
      %p3430 = pneg %p3429
    $region87: #{_seq2seq_jit.1} parent=1 // pred_check_branch
      %3432 = sbr.rel (%p3430) target = $region89
    $region88: #{_seq2seq_jit.1} parent=1 // pred_region
      %v3433 = vld [vmem:[#allocation3 + $0x10] sm:$0xff]
      %3434 = vst [vmem:[#allocation5] sm:$0xff] %v3433
    $region89: #{_seq2seq_jit.1} parent=1 // pred_fallthru
      _
    %p3435 = scmp.ne.s32.totalorder %s3428, 1
    // Predicated region
    $region90: #{_seq2seq_jit.1} parent=1 // pred_check
      %p3436 = pneg %p3435
    $region91: #{_seq2seq_jit.1} parent=1 // pred_check_branch
      %3438 = sbr.rel (%p3436) target = $region93
    $region92: #{_seq2seq_jit.1} parent=1 // pred_region
      %v3440 = vlaneseq
      %v3441 = vshrl.u32 %v3440, 7
      %v3442 = vsub.s32 0, %v3441
      %v3443 = vrot.slane %v2608, %v3442
      %v3445 = vsel %vm91, %v3425, 0
      %3447 = vmatprep.subr.mxu0 0.0
      %3448 = vmatpush1.msra.mxu0 0.0
      %3449 = vmatprep.subr.mxu0 0.0
      %3450 = vmatpush1.msra.mxu0 0.0
      %3451 = vmatprep.subr.mxu0 0.0
      %3452 = vmatpush1.msra.mxu0 0.0
      %3453 = vmatprep.subr.mxu0 0.0
      %3454 = vmatpush1.msra.mxu0 0.0
      %3455 = vmatprep.subr.mxu0 0.0
      %3456 = vmatpush1.msra.mxu0 0.0
      %3457 = vmatprep.subr.mxu0 0.0
      %3458 = vmatpush1.msra.mxu0 0.0
      %3459 = vmatprep.subr.mxu0 0.0
      %3460 = vmatpush1.msra.mxu0 0.0
      %3461 = vmatprep.subr.mxu0 0.0
      %3462 = vmatpush1.msra.mxu0 0.0
      %3463 = vmatprep.subr.mxu0 0.0
      %3464 = vmatpush1.msra.mxu0 0.0
      %3465 = vmatprep.subr.mxu0 0.0
      %3466 = vmatpush1.msra.mxu0 0.0
      %3467 = vmatprep.subr.mxu0 0.0
      %3468 = vmatpush1.msra.mxu0 0.0
      %3469 = vmatprep.subr.mxu0 0.0
      %3470 = vmatpush1.msra.mxu0 0.0
      %3471 = vmatprep.subr.mxu0 0.0
      %3472 = vmatpush1.msra.mxu0 %v2607
      %3473 = vmatprep.subr.mxu0 0.0
      %3474 = vmatpush1.msra.mxu0 %v2606
      %3475 = vmatprep.subr.mxu0 0.0
      %3476 = vmatpush1.msra.mxu0 %v2605
      %3477 = vmatprep.subr.mxu0 0.0
      %3478 = vmatpush1.msra.mxu0 %v2604
      %3479 = vmatprep.subr.mxu0 0.0
      %3480 = vmatpush2.msra.mxu0 0.0
      %3481 = vmatprep.subr.mxu0 0.0
      %3482 = vmatpush2.msra.mxu0 0.0
      %3483 = vmatprep.subr.mxu0 0.0
      %3484 = vmatpush2.msra.mxu0 0.0
      %3485 = vmatprep.subr.mxu0 0.0
      %3486 = vmatpush2.msra.mxu0 0.0
      %3487 = vmatprep.subr.mxu0 0.0
      %3488 = vmatpush2.msra.mxu0 0.0
      %3489 = vmatprep.subr.mxu0 0.0
      %3490 = vmatpush2.msra.mxu0 0.0
      %3491 = vmatprep.subr.mxu0 0.0
      %3492 = vmatpush2.msra.mxu0 0.0
      %3493 = vmatprep.subr.mxu0 0.0
      %3494 = vmatpush2.msra.mxu0 0.0
      %3495 = vmatprep.subr.mxu0 0.0
      %3496 = vmatpush2.msra.mxu0 0.0
      %3497 = vmatprep.subr.mxu0 0.0
      %3498 = vmatpush2.msra.mxu0 0.0
      %3499 = vmatprep.subr.mxu0 0.0
      %3500 = vmatpush2.msra.mxu0 0.0
      %3501 = vmatprep.subr.mxu0 0.0
      %3502 = vmatpush2.msra.mxu0 0.0
      %3503 = vmatprep.subr.mxu0 0.0
      %3504 = vmatpush2.msra.mxu0 0.0
      %3505 = vmatprep.subr.mxu0 0.0
      %3506 = vmatpush2.msra.mxu0 0.0
      %3507 = vmatprep.subr.mxu0 0.0
      %3508 = vmatpush2.msra.mxu0 0.0
      %3509 = vmatprep.subr.mxu0 0.0
      %3510 = vmatpush2.msra.mxu0 0.0
      %3511 = vmatprep.mubr.f32.mxu0 0.0
      %3512 = vmatmul.mubr.f32.gmra.mxu0 %v3445
      %v3513 = vpop.f32.mrf.mxu0
      %v3514 = vadd.f32 %v3443, %v3513
      %v3515 = vpop.f32.mrf.mxu0
      %3516 = vdwg.mxu0
      %3517 = vmax.xlane.f32.xlu0 %v3514
      %v3518 = vpop.xlane.xlu0 %3517
      %vm3519 = vcmp.eq.f32.partialorder %v3514, %v3518
      %v3520 = vsel %vm3519, %v2610, 128
      %v3521 = vand.u32 %v3520, 65535
      %v3522 = vshra.s32 %v3520, 16
      %v3523 = vcvt.s32.f32 %v3521
      %v3524 = vcvt.s32.f32 %v3522
      %3525 = vmin.xlane.f32.xlu0 %v3524
      %v3526 = vpop.xlane.xlu0 %3525
      %vm3527 = vcmp.eq.f32.partialorder %v3524, %v3526
      %v3528 = vsel %vm3527, %v3523, inf
      %3529 = vmin.xlane.f32.xlu0 %v3528
      %v3530 = vpop.xlane.xlu0 %3529
      %v3531 = vcvt.f32.s32 %v3530
      %v3532 = vcvt.f32.s32 %v3526
      %v3533 = vshll.u32 %v3532, 16
      %v3534 = vadd.s32 %v3533, %v3531
      %vm3535 = vcmp.eq.s32.totalorder %v2610, %v3534
      %v3536 = vsel %vm3535, 1, 0
      %v3537 = vcvt.s32.f32 %v3536
      %3538 = vmatprep.subr.mxu0 0.0
      %3539 = vmatpush1.msra.mxu0 %v2603
      %3540 = vmatprep.subr.mxu0 0.0
      %3541 = vmatpush1.msra.mxu0 %v2602
      %3542 = vmatprep.subr.mxu0 0.0
      %3543 = vmatpush1.msra.mxu0 %v2601
      %3544 = vmatprep.subr.mxu0 0.0
      %3545 = vmatpush1.msra.mxu0 %v2600
      %3546 = vmatprep.subr.mxu0 0.0
      %3547 = vmatpush1.msra.mxu0 %v2599
      %3548 = vmatprep.subr.mxu0 0.0
      %3549 = vmatpush1.msra.mxu0 %v2598
      %3550 = vmatprep.subr.mxu0 0.0
      %3551 = vmatpush1.msra.mxu0 %v2597
      %3552 = vmatprep.subr.mxu0 0.0
      %3553 = vmatpush1.msra.mxu0 %v2596
      %3554 = vmatprep.subr.mxu0 0.0
      %3555 = vmatpush1.msra.mxu0 %v2595
      %3556 = vmatprep.subr.mxu0 0.0
      %3557 = vmatpush1.msra.mxu0 %v2594
      %3558 = vmatprep.subr.mxu0 0.0
      %3559 = vmatpush1.msra.mxu0 %v2593
      %3560 = vmatprep.subr.mxu0 0.0
      %3561 = vmatpush1.msra.mxu0 %v2592
      %3562 = vmatprep.subr.mxu0 0.0
      %3563 = vmatpush1.msra.mxu0 %v2591
      %3564 = vmatprep.subr.mxu0 0.0
      %3565 = vmatpush1.msra.mxu0 %v2590
      %3566 = vmatprep.subr.mxu0 0.0
      %3567 = vmatpush1.msra.mxu0 %v2589
      %3568 = vmatprep.subr.mxu0 0.0
      %3569 = vmatpush1.msra.mxu0 %v2588
      %3570 = vmatprep.subr.mxu0 0.0
      %3571 = vmatpush2.msra.mxu0 0.0
      %3572 = vmatprep.subr.mxu0 0.0
      %3573 = vmatpush2.msra.mxu0 0.0
      %3574 = vmatprep.subr.mxu0 0.0
      %3575 = vmatpush2.msra.mxu0 0.0
      %3576 = vmatprep.subr.mxu0 0.0
      %3577 = vmatpush2.msra.mxu0 0.0
      %3578 = vmatprep.subr.mxu0 0.0
      %3579 = vmatpush2.msra.mxu0 0.0
      %3580 = vmatprep.subr.mxu0 0.0
      %3581 = vmatpush2.msra.mxu0 0.0
      %3582 = vmatprep.subr.mxu0 0.0
      %3583 = vmatpush2.msra.mxu0 0.0
      %3584 = vmatprep.subr.mxu0 0.0
      %3585 = vmatpush2.msra.mxu0 0.0
      %3586 = vmatprep.subr.mxu0 0.0
      %3587 = vmatpush2.msra.mxu0 0.0
      %3588 = vmatprep.subr.mxu0 0.0
      %3589 = vmatpush2.msra.mxu0 0.0
      %3590 = vmatprep.subr.mxu0 0.0
      %3591 = vmatpush2.msra.mxu0 0.0
      %3592 = vmatprep.subr.mxu0 0.0
      %3593 = vmatpush2.msra.mxu0 0.0
      %3594 = vmatprep.subr.mxu0 0.0
      %3595 = vmatpush2.msra.mxu0 0.0
      %3596 = vmatprep.subr.mxu0 0.0
      %3597 = vmatpush2.msra.mxu0 0.0
      %3598 = vmatprep.subr.mxu0 0.0
      %3599 = vmatpush2.msra.mxu0 0.0
      %3600 = vmatprep.subr.mxu0 0.0
      %3601 = vmatpush2.msra.mxu0 0.0
      %3602 = vmatprep.mubr.f32.mxu0 0.0
      %3603 = vmatmul.mubr.f32.gmra.mxu0 %v3537
      %v3604 = vpop.f32.mrf.mxu0
      %v3605 = vadd.f32 0.0, %v3604
      %v3606 = vpop.f32.mrf.mxu0
      %3607 = vdwg.mxu0
      %v3609 = vlaneseq
      %v3610 = vshrl.u32 %v3609, 7
      %v3611 = vsub.s32 0, %v3610
      %v3612 = vrot.slane %v2578, %v3611
      %v3615 = vsel %vm91, %v3605, 0
      %3617 = vmatprep.subr.mxu0 0.0
      %3618 = vmatpush1.msra.mxu0 0.0
      %3619 = vmatprep.subr.mxu0 0.0
      %3620 = vmatpush1.msra.mxu0 0.0
      %3621 = vmatprep.subr.mxu0 0.0
      %3622 = vmatpush1.msra.mxu0 0.0
      %3623 = vmatprep.subr.mxu0 0.0
      %3624 = vmatpush1.msra.mxu0 0.0
      %3625 = vmatprep.subr.mxu0 0.0
      %3626 = vmatpush1.msra.mxu0 0.0
      %3627 = vmatprep.subr.mxu0 0.0
      %3628 = vmatpush1.msra.mxu0 0.0
      %3629 = vmatprep.subr.mxu0 0.0
      %3630 = vmatpush1.msra.mxu0 0.0
      %3631 = vmatprep.subr.mxu0 0.0
      %3632 = vmatpush1.msra.mxu0 0.0
      %3633 = vmatprep.subr.mxu0 0.0
      %3634 = vmatpush1.msra.mxu0 0.0
      %3635 = vmatprep.subr.mxu0 0.0
      %3636 = vmatpush1.msra.mxu0 0.0
      %3637 = vmatprep.subr.mxu0 0.0
      %3638 = vmatpush1.msra.mxu0 0.0
      %3639 = vmatprep.subr.mxu0 0.0
      %3640 = vmatpush1.msra.mxu0 0.0
      %3641 = vmatprep.subr.mxu0 0.0
      %3642 = vmatpush1.msra.mxu0 %v2573
      %3643 = vmatprep.subr.mxu0 0.0
      %3644 = vmatpush1.msra.mxu0 %v2572
      %3645 = vmatprep.subr.mxu0 0.0
      %3646 = vmatpush1.msra.mxu0 %v2571
      %3647 = vmatprep.subr.mxu0 0.0
      %3648 = vmatpush1.msra.mxu0 %v2570
      %3649 = vmatprep.subr.mxu0 0.0
      %3650 = vmatpush2.msra.mxu0 0.0
      %3651 = vmatprep.subr.mxu0 0.0
      %3652 = vmatpush2.msra.mxu0 0.0
      %3653 = vmatprep.subr.mxu0 0.0
      %3654 = vmatpush2.msra.mxu0 0.0
      %3655 = vmatprep.subr.mxu0 0.0
      %3656 = vmatpush2.msra.mxu0 0.0
      %3657 = vmatprep.subr.mxu0 0.0
      %3658 = vmatpush2.msra.mxu0 0.0
      %3659 = vmatprep.subr.mxu0 0.0
      %3660 = vmatpush2.msra.mxu0 0.0
      %3661 = vmatprep.subr.mxu0 0.0
      %3662 = vmatpush2.msra.mxu0 0.0
      %3663 = vmatprep.subr.mxu0 0.0
      %3664 = vmatpush2.msra.mxu0 0.0
      %3665 = vmatprep.subr.mxu0 0.0
      %3666 = vmatpush2.msra.mxu0 0.0
      %3667 = vmatprep.subr.mxu0 0.0
      %3668 = vmatpush2.msra.mxu0 0.0
      %3669 = vmatprep.subr.mxu0 0.0
      %3670 = vmatpush2.msra.mxu0 0.0
      %3671 = vmatprep.subr.mxu0 0.0
      %3672 = vmatpush2.msra.mxu0 0.0
      %3673 = vmatprep.subr.mxu0 0.0
      %3674 = vmatpush2.msra.mxu0 0.0
      %3675 = vmatprep.subr.mxu0 0.0
      %3676 = vmatpush2.msra.mxu0 0.0
      %3677 = vmatprep.subr.mxu0 0.0
      %3678 = vmatpush2.msra.mxu0 0.0
      %3679 = vmatprep.subr.mxu0 0.0
      %3680 = vmatpush2.msra.mxu0 0.0
      %3681 = vmatprep.mubr.f32.mxu0 0.0
      %3682 = vmatmul.mubr.f32.gmra.mxu0 %v3615
      %v3683 = vpop.f32.mrf.mxu0
      %v3684 = vadd.f32 %v3612, %v3683
      %v3685 = vpop.f32.mrf.mxu0
      %3686 = vdwg.mxu0
      %3687 = vst [vmem:[#allocation5] sm:$0xff] %v3684
    $region93: #{_seq2seq_jit.1} parent=1 // pred_fallthru
      _
    %v3688 = vld [vmem:[#allocation5] sm:$0xff]
    %3689 = vmatprep.subr.mxu0 0.0
    %3690 = vmatpush1.msra.mxu0 0.0
    %3691 = vmatprep.subr.mxu0 0.0
    %3692 = vmatpush1.msra.mxu0 0.0
    %3693 = vmatprep.subr.mxu0 0.0
    %3694 = vmatpush1.msra.mxu0 0.0
    %3695 = vmatprep.subr.mxu0 0.0
    %3696 = vmatpush1.msra.mxu0 0.0
    %3697 = vmatprep.subr.mxu0 0.0
    %3698 = vmatpush1.msra.mxu0 0.0
    %3699 = vmatprep.subr.mxu0 0.0
    %3700 = vmatpush1.msra.mxu0 0.0
    %3701 = vmatprep.subr.mxu0 0.0
    %3702 = vmatpush1.msra.mxu0 0.0
    %3703 = vmatprep.subr.mxu0 0.0
    %3704 = vmatpush1.msra.mxu0 0.0
    %3705 = vmatprep.subr.mxu0 0.0
    %3706 = vmatpush1.msra.mxu0 0.0
    %3707 = vmatprep.subr.mxu0 0.0
    %3708 = vmatpush1.msra.mxu0 0.0
    %3709 = vmatprep.subr.mxu0 0.0
    %3710 = vmatpush1.msra.mxu0 0.0
    %3711 = vmatprep.subr.mxu0 0.0
    %3712 = vmatpush1.msra.mxu0 0.0
    %3713 = vmatprep.subr.mxu0 0.0
    %3714 = vmatpush1.msra.mxu0 %v2577
    %3715 = vmatprep.subr.mxu0 0.0
    %3716 = vmatpush1.msra.mxu0 %v2576
    %3717 = vmatprep.subr.mxu0 0.0
    %3718 = vmatpush1.msra.mxu0 %v2575
    %3719 = vmatprep.subr.mxu0 0.0
    %3720 = vmatpush1.msra.mxu0 %v2574
    %3721 = vmatprep.subr.mxu0 0.0
    %3722 = vmatpush2.msra.mxu0 0.0
    %3723 = vmatprep.subr.mxu0 0.0
    %3724 = vmatpush2.msra.mxu0 0.0
    %3725 = vmatprep.subr.mxu0 0.0
    %3726 = vmatpush2.msra.mxu0 0.0
    %3727 = vmatprep.subr.mxu0 0.0
    %3728 = vmatpush2.msra.mxu0 0.0
    %3729 = vmatprep.subr.mxu0 0.0
    %3730 = vmatpush2.msra.mxu0 0.0
    %3731 = vmatprep.subr.mxu0 0.0
    %3732 = vmatpush2.msra.mxu0 0.0
    %3733 = vmatprep.subr.mxu0 0.0
    %3734 = vmatpush2.msra.mxu0 0.0
    %3735 = vmatprep.subr.mxu0 0.0
    %3736 = vmatpush2.msra.mxu0 0.0
    %3737 = vmatprep.subr.mxu0 0.0
    %3738 = vmatpush2.msra.mxu0 0.0
    %3739 = vmatprep.subr.mxu0 0.0
    %3740 = vmatpush2.msra.mxu0 0.0
    %3741 = vmatprep.subr.mxu0 0.0
    %3742 = vmatpush2.msra.mxu0 0.0
    %3743 = vmatprep.subr.mxu0 0.0
    %3744 = vmatpush2.msra.mxu0 0.0
    %3745 = vmatprep.subr.mxu0 0.0
    %3746 = vmatpush2.msra.mxu0 0.0
    %3747 = vmatprep.subr.mxu0 0.0
    %3748 = vmatpush2.msra.mxu0 0.0
    %3749 = vmatprep.subr.mxu0 0.0
    %3750 = vmatpush2.msra.mxu0 0.0
    %3751 = vmatprep.subr.mxu0 0.0
    %3752 = vmatpush2.msra.mxu0 0.0
    %3753 = vmatprep.mubr.f32.mxu0 0.0
    %3754 = vmatmul.mubr.f32.gmra.mxu0 %v3326
    %v3755 = vpop.f32.mrf.mxu0
    %v3756 = vadd.f32 0.0, %v3755
    %v3757 = vpop.f32.mrf.mxu0
    %3758 = vdwg.mxu0
    %v3759 = vadd.f32 %v3688, %v3756
    %v3760 = vxor.u32 %v3759, 2147483648
    %v3761 = vmul.f32 %v3760, 1.442695
    %v3762 = vpow.pop %v3761
    %v3763 = vadd.f32 %v3762, 1.0
    %v3764 = vrcp.pop %v3763
    %v3765 = vmul.f32 1.0, %v3764
    %v3766 = vtanh.pop %v3759
    %v3767 = vmul.f32 %v3765, %v3244
    %3769 = vrot.lane.b32.xlu0 %v3766, 64
    %v3770 = vpop.permute.xlu0 %3769
    %v3772 = vmul.f32 %v3765, %v3770
    %3774 = vrot.lane.b32.xlu0 %v3772, 32
    %v3775 = vpop.permute.xlu0 %3774
    %v3777 = vadd.f32 %v3767, %v3775
    %v3778 = vtanh.pop %v3777
    %3780 = vrot.lane.b32.xlu0 %v3778, 64
    %v3781 = vpop.permute.xlu0 %3780
    %v3783 = vmul.f32 %v3765, %v3781
    %v3784 = vsel %vm91, %v3425, 0
    %3786 = vmatprep.subr.mxu0 0.0
    %3787 = vmatpush1.msra.mxu0 0.0
    %3788 = vmatprep.subr.mxu0 0.0
    %3789 = vmatpush1.msra.mxu0 0.0
    %3790 = vmatprep.subr.mxu0 0.0
    %3791 = vmatpush1.msra.mxu0 0.0
    %3792 = vmatprep.subr.mxu0 0.0
    %3793 = vmatpush1.msra.mxu0 0.0
    %3794 = vmatprep.subr.mxu0 0.0
    %3795 = vmatpush1.msra.mxu0 0.0
    %3796 = vmatprep.subr.mxu0 0.0
    %3797 = vmatpush1.msra.mxu0 0.0
    %3798 = vmatprep.subr.mxu0 0.0
    %3799 = vmatpush1.msra.mxu0 0.0
    %3800 = vmatprep.subr.mxu0 0.0
    %3801 = vmatpush1.msra.mxu0 0.0
    %3802 = vmatprep.subr.mxu0 0.0
    %3803 = vmatpush1.msra.mxu0 0.0
    %3804 = vmatprep.subr.mxu0 0.0
    %3805 = vmatpush1.msra.mxu0 0.0
    %3806 = vmatprep.subr.mxu0 0.0
    %3807 = vmatpush1.msra.mxu0 0.0
    %3808 = vmatprep.subr.mxu0 0.0
    %3809 = vmatpush1.msra.mxu0 0.0
    %3810 = vmatprep.subr.mxu0 0.0
    %3811 = vmatpush1.msra.mxu0 %v2586
    %3812 = vmatprep.subr.mxu0 0.0
    %3813 = vmatpush1.msra.mxu0 %v2585
    %3814 = vmatprep.subr.mxu0 0.0
    %3815 = vmatpush1.msra.mxu0 %v2584
    %3816 = vmatprep.subr.mxu0 0.0
    %3817 = vmatpush1.msra.mxu0 %v2583
    %3818 = vmatprep.subr.mxu0 0.0
    %3819 = vmatpush2.msra.mxu0 0.0
    %3820 = vmatprep.subr.mxu0 0.0
    %3821 = vmatpush2.msra.mxu0 0.0
    %3822 = vmatprep.subr.mxu0 0.0
    %3823 = vmatpush2.msra.mxu0 0.0
    %3824 = vmatprep.subr.mxu0 0.0
    %3825 = vmatpush2.msra.mxu0 0.0
    %3826 = vmatprep.subr.mxu0 0.0
    %3827 = vmatpush2.msra.mxu0 0.0
    %3828 = vmatprep.subr.mxu0 0.0
    %3829 = vmatpush2.msra.mxu0 0.0
    %3830 = vmatprep.subr.mxu0 0.0
    %3831 = vmatpush2.msra.mxu0 0.0
    %3832 = vmatprep.subr.mxu0 0.0
    %3833 = vmatpush2.msra.mxu0 0.0
    %3834 = vmatprep.subr.mxu0 0.0
    %3835 = vmatpush2.msra.mxu0 0.0
    %3836 = vmatprep.subr.mxu0 0.0
    %3837 = vmatpush2.msra.mxu0 0.0
    %3838 = vmatprep.subr.mxu0 0.0
    %3839 = vmatpush2.msra.mxu0 0.0
    %3840 = vmatprep.subr.mxu0 0.0
    %3841 = vmatpush2.msra.mxu0 0.0
    %3842 = vmatprep.subr.mxu0 0.0
    %3843 = vmatpush2.msra.mxu0 0.0
    %3844 = vmatprep.subr.mxu0 0.0
    %3845 = vmatpush2.msra.mxu0 0.0
    %3846 = vmatprep.subr.mxu0 0.0
    %3847 = vmatpush2.msra.mxu0 0.0
    %3848 = vmatprep.subr.mxu0 0.0
    %3849 = vmatpush2.msra.mxu0 0.0
    %3850 = vmatprep.mubr.f32.mxu0 0.0
    %3851 = vmatmul.mubr.f32.gmra.mxu0 %v3784
    %v3852 = vpop.f32.mrf.mxu0
    %v3853 = vadd.f32 0.0, %v3852
    %v3854 = vpop.f32.mrf.mxu0
    %3855 = vdwg.mxu0
    %3857 = vrot.lane.b32.xlu0 %v3783, 32
    %v3858 = vpop.permute.xlu0 %3857
    %v3859 = vsel %vm91, %v3858, 0
    %3861 = vmatprep.subr.mxu0 0.0
    %3862 = vmatpush1.msra.mxu0 0.0
    %3863 = vmatprep.subr.mxu0 0.0
    %3864 = vmatpush1.msra.mxu0 0.0
    %3865 = vmatprep.subr.mxu0 0.0
    %3866 = vmatpush1.msra.mxu0 0.0
    %3867 = vmatprep.subr.mxu0 0.0
    %3868 = vmatpush1.msra.mxu0 0.0
    %3869 = vmatprep.subr.mxu0 0.0
    %3870 = vmatpush1.msra.mxu0 0.0
    %3871 = vmatprep.subr.mxu0 0.0
    %3872 = vmatpush1.msra.mxu0 0.0
    %3873 = vmatprep.subr.mxu0 0.0
    %3874 = vmatpush1.msra.mxu0 0.0
    %3875 = vmatprep.subr.mxu0 0.0
    %3876 = vmatpush1.msra.mxu0 0.0
    %3877 = vmatprep.subr.mxu0 0.0
    %3878 = vmatpush1.msra.mxu0 0.0
    %3879 = vmatprep.subr.mxu0 0.0
    %3880 = vmatpush1.msra.mxu0 0.0
    %3881 = vmatprep.subr.mxu0 0.0
    %3882 = vmatpush1.msra.mxu0 0.0
    %3883 = vmatprep.subr.mxu0 0.0
    %3884 = vmatpush1.msra.mxu0 0.0
    %3885 = vmatprep.subr.mxu0 0.0
    %3886 = vmatpush1.msra.mxu0 %v2582
    %3887 = vmatprep.subr.mxu0 0.0
    %3888 = vmatpush1.msra.mxu0 %v2581
    %3889 = vmatprep.subr.mxu0 0.0
    %3890 = vmatpush1.msra.mxu0 %v2580
    %3891 = vmatprep.subr.mxu0 0.0
    %3892 = vmatpush1.msra.mxu0 %v2579
    %3893 = vmatprep.subr.mxu0 0.0
    %3894 = vmatpush2.msra.mxu0 0.0
    %3895 = vmatprep.subr.mxu0 0.0
    %3896 = vmatpush2.msra.mxu0 0.0
    %3897 = vmatprep.subr.mxu0 0.0
    %3898 = vmatpush2.msra.mxu0 0.0
    %3899 = vmatprep.subr.mxu0 0.0
    %3900 = vmatpush2.msra.mxu0 0.0
    %3901 = vmatprep.subr.mxu0 0.0
    %3902 = vmatpush2.msra.mxu0 0.0
    %3903 = vmatprep.subr.mxu0 0.0
    %3904 = vmatpush2.msra.mxu0 0.0
    %3905 = vmatprep.subr.mxu0 0.0
    %3906 = vmatpush2.msra.mxu0 0.0
    %3907 = vmatprep.subr.mxu0 0.0
    %3908 = vmatpush2.msra.mxu0 0.0
    %3909 = vmatprep.subr.mxu0 0.0
    %3910 = vmatpush2.msra.mxu0 0.0
    %3911 = vmatprep.subr.mxu0 0.0
    %3912 = vmatpush2.msra.mxu0 0.0
    %3913 = vmatprep.subr.mxu0 0.0
    %3914 = vmatpush2.msra.mxu0 0.0
    %3915 = vmatprep.subr.mxu0 0.0
    %3916 = vmatpush2.msra.mxu0 0.0
    %3917 = vmatprep.subr.mxu0 0.0
    %3918 = vmatpush2.msra.mxu0 0.0
    %3919 = vmatprep.subr.mxu0 0.0
    %3920 = vmatpush2.msra.mxu0 0.0
    %3921 = vmatprep.subr.mxu0 0.0
    %3922 = vmatpush2.msra.mxu0 0.0
    %3923 = vmatprep.subr.mxu0 0.0
    %3924 = vmatpush2.msra.mxu0 0.0
    %3925 = vmatprep.mubr.f32.mxu0 0.0
    %3926 = vmatmul.mubr.f32.gmra.mxu0 %v3859
    %v3927 = vpop.f32.mrf.mxu0
    %v3928 = vadd.f32 %v3853, %v3927
    %v3929 = vpop.f32.mrf.mxu0
    %3930 = vdwg.mxu0
    %v3931 = vadd.f32 %v3928, %v2863
    %v3932 = vxor.u32 %v3931, 2147483648
    %v3933 = vmul.f32 %v3932, 1.442695
    %v3934 = vpow.pop %v3933
    %v3935 = vadd.f32 %v3934, 1.0
    %v3936 = vrcp.pop %v3935
    %v3937 = vmul.f32 1.0, %v3936
    %v3938 = vtanh.pop %v3931
    %v3939 = vmul.f32 %v3937, %v3416
    %3941 = vrot.lane.b32.xlu0 %v3938, 64
    %v3942 = vpop.permute.xlu0 %3941
    %v3944 = vmul.f32 %v3937, %v3942
    %3946 = vrot.lane.b32.xlu0 %v3944, 32
    %v3947 = vpop.permute.xlu0 %3946
    %v3949 = vadd.f32 %v3939, %v3947
    %v3950 = vtanh.pop %v3949
    %3952 = vrot.lane.b32.xlu0 %v3950, 64
    %v3953 = vpop.permute.xlu0 %3952
    %v3955 = vmul.f32 %v3937, %v3953
    %3957 = vrot.lane.b32.xlu0 %v3955, 32
    %v3958 = vpop.permute.xlu0 %3957
    %3960 = vst.msk [vmem:[#allocation4 + $0x10] sm:$0xff] %vm91, %v3958
    %s3961 = sld [smem:[#allocation6 + $0x2]]
    %p3962 = scmp.eq.s32.totalorder %s3961, 1
    // Predicated region
    $region94: #{_seq2seq_jit.1} parent=1 // pred_check
      %p3963 = pneg %p3962
    $region95: #{_seq2seq_jit.1} parent=1 // pred_check_branch
      %3965 = sbr.rel (%p3963) target = $region97
    $region96: #{_seq2seq_jit.1} parent=1 // pred_region
      %v3966 = vld [vmem:[#allocation3 + $0x18] sm:$0xff]
      %3967 = vst [vmem:[#allocation5] sm:$0xff] %v3966
    $region97: #{_seq2seq_jit.1} parent=1 // pred_fallthru
      _
    %p3968 = scmp.ne.s32.totalorder %s3961, 1
    // Predicated region
    $region98: #{_seq2seq_jit.1} parent=1 // pred_check
      %p3969 = pneg %p3968
    $region99: #{_seq2seq_jit.1} parent=1 // pred_check_branch
      %3971 = sbr.rel (%p3969) target = $region101
    $region100: #{_seq2seq_jit.1} parent=1 // pred_region
      %v3973 = vlaneseq
      %v3974 = vshrl.u32 %v3973, 7
      %v3975 = vsub.s32 0, %v3974
      %v3976 = vrot.slane %v2608, %v3975
      %v3978 = vsel %vm91, %v3958, 0
      %3980 = vmatprep.subr.mxu0 0.0
      %3981 = vmatpush1.msra.mxu0 0.0
      %3982 = vmatprep.subr.mxu0 0.0
      %3983 = vmatpush1.msra.mxu0 0.0
      %3984 = vmatprep.subr.mxu0 0.0
      %3985 = vmatpush1.msra.mxu0 0.0
      %3986 = vmatprep.subr.mxu0 0.0
      %3987 = vmatpush1.msra.mxu0 0.0
      %3988 = vmatprep.subr.mxu0 0.0
      %3989 = vmatpush1.msra.mxu0 0.0
      %3990 = vmatprep.subr.mxu0 0.0
      %3991 = vmatpush1.msra.mxu0 0.0
      %3992 = vmatprep.subr.mxu0 0.0
      %3993 = vmatpush1.msra.mxu0 0.0
      %3994 = vmatprep.subr.mxu0 0.0
      %3995 = vmatpush1.msra.mxu0 0.0
      %3996 = vmatprep.subr.mxu0 0.0
      %3997 = vmatpush1.msra.mxu0 0.0
      %3998 = vmatprep.subr.mxu0 0.0
      %3999 = vmatpush1.msra.mxu0 0.0
      %4000 = vmatprep.subr.mxu0 0.0
      %4001 = vmatpush1.msra.mxu0 0.0
      %4002 = vmatprep.subr.mxu0 0.0
      %4003 = vmatpush1.msra.mxu0 0.0
      %4004 = vmatprep.subr.mxu0 0.0
      %4005 = vmatpush1.msra.mxu0 %v2607
      %4006 = vmatprep.subr.mxu0 0.0
      %4007 = vmatpush1.msra.mxu0 %v2606
      %4008 = vmatprep.subr.mxu0 0.0
      %4009 = vmatpush1.msra.mxu0 %v2605
      %4010 = vmatprep.subr.mxu0 0.0
      %4011 = vmatpush1.msra.mxu0 %v2604
      %4012 = vmatprep.subr.mxu0 0.0
      %4013 = vmatpush2.msra.mxu0 0.0
      %4014 = vmatprep.subr.mxu0 0.0
      %4015 = vmatpush2.msra.mxu0 0.0
      %4016 = vmatprep.subr.mxu0 0.0
      %4017 = vmatpush2.msra.mxu0 0.0
      %4018 = vmatprep.subr.mxu0 0.0
      %4019 = vmatpush2.msra.mxu0 0.0
      %4020 = vmatprep.subr.mxu0 0.0
      %4021 = vmatpush2.msra.mxu0 0.0
      %4022 = vmatprep.subr.mxu0 0.0
      %4023 = vmatpush2.msra.mxu0 0.0
      %4024 = vmatprep.subr.mxu0 0.0
      %4025 = vmatpush2.msra.mxu0 0.0
      %4026 = vmatprep.subr.mxu0 0.0
      %4027 = vmatpush2.msra.mxu0 0.0
      %4028 = vmatprep.subr.mxu0 0.0
      %4029 = vmatpush2.msra.mxu0 0.0
      %4030 = vmatprep.subr.mxu0 0.0
      %4031 = vmatpush2.msra.mxu0 0.0
      %4032 = vmatprep.subr.mxu0 0.0
      %4033 = vmatpush2.msra.mxu0 0.0
      %4034 = vmatprep.subr.mxu0 0.0
      %4035 = vmatpush2.msra.mxu0 0.0
      %4036 = vmatprep.subr.mxu0 0.0
      %4037 = vmatpush2.msra.mxu0 0.0
      %4038 = vmatprep.subr.mxu0 0.0
      %4039 = vmatpush2.msra.mxu0 0.0
      %4040 = vmatprep.subr.mxu0 0.0
      %4041 = vmatpush2.msra.mxu0 0.0
      %4042 = vmatprep.subr.mxu0 0.0
      %4043 = vmatpush2.msra.mxu0 0.0
      %4044 = vmatprep.mubr.f32.mxu0 0.0
      %4045 = vmatmul.mubr.f32.gmra.mxu0 %v3978
      %v4046 = vpop.f32.mrf.mxu0
      %v4047 = vadd.f32 %v3976, %v4046
      %v4048 = vpop.f32.mrf.mxu0
      %4049 = vdwg.mxu0
      %4050 = vmax.xlane.f32.xlu0 %v4047
      %v4051 = vpop.xlane.xlu0 %4050
      %vm4052 = vcmp.eq.f32.partialorder %v4047, %v4051
      %v4053 = vsel %vm4052, %v2610, 128
      %v4054 = vand.u32 %v4053, 65535
      %v4055 = vshra.s32 %v4053, 16
      %v4056 = vcvt.s32.f32 %v4054
      %v4057 = vcvt.s32.f32 %v4055
      %4058 = vmin.xlane.f32.xlu0 %v4057
      %v4059 = vpop.xlane.xlu0 %4058
      %vm4060 = vcmp.eq.f32.partialorder %v4057, %v4059
      %v4061 = vsel %vm4060, %v4056, inf
      %4062 = vmin.xlane.f32.xlu0 %v4061
      %v4063 = vpop.xlane.xlu0 %4062
      %v4064 = vcvt.f32.s32 %v4063
      %v4065 = vcvt.f32.s32 %v4059
      %v4066 = vshll.u32 %v4065, 16
      %v4067 = vadd.s32 %v4066, %v4064
      %vm4068 = vcmp.eq.s32.totalorder %v2610, %v4067
      %v4069 = vsel %vm4068, 1, 0
      %v4070 = vcvt.s32.f32 %v4069
      %4071 = vmatprep.subr.mxu0 0.0
      %4072 = vmatpush1.msra.mxu0 %v2603
      %4073 = vmatprep.subr.mxu0 0.0
      %4074 = vmatpush1.msra.mxu0 %v2602
      %4075 = vmatprep.subr.mxu0 0.0
      %4076 = vmatpush1.msra.mxu0 %v2601
      %4077 = vmatprep.subr.mxu0 0.0
      %4078 = vmatpush1.msra.mxu0 %v2600
      %4079 = vmatprep.subr.mxu0 0.0
      %4080 = vmatpush1.msra.mxu0 %v2599
      %4081 = vmatprep.subr.mxu0 0.0
      %4082 = vmatpush1.msra.mxu0 %v2598
      %4083 = vmatprep.subr.mxu0 0.0
      %4084 = vmatpush1.msra.mxu0 %v2597
      %4085 = vmatprep.subr.mxu0 0.0
      %4086 = vmatpush1.msra.mxu0 %v2596
      %4087 = vmatprep.subr.mxu0 0.0
      %4088 = vmatpush1.msra.mxu0 %v2595
      %4089 = vmatprep.subr.mxu0 0.0
      %4090 = vmatpush1.msra.mxu0 %v2594
      %4091 = vmatprep.subr.mxu0 0.0
      %4092 = vmatpush1.msra.mxu0 %v2593
      %4093 = vmatprep.subr.mxu0 0.0
      %4094 = vmatpush1.msra.mxu0 %v2592
      %4095 = vmatprep.subr.mxu0 0.0
      %4096 = vmatpush1.msra.mxu0 %v2591
      %4097 = vmatprep.subr.mxu0 0.0
      %4098 = vmatpush1.msra.mxu0 %v2590
      %4099 = vmatprep.subr.mxu0 0.0
      %4100 = vmatpush1.msra.mxu0 %v2589
      %4101 = vmatprep.subr.mxu0 0.0
      %4102 = vmatpush1.msra.mxu0 %v2588
      %4103 = vmatprep.subr.mxu0 0.0
      %4104 = vmatpush2.msra.mxu0 0.0
      %4105 = vmatprep.subr.mxu0 0.0
      %4106 = vmatpush2.msra.mxu0 0.0
      %4107 = vmatprep.subr.mxu0 0.0
      %4108 = vmatpush2.msra.mxu0 0.0
      %4109 = vmatprep.subr.mxu0 0.0
      %4110 = vmatpush2.msra.mxu0 0.0
      %4111 = vmatprep.subr.mxu0 0.0
      %4112 = vmatpush2.msra.mxu0 0.0
      %4113 = vmatprep.subr.mxu0 0.0
      %4114 = vmatpush2.msra.mxu0 0.0
      %4115 = vmatprep.subr.mxu0 0.0
      %4116 = vmatpush2.msra.mxu0 0.0
      %4117 = vmatprep.subr.mxu0 0.0
      %4118 = vmatpush2.msra.mxu0 0.0
      %4119 = vmatprep.subr.mxu0 0.0
      %4120 = vmatpush2.msra.mxu0 0.0
      %4121 = vmatprep.subr.mxu0 0.0
      %4122 = vmatpush2.msra.mxu0 0.0
      %4123 = vmatprep.subr.mxu0 0.0
      %4124 = vmatpush2.msra.mxu0 0.0
      %4125 = vmatprep.subr.mxu0 0.0
      %4126 = vmatpush2.msra.mxu0 0.0
      %4127 = vmatprep.subr.mxu0 0.0
      %4128 = vmatpush2.msra.mxu0 0.0
      %4129 = vmatprep.subr.mxu0 0.0
      %4130 = vmatpush2.msra.mxu0 0.0
      %4131 = vmatprep.subr.mxu0 0.0
      %4132 = vmatpush2.msra.mxu0 0.0
      %4133 = vmatprep.subr.mxu0 0.0
      %4134 = vmatpush2.msra.mxu0 0.0
      %4135 = vmatprep.mubr.f32.mxu0 0.0
      %4136 = vmatmul.mubr.f32.gmra.mxu0 %v4070
      %v4137 = vpop.f32.mrf.mxu0
      %v4138 = vadd.f32 0.0, %v4137
      %v4139 = vpop.f32.mrf.mxu0
      %4140 = vdwg.mxu0
      %v4142 = vlaneseq
      %v4143 = vshrl.u32 %v4142, 7
      %v4144 = vsub.s32 0, %v4143
      %v4145 = vrot.slane %v2578, %v4144
      %v4148 = vsel %vm91, %v4138, 0
      %4150 = vmatprep.subr.mxu0 0.0
      %4151 = vmatpush1.msra.mxu0 0.0
      %4152 = vmatprep.subr.mxu0 0.0
      %4153 = vmatpush1.msra.mxu0 0.0
      %4154 = vmatprep.subr.mxu0 0.0
      %4155 = vmatpush1.msra.mxu0 0.0
      %4156 = vmatprep.subr.mxu0 0.0
      %4157 = vmatpush1.msra.mxu0 0.0
      %4158 = vmatprep.subr.mxu0 0.0
      %4159 = vmatpush1.msra.mxu0 0.0
      %4160 = vmatprep.subr.mxu0 0.0
      %4161 = vmatpush1.msra.mxu0 0.0
      %4162 = vmatprep.subr.mxu0 0.0
      %4163 = vmatpush1.msra.mxu0 0.0
      %4164 = vmatprep.subr.mxu0 0.0
      %4165 = vmatpush1.msra.mxu0 0.0
      %4166 = vmatprep.subr.mxu0 0.0
      %4167 = vmatpush1.msra.mxu0 0.0
      %4168 = vmatprep.subr.mxu0 0.0
      %4169 = vmatpush1.msra.mxu0 0.0
      %4170 = vmatprep.subr.mxu0 0.0
      %4171 = vmatpush1.msra.mxu0 0.0
      %4172 = vmatprep.subr.mxu0 0.0
      %4173 = vmatpush1.msra.mxu0 0.0
      %4174 = vmatprep.subr.mxu0 0.0
      %4175 = vmatpush1.msra.mxu0 %v2573
      %4176 = vmatprep.subr.mxu0 0.0
      %4177 = vmatpush1.msra.mxu0 %v2572
      %4178 = vmatprep.subr.mxu0 0.0
      %4179 = vmatpush1.msra.mxu0 %v2571
      %4180 = vmatprep.subr.mxu0 0.0
      %4181 = vmatpush1.msra.mxu0 %v2570
      %4182 = vmatprep.subr.mxu0 0.0
      %4183 = vmatpush2.msra.mxu0 0.0
      %4184 = vmatprep.subr.mxu0 0.0
      %4185 = vmatpush2.msra.mxu0 0.0
      %4186 = vmatprep.subr.mxu0 0.0
      %4187 = vmatpush2.msra.mxu0 0.0
      %4188 = vmatprep.subr.mxu0 0.0
      %4189 = vmatpush2.msra.mxu0 0.0
      %4190 = vmatprep.subr.mxu0 0.0
      %4191 = vmatpush2.msra.mxu0 0.0
      %4192 = vmatprep.subr.mxu0 0.0
      %4193 = vmatpush2.msra.mxu0 0.0
      %4194 = vmatprep.subr.mxu0 0.0
      %4195 = vmatpush2.msra.mxu0 0.0
      %4196 = vmatprep.subr.mxu0 0.0
      %4197 = vmatpush2.msra.mxu0 0.0
      %4198 = vmatprep.subr.mxu0 0.0
      %4199 = vmatpush2.msra.mxu0 0.0
      %4200 = vmatprep.subr.mxu0 0.0
      %4201 = vmatpush2.msra.mxu0 0.0
      %4202 = vmatprep.subr.mxu0 0.0
      %4203 = vmatpush2.msra.mxu0 0.0
      %4204 = vmatprep.subr.mxu0 0.0
      %4205 = vmatpush2.msra.mxu0 0.0
      %4206 = vmatprep.subr.mxu0 0.0
      %4207 = vmatpush2.msra.mxu0 0.0
      %4208 = vmatprep.subr.mxu0 0.0
      %4209 = vmatpush2.msra.mxu0 0.0
      %4210 = vmatprep.subr.mxu0 0.0
      %4211 = vmatpush2.msra.mxu0 0.0
      %4212 = vmatprep.subr.mxu0 0.0
      %4213 = vmatpush2.msra.mxu0 0.0
      %4214 = vmatprep.mubr.f32.mxu0 0.0
      %4215 = vmatmul.mubr.f32.gmra.mxu0 %v4148
      %v4216 = vpop.f32.mrf.mxu0
      %v4217 = vadd.f32 %v4145, %v4216
      %v4218 = vpop.f32.mrf.mxu0
      %4219 = vdwg.mxu0
      %4220 = vst [vmem:[#allocation5] sm:$0xff] %v4217
    $region101: #{_seq2seq_jit.1} parent=1 // pred_fallthru
      _
    %v4221 = vld [vmem:[#allocation5] sm:$0xff]
    %4222 = vmatprep.subr.mxu0 0.0
    %4223 = vmatpush1.msra.mxu0 0.0
    %4224 = vmatprep.subr.mxu0 0.0
    %4225 = vmatpush1.msra.mxu0 0.0
    %4226 = vmatprep.subr.mxu0 0.0
    %4227 = vmatpush1.msra.mxu0 0.0
    %4228 = vmatprep.subr.mxu0 0.0
    %4229 = vmatpush1.msra.mxu0 0.0
    %4230 = vmatprep.subr.mxu0 0.0
    %4231 = vmatpush1.msra.mxu0 0.0
    %4232 = vmatprep.subr.mxu0 0.0
    %4233 = vmatpush1.msra.mxu0 0.0
    %4234 = vmatprep.subr.mxu0 0.0
    %4235 = vmatpush1.msra.mxu0 0.0
    %4236 = vmatprep.subr.mxu0 0.0
    %4237 = vmatpush1.msra.mxu0 0.0
    %4238 = vmatprep.subr.mxu0 0.0
    %4239 = vmatpush1.msra.mxu0 0.0
    %4240 = vmatprep.subr.mxu0 0.0
    %4241 = vmatpush1.msra.mxu0 0.0
    %4242 = vmatprep.subr.mxu0 0.0
    %4243 = vmatpush1.msra.mxu0 0.0
    %4244 = vmatprep.subr.mxu0 0.0
    %4245 = vmatpush1.msra.mxu0 0.0
    %4246 = vmatprep.subr.mxu0 0.0
    %4247 = vmatpush1.msra.mxu0 %v2577
    %4248 = vmatprep.subr.mxu0 0.0
    %4249 = vmatpush1.msra.mxu0 %v2576
    %4250 = vmatprep.subr.mxu0 0.0
    %4251 = vmatpush1.msra.mxu0 %v2575
    %4252 = vmatprep.subr.mxu0 0.0
    %4253 = vmatpush1.msra.mxu0 %v2574
    %4254 = vmatprep.subr.mxu0 0.0
    %4255 = vmatpush2.msra.mxu0 0.0
    %4256 = vmatprep.subr.mxu0 0.0
    %4257 = vmatpush2.msra.mxu0 0.0
    %4258 = vmatprep.subr.mxu0 0.0
    %4259 = vmatpush2.msra.mxu0 0.0
    %4260 = vmatprep.subr.mxu0 0.0
    %4261 = vmatpush2.msra.mxu0 0.0
    %4262 = vmatprep.subr.mxu0 0.0
    %4263 = vmatpush2.msra.mxu0 0.0
    %4264 = vmatprep.subr.mxu0 0.0
    %4265 = vmatpush2.msra.mxu0 0.0
    %4266 = vmatprep.subr.mxu0 0.0
    %4267 = vmatpush2.msra.mxu0 0.0
    %4268 = vmatprep.subr.mxu0 0.0
    %4269 = vmatpush2.msra.mxu0 0.0
    %4270 = vmatprep.subr.mxu0 0.0
    %4271 = vmatpush2.msra.mxu0 0.0
    %4272 = vmatprep.subr.mxu0 0.0
    %4273 = vmatpush2.msra.mxu0 0.0
    %4274 = vmatprep.subr.mxu0 0.0
    %4275 = vmatpush2.msra.mxu0 0.0
    %4276 = vmatprep.subr.mxu0 0.0
    %4277 = vmatpush2.msra.mxu0 0.0
    %4278 = vmatprep.subr.mxu0 0.0
    %4279 = vmatpush2.msra.mxu0 0.0
    %4280 = vmatprep.subr.mxu0 0.0
    %4281 = vmatpush2.msra.mxu0 0.0
    %4282 = vmatprep.subr.mxu0 0.0
    %4283 = vmatpush2.msra.mxu0 0.0
    %4284 = vmatprep.subr.mxu0 0.0
    %4285 = vmatpush2.msra.mxu0 0.0
    %4286 = vmatprep.mubr.f32.mxu0 0.0
    %4287 = vmatmul.mubr.f32.gmra.mxu0 %v3859
    %v4288 = vpop.f32.mrf.mxu0
    %v4289 = vadd.f32 0.0, %v4288
    %v4290 = vpop.f32.mrf.mxu0
    %4291 = vdwg.mxu0
    %v4292 = vadd.f32 %v4221, %v4289
    %v4293 = vxor.u32 %v4292, 2147483648
    %v4294 = vmul.f32 %v4293, 1.442695
    %v4295 = vpow.pop %v4294
    %v4296 = vadd.f32 %v4295, 1.0
    %v4297 = vrcp.pop %v4296
    %v4298 = vmul.f32 1.0, %v4297
    %v4299 = vtanh.pop %v4292
    %v4300 = vmul.f32 %v4298, %v3777
    %4302 = vrot.lane.b32.xlu0 %v4299, 64
    %v4303 = vpop.permute.xlu0 %4302
    %v4305 = vmul.f32 %v4298, %v4303
    %4307 = vrot.lane.b32.xlu0 %v4305, 32
    %v4308 = vpop.permute.xlu0 %4307
    %v4310 = vadd.f32 %v4300, %v4308
    %v4311 = vtanh.pop %v4310
    %4313 = vrot.lane.b32.xlu0 %v4311, 64
    %v4314 = vpop.permute.xlu0 %4313
    %v4316 = vmul.f32 %v4298, %v4314
    %v4317 = vsel %vm91, %v3958, 0
    %4319 = vmatprep.subr.mxu0 0.0
    %4320 = vmatpush1.msra.mxu0 0.0
    %4321 = vmatprep.subr.mxu0 0.0
    %4322 = vmatpush1.msra.mxu0 0.0
    %4323 = vmatprep.subr.mxu0 0.0
    %4324 = vmatpush1.msra.mxu0 0.0
    %4325 = vmatprep.subr.mxu0 0.0
    %4326 = vmatpush1.msra.mxu0 0.0
    %4327 = vmatprep.subr.mxu0 0.0
    %4328 = vmatpush1.msra.mxu0 0.0
    %4329 = vmatprep.subr.mxu0 0.0
    %4330 = vmatpush1.msra.mxu0 0.0
    %4331 = vmatprep.subr.mxu0 0.0
    %4332 = vmatpush1.msra.mxu0 0.0
    %4333 = vmatprep.subr.mxu0 0.0
    %4334 = vmatpush1.msra.mxu0 0.0
    %4335 = vmatprep.subr.mxu0 0.0
    %4336 = vmatpush1.msra.mxu0 0.0
    %4337 = vmatprep.subr.mxu0 0.0
    %4338 = vmatpush1.msra.mxu0 0.0
    %4339 = vmatprep.subr.mxu0 0.0
    %4340 = vmatpush1.msra.mxu0 0.0
    %4341 = vmatprep.subr.mxu0 0.0
    %4342 = vmatpush1.msra.mxu0 0.0
    %4343 = vmatprep.subr.mxu0 0.0
    %4344 = vmatpush1.msra.mxu0 %v2586
    %4345 = vmatprep.subr.mxu0 0.0
    %4346 = vmatpush1.msra.mxu0 %v2585
    %4347 = vmatprep.subr.mxu0 0.0
    %4348 = vmatpush1.msra.mxu0 %v2584
    %4349 = vmatprep.subr.mxu0 0.0
    %4350 = vmatpush1.msra.mxu0 %v2583
    %4351 = vmatprep.subr.mxu0 0.0
    %4352 = vmatpush2.msra.mxu0 0.0
    %4353 = vmatprep.subr.mxu0 0.0
    %4354 = vmatpush2.msra.mxu0 0.0
    %4355 = vmatprep.subr.mxu0 0.0
    %4356 = vmatpush2.msra.mxu0 0.0
    %4357 = vmatprep.subr.mxu0 0.0
    %4358 = vmatpush2.msra.mxu0 0.0
    %4359 = vmatprep.subr.mxu0 0.0
    %4360 = vmatpush2.msra.mxu0 0.0
    %4361 = vmatprep.subr.mxu0 0.0
    %4362 = vmatpush2.msra.mxu0 0.0
    %4363 = vmatprep.subr.mxu0 0.0
    %4364 = vmatpush2.msra.mxu0 0.0
    %4365 = vmatprep.subr.mxu0 0.0
    %4366 = vmatpush2.msra.mxu0 0.0
    %4367 = vmatprep.subr.mxu0 0.0
    %4368 = vmatpush2.msra.mxu0 0.0
    %4369 = vmatprep.subr.mxu0 0.0
    %4370 = vmatpush2.msra.mxu0 0.0
    %4371 = vmatprep.subr.mxu0 0.0
    %4372 = vmatpush2.msra.mxu0 0.0
    %4373 = vmatprep.subr.mxu0 0.0
    %4374 = vmatpush2.msra.mxu0 0.0
    %4375 = vmatprep.subr.mxu0 0.0
    %4376 = vmatpush2.msra.mxu0 0.0
    %4377 = vmatprep.subr.mxu0 0.0
    %4378 = vmatpush2.msra.mxu0 0.0
    %4379 = vmatprep.subr.mxu0 0.0
    %4380 = vmatpush2.msra.mxu0 0.0
    %4381 = vmatprep.subr.mxu0 0.0
    %4382 = vmatpush2.msra.mxu0 0.0
    %4383 = vmatprep.mubr.f32.mxu0 0.0
    %4384 = vmatmul.mubr.f32.gmra.mxu0 %v4317
    %v4385 = vpop.f32.mrf.mxu0
    %v4386 = vadd.f32 0.0, %v4385
    %v4387 = vpop.f32.mrf.mxu0
    %4388 = vdwg.mxu0
    %4390 = vrot.lane.b32.xlu0 %v4316, 32
    %v4391 = vpop.permute.xlu0 %4390
    %v4392 = vsel %vm91, %v4391, 0
    %4394 = vmatprep.subr.mxu0 0.0
    %4395 = vmatpush1.msra.mxu0 0.0
    %4396 = vmatprep.subr.mxu0 0.0
    %4397 = vmatpush1.msra.mxu0 0.0
    %4398 = vmatprep.subr.mxu0 0.0
    %4399 = vmatpush1.msra.mxu0 0.0
    %4400 = vmatprep.subr.mxu0 0.0
    %4401 = vmatpush1.msra.mxu0 0.0
    %4402 = vmatprep.subr.mxu0 0.0
    %4403 = vmatpush1.msra.mxu0 0.0
    %4404 = vmatprep.subr.mxu0 0.0
    %4405 = vmatpush1.msra.mxu0 0.0
    %4406 = vmatprep.subr.mxu0 0.0
    %4407 = vmatpush1.msra.mxu0 0.0
    %4408 = vmatprep.subr.mxu0 0.0
    %4409 = vmatpush1.msra.mxu0 0.0
    %4410 = vmatprep.subr.mxu0 0.0
    %4411 = vmatpush1.msra.mxu0 0.0
    %4412 = vmatprep.subr.mxu0 0.0
    %4413 = vmatpush1.msra.mxu0 0.0
    %4414 = vmatprep.subr.mxu0 0.0
    %4415 = vmatpush1.msra.mxu0 0.0
    %4416 = vmatprep.subr.mxu0 0.0
    %4417 = vmatpush1.msra.mxu0 0.0
    %4418 = vmatprep.subr.mxu0 0.0
    %4419 = vmatpush1.msra.mxu0 %v2582
    %4420 = vmatprep.subr.mxu0 0.0
    %4421 = vmatpush1.msra.mxu0 %v2581
    %4422 = vmatprep.subr.mxu0 0.0
    %4423 = vmatpush1.msra.mxu0 %v2580
    %4424 = vmatprep.subr.mxu0 0.0
    %4425 = vmatpush1.msra.mxu0 %v2579
    %4426 = vmatprep.subr.mxu0 0.0
    %4427 = vmatpush2.msra.mxu0 0.0
    %4428 = vmatprep.subr.mxu0 0.0
    %4429 = vmatpush2.msra.mxu0 0.0
    %4430 = vmatprep.subr.mxu0 0.0
    %4431 = vmatpush2.msra.mxu0 0.0
    %4432 = vmatprep.subr.mxu0 0.0
    %4433 = vmatpush2.msra.mxu0 0.0
    %4434 = vmatprep.subr.mxu0 0.0
    %4435 = vmatpush2.msra.mxu0 0.0
    %4436 = vmatprep.subr.mxu0 0.0
    %4437 = vmatpush2.msra.mxu0 0.0
    %4438 = vmatprep.subr.mxu0 0.0
    %4439 = vmatpush2.msra.mxu0 0.0
    %4440 = vmatprep.subr.mxu0 0.0
    %4441 = vmatpush2.msra.mxu0 0.0
    %4442 = vmatprep.subr.mxu0 0.0
    %4443 = vmatpush2.msra.mxu0 0.0
    %4444 = vmatprep.subr.mxu0 0.0
    %4445 = vmatpush2.msra.mxu0 0.0
    %4446 = vmatprep.subr.mxu0 0.0
    %4447 = vmatpush2.msra.mxu0 0.0
    %4448 = vmatprep.subr.mxu0 0.0
    %4449 = vmatpush2.msra.mxu0 0.0
    %4450 = vmatprep.subr.mxu0 0.0
    %4451 = vmatpush2.msra.mxu0 0.0
    %4452 = vmatprep.subr.mxu0 0.0
    %4453 = vmatpush2.msra.mxu0 0.0
    %4454 = vmatprep.subr.mxu0 0.0
    %4455 = vmatpush2.msra.mxu0 0.0
    %4456 = vmatprep.subr.mxu0 0.0
    %4457 = vmatpush2.msra.mxu0 0.0
    %4458 = vmatprep.mubr.f32.mxu0 0.0
    %4459 = vmatmul.mubr.f32.gmra.mxu0 %v4392
    %v4460 = vpop.f32.mrf.mxu0
    %v4461 = vadd.f32 %v4386, %v4460
    %v4462 = vpop.f32.mrf.mxu0
    %4463 = vdwg.mxu0
    %v4464 = vadd.f32 %v4461, %v2863
    %v4465 = vxor.u32 %v4464, 2147483648
    %v4466 = vmul.f32 %v4465, 1.442695
    %v4467 = vpow.pop %v4466
    %v4468 = vadd.f32 %v4467, 1.0
    %v4469 = vrcp.pop %v4468
    %v4470 = vmul.f32 1.0, %v4469
    %v4471 = vtanh.pop %v4464
    %v4472 = vmul.f32 %v4470, %v3949
    %4474 = vrot.lane.b32.xlu0 %v4471, 64
    %v4475 = vpop.permute.xlu0 %4474
    %v4477 = vmul.f32 %v4470, %v4475
    %4479 = vrot.lane.b32.xlu0 %v4477, 32
    %v4480 = vpop.permute.xlu0 %4479
    %v4482 = vadd.f32 %v4472, %v4480
    %v4483 = vtanh.pop %v4482
    %4485 = vrot.lane.b32.xlu0 %v4483, 64
    %v4486 = vpop.permute.xlu0 %4485
    %v4488 = vmul.f32 %v4470, %v4486
    %4490 = vrot.lane.b32.xlu0 %v4488, 32
    %v4491 = vpop.permute.xlu0 %4490
    %4493 = vst.msk [vmem:[#allocation4 + $0x18] sm:$0xff] %vm91, %v4491
    %s4494 = sld [smem:[#allocation6 + $0x3]]
    %p4495 = scmp.eq.s32.totalorder %s4494, 1
    // Predicated region
    $region102: #{_seq2seq_jit.1} parent=1 // pred_check
      %p4496 = pneg %p4495
    $region103: #{_seq2seq_jit.1} parent=1 // pred_check_branch
      %4498 = sbr.rel (%p4496) target = $region105
    $region104: #{_seq2seq_jit.1} parent=1 // pred_region
      %v4499 = vld [vmem:[#allocation3 + $0x20] sm:$0xff]
      %4500 = vst [vmem:[#allocation5] sm:$0xff] %v4499
    $region105: #{_seq2seq_jit.1} parent=1 // pred_fallthru
      _
    %p4501 = scmp.ne.s32.totalorder %s4494, 1
    // Predicated region
    $region106: #{_seq2seq_jit.1} parent=1 // pred_check
      %p4502 = pneg %p4501
    $region107: #{_seq2seq_jit.1} parent=1 // pred_check_branch
      %4504 = sbr.rel (%p4502) target = $region109
    $region108: #{_seq2seq_jit.1} parent=1 // pred_region
      %v4506 = vlaneseq
      %v4507 = vshrl.u32 %v4506, 7
      %v4508 = vsub.s32 0, %v4507
      %v4509 = vrot.slane %v2608, %v4508
      %v4511 = vsel %vm91, %v4491, 0
      %4513 = vmatprep.subr.mxu0 0.0
      %4514 = vmatpush1.msra.mxu0 0.0
      %4515 = vmatprep.subr.mxu0 0.0
      %4516 = vmatpush1.msra.mxu0 0.0
      %4517 = vmatprep.subr.mxu0 0.0
      %4518 = vmatpush1.msra.mxu0 0.0
      %4519 = vmatprep.subr.mxu0 0.0
      %4520 = vmatpush1.msra.mxu0 0.0
      %4521 = vmatprep.subr.mxu0 0.0
      %4522 = vmatpush1.msra.mxu0 0.0
      %4523 = vmatprep.subr.mxu0 0.0
      %4524 = vmatpush1.msra.mxu0 0.0
      %4525 = vmatprep.subr.mxu0 0.0
      %4526 = vmatpush1.msra.mxu0 0.0
      %4527 = vmatprep.subr.mxu0 0.0
      %4528 = vmatpush1.msra.mxu0 0.0
      %4529 = vmatprep.subr.mxu0 0.0
      %4530 = vmatpush1.msra.mxu0 0.0
      %4531 = vmatprep.subr.mxu0 0.0
      %4532 = vmatpush1.msra.mxu0 0.0
      %4533 = vmatprep.subr.mxu0 0.0
      %4534 = vmatpush1.msra.mxu0 0.0
      %4535 = vmatprep.subr.mxu0 0.0
      %4536 = vmatpush1.msra.mxu0 0.0
      %4537 = vmatprep.subr.mxu0 0.0
      %4538 = vmatpush1.msra.mxu0 %v2607
      %4539 = vmatprep.subr.mxu0 0.0
      %4540 = vmatpush1.msra.mxu0 %v2606
      %4541 = vmatprep.subr.mxu0 0.0
      %4542 = vmatpush1.msra.mxu0 %v2605
      %4543 = vmatprep.subr.mxu0 0.0
      %4544 = vmatpush1.msra.mxu0 %v2604
      %4545 = vmatprep.subr.mxu0 0.0
      %4546 = vmatpush2.msra.mxu0 0.0
      %4547 = vmatprep.subr.mxu0 0.0
      %4548 = vmatpush2.msra.mxu0 0.0
      %4549 = vmatprep.subr.mxu0 0.0
      %4550 = vmatpush2.msra.mxu0 0.0
      %4551 = vmatprep.subr.mxu0 0.0
      %4552 = vmatpush2.msra.mxu0 0.0
      %4553 = vmatprep.subr.mxu0 0.0
      %4554 = vmatpush2.msra.mxu0 0.0
      %4555 = vmatprep.subr.mxu0 0.0
      %4556 = vmatpush2.msra.mxu0 0.0
      %4557 = vmatprep.subr.mxu0 0.0
      %4558 = vmatpush2.msra.mxu0 0.0
      %4559 = vmatprep.subr.mxu0 0.0
      %4560 = vmatpush2.msra.mxu0 0.0
      %4561 = vmatprep.subr.mxu0 0.0
      %4562 = vmatpush2.msra.mxu0 0.0
      %4563 = vmatprep.subr.mxu0 0.0
      %4564 = vmatpush2.msra.mxu0 0.0
      %4565 = vmatprep.subr.mxu0 0.0
      %4566 = vmatpush2.msra.mxu0 0.0
      %4567 = vmatprep.subr.mxu0 0.0
      %4568 = vmatpush2.msra.mxu0 0.0
      %4569 = vmatprep.subr.mxu0 0.0
      %4570 = vmatpush2.msra.mxu0 0.0
      %4571 = vmatprep.subr.mxu0 0.0
      %4572 = vmatpush2.msra.mxu0 0.0
      %4573 = vmatprep.subr.mxu0 0.0
      %4574 = vmatpush2.msra.mxu0 0.0
      %4575 = vmatprep.subr.mxu0 0.0
      %4576 = vmatpush2.msra.mxu0 0.0
      %4577 = vmatprep.mubr.f32.mxu0 0.0
      %4578 = vmatmul.mubr.f32.gmra.mxu0 %v4511
      %v4579 = vpop.f32.mrf.mxu0
      %v4580 = vadd.f32 %v4509, %v4579
      %v4581 = vpop.f32.mrf.mxu0
      %4582 = vdwg.mxu0
      %4583 = vmax.xlane.f32.xlu0 %v4580
      %v4584 = vpop.xlane.xlu0 %4583
      %vm4585 = vcmp.eq.f32.partialorder %v4580, %v4584
      %v4586 = vsel %vm4585, %v2610, 128
      %v4587 = vand.u32 %v4586, 65535
      %v4588 = vshra.s32 %v4586, 16
      %v4589 = vcvt.s32.f32 %v4587
      %v4590 = vcvt.s32.f32 %v4588
      %4591 = vmin.xlane.f32.xlu0 %v4590
      %v4592 = vpop.xlane.xlu0 %4591
      %vm4593 = vcmp.eq.f32.partialorder %v4590, %v4592
      %v4594 = vsel %vm4593, %v4589, inf
      %4595 = vmin.xlane.f32.xlu0 %v4594
      %v4596 = vpop.xlane.xlu0 %4595
      %v4597 = vcvt.f32.s32 %v4596
      %v4598 = vcvt.f32.s32 %v4592
      %v4599 = vshll.u32 %v4598, 16
      %v4600 = vadd.s32 %v4599, %v4597
      %vm4601 = vcmp.eq.s32.totalorder %v2610, %v4600
      %v4602 = vsel %vm4601, 1, 0
      %v4603 = vcvt.s32.f32 %v4602
      %4604 = vmatprep.subr.mxu0 0.0
      %4605 = vmatpush1.msra.mxu0 %v2603
      %4606 = vmatprep.subr.mxu0 0.0
      %4607 = vmatpush1.msra.mxu0 %v2602
      %4608 = vmatprep.subr.mxu0 0.0
      %4609 = vmatpush1.msra.mxu0 %v2601
      %4610 = vmatprep.subr.mxu0 0.0
      %4611 = vmatpush1.msra.mxu0 %v2600
      %4612 = vmatprep.subr.mxu0 0.0
      %4613 = vmatpush1.msra.mxu0 %v2599
      %4614 = vmatprep.subr.mxu0 0.0
      %4615 = vmatpush1.msra.mxu0 %v2598
      %4616 = vmatprep.subr.mxu0 0.0
      %4617 = vmatpush1.msra.mxu0 %v2597
      %4618 = vmatprep.subr.mxu0 0.0
      %4619 = vmatpush1.msra.mxu0 %v2596
      %4620 = vmatprep.subr.mxu0 0.0
      %4621 = vmatpush1.msra.mxu0 %v2595
      %4622 = vmatprep.subr.mxu0 0.0
      %4623 = vmatpush1.msra.mxu0 %v2594
      %4624 = vmatprep.subr.mxu0 0.0
      %4625 = vmatpush1.msra.mxu0 %v2593
      %4626 = vmatprep.subr.mxu0 0.0
      %4627 = vmatpush1.msra.mxu0 %v2592
      %4628 = vmatprep.subr.mxu0 0.0
      %4629 = vmatpush1.msra.mxu0 %v2591
      %4630 = vmatprep.subr.mxu0 0.0
      %4631 = vmatpush1.msra.mxu0 %v2590
      %4632 = vmatprep.subr.mxu0 0.0
      %4633 = vmatpush1.msra.mxu0 %v2589
      %4634 = vmatprep.subr.mxu0 0.0
      %4635 = vmatpush1.msra.mxu0 %v2588
      %4636 = vmatprep.subr.mxu0 0.0
      %4637 = vmatpush2.msra.mxu0 0.0
      %4638 = vmatprep.subr.mxu0 0.0
      %4639 = vmatpush2.msra.mxu0 0.0
      %4640 = vmatprep.subr.mxu0 0.0
      %4641 = vmatpush2.msra.mxu0 0.0
      %4642 = vmatprep.subr.mxu0 0.0
      %4643 = vmatpush2.msra.mxu0 0.0
      %4644 = vmatprep.subr.mxu0 0.0
      %4645 = vmatpush2.msra.mxu0 0.0
      %4646 = vmatprep.subr.mxu0 0.0
      %4647 = vmatpush2.msra.mxu0 0.0
      %4648 = vmatprep.subr.mxu0 0.0
      %4649 = vmatpush2.msra.mxu0 0.0
      %4650 = vmatprep.subr.mxu0 0.0
      %4651 = vmatpush2.msra.mxu0 0.0
      %4652 = vmatprep.subr.mxu0 0.0
      %4653 = vmatpush2.msra.mxu0 0.0
      %4654 = vmatprep.subr.mxu0 0.0
      %4655 = vmatpush2.msra.mxu0 0.0
      %4656 = vmatprep.subr.mxu0 0.0
      %4657 = vmatpush2.msra.mxu0 0.0
      %4658 = vmatprep.subr.mxu0 0.0
      %4659 = vmatpush2.msra.mxu0 0.0
      %4660 = vmatprep.subr.mxu0 0.0
      %4661 = vmatpush2.msra.mxu0 0.0
      %4662 = vmatprep.subr.mxu0 0.0
      %4663 = vmatpush2.msra.mxu0 0.0
      %4664 = vmatprep.subr.mxu0 0.0
      %4665 = vmatpush2.msra.mxu0 0.0
      %4666 = vmatprep.subr.mxu0 0.0
      %4667 = vmatpush2.msra.mxu0 0.0
      %4668 = vmatprep.mubr.f32.mxu0 0.0
      %4669 = vmatmul.mubr.f32.gmra.mxu0 %v4603
      %v4670 = vpop.f32.mrf.mxu0
      %v4671 = vadd.f32 0.0, %v4670
      %v4672 = vpop.f32.mrf.mxu0
      %4673 = vdwg.mxu0
      %v4675 = vlaneseq
      %v4676 = vshrl.u32 %v4675, 7
      %v4677 = vsub.s32 0, %v4676
      %v4678 = vrot.slane %v2578, %v4677
      %v4681 = vsel %vm91, %v4671, 0
      %4683 = vmatprep.subr.mxu0 0.0
      %4684 = vmatpush1.msra.mxu0 0.0
      %4685 = vmatprep.subr.mxu0 0.0
      %4686 = vmatpush1.msra.mxu0 0.0
      %4687 = vmatprep.subr.mxu0 0.0
      %4688 = vmatpush1.msra.mxu0 0.0
      %4689 = vmatprep.subr.mxu0 0.0
      %4690 = vmatpush1.msra.mxu0 0.0
      %4691 = vmatprep.subr.mxu0 0.0
      %4692 = vmatpush1.msra.mxu0 0.0
      %4693 = vmatprep.subr.mxu0 0.0
      %4694 = vmatpush1.msra.mxu0 0.0
      %4695 = vmatprep.subr.mxu0 0.0
      %4696 = vmatpush1.msra.mxu0 0.0
      %4697 = vmatprep.subr.mxu0 0.0
      %4698 = vmatpush1.msra.mxu0 0.0
      %4699 = vmatprep.subr.mxu0 0.0
      %4700 = vmatpush1.msra.mxu0 0.0
      %4701 = vmatprep.subr.mxu0 0.0
      %4702 = vmatpush1.msra.mxu0 0.0
      %4703 = vmatprep.subr.mxu0 0.0
      %4704 = vmatpush1.msra.mxu0 0.0
      %4705 = vmatprep.subr.mxu0 0.0
      %4706 = vmatpush1.msra.mxu0 0.0
      %4707 = vmatprep.subr.mxu0 0.0
      %4708 = vmatpush1.msra.mxu0 %v2573
      %4709 = vmatprep.subr.mxu0 0.0
      %4710 = vmatpush1.msra.mxu0 %v2572
      %4711 = vmatprep.subr.mxu0 0.0
      %4712 = vmatpush1.msra.mxu0 %v2571
      %4713 = vmatprep.subr.mxu0 0.0
      %4714 = vmatpush1.msra.mxu0 %v2570
      %4715 = vmatprep.subr.mxu0 0.0
      %4716 = vmatpush2.msra.mxu0 0.0
      %4717 = vmatprep.subr.mxu0 0.0
      %4718 = vmatpush2.msra.mxu0 0.0
      %4719 = vmatprep.subr.mxu0 0.0
      %4720 = vmatpush2.msra.mxu0 0.0
      %4721 = vmatprep.subr.mxu0 0.0
      %4722 = vmatpush2.msra.mxu0 0.0
      %4723 = vmatprep.subr.mxu0 0.0
      %4724 = vmatpush2.msra.mxu0 0.0
      %4725 = vmatprep.subr.mxu0 0.0
      %4726 = vmatpush2.msra.mxu0 0.0
      %4727 = vmatprep.subr.mxu0 0.0
      %4728 = vmatpush2.msra.mxu0 0.0
      %4729 = vmatprep.subr.mxu0 0.0
      %4730 = vmatpush2.msra.mxu0 0.0
      %4731 = vmatprep.subr.mxu0 0.0
      %4732 = vmatpush2.msra.mxu0 0.0
      %4733 = vmatprep.subr.mxu0 0.0
      %4734 = vmatpush2.msra.mxu0 0.0
      %4735 = vmatprep.subr.mxu0 0.0
      %4736 = vmatpush2.msra.mxu0 0.0
      %4737 = vmatprep.subr.mxu0 0.0
      %4738 = vmatpush2.msra.mxu0 0.0
      %4739 = vmatprep.subr.mxu0 0.0
      %4740 = vmatpush2.msra.mxu0 0.0
      %4741 = vmatprep.subr.mxu0 0.0
      %4742 = vmatpush2.msra.mxu0 0.0
      %4743 = vmatprep.subr.mxu0 0.0
      %4744 = vmatpush2.msra.mxu0 0.0
      %4745 = vmatprep.subr.mxu0 0.0
      %4746 = vmatpush2.msra.mxu0 0.0
      %4747 = vmatprep.mubr.f32.mxu0 0.0
      %4748 = vmatmul.mubr.f32.gmra.mxu0 %v4681
      %v4749 = vpop.f32.mrf.mxu0
      %v4750 = vadd.f32 %v4678, %v4749
      %v4751 = vpop.f32.mrf.mxu0
      %4752 = vdwg.mxu0
      %4753 = vst [vmem:[#allocation5] sm:$0xff] %v4750
    $region109: #{_seq2seq_jit.1} parent=1 // pred_fallthru
      _
    %v4754 = vld [vmem:[#allocation5] sm:$0xff]
    %4755 = vmatprep.subr.mxu0 0.0
    %4756 = vmatpush1.msra.mxu0 0.0
    %4757 = vmatprep.subr.mxu0 0.0
    %4758 = vmatpush1.msra.mxu0 0.0
    %4759 = vmatprep.subr.mxu0 0.0
    %4760 = vmatpush1.msra.mxu0 0.0
    %4761 = vmatprep.subr.mxu0 0.0
    %4762 = vmatpush1.msra.mxu0 0.0
    %4763 = vmatprep.subr.mxu0 0.0
    %4764 = vmatpush1.msra.mxu0 0.0
    %4765 = vmatprep.subr.mxu0 0.0
    %4766 = vmatpush1.msra.mxu0 0.0
    %4767 = vmatprep.subr.mxu0 0.0
    %4768 = vmatpush1.msra.mxu0 0.0
    %4769 = vmatprep.subr.mxu0 0.0
    %4770 = vmatpush1.msra.mxu0 0.0
    %4771 = vmatprep.subr.mxu0 0.0
    %4772 = vmatpush1.msra.mxu0 0.0
    %4773 = vmatprep.subr.mxu0 0.0
    %4774 = vmatpush1.msra.mxu0 0.0
    %4775 = vmatprep.subr.mxu0 0.0
    %4776 = vmatpush1.msra.mxu0 0.0
    %4777 = vmatprep.subr.mxu0 0.0
    %4778 = vmatpush1.msra.mxu0 0.0
    %4779 = vmatprep.subr.mxu0 0.0
    %4780 = vmatpush1.msra.mxu0 %v2577
    %4781 = vmatprep.subr.mxu0 0.0
    %4782 = vmatpush1.msra.mxu0 %v2576
    %4783 = vmatprep.subr.mxu0 0.0
    %4784 = vmatpush1.msra.mxu0 %v2575
    %4785 = vmatprep.subr.mxu0 0.0
    %4786 = vmatpush1.msra.mxu0 %v2574
    %4787 = vmatprep.subr.mxu0 0.0
    %4788 = vmatpush2.msra.mxu0 0.0
    %4789 = vmatprep.subr.mxu0 0.0
    %4790 = vmatpush2.msra.mxu0 0.0
    %4791 = vmatprep.subr.mxu0 0.0
    %4792 = vmatpush2.msra.mxu0 0.0
    %4793 = vmatprep.subr.mxu0 0.0
    %4794 = vmatpush2.msra.mxu0 0.0
    %4795 = vmatprep.subr.mxu0 0.0
    %4796 = vmatpush2.msra.mxu0 0.0
    %4797 = vmatprep.subr.mxu0 0.0
    %4798 = vmatpush2.msra.mxu0 0.0
    %4799 = vmatprep.subr.mxu0 0.0
    %4800 = vmatpush2.msra.mxu0 0.0
    %4801 = vmatprep.subr.mxu0 0.0
    %4802 = vmatpush2.msra.mxu0 0.0
    %4803 = vmatprep.subr.mxu0 0.0
    %4804 = vmatpush2.msra.mxu0 0.0
    %4805 = vmatprep.subr.mxu0 0.0
    %4806 = vmatpush2.msra.mxu0 0.0
    %4807 = vmatprep.subr.mxu0 0.0
    %4808 = vmatpush2.msra.mxu0 0.0
    %4809 = vmatprep.subr.mxu0 0.0
    %4810 = vmatpush2.msra.mxu0 0.0
    %4811 = vmatprep.subr.mxu0 0.0
    %4812 = vmatpush2.msra.mxu0 0.0
    %4813 = vmatprep.subr.mxu0 0.0
    %4814 = vmatpush2.msra.mxu0 0.0
    %4815 = vmatprep.subr.mxu0 0.0
    %4816 = vmatpush2.msra.mxu0 0.0
    %4817 = vmatprep.subr.mxu0 0.0
    %4818 = vmatpush2.msra.mxu0 0.0
    %4819 = vmatprep.mubr.f32.mxu0 0.0
    %4820 = vmatmul.mubr.f32.gmra.mxu0 %v4392
    %v4821 = vpop.f32.mrf.mxu0
    %v4822 = vadd.f32 0.0, %v4821
    %v4823 = vpop.f32.mrf.mxu0
    %4824 = vdwg.mxu0
    %v4825 = vadd.f32 %v4754, %v4822
    %v4826 = vxor.u32 %v4825, 2147483648
    %v4827 = vmul.f32 %v4826, 1.442695
    %v4828 = vpow.pop %v4827
    %v4829 = vadd.f32 %v4828, 1.0
    %v4830 = vrcp.pop %v4829
    %v4831 = vmul.f32 1.0, %v4830
    %v4832 = vtanh.pop %v4825
    %v4833 = vmul.f32 %v4831, %v4310
    %4835 = vrot.lane.b32.xlu0 %v4832, 64
    %v4836 = vpop.permute.xlu0 %4835
    %v4838 = vmul.f32 %v4831, %v4836
    %4840 = vrot.lane.b32.xlu0 %v4838, 32
    %v4841 = vpop.permute.xlu0 %4840
    %v4843 = vadd.f32 %v4833, %v4841
    %v4844 = vtanh.pop %v4843
    %4846 = vrot.lane.b32.xlu0 %v4844, 64
    %v4847 = vpop.permute.xlu0 %4846
    %v4849 = vmul.f32 %v4831, %v4847
    %v4850 = vsel %vm91, %v4491, 0
    %4852 = vmatprep.subr.mxu0 0.0
    %4853 = vmatpush1.msra.mxu0 0.0
    %4854 = vmatprep.subr.mxu0 0.0
    %4855 = vmatpush1.msra.mxu0 0.0
    %4856 = vmatprep.subr.mxu0 0.0
    %4857 = vmatpush1.msra.mxu0 0.0
    %4858 = vmatprep.subr.mxu0 0.0
    %4859 = vmatpush1.msra.mxu0 0.0
    %4860 = vmatprep.subr.mxu0 0.0
    %4861 = vmatpush1.msra.mxu0 0.0
    %4862 = vmatprep.subr.mxu0 0.0
    %4863 = vmatpush1.msra.mxu0 0.0
    %4864 = vmatprep.subr.mxu0 0.0
    %4865 = vmatpush1.msra.mxu0 0.0
    %4866 = vmatprep.subr.mxu0 0.0
    %4867 = vmatpush1.msra.mxu0 0.0
    %4868 = vmatprep.subr.mxu0 0.0
    %4869 = vmatpush1.msra.mxu0 0.0
    %4870 = vmatprep.subr.mxu0 0.0
    %4871 = vmatpush1.msra.mxu0 0.0
    %4872 = vmatprep.subr.mxu0 0.0
    %4873 = vmatpush1.msra.mxu0 0.0
    %4874 = vmatprep.subr.mxu0 0.0
    %4875 = vmatpush1.msra.mxu0 0.0
    %4876 = vmatprep.subr.mxu0 0.0
    %4877 = vmatpush1.msra.mxu0 %v2586
    %4878 = vmatprep.subr.mxu0 0.0
    %4879 = vmatpush1.msra.mxu0 %v2585
    %4880 = vmatprep.subr.mxu0 0.0
    %4881 = vmatpush1.msra.mxu0 %v2584
    %4882 = vmatprep.subr.mxu0 0.0
    %4883 = vmatpush1.msra.mxu0 %v2583
    %4884 = vmatprep.subr.mxu0 0.0
    %4885 = vmatpush2.msra.mxu0 0.0
    %4886 = vmatprep.subr.mxu0 0.0
    %4887 = vmatpush2.msra.mxu0 0.0
    %4888 = vmatprep.subr.mxu0 0.0
    %4889 = vmatpush2.msra.mxu0 0.0
    %4890 = vmatprep.subr.mxu0 0.0
    %4891 = vmatpush2.msra.mxu0 0.0
    %4892 = vmatprep.subr.mxu0 0.0
    %4893 = vmatpush2.msra.mxu0 0.0
    %4894 = vmatprep.subr.mxu0 0.0
    %4895 = vmatpush2.msra.mxu0 0.0
    %4896 = vmatprep.subr.mxu0 0.0
    %4897 = vmatpush2.msra.mxu0 0.0
    %4898 = vmatprep.subr.mxu0 0.0
    %4899 = vmatpush2.msra.mxu0 0.0
    %4900 = vmatprep.subr.mxu0 0.0
    %4901 = vmatpush2.msra.mxu0 0.0
    %4902 = vmatprep.subr.mxu0 0.0
    %4903 = vmatpush2.msra.mxu0 0.0
    %4904 = vmatprep.subr.mxu0 0.0
    %4905 = vmatpush2.msra.mxu0 0.0
    %4906 = vmatprep.subr.mxu0 0.0
    %4907 = vmatpush2.msra.mxu0 0.0
    %4908 = vmatprep.subr.mxu0 0.0
    %4909 = vmatpush2.msra.mxu0 0.0
    %4910 = vmatprep.subr.mxu0 0.0
    %4911 = vmatpush2.msra.mxu0 0.0
    %4912 = vmatprep.subr.mxu0 0.0
    %4913 = vmatpush2.msra.mxu0 0.0
    %4914 = vmatprep.subr.mxu0 0.0
    %4915 = vmatpush2.msra.mxu0 0.0
    %4916 = vmatprep.mubr.f32.mxu0 0.0
    %4917 = vmatmul.mubr.f32.gmra.mxu0 %v4850
    %v4918 = vpop.f32.mrf.mxu0
    %v4919 = vadd.f32 0.0, %v4918
    %v4920 = vpop.f32.mrf.mxu0
    %4921 = vdwg.mxu0
    %4923 = vrot.lane.b32.xlu0 %v4849, 32
    %v4924 = vpop.permute.xlu0 %4923
    %v4925 = vsel %vm91, %v4924, 0
    %4927 = vmatprep.subr.mxu0 0.0
    %4928 = vmatpush1.msra.mxu0 0.0
    %4929 = vmatprep.subr.mxu0 0.0
    %4930 = vmatpush1.msra.mxu0 0.0
    %4931 = vmatprep.subr.mxu0 0.0
    %4932 = vmatpush1.msra.mxu0 0.0
    %4933 = vmatprep.subr.mxu0 0.0
    %4934 = vmatpush1.msra.mxu0 0.0
    %4935 = vmatprep.subr.mxu0 0.0
    %4936 = vmatpush1.msra.mxu0 0.0
    %4937 = vmatprep.subr.mxu0 0.0
    %4938 = vmatpush1.msra.mxu0 0.0
    %4939 = vmatprep.subr.mxu0 0.0
    %4940 = vmatpush1.msra.mxu0 0.0
    %4941 = vmatprep.subr.mxu0 0.0
    %4942 = vmatpush1.msra.mxu0 0.0
    %4943 = vmatprep.subr.mxu0 0.0
    %4944 = vmatpush1.msra.mxu0 0.0
    %4945 = vmatprep.subr.mxu0 0.0
    %4946 = vmatpush1.msra.mxu0 0.0
    %4947 = vmatprep.subr.mxu0 0.0
    %4948 = vmatpush1.msra.mxu0 0.0
    %4949 = vmatprep.subr.mxu0 0.0
    %4950 = vmatpush1.msra.mxu0 0.0
    %4951 = vmatprep.subr.mxu0 0.0
    %4952 = vmatpush1.msra.mxu0 %v2582
    %4953 = vmatprep.subr.mxu0 0.0
    %4954 = vmatpush1.msra.mxu0 %v2581
    %4955 = vmatprep.subr.mxu0 0.0
    %4956 = vmatpush1.msra.mxu0 %v2580
    %4957 = vmatprep.subr.mxu0 0.0
    %4958 = vmatpush1.msra.mxu0 %v2579
    %4959 = vmatprep.subr.mxu0 0.0
    %4960 = vmatpush2.msra.mxu0 0.0
    %4961 = vmatprep.subr.mxu0 0.0
    %4962 = vmatpush2.msra.mxu0 0.0
    %4963 = vmatprep.subr.mxu0 0.0
    %4964 = vmatpush2.msra.mxu0 0.0
    %4965 = vmatprep.subr.mxu0 0.0
    %4966 = vmatpush2.msra.mxu0 0.0
    %4967 = vmatprep.subr.mxu0 0.0
    %4968 = vmatpush2.msra.mxu0 0.0
    %4969 = vmatprep.subr.mxu0 0.0
    %4970 = vmatpush2.msra.mxu0 0.0
    %4971 = vmatprep.subr.mxu0 0.0
    %4972 = vmatpush2.msra.mxu0 0.0
    %4973 = vmatprep.subr.mxu0 0.0
    %4974 = vmatpush2.msra.mxu0 0.0
    %4975 = vmatprep.subr.mxu0 0.0
    %4976 = vmatpush2.msra.mxu0 0.0
    %4977 = vmatprep.subr.mxu0 0.0
    %4978 = vmatpush2.msra.mxu0 0.0
    %4979 = vmatprep.subr.mxu0 0.0
    %4980 = vmatpush2.msra.mxu0 0.0
    %4981 = vmatprep.subr.mxu0 0.0
    %4982 = vmatpush2.msra.mxu0 0.0
    %4983 = vmatprep.subr.mxu0 0.0
    %4984 = vmatpush2.msra.mxu0 0.0
    %4985 = vmatprep.subr.mxu0 0.0
    %4986 = vmatpush2.msra.mxu0 0.0
    %4987 = vmatprep.subr.mxu0 0.0
    %4988 = vmatpush2.msra.mxu0 0.0
    %4989 = vmatprep.subr.mxu0 0.0
    %4990 = vmatpush2.msra.mxu0 0.0
    %4991 = vmatprep.mubr.f32.mxu0 0.0
    %4992 = vmatmul.mubr.f32.gmra.mxu0 %v4925
    %v4993 = vpop.f32.mrf.mxu0
    %v4994 = vadd.f32 %v4919, %v4993
    %v4995 = vpop.f32.mrf.mxu0
    %4996 = vdwg.mxu0
    %v4997 = vadd.f32 %v4994, %v2863
    %v4998 = vxor.u32 %v4997, 2147483648
    %v4999 = vmul.f32 %v4998, 1.442695
    %v5000 = vpow.pop %v4999
    %v5001 = vadd.f32 %v5000, 1.0
    %v5002 = vrcp.pop %v5001
    %v5003 = vmul.f32 1.0, %v5002
    %v5004 = vtanh.pop %v4997
    %v5005 = vmul.f32 %v5003, %v4482
    %5007 = vrot.lane.b32.xlu0 %v5004, 64
    %v5008 = vpop.permute.xlu0 %5007
    %v5010 = vmul.f32 %v5003, %v5008
    %5012 = vrot.lane.b32.xlu0 %v5010, 32
    %v5013 = vpop.permute.xlu0 %5012
    %v5015 = vadd.f32 %v5005, %v5013
    %v5016 = vtanh.pop %v5015
    %5018 = vrot.lane.b32.xlu0 %v5016, 64
    %v5019 = vpop.permute.xlu0 %5018
    %v5021 = vmul.f32 %v5003, %v5019
    %5023 = vrot.lane.b32.xlu0 %v5021, 32
    %v5024 = vpop.permute.xlu0 %5023
    %5026 = vst.msk [vmem:[#allocation4 + $0x20] sm:$0xff] %vm91, %v5024
    %s5027 = sld [smem:[#allocation6 + $0x4]]
    %p5028 = scmp.eq.s32.totalorder %s5027, 1
    // Predicated region
    $region110: #{_seq2seq_jit.1} parent=1 // pred_check
      %p5029 = pneg %p5028
    $region111: #{_seq2seq_jit.1} parent=1 // pred_check_branch
      %5031 = sbr.rel (%p5029) target = $region113
    $region112: #{_seq2seq_jit.1} parent=1 // pred_region
      %v5032 = vld [vmem:[#allocation3 + $0x28] sm:$0xff]
      %5033 = vst [vmem:[#allocation5] sm:$0xff] %v5032
    $region113: #{_seq2seq_jit.1} parent=1 // pred_fallthru
      _
    %p5034 = scmp.ne.s32.totalorder %s5027, 1
    // Predicated region
    $region114: #{_seq2seq_jit.1} parent=1 // pred_check
      %p5035 = pneg %p5034
    $region115: #{_seq2seq_jit.1} parent=1 // pred_check_branch
      %5037 = sbr.rel (%p5035) target = $region117
    $region116: #{_seq2seq_jit.1} parent=1 // pred_region
      %v5039 = vlaneseq
      %v5040 = vshrl.u32 %v5039, 7
      %v5041 = vsub.s32 0, %v5040
      %v5042 = vrot.slane %v2608, %v5041
      %v5044 = vsel %vm91, %v5024, 0
      %5046 = vmatprep.subr.mxu0 0.0
      %5047 = vmatpush1.msra.mxu0 0.0
      %5048 = vmatprep.subr.mxu0 0.0
      %5049 = vmatpush1.msra.mxu0 0.0
      %5050 = vmatprep.subr.mxu0 0.0
      %5051 = vmatpush1.msra.mxu0 0.0
      %5052 = vmatprep.subr.mxu0 0.0
      %5053 = vmatpush1.msra.mxu0 0.0
      %5054 = vmatprep.subr.mxu0 0.0
      %5055 = vmatpush1.msra.mxu0 0.0
      %5056 = vmatprep.subr.mxu0 0.0
      %5057 = vmatpush1.msra.mxu0 0.0
      %5058 = vmatprep.subr.mxu0 0.0
      %5059 = vmatpush1.msra.mxu0 0.0
      %5060 = vmatprep.subr.mxu0 0.0
      %5061 = vmatpush1.msra.mxu0 0.0
      %5062 = vmatprep.subr.mxu0 0.0
      %5063 = vmatpush1.msra.mxu0 0.0
      %5064 = vmatprep.subr.mxu0 0.0
      %5065 = vmatpush1.msra.mxu0 0.0
      %5066 = vmatprep.subr.mxu0 0.0
      %5067 = vmatpush1.msra.mxu0 0.0
      %5068 = vmatprep.subr.mxu0 0.0
      %5069 = vmatpush1.msra.mxu0 0.0
      %5070 = vmatprep.subr.mxu0 0.0
      %5071 = vmatpush1.msra.mxu0 %v2607
      %5072 = vmatprep.subr.mxu0 0.0
      %5073 = vmatpush1.msra.mxu0 %v2606
      %5074 = vmatprep.subr.mxu0 0.0
      %5075 = vmatpush1.msra.mxu0 %v2605
      %5076 = vmatprep.subr.mxu0 0.0
      %5077 = vmatpush1.msra.mxu0 %v2604
      %5078 = vmatprep.subr.mxu0 0.0
      %5079 = vmatpush2.msra.mxu0 0.0
      %5080 = vmatprep.subr.mxu0 0.0
      %5081 = vmatpush2.msra.mxu0 0.0
      %5082 = vmatprep.subr.mxu0 0.0
      %5083 = vmatpush2.msra.mxu0 0.0
      %5084 = vmatprep.subr.mxu0 0.0
      %5085 = vmatpush2.msra.mxu0 0.0
      %5086 = vmatprep.subr.mxu0 0.0
      %5087 = vmatpush2.msra.mxu0 0.0
      %5088 = vmatprep.subr.mxu0 0.0
      %5089 = vmatpush2.msra.mxu0 0.0
      %5090 = vmatprep.subr.mxu0 0.0
      %5091 = vmatpush2.msra.mxu0 0.0
      %5092 = vmatprep.subr.mxu0 0.0
      %5093 = vmatpush2.msra.mxu0 0.0
      %5094 = vmatprep.subr.mxu0 0.0
      %5095 = vmatpush2.msra.mxu0 0.0
      %5096 = vmatprep.subr.mxu0 0.0
      %5097 = vmatpush2.msra.mxu0 0.0
      %5098 = vmatprep.subr.mxu0 0.0
      %5099 = vmatpush2.msra.mxu0 0.0
      %5100 = vmatprep.subr.mxu0 0.0
      %5101 = vmatpush2.msra.mxu0 0.0
      %5102 = vmatprep.subr.mxu0 0.0
      %5103 = vmatpush2.msra.mxu0 0.0
      %5104 = vmatprep.subr.mxu0 0.0
      %5105 = vmatpush2.msra.mxu0 0.0
      %5106 = vmatprep.subr.mxu0 0.0
      %5107 = vmatpush2.msra.mxu0 0.0
      %5108 = vmatprep.subr.mxu0 0.0
      %5109 = vmatpush2.msra.mxu0 0.0
      %5110 = vmatprep.mubr.f32.mxu0 0.0
      %5111 = vmatmul.mubr.f32.gmra.mxu0 %v5044
      %v5112 = vpop.f32.mrf.mxu0
      %v5113 = vadd.f32 %v5042, %v5112
      %v5114 = vpop.f32.mrf.mxu0
      %5115 = vdwg.mxu0
      %5116 = vmax.xlane.f32.xlu0 %v5113
      %v5117 = vpop.xlane.xlu0 %5116
      %vm5118 = vcmp.eq.f32.partialorder %v5113, %v5117
      %v5119 = vsel %vm5118, %v2610, 128
      %v5120 = vand.u32 %v5119, 65535
      %v5121 = vshra.s32 %v5119, 16
      %v5122 = vcvt.s32.f32 %v5120
      %v5123 = vcvt.s32.f32 %v5121
      %5124 = vmin.xlane.f32.xlu0 %v5123
      %v5125 = vpop.xlane.xlu0 %5124
      %vm5126 = vcmp.eq.f32.partialorder %v5123, %v5125
      %v5127 = vsel %vm5126, %v5122, inf
      %5128 = vmin.xlane.f32.xlu0 %v5127
      %v5129 = vpop.xlane.xlu0 %5128
      %v5130 = vcvt.f32.s32 %v5129
      %v5131 = vcvt.f32.s32 %v5125
      %v5132 = vshll.u32 %v5131, 16
      %v5133 = vadd.s32 %v5132, %v5130
      %vm5134 = vcmp.eq.s32.totalorder %v2610, %v5133
      %v5135 = vsel %vm5134, 1, 0
      %v5136 = vcvt.s32.f32 %v5135
      %5137 = vmatprep.subr.mxu0 0.0
      %5138 = vmatpush1.msra.mxu0 %v2603
      %5139 = vmatprep.subr.mxu0 0.0
      %5140 = vmatpush1.msra.mxu0 %v2602
      %5141 = vmatprep.subr.mxu0 0.0
      %5142 = vmatpush1.msra.mxu0 %v2601
      %5143 = vmatprep.subr.mxu0 0.0
      %5144 = vmatpush1.msra.mxu0 %v2600
      %5145 = vmatprep.subr.mxu0 0.0
      %5146 = vmatpush1.msra.mxu0 %v2599
      %5147 = vmatprep.subr.mxu0 0.0
      %5148 = vmatpush1.msra.mxu0 %v2598
      %5149 = vmatprep.subr.mxu0 0.0
      %5150 = vmatpush1.msra.mxu0 %v2597
      %5151 = vmatprep.subr.mxu0 0.0
      %5152 = vmatpush1.msra.mxu0 %v2596
      %5153 = vmatprep.subr.mxu0 0.0
      %5154 = vmatpush1.msra.mxu0 %v2595
      %5155 = vmatprep.subr.mxu0 0.0
      %5156 = vmatpush1.msra.mxu0 %v2594
      %5157 = vmatprep.subr.mxu0 0.0
      %5158 = vmatpush1.msra.mxu0 %v2593
      %5159 = vmatprep.subr.mxu0 0.0
      %5160 = vmatpush1.msra.mxu0 %v2592
      %5161 = vmatprep.subr.mxu0 0.0
      %5162 = vmatpush1.msra.mxu0 %v2591
      %5163 = vmatprep.subr.mxu0 0.0
      %5164 = vmatpush1.msra.mxu0 %v2590
      %5165 = vmatprep.subr.mxu0 0.0
      %5166 = vmatpush1.msra.mxu0 %v2589
      %5167 = vmatprep.subr.mxu0 0.0
      %5168 = vmatpush1.msra.mxu0 %v2588
      %5169 = vmatprep.subr.mxu0 0.0
      %5170 = vmatpush2.msra.mxu0 0.0
      %5171 = vmatprep.subr.mxu0 0.0
      %5172 = vmatpush2.msra.mxu0 0.0
      %5173 = vmatprep.subr.mxu0 0.0
      %5174 = vmatpush2.msra.mxu0 0.0
      %5175 = vmatprep.subr.mxu0 0.0
      %5176 = vmatpush2.msra.mxu0 0.0
      %5177 = vmatprep.subr.mxu0 0.0
      %5178 = vmatpush2.msra.mxu0 0.0
      %5179 = vmatprep.subr.mxu0 0.0
      %5180 = vmatpush2.msra.mxu0 0.0
      %5181 = vmatprep.subr.mxu0 0.0
      %5182 = vmatpush2.msra.mxu0 0.0
      %5183 = vmatprep.subr.mxu0 0.0
      %5184 = vmatpush2.msra.mxu0 0.0
      %5185 = vmatprep.subr.mxu0 0.0
      %5186 = vmatpush2.msra.mxu0 0.0
      %5187 = vmatprep.subr.mxu0 0.0
      %5188 = vmatpush2.msra.mxu0 0.0
      %5189 = vmatprep.subr.mxu0 0.0
      %5190 = vmatpush2.msra.mxu0 0.0
      %5191 = vmatprep.subr.mxu0 0.0
      %5192 = vmatpush2.msra.mxu0 0.0
      %5193 = vmatprep.subr.mxu0 0.0
      %5194 = vmatpush2.msra.mxu0 0.0
      %5195 = vmatprep.subr.mxu0 0.0
      %5196 = vmatpush2.msra.mxu0 0.0
      %5197 = vmatprep.subr.mxu0 0.0
      %5198 = vmatpush2.msra.mxu0 0.0
      %5199 = vmatprep.subr.mxu0 0.0
      %5200 = vmatpush2.msra.mxu0 0.0
      %5201 = vmatprep.mubr.f32.mxu0 0.0
      %5202 = vmatmul.mubr.f32.gmra.mxu0 %v5136
      %v5203 = vpop.f32.mrf.mxu0
      %v5204 = vadd.f32 0.0, %v5203
      %v5205 = vpop.f32.mrf.mxu0
      %5206 = vdwg.mxu0
      %v5208 = vlaneseq
      %v5209 = vshrl.u32 %v5208, 7
      %v5210 = vsub.s32 0, %v5209
      %v5211 = vrot.slane %v2578, %v5210
      %v5214 = vsel %vm91, %v5204, 0
      %5216 = vmatprep.subr.mxu0 0.0
      %5217 = vmatpush1.msra.mxu0 0.0
      %5218 = vmatprep.subr.mxu0 0.0
      %5219 = vmatpush1.msra.mxu0 0.0
      %5220 = vmatprep.subr.mxu0 0.0
      %5221 = vmatpush1.msra.mxu0 0.0
      %5222 = vmatprep.subr.mxu0 0.0
      %5223 = vmatpush1.msra.mxu0 0.0
      %5224 = vmatprep.subr.mxu0 0.0
      %5225 = vmatpush1.msra.mxu0 0.0
      %5226 = vmatprep.subr.mxu0 0.0
      %5227 = vmatpush1.msra.mxu0 0.0
      %5228 = vmatprep.subr.mxu0 0.0
      %5229 = vmatpush1.msra.mxu0 0.0
      %5230 = vmatprep.subr.mxu0 0.0
      %5231 = vmatpush1.msra.mxu0 0.0
      %5232 = vmatprep.subr.mxu0 0.0
      %5233 = vmatpush1.msra.mxu0 0.0
      %5234 = vmatprep.subr.mxu0 0.0
      %5235 = vmatpush1.msra.mxu0 0.0
      %5236 = vmatprep.subr.mxu0 0.0
      %5237 = vmatpush1.msra.mxu0 0.0
      %5238 = vmatprep.subr.mxu0 0.0
      %5239 = vmatpush1.msra.mxu0 0.0
      %5240 = vmatprep.subr.mxu0 0.0
      %5241 = vmatpush1.msra.mxu0 %v2573
      %5242 = vmatprep.subr.mxu0 0.0
      %5243 = vmatpush1.msra.mxu0 %v2572
      %5244 = vmatprep.subr.mxu0 0.0
      %5245 = vmatpush1.msra.mxu0 %v2571
      %5246 = vmatprep.subr.mxu0 0.0
      %5247 = vmatpush1.msra.mxu0 %v2570
      %5248 = vmatprep.subr.mxu0 0.0
      %5249 = vmatpush2.msra.mxu0 0.0
      %5250 = vmatprep.subr.mxu0 0.0
      %5251 = vmatpush2.msra.mxu0 0.0
      %5252 = vmatprep.subr.mxu0 0.0
      %5253 = vmatpush2.msra.mxu0 0.0
      %5254 = vmatprep.subr.mxu0 0.0
      %5255 = vmatpush2.msra.mxu0 0.0
      %5256 = vmatprep.subr.mxu0 0.0
      %5257 = vmatpush2.msra.mxu0 0.0
      %5258 = vmatprep.subr.mxu0 0.0
      %5259 = vmatpush2.msra.mxu0 0.0
      %5260 = vmatprep.subr.mxu0 0.0
      %5261 = vmatpush2.msra.mxu0 0.0
      %5262 = vmatprep.subr.mxu0 0.0
      %5263 = vmatpush2.msra.mxu0 0.0
      %5264 = vmatprep.subr.mxu0 0.0
      %5265 = vmatpush2.msra.mxu0 0.0
      %5266 = vmatprep.subr.mxu0 0.0
      %5267 = vmatpush2.msra.mxu0 0.0
      %5268 = vmatprep.subr.mxu0 0.0
      %5269 = vmatpush2.msra.mxu0 0.0
      %5270 = vmatprep.subr.mxu0 0.0
      %5271 = vmatpush2.msra.mxu0 0.0
      %5272 = vmatprep.subr.mxu0 0.0
      %5273 = vmatpush2.msra.mxu0 0.0
      %5274 = vmatprep.subr.mxu0 0.0
      %5275 = vmatpush2.msra.mxu0 0.0
      %5276 = vmatprep.subr.mxu0 0.0
      %5277 = vmatpush2.msra.mxu0 0.0
      %5278 = vmatprep.subr.mxu0 0.0
      %5279 = vmatpush2.msra.mxu0 0.0
      %5280 = vmatprep.mubr.f32.mxu0 0.0
      %5281 = vmatmul.mubr.f32.gmra.mxu0 %v5214
      %v5282 = vpop.f32.mrf.mxu0
      %v5283 = vadd.f32 %v5211, %v5282
      %v5284 = vpop.f32.mrf.mxu0
      %5285 = vdwg.mxu0
      %5286 = vst [vmem:[#allocation5] sm:$0xff] %v5283
    $region117: #{_seq2seq_jit.1} parent=1 // pred_fallthru
      _
    %v5287 = vld [vmem:[#allocation5] sm:$0xff]
    %5288 = vmatprep.subr.mxu0 0.0
    %5289 = vmatpush1.msra.mxu0 0.0
    %5290 = vmatprep.subr.mxu0 0.0
    %5291 = vmatpush1.msra.mxu0 0.0
    %5292 = vmatprep.subr.mxu0 0.0
    %5293 = vmatpush1.msra.mxu0 0.0
    %5294 = vmatprep.subr.mxu0 0.0
    %5295 = vmatpush1.msra.mxu0 0.0
    %5296 = vmatprep.subr.mxu0 0.0
    %5297 = vmatpush1.msra.mxu0 0.0
    %5298 = vmatprep.subr.mxu0 0.0
    %5299 = vmatpush1.msra.mxu0 0.0
    %5300 = vmatprep.subr.mxu0 0.0
    %5301 = vmatpush1.msra.mxu0 0.0
    %5302 = vmatprep.subr.mxu0 0.0
    %5303 = vmatpush1.msra.mxu0 0.0
    %5304 = vmatprep.subr.mxu0 0.0
    %5305 = vmatpush1.msra.mxu0 0.0
    %5306 = vmatprep.subr.mxu0 0.0
    %5307 = vmatpush1.msra.mxu0 0.0
    %5308 = vmatprep.subr.mxu0 0.0
    %5309 = vmatpush1.msra.mxu0 0.0
    %5310 = vmatprep.subr.mxu0 0.0
    %5311 = vmatpush1.msra.mxu0 0.0
    %5312 = vmatprep.subr.mxu0 0.0
    %5313 = vmatpush1.msra.mxu0 %v2577
    %5314 = vmatprep.subr.mxu0 0.0
    %5315 = vmatpush1.msra.mxu0 %v2576
    %5316 = vmatprep.subr.mxu0 0.0
    %5317 = vmatpush1.msra.mxu0 %v2575
    %5318 = vmatprep.subr.mxu0 0.0
    %5319 = vmatpush1.msra.mxu0 %v2574
    %5320 = vmatprep.subr.mxu0 0.0
    %5321 = vmatpush2.msra.mxu0 0.0
    %5322 = vmatprep.subr.mxu0 0.0
    %5323 = vmatpush2.msra.mxu0 0.0
    %5324 = vmatprep.subr.mxu0 0.0
    %5325 = vmatpush2.msra.mxu0 0.0
    %5326 = vmatprep.subr.mxu0 0.0
    %5327 = vmatpush2.msra.mxu0 0.0
    %5328 = vmatprep.subr.mxu0 0.0
    %5329 = vmatpush2.msra.mxu0 0.0
    %5330 = vmatprep.subr.mxu0 0.0
    %5331 = vmatpush2.msra.mxu0 0.0
    %5332 = vmatprep.subr.mxu0 0.0
    %5333 = vmatpush2.msra.mxu0 0.0
    %5334 = vmatprep.subr.mxu0 0.0
    %5335 = vmatpush2.msra.mxu0 0.0
    %5336 = vmatprep.subr.mxu0 0.0
    %5337 = vmatpush2.msra.mxu0 0.0
    %5338 = vmatprep.subr.mxu0 0.0
    %5339 = vmatpush2.msra.mxu0 0.0
    %5340 = vmatprep.subr.mxu0 0.0
    %5341 = vmatpush2.msra.mxu0 0.0
    %5342 = vmatprep.subr.mxu0 0.0
    %5343 = vmatpush2.msra.mxu0 0.0
    %5344 = vmatprep.subr.mxu0 0.0
    %5345 = vmatpush2.msra.mxu0 0.0
    %5346 = vmatprep.subr.mxu0 0.0
    %5347 = vmatpush2.msra.mxu0 0.0
    %5348 = vmatprep.subr.mxu0 0.0
    %5349 = vmatpush2.msra.mxu0 0.0
    %5350 = vmatprep.subr.mxu0 0.0
    %5351 = vmatpush2.msra.mxu0 0.0
    %5352 = vmatprep.mubr.f32.mxu0 0.0
    %5353 = vmatmul.mubr.f32.gmra.mxu0 %v4925
    %v5354 = vpop.f32.mrf.mxu0
    %v5355 = vadd.f32 0.0, %v5354
    %v5356 = vpop.f32.mrf.mxu0
    %5357 = vdwg.mxu0
    %v5358 = vadd.f32 %v5287, %v5355
    %v5359 = vxor.u32 %v5358, 2147483648
    %v5360 = vmul.f32 %v5359, 1.442695
    %v5361 = vpow.pop %v5360
    %v5362 = vadd.f32 %v5361, 1.0
    %v5363 = vrcp.pop %v5362
    %v5364 = vmul.f32 1.0, %v5363
    %v5365 = vtanh.pop %v5358
    %v5366 = vmul.f32 %v5364, %v4843
    %5368 = vrot.lane.b32.xlu0 %v5365, 64
    %v5369 = vpop.permute.xlu0 %5368
    %v5371 = vmul.f32 %v5364, %v5369
    %5373 = vrot.lane.b32.xlu0 %v5371, 32
    %v5374 = vpop.permute.xlu0 %5373
    %v5376 = vadd.f32 %v5366, %v5374
    %v5377 = vtanh.pop %v5376
    %5379 = vrot.lane.b32.xlu0 %v5377, 64
    %v5380 = vpop.permute.xlu0 %5379
    %v5382 = vmul.f32 %v5364, %v5380
    %v5383 = vsel %vm91, %v5024, 0
    %5385 = vmatprep.subr.mxu0 0.0
    %5386 = vmatpush1.msra.mxu0 0.0
    %5387 = vmatprep.subr.mxu0 0.0
    %5388 = vmatpush1.msra.mxu0 0.0
    %5389 = vmatprep.subr.mxu0 0.0
    %5390 = vmatpush1.msra.mxu0 0.0
    %5391 = vmatprep.subr.mxu0 0.0
    %5392 = vmatpush1.msra.mxu0 0.0
    %5393 = vmatprep.subr.mxu0 0.0
    %5394 = vmatpush1.msra.mxu0 0.0
    %5395 = vmatprep.subr.mxu0 0.0
    %5396 = vmatpush1.msra.mxu0 0.0
    %5397 = vmatprep.subr.mxu0 0.0
    %5398 = vmatpush1.msra.mxu0 0.0
    %5399 = vmatprep.subr.mxu0 0.0
    %5400 = vmatpush1.msra.mxu0 0.0
    %5401 = vmatprep.subr.mxu0 0.0
    %5402 = vmatpush1.msra.mxu0 0.0
    %5403 = vmatprep.subr.mxu0 0.0
    %5404 = vmatpush1.msra.mxu0 0.0
    %5405 = vmatprep.subr.mxu0 0.0
    %5406 = vmatpush1.msra.mxu0 0.0
    %5407 = vmatprep.subr.mxu0 0.0
    %5408 = vmatpush1.msra.mxu0 0.0
    %5409 = vmatprep.subr.mxu0 0.0
    %5410 = vmatpush1.msra.mxu0 %v2586
    %5411 = vmatprep.subr.mxu0 0.0
    %5412 = vmatpush1.msra.mxu0 %v2585
    %5413 = vmatprep.subr.mxu0 0.0
    %5414 = vmatpush1.msra.mxu0 %v2584
    %5415 = vmatprep.subr.mxu0 0.0
    %5416 = vmatpush1.msra.mxu0 %v2583
    %5417 = vmatprep.subr.mxu0 0.0
    %5418 = vmatpush2.msra.mxu0 0.0
    %5419 = vmatprep.subr.mxu0 0.0
    %5420 = vmatpush2.msra.mxu0 0.0
    %5421 = vmatprep.subr.mxu0 0.0
    %5422 = vmatpush2.msra.mxu0 0.0
    %5423 = vmatprep.subr.mxu0 0.0
    %5424 = vmatpush2.msra.mxu0 0.0
    %5425 = vmatprep.subr.mxu0 0.0
    %5426 = vmatpush2.msra.mxu0 0.0
    %5427 = vmatprep.subr.mxu0 0.0
    %5428 = vmatpush2.msra.mxu0 0.0
    %5429 = vmatprep.subr.mxu0 0.0
    %5430 = vmatpush2.msra.mxu0 0.0
    %5431 = vmatprep.subr.mxu0 0.0
    %5432 = vmatpush2.msra.mxu0 0.0
    %5433 = vmatprep.subr.mxu0 0.0
    %5434 = vmatpush2.msra.mxu0 0.0
    %5435 = vmatprep.subr.mxu0 0.0
    %5436 = vmatpush2.msra.mxu0 0.0
    %5437 = vmatprep.subr.mxu0 0.0
    %5438 = vmatpush2.msra.mxu0 0.0
    %5439 = vmatprep.subr.mxu0 0.0
    %5440 = vmatpush2.msra.mxu0 0.0
    %5441 = vmatprep.subr.mxu0 0.0
    %5442 = vmatpush2.msra.mxu0 0.0
    %5443 = vmatprep.subr.mxu0 0.0
    %5444 = vmatpush2.msra.mxu0 0.0
    %5445 = vmatprep.subr.mxu0 0.0
    %5446 = vmatpush2.msra.mxu0 0.0
    %5447 = vmatprep.subr.mxu0 0.0
    %5448 = vmatpush2.msra.mxu0 0.0
    %5449 = vmatprep.mubr.f32.mxu0 0.0
    %5450 = vmatmul.mubr.f32.gmra.mxu0 %v5383
    %v5451 = vpop.f32.mrf.mxu0
    %v5452 = vadd.f32 0.0, %v5451
    %v5453 = vpop.f32.mrf.mxu0
    %5454 = vdwg.mxu0
    %5456 = vrot.lane.b32.xlu0 %v5382, 32
    %v5457 = vpop.permute.xlu0 %5456
    %v5458 = vsel %vm91, %v5457, 0
    %5460 = vmatprep.subr.mxu0 0.0
    %5461 = vmatpush1.msra.mxu0 0.0
    %5462 = vmatprep.subr.mxu0 0.0
    %5463 = vmatpush1.msra.mxu0 0.0
    %5464 = vmatprep.subr.mxu0 0.0
    %5465 = vmatpush1.msra.mxu0 0.0
    %5466 = vmatprep.subr.mxu0 0.0
    %5467 = vmatpush1.msra.mxu0 0.0
    %5468 = vmatprep.subr.mxu0 0.0
    %5469 = vmatpush1.msra.mxu0 0.0
    %5470 = vmatprep.subr.mxu0 0.0
    %5471 = vmatpush1.msra.mxu0 0.0
    %5472 = vmatprep.subr.mxu0 0.0
    %5473 = vmatpush1.msra.mxu0 0.0
    %5474 = vmatprep.subr.mxu0 0.0
    %5475 = vmatpush1.msra.mxu0 0.0
    %5476 = vmatprep.subr.mxu0 0.0
    %5477 = vmatpush1.msra.mxu0 0.0
    %5478 = vmatprep.subr.mxu0 0.0
    %5479 = vmatpush1.msra.mxu0 0.0
    %5480 = vmatprep.subr.mxu0 0.0
    %5481 = vmatpush1.msra.mxu0 0.0
    %5482 = vmatprep.subr.mxu0 0.0
    %5483 = vmatpush1.msra.mxu0 0.0
    %5484 = vmatprep.subr.mxu0 0.0
    %5485 = vmatpush1.msra.mxu0 %v2582
    %5486 = vmatprep.subr.mxu0 0.0
    %5487 = vmatpush1.msra.mxu0 %v2581
    %5488 = vmatprep.subr.mxu0 0.0
    %5489 = vmatpush1.msra.mxu0 %v2580
    %5490 = vmatprep.subr.mxu0 0.0
    %5491 = vmatpush1.msra.mxu0 %v2579
    %5492 = vmatprep.subr.mxu0 0.0
    %5493 = vmatpush2.msra.mxu0 0.0
    %5494 = vmatprep.subr.mxu0 0.0
    %5495 = vmatpush2.msra.mxu0 0.0
    %5496 = vmatprep.subr.mxu0 0.0
    %5497 = vmatpush2.msra.mxu0 0.0
    %5498 = vmatprep.subr.mxu0 0.0
    %5499 = vmatpush2.msra.mxu0 0.0
    %5500 = vmatprep.subr.mxu0 0.0
    %5501 = vmatpush2.msra.mxu0 0.0
    %5502 = vmatprep.subr.mxu0 0.0
    %5503 = vmatpush2.msra.mxu0 0.0
    %5504 = vmatprep.subr.mxu0 0.0
    %5505 = vmatpush2.msra.mxu0 0.0
    %5506 = vmatprep.subr.mxu0 0.0
    %5507 = vmatpush2.msra.mxu0 0.0
    %5508 = vmatprep.subr.mxu0 0.0
    %5509 = vmatpush2.msra.mxu0 0.0
    %5510 = vmatprep.subr.mxu0 0.0
    %5511 = vmatpush2.msra.mxu0 0.0
    %5512 = vmatprep.subr.mxu0 0.0
    %5513 = vmatpush2.msra.mxu0 0.0
    %5514 = vmatprep.subr.mxu0 0.0
    %5515 = vmatpush2.msra.mxu0 0.0
    %5516 = vmatprep.subr.mxu0 0.0
    %5517 = vmatpush2.msra.mxu0 0.0
    %5518 = vmatprep.subr.mxu0 0.0
    %5519 = vmatpush2.msra.mxu0 0.0
    %5520 = vmatprep.subr.mxu0 0.0
    %5521 = vmatpush2.msra.mxu0 0.0
    %5522 = vmatprep.subr.mxu0 0.0
    %5523 = vmatpush2.msra.mxu0 0.0
    %5524 = vmatprep.mubr.f32.mxu0 0.0
    %5525 = vmatmul.mubr.f32.gmra.mxu0 %v5458
    %v5526 = vpop.f32.mrf.mxu0
    %v5527 = vadd.f32 %v5452, %v5526
    %v5528 = vpop.f32.mrf.mxu0
    %5529 = vdwg.mxu0
    %v5530 = vadd.f32 %v5527, %v2863
    %v5531 = vxor.u32 %v5530, 2147483648
    %v5532 = vmul.f32 %v5531, 1.442695
    %v5533 = vpow.pop %v5532
    %v5534 = vadd.f32 %v5533, 1.0
    %v5535 = vrcp.pop %v5534
    %v5536 = vmul.f32 1.0, %v5535
    %v5537 = vtanh.pop %v5530
    %v5538 = vmul.f32 %v5536, %v5015
    %5540 = vrot.lane.b32.xlu0 %v5537, 64
    %v5541 = vpop.permute.xlu0 %5540
    %v5543 = vmul.f32 %v5536, %v5541
    %5545 = vrot.lane.b32.xlu0 %v5543, 32
    %v5546 = vpop.permute.xlu0 %5545
    %v5548 = vadd.f32 %v5538, %v5546
    %v5549 = vtanh.pop %v5548
    %5551 = vrot.lane.b32.xlu0 %v5549, 64
    %v5552 = vpop.permute.xlu0 %5551
    %v5554 = vmul.f32 %v5536, %v5552
    %5556 = vrot.lane.b32.xlu0 %v5554, 32
    %v5557 = vpop.permute.xlu0 %5556
    %5559 = vst.msk [vmem:[#allocation4 + $0x28] sm:$0xff] %vm91, %v5557
    %s5560 = sld [smem:[#allocation6 + $0x5]]
    %p5561 = scmp.eq.s32.totalorder %s5560, 1
    // Predicated region
    $region118: #{_seq2seq_jit.1} parent=1 // pred_check
      %p5562 = pneg %p5561
    $region119: #{_seq2seq_jit.1} parent=1 // pred_check_branch
      %5564 = sbr.rel (%p5562) target = $region121
    $region120: #{_seq2seq_jit.1} parent=1 // pred_region
      %v5565 = vld [vmem:[#allocation3 + $0x30] sm:$0xff]
      %5566 = vst [vmem:[#allocation5] sm:$0xff] %v5565
    $region121: #{_seq2seq_jit.1} parent=1 // pred_fallthru
      _
    %p5567 = scmp.ne.s32.totalorder %s5560, 1
    // Predicated region
    $region122: #{_seq2seq_jit.1} parent=1 // pred_check
      %p5568 = pneg %p5567
    $region123: #{_seq2seq_jit.1} parent=1 // pred_check_branch
      %5570 = sbr.rel (%p5568) target = $region125
    $region124: #{_seq2seq_jit.1} parent=1 // pred_region
      %v5572 = vlaneseq
      %v5573 = vshrl.u32 %v5572, 7
      %v5574 = vsub.s32 0, %v5573
      %v5575 = vrot.slane %v2608, %v5574
      %v5577 = vsel %vm91, %v5557, 0
      %5579 = vmatprep.subr.mxu0 0.0
      %5580 = vmatpush1.msra.mxu0 0.0
      %5581 = vmatprep.subr.mxu0 0.0
      %5582 = vmatpush1.msra.mxu0 0.0
      %5583 = vmatprep.subr.mxu0 0.0
      %5584 = vmatpush1.msra.mxu0 0.0
      %5585 = vmatprep.subr.mxu0 0.0
      %5586 = vmatpush1.msra.mxu0 0.0
      %5587 = vmatprep.subr.mxu0 0.0
      %5588 = vmatpush1.msra.mxu0 0.0
      %5589 = vmatprep.subr.mxu0 0.0
      %5590 = vmatpush1.msra.mxu0 0.0
      %5591 = vmatprep.subr.mxu0 0.0
      %5592 = vmatpush1.msra.mxu0 0.0
      %5593 = vmatprep.subr.mxu0 0.0
      %5594 = vmatpush1.msra.mxu0 0.0
      %5595 = vmatprep.subr.mxu0 0.0
      %5596 = vmatpush1.msra.mxu0 0.0
      %5597 = vmatprep.subr.mxu0 0.0
      %5598 = vmatpush1.msra.mxu0 0.0
      %5599 = vmatprep.subr.mxu0 0.0
      %5600 = vmatpush1.msra.mxu0 0.0
      %5601 = vmatprep.subr.mxu0 0.0
      %5602 = vmatpush1.msra.mxu0 0.0
      %5603 = vmatprep.subr.mxu0 0.0
      %5604 = vmatpush1.msra.mxu0 %v2607
      %5605 = vmatprep.subr.mxu0 0.0
      %5606 = vmatpush1.msra.mxu0 %v2606
      %5607 = vmatprep.subr.mxu0 0.0
      %5608 = vmatpush1.msra.mxu0 %v2605
      %5609 = vmatprep.subr.mxu0 0.0
      %5610 = vmatpush1.msra.mxu0 %v2604
      %5611 = vmatprep.subr.mxu0 0.0
      %5612 = vmatpush2.msra.mxu0 0.0
      %5613 = vmatprep.subr.mxu0 0.0
      %5614 = vmatpush2.msra.mxu0 0.0
      %5615 = vmatprep.subr.mxu0 0.0
      %5616 = vmatpush2.msra.mxu0 0.0
      %5617 = vmatprep.subr.mxu0 0.0
      %5618 = vmatpush2.msra.mxu0 0.0
      %5619 = vmatprep.subr.mxu0 0.0
      %5620 = vmatpush2.msra.mxu0 0.0
      %5621 = vmatprep.subr.mxu0 0.0
      %5622 = vmatpush2.msra.mxu0 0.0
      %5623 = vmatprep.subr.mxu0 0.0
      %5624 = vmatpush2.msra.mxu0 0.0
      %5625 = vmatprep.subr.mxu0 0.0
      %5626 = vmatpush2.msra.mxu0 0.0
      %5627 = vmatprep.subr.mxu0 0.0
      %5628 = vmatpush2.msra.mxu0 0.0
      %5629 = vmatprep.subr.mxu0 0.0
      %5630 = vmatpush2.msra.mxu0 0.0
      %5631 = vmatprep.subr.mxu0 0.0
      %5632 = vmatpush2.msra.mxu0 0.0
      %5633 = vmatprep.subr.mxu0 0.0
      %5634 = vmatpush2.msra.mxu0 0.0
      %5635 = vmatprep.subr.mxu0 0.0
      %5636 = vmatpush2.msra.mxu0 0.0
      %5637 = vmatprep.subr.mxu0 0.0
      %5638 = vmatpush2.msra.mxu0 0.0
      %5639 = vmatprep.subr.mxu0 0.0
      %5640 = vmatpush2.msra.mxu0 0.0
      %5641 = vmatprep.subr.mxu0 0.0
      %5642 = vmatpush2.msra.mxu0 0.0
      %5643 = vmatprep.mubr.f32.mxu0 0.0
      %5644 = vmatmul.mubr.f32.gmra.mxu0 %v5577
      %v5645 = vpop.f32.mrf.mxu0
      %v5646 = vadd.f32 %v5575, %v5645
      %v5647 = vpop.f32.mrf.mxu0
      %5648 = vdwg.mxu0
      %5649 = vmax.xlane.f32.xlu0 %v5646
      %v5650 = vpop.xlane.xlu0 %5649
      %vm5651 = vcmp.eq.f32.partialorder %v5646, %v5650
      %v5652 = vsel %vm5651, %v2610, 128
      %v5653 = vand.u32 %v5652, 65535
      %v5654 = vshra.s32 %v5652, 16
      %v5655 = vcvt.s32.f32 %v5653
      %v5656 = vcvt.s32.f32 %v5654
      %5657 = vmin.xlane.f32.xlu0 %v5656
      %v5658 = vpop.xlane.xlu0 %5657
      %vm5659 = vcmp.eq.f32.partialorder %v5656, %v5658
      %v5660 = vsel %vm5659, %v5655, inf
      %5661 = vmin.xlane.f32.xlu0 %v5660
      %v5662 = vpop.xlane.xlu0 %5661
      %v5663 = vcvt.f32.s32 %v5662
      %v5664 = vcvt.f32.s32 %v5658
      %v5665 = vshll.u32 %v5664, 16
      %v5666 = vadd.s32 %v5665, %v5663
      %vm5667 = vcmp.eq.s32.totalorder %v2610, %v5666
      %v5668 = vsel %vm5667, 1, 0
      %v5669 = vcvt.s32.f32 %v5668
      %5670 = vmatprep.subr.mxu0 0.0
      %5671 = vmatpush1.msra.mxu0 %v2603
      %5672 = vmatprep.subr.mxu0 0.0
      %5673 = vmatpush1.msra.mxu0 %v2602
      %5674 = vmatprep.subr.mxu0 0.0
      %5675 = vmatpush1.msra.mxu0 %v2601
      %5676 = vmatprep.subr.mxu0 0.0
      %5677 = vmatpush1.msra.mxu0 %v2600
      %5678 = vmatprep.subr.mxu0 0.0
      %5679 = vmatpush1.msra.mxu0 %v2599
      %5680 = vmatprep.subr.mxu0 0.0
      %5681 = vmatpush1.msra.mxu0 %v2598
      %5682 = vmatprep.subr.mxu0 0.0
      %5683 = vmatpush1.msra.mxu0 %v2597
      %5684 = vmatprep.subr.mxu0 0.0
      %5685 = vmatpush1.msra.mxu0 %v2596
      %5686 = vmatprep.subr.mxu0 0.0
      %5687 = vmatpush1.msra.mxu0 %v2595
      %5688 = vmatprep.subr.mxu0 0.0
      %5689 = vmatpush1.msra.mxu0 %v2594
      %5690 = vmatprep.subr.mxu0 0.0
      %5691 = vmatpush1.msra.mxu0 %v2593
      %5692 = vmatprep.subr.mxu0 0.0
      %5693 = vmatpush1.msra.mxu0 %v2592
      %5694 = vmatprep.subr.mxu0 0.0
      %5695 = vmatpush1.msra.mxu0 %v2591
      %5696 = vmatprep.subr.mxu0 0.0
      %5697 = vmatpush1.msra.mxu0 %v2590
      %5698 = vmatprep.subr.mxu0 0.0
      %5699 = vmatpush1.msra.mxu0 %v2589
      %5700 = vmatprep.subr.mxu0 0.0
      %5701 = vmatpush1.msra.mxu0 %v2588
      %5702 = vmatprep.subr.mxu0 0.0
      %5703 = vmatpush2.msra.mxu0 0.0
      %5704 = vmatprep.subr.mxu0 0.0
      %5705 = vmatpush2.msra.mxu0 0.0
      %5706 = vmatprep.subr.mxu0 0.0
      %5707 = vmatpush2.msra.mxu0 0.0
      %5708 = vmatprep.subr.mxu0 0.0
      %5709 = vmatpush2.msra.mxu0 0.0
      %5710 = vmatprep.subr.mxu0 0.0
      %5711 = vmatpush2.msra.mxu0 0.0
      %5712 = vmatprep.subr.mxu0 0.0
      %5713 = vmatpush2.msra.mxu0 0.0
      %5714 = vmatprep.subr.mxu0 0.0
      %5715 = vmatpush2.msra.mxu0 0.0
      %5716 = vmatprep.subr.mxu0 0.0
      %5717 = vmatpush2.msra.mxu0 0.0
      %5718 = vmatprep.subr.mxu0 0.0
      %5719 = vmatpush2.msra.mxu0 0.0
      %5720 = vmatprep.subr.mxu0 0.0
      %5721 = vmatpush2.msra.mxu0 0.0
      %5722 = vmatprep.subr.mxu0 0.0
      %5723 = vmatpush2.msra.mxu0 0.0
      %5724 = vmatprep.subr.mxu0 0.0
      %5725 = vmatpush2.msra.mxu0 0.0
      %5726 = vmatprep.subr.mxu0 0.0
      %5727 = vmatpush2.msra.mxu0 0.0
      %5728 = vmatprep.subr.mxu0 0.0
      %5729 = vmatpush2.msra.mxu0 0.0
      %5730 = vmatprep.subr.mxu0 0.0
      %5731 = vmatpush2.msra.mxu0 0.0
      %5732 = vmatprep.subr.mxu0 0.0
      %5733 = vmatpush2.msra.mxu0 0.0
      %5734 = vmatprep.mubr.f32.mxu0 0.0
      %5735 = vmatmul.mubr.f32.gmra.mxu0 %v5669
      %v5736 = vpop.f32.mrf.mxu0
      %v5737 = vadd.f32 0.0, %v5736
      %v5738 = vpop.f32.mrf.mxu0
      %5739 = vdwg.mxu0
      %v5741 = vlaneseq
      %v5742 = vshrl.u32 %v5741, 7
      %v5743 = vsub.s32 0, %v5742
      %v5744 = vrot.slane %v2578, %v5743
      %v5747 = vsel %vm91, %v5737, 0
      %5749 = vmatprep.subr.mxu0 0.0
      %5750 = vmatpush1.msra.mxu0 0.0
      %5751 = vmatprep.subr.mxu0 0.0
      %5752 = vmatpush1.msra.mxu0 0.0
      %5753 = vmatprep.subr.mxu0 0.0
      %5754 = vmatpush1.msra.mxu0 0.0
      %5755 = vmatprep.subr.mxu0 0.0
      %5756 = vmatpush1.msra.mxu0 0.0
      %5757 = vmatprep.subr.mxu0 0.0
      %5758 = vmatpush1.msra.mxu0 0.0
      %5759 = vmatprep.subr.mxu0 0.0
      %5760 = vmatpush1.msra.mxu0 0.0
      %5761 = vmatprep.subr.mxu0 0.0
      %5762 = vmatpush1.msra.mxu0 0.0
      %5763 = vmatprep.subr.mxu0 0.0
      %5764 = vmatpush1.msra.mxu0 0.0
      %5765 = vmatprep.subr.mxu0 0.0
      %5766 = vmatpush1.msra.mxu0 0.0
      %5767 = vmatprep.subr.mxu0 0.0
      %5768 = vmatpush1.msra.mxu0 0.0
      %5769 = vmatprep.subr.mxu0 0.0
      %5770 = vmatpush1.msra.mxu0 0.0
      %5771 = vmatprep.subr.mxu0 0.0
      %5772 = vmatpush1.msra.mxu0 0.0
      %5773 = vmatprep.subr.mxu0 0.0
      %5774 = vmatpush1.msra.mxu0 %v2573
      %5775 = vmatprep.subr.mxu0 0.0
      %5776 = vmatpush1.msra.mxu0 %v2572
      %5777 = vmatprep.subr.mxu0 0.0
      %5778 = vmatpush1.msra.mxu0 %v2571
      %5779 = vmatprep.subr.mxu0 0.0
      %5780 = vmatpush1.msra.mxu0 %v2570
      %5781 = vmatprep.subr.mxu0 0.0
      %5782 = vmatpush2.msra.mxu0 0.0
      %5783 = vmatprep.subr.mxu0 0.0
      %5784 = vmatpush2.msra.mxu0 0.0
      %5785 = vmatprep.subr.mxu0 0.0
      %5786 = vmatpush2.msra.mxu0 0.0
      %5787 = vmatprep.subr.mxu0 0.0
      %5788 = vmatpush2.msra.mxu0 0.0
      %5789 = vmatprep.subr.mxu0 0.0
      %5790 = vmatpush2.msra.mxu0 0.0
      %5791 = vmatprep.subr.mxu0 0.0
      %5792 = vmatpush2.msra.mxu0 0.0
      %5793 = vmatprep.subr.mxu0 0.0
      %5794 = vmatpush2.msra.mxu0 0.0
      %5795 = vmatprep.subr.mxu0 0.0
      %5796 = vmatpush2.msra.mxu0 0.0
      %5797 = vmatprep.subr.mxu0 0.0
      %5798 = vmatpush2.msra.mxu0 0.0
      %5799 = vmatprep.subr.mxu0 0.0
      %5800 = vmatpush2.msra.mxu0 0.0
      %5801 = vmatprep.subr.mxu0 0.0
      %5802 = vmatpush2.msra.mxu0 0.0
      %5803 = vmatprep.subr.mxu0 0.0
      %5804 = vmatpush2.msra.mxu0 0.0
      %5805 = vmatprep.subr.mxu0 0.0
      %5806 = vmatpush2.msra.mxu0 0.0
      %5807 = vmatprep.subr.mxu0 0.0
      %5808 = vmatpush2.msra.mxu0 0.0
      %5809 = vmatprep.subr.mxu0 0.0
      %5810 = vmatpush2.msra.mxu0 0.0
      %5811 = vmatprep.subr.mxu0 0.0
      %5812 = vmatpush2.msra.mxu0 0.0
      %5813 = vmatprep.mubr.f32.mxu0 0.0
      %5814 = vmatmul.mubr.f32.gmra.mxu0 %v5747
      %v5815 = vpop.f32.mrf.mxu0
      %v5816 = vadd.f32 %v5744, %v5815
      %v5817 = vpop.f32.mrf.mxu0
      %5818 = vdwg.mxu0
      %5819 = vst [vmem:[#allocation5] sm:$0xff] %v5816
    $region125: #{_seq2seq_jit.1} parent=1 // pred_fallthru
      _
    %v5820 = vld [vmem:[#allocation5] sm:$0xff]
    %5821 = vmatprep.subr.mxu0 0.0
    %5822 = vmatpush1.msra.mxu0 0.0
    %5823 = vmatprep.subr.mxu0 0.0
    %5824 = vmatpush1.msra.mxu0 0.0
    %5825 = vmatprep.subr.mxu0 0.0
    %5826 = vmatpush1.msra.mxu0 0.0
    %5827 = vmatprep.subr.mxu0 0.0
    %5828 = vmatpush1.msra.mxu0 0.0
    %5829 = vmatprep.subr.mxu0 0.0
    %5830 = vmatpush1.msra.mxu0 0.0
    %5831 = vmatprep.subr.mxu0 0.0
    %5832 = vmatpush1.msra.mxu0 0.0
    %5833 = vmatprep.subr.mxu0 0.0
    %5834 = vmatpush1.msra.mxu0 0.0
    %5835 = vmatprep.subr.mxu0 0.0
    %5836 = vmatpush1.msra.mxu0 0.0
    %5837 = vmatprep.subr.mxu0 0.0
    %5838 = vmatpush1.msra.mxu0 0.0
    %5839 = vmatprep.subr.mxu0 0.0
    %5840 = vmatpush1.msra.mxu0 0.0
    %5841 = vmatprep.subr.mxu0 0.0
    %5842 = vmatpush1.msra.mxu0 0.0
    %5843 = vmatprep.subr.mxu0 0.0
    %5844 = vmatpush1.msra.mxu0 0.0
    %5845 = vmatprep.subr.mxu0 0.0
    %5846 = vmatpush1.msra.mxu0 %v2577
    %5847 = vmatprep.subr.mxu0 0.0
    %5848 = vmatpush1.msra.mxu0 %v2576
    %5849 = vmatprep.subr.mxu0 0.0
    %5850 = vmatpush1.msra.mxu0 %v2575
    %5851 = vmatprep.subr.mxu0 0.0
    %5852 = vmatpush1.msra.mxu0 %v2574
    %5853 = vmatprep.subr.mxu0 0.0
    %5854 = vmatpush2.msra.mxu0 0.0
    %5855 = vmatprep.subr.mxu0 0.0
    %5856 = vmatpush2.msra.mxu0 0.0
    %5857 = vmatprep.subr.mxu0 0.0
    %5858 = vmatpush2.msra.mxu0 0.0
    %5859 = vmatprep.subr.mxu0 0.0
    %5860 = vmatpush2.msra.mxu0 0.0
    %5861 = vmatprep.subr.mxu0 0.0
    %5862 = vmatpush2.msra.mxu0 0.0
    %5863 = vmatprep.subr.mxu0 0.0
    %5864 = vmatpush2.msra.mxu0 0.0
    %5865 = vmatprep.subr.mxu0 0.0
    %5866 = vmatpush2.msra.mxu0 0.0
    %5867 = vmatprep.subr.mxu0 0.0
    %5868 = vmatpush2.msra.mxu0 0.0
    %5869 = vmatprep.subr.mxu0 0.0
    %5870 = vmatpush2.msra.mxu0 0.0
    %5871 = vmatprep.subr.mxu0 0.0
    %5872 = vmatpush2.msra.mxu0 0.0
    %5873 = vmatprep.subr.mxu0 0.0
    %5874 = vmatpush2.msra.mxu0 0.0
    %5875 = vmatprep.subr.mxu0 0.0
    %5876 = vmatpush2.msra.mxu0 0.0
    %5877 = vmatprep.subr.mxu0 0.0
    %5878 = vmatpush2.msra.mxu0 0.0
    %5879 = vmatprep.subr.mxu0 0.0
    %5880 = vmatpush2.msra.mxu0 0.0
    %5881 = vmatprep.subr.mxu0 0.0
    %5882 = vmatpush2.msra.mxu0 0.0
    %5883 = vmatprep.subr.mxu0 0.0
    %5884 = vmatpush2.msra.mxu0 0.0
    %5885 = vmatprep.mubr.f32.mxu0 0.0
    %5886 = vmatmul.mubr.f32.gmra.mxu0 %v5458
    %v5887 = vpop.f32.mrf.mxu0
    %v5888 = vadd.f32 0.0, %v5887
    %v5889 = vpop.f32.mrf.mxu0
    %5890 = vdwg.mxu0
    %v5891 = vadd.f32 %v5820, %v5888
    %v5892 = vxor.u32 %v5891, 2147483648
    %v5893 = vmul.f32 %v5892, 1.442695
    %v5894 = vpow.pop %v5893
    %v5895 = vadd.f32 %v5894, 1.0
    %v5896 = vrcp.pop %v5895
    %v5897 = vmul.f32 1.0, %v5896
    %v5898 = vtanh.pop %v5891
    %v5899 = vmul.f32 %v5897, %v5376
    %5901 = vrot.lane.b32.xlu0 %v5898, 64
    %v5902 = vpop.permute.xlu0 %5901
    %v5904 = vmul.f32 %v5897, %v5902
    %5906 = vrot.lane.b32.xlu0 %v5904, 32
    %v5907 = vpop.permute.xlu0 %5906
    %v5909 = vadd.f32 %v5899, %v5907
    %v5910 = vtanh.pop %v5909
    %5912 = vrot.lane.b32.xlu0 %v5910, 64
    %v5913 = vpop.permute.xlu0 %5912
    %v5915 = vmul.f32 %v5897, %v5913
    %v5916 = vsel %vm91, %v5557, 0
    %5918 = vmatprep.subr.mxu0 0.0
    %5919 = vmatpush1.msra.mxu0 0.0
    %5920 = vmatprep.subr.mxu0 0.0
    %5921 = vmatpush1.msra.mxu0 0.0
    %5922 = vmatprep.subr.mxu0 0.0
    %5923 = vmatpush1.msra.mxu0 0.0
    %5924 = vmatprep.subr.mxu0 0.0
    %5925 = vmatpush1.msra.mxu0 0.0
    %5926 = vmatprep.subr.mxu0 0.0
    %5927 = vmatpush1.msra.mxu0 0.0
    %5928 = vmatprep.subr.mxu0 0.0
    %5929 = vmatpush1.msra.mxu0 0.0
    %5930 = vmatprep.subr.mxu0 0.0
    %5931 = vmatpush1.msra.mxu0 0.0
    %5932 = vmatprep.subr.mxu0 0.0
    %5933 = vmatpush1.msra.mxu0 0.0
    %5934 = vmatprep.subr.mxu0 0.0
    %5935 = vmatpush1.msra.mxu0 0.0
    %5936 = vmatprep.subr.mxu0 0.0
    %5937 = vmatpush1.msra.mxu0 0.0
    %5938 = vmatprep.subr.mxu0 0.0
    %5939 = vmatpush1.msra.mxu0 0.0
    %5940 = vmatprep.subr.mxu0 0.0
    %5941 = vmatpush1.msra.mxu0 0.0
    %5942 = vmatprep.subr.mxu0 0.0
    %5943 = vmatpush1.msra.mxu0 %v2586
    %5944 = vmatprep.subr.mxu0 0.0
    %5945 = vmatpush1.msra.mxu0 %v2585
    %5946 = vmatprep.subr.mxu0 0.0
    %5947 = vmatpush1.msra.mxu0 %v2584
    %5948 = vmatprep.subr.mxu0 0.0
    %5949 = vmatpush1.msra.mxu0 %v2583
    %5950 = vmatprep.subr.mxu0 0.0
    %5951 = vmatpush2.msra.mxu0 0.0
    %5952 = vmatprep.subr.mxu0 0.0
    %5953 = vmatpush2.msra.mxu0 0.0
    %5954 = vmatprep.subr.mxu0 0.0
    %5955 = vmatpush2.msra.mxu0 0.0
    %5956 = vmatprep.subr.mxu0 0.0
    %5957 = vmatpush2.msra.mxu0 0.0
    %5958 = vmatprep.subr.mxu0 0.0
    %5959 = vmatpush2.msra.mxu0 0.0
    %5960 = vmatprep.subr.mxu0 0.0
    %5961 = vmatpush2.msra.mxu0 0.0
    %5962 = vmatprep.subr.mxu0 0.0
    %5963 = vmatpush2.msra.mxu0 0.0
    %5964 = vmatprep.subr.mxu0 0.0
    %5965 = vmatpush2.msra.mxu0 0.0
    %5966 = vmatprep.subr.mxu0 0.0
    %5967 = vmatpush2.msra.mxu0 0.0
    %5968 = vmatprep.subr.mxu0 0.0
    %5969 = vmatpush2.msra.mxu0 0.0
    %5970 = vmatprep.subr.mxu0 0.0
    %5971 = vmatpush2.msra.mxu0 0.0
    %5972 = vmatprep.subr.mxu0 0.0
    %5973 = vmatpush2.msra.mxu0 0.0
    %5974 = vmatprep.subr.mxu0 0.0
    %5975 = vmatpush2.msra.mxu0 0.0
    %5976 = vmatprep.subr.mxu0 0.0
    %5977 = vmatpush2.msra.mxu0 0.0
    %5978 = vmatprep.subr.mxu0 0.0
    %5979 = vmatpush2.msra.mxu0 0.0
    %5980 = vmatprep.subr.mxu0 0.0
    %5981 = vmatpush2.msra.mxu0 0.0
    %5982 = vmatprep.mubr.f32.mxu0 0.0
    %5983 = vmatmul.mubr.f32.gmra.mxu0 %v5916
    %v5984 = vpop.f32.mrf.mxu0
    %v5985 = vadd.f32 0.0, %v5984
    %v5986 = vpop.f32.mrf.mxu0
    %5987 = vdwg.mxu0
    %5989 = vrot.lane.b32.xlu0 %v5915, 32
    %v5990 = vpop.permute.xlu0 %5989
    %v5991 = vsel %vm91, %v5990, 0
    %5993 = vmatprep.subr.mxu0 0.0
    %5994 = vmatpush1.msra.mxu0 0.0
    %5995 = vmatprep.subr.mxu0 0.0
    %5996 = vmatpush1.msra.mxu0 0.0
    %5997 = vmatprep.subr.mxu0 0.0
    %5998 = vmatpush1.msra.mxu0 0.0
    %5999 = vmatprep.subr.mxu0 0.0
    %6000 = vmatpush1.msra.mxu0 0.0
    %6001 = vmatprep.subr.mxu0 0.0
    %6002 = vmatpush1.msra.mxu0 0.0
    %6003 = vmatprep.subr.mxu0 0.0
    %6004 = vmatpush1.msra.mxu0 0.0
    %6005 = vmatprep.subr.mxu0 0.0
    %6006 = vmatpush1.msra.mxu0 0.0
    %6007 = vmatprep.subr.mxu0 0.0
    %6008 = vmatpush1.msra.mxu0 0.0
    %6009 = vmatprep.subr.mxu0 0.0
    %6010 = vmatpush1.msra.mxu0 0.0
    %6011 = vmatprep.subr.mxu0 0.0
    %6012 = vmatpush1.msra.mxu0 0.0
    %6013 = vmatprep.subr.mxu0 0.0
    %6014 = vmatpush1.msra.mxu0 0.0
    %6015 = vmatprep.subr.mxu0 0.0
    %6016 = vmatpush1.msra.mxu0 0.0
    %6017 = vmatprep.subr.mxu0 0.0
    %6018 = vmatpush1.msra.mxu0 %v2582
    %6019 = vmatprep.subr.mxu0 0.0
    %6020 = vmatpush1.msra.mxu0 %v2581
    %6021 = vmatprep.subr.mxu0 0.0
    %6022 = vmatpush1.msra.mxu0 %v2580
    %6023 = vmatprep.subr.mxu0 0.0
    %6024 = vmatpush1.msra.mxu0 %v2579
    %6025 = vmatprep.subr.mxu0 0.0
    %6026 = vmatpush2.msra.mxu0 0.0
    %6027 = vmatprep.subr.mxu0 0.0
    %6028 = vmatpush2.msra.mxu0 0.0
    %6029 = vmatprep.subr.mxu0 0.0
    %6030 = vmatpush2.msra.mxu0 0.0
    %6031 = vmatprep.subr.mxu0 0.0
    %6032 = vmatpush2.msra.mxu0 0.0
    %6033 = vmatprep.subr.mxu0 0.0
    %6034 = vmatpush2.msra.mxu0 0.0
    %6035 = vmatprep.subr.mxu0 0.0
    %6036 = vmatpush2.msra.mxu0 0.0
    %6037 = vmatprep.subr.mxu0 0.0
    %6038 = vmatpush2.msra.mxu0 0.0
    %6039 = vmatprep.subr.mxu0 0.0
    %6040 = vmatpush2.msra.mxu0 0.0
    %6041 = vmatprep.subr.mxu0 0.0
    %6042 = vmatpush2.msra.mxu0 0.0
    %6043 = vmatprep.subr.mxu0 0.0
    %6044 = vmatpush2.msra.mxu0 0.0
    %6045 = vmatprep.subr.mxu0 0.0
    %6046 = vmatpush2.msra.mxu0 0.0
    %6047 = vmatprep.subr.mxu0 0.0
    %6048 = vmatpush2.msra.mxu0 0.0
    %6049 = vmatprep.subr.mxu0 0.0
    %6050 = vmatpush2.msra.mxu0 0.0
    %6051 = vmatprep.subr.mxu0 0.0
    %6052 = vmatpush2.msra.mxu0 0.0
    %6053 = vmatprep.subr.mxu0 0.0
    %6054 = vmatpush2.msra.mxu0 0.0
    %6055 = vmatprep.subr.mxu0 0.0
    %6056 = vmatpush2.msra.mxu0 0.0
    %6057 = vmatprep.mubr.f32.mxu0 0.0
    %6058 = vmatmul.mubr.f32.gmra.mxu0 %v5991
    %v6059 = vpop.f32.mrf.mxu0
    %v6060 = vadd.f32 %v5985, %v6059
    %v6061 = vpop.f32.mrf.mxu0
    %6062 = vdwg.mxu0
    %v6063 = vadd.f32 %v6060, %v2863
    %v6064 = vxor.u32 %v6063, 2147483648
    %v6065 = vmul.f32 %v6064, 1.442695
    %v6066 = vpow.pop %v6065
    %v6067 = vadd.f32 %v6066, 1.0
    %v6068 = vrcp.pop %v6067
    %v6069 = vmul.f32 1.0, %v6068
    %v6070 = vtanh.pop %v6063
    %v6071 = vmul.f32 %v6069, %v5548
    %6073 = vrot.lane.b32.xlu0 %v6070, 64
    %v6074 = vpop.permute.xlu0 %6073
    %v6076 = vmul.f32 %v6069, %v6074
    %6078 = vrot.lane.b32.xlu0 %v6076, 32
    %v6079 = vpop.permute.xlu0 %6078
    %v6081 = vadd.f32 %v6071, %v6079
    %v6082 = vtanh.pop %v6081
    %6084 = vrot.lane.b32.xlu0 %v6082, 64
    %v6085 = vpop.permute.xlu0 %6084
    %v6087 = vmul.f32 %v6069, %v6085
    %6089 = vrot.lane.b32.xlu0 %v6087, 32
    %v6090 = vpop.permute.xlu0 %6089
    %6092 = vst.msk [vmem:[#allocation4 + $0x30] sm:$0xff] %vm91, %v6090
    %s6093 = sld [smem:[#allocation6 + $0x6]]
    %p6094 = scmp.eq.s32.totalorder %s6093, 1
    // Predicated region
    $region126: #{_seq2seq_jit.1} parent=1 // pred_check
      %p6095 = pneg %p6094
    $region127: #{_seq2seq_jit.1} parent=1 // pred_check_branch
      %6097 = sbr.rel (%p6095) target = $region129
    $region128: #{_seq2seq_jit.1} parent=1 // pred_region
      %v6098 = vld [vmem:[#allocation3 + $0x38] sm:$0xff]
      %6099 = vst [vmem:[#allocation5] sm:$0xff] %v6098
    $region129: #{_seq2seq_jit.1} parent=1 // pred_fallthru
      _
    %p6100 = scmp.ne.s32.totalorder %s6093, 1
    // Predicated region
    $region130: #{_seq2seq_jit.1} parent=1 // pred_check
      %p6101 = pneg %p6100
    $region131: #{_seq2seq_jit.1} parent=1 // pred_check_branch
      %6103 = sbr.rel (%p6101) target = $region133
    $region132: #{_seq2seq_jit.1} parent=1 // pred_region
      %v6105 = vlaneseq
      %v6106 = vshrl.u32 %v6105, 7
      %v6107 = vsub.s32 0, %v6106
      %v6108 = vrot.slane %v2608, %v6107
      %v6110 = vsel %vm91, %v6090, 0
      %6112 = vmatprep.subr.mxu0 0.0
      %6113 = vmatpush1.msra.mxu0 0.0
      %6114 = vmatprep.subr.mxu0 0.0
      %6115 = vmatpush1.msra.mxu0 0.0
      %6116 = vmatprep.subr.mxu0 0.0
      %6117 = vmatpush1.msra.mxu0 0.0
      %6118 = vmatprep.subr.mxu0 0.0
      %6119 = vmatpush1.msra.mxu0 0.0
      %6120 = vmatprep.subr.mxu0 0.0
      %6121 = vmatpush1.msra.mxu0 0.0
      %6122 = vmatprep.subr.mxu0 0.0
      %6123 = vmatpush1.msra.mxu0 0.0
      %6124 = vmatprep.subr.mxu0 0.0
      %6125 = vmatpush1.msra.mxu0 0.0
      %6126 = vmatprep.subr.mxu0 0.0
      %6127 = vmatpush1.msra.mxu0 0.0
      %6128 = vmatprep.subr.mxu0 0.0
      %6129 = vmatpush1.msra.mxu0 0.0
      %6130 = vmatprep.subr.mxu0 0.0
      %6131 = vmatpush1.msra.mxu0 0.0
      %6132 = vmatprep.subr.mxu0 0.0
      %6133 = vmatpush1.msra.mxu0 0.0
      %6134 = vmatprep.subr.mxu0 0.0
      %6135 = vmatpush1.msra.mxu0 0.0
      %6136 = vmatprep.subr.mxu0 0.0
      %6137 = vmatpush1.msra.mxu0 %v2607
      %6138 = vmatprep.subr.mxu0 0.0
      %6139 = vmatpush1.msra.mxu0 %v2606
      %6140 = vmatprep.subr.mxu0 0.0
      %6141 = vmatpush1.msra.mxu0 %v2605
      %6142 = vmatprep.subr.mxu0 0.0
      %6143 = vmatpush1.msra.mxu0 %v2604
      %6144 = vmatprep.subr.mxu0 0.0
      %6145 = vmatpush2.msra.mxu0 0.0
      %6146 = vmatprep.subr.mxu0 0.0
      %6147 = vmatpush2.msra.mxu0 0.0
      %6148 = vmatprep.subr.mxu0 0.0
      %6149 = vmatpush2.msra.mxu0 0.0
      %6150 = vmatprep.subr.mxu0 0.0
      %6151 = vmatpush2.msra.mxu0 0.0
      %6152 = vmatprep.subr.mxu0 0.0
      %6153 = vmatpush2.msra.mxu0 0.0
      %6154 = vmatprep.subr.mxu0 0.0
      %6155 = vmatpush2.msra.mxu0 0.0
      %6156 = vmatprep.subr.mxu0 0.0
      %6157 = vmatpush2.msra.mxu0 0.0
      %6158 = vmatprep.subr.mxu0 0.0
      %6159 = vmatpush2.msra.mxu0 0.0
      %6160 = vmatprep.subr.mxu0 0.0
      %6161 = vmatpush2.msra.mxu0 0.0
      %6162 = vmatprep.subr.mxu0 0.0
      %6163 = vmatpush2.msra.mxu0 0.0
      %6164 = vmatprep.subr.mxu0 0.0
      %6165 = vmatpush2.msra.mxu0 0.0
      %6166 = vmatprep.subr.mxu0 0.0
      %6167 = vmatpush2.msra.mxu0 0.0
      %6168 = vmatprep.subr.mxu0 0.0
      %6169 = vmatpush2.msra.mxu0 0.0
      %6170 = vmatprep.subr.mxu0 0.0
      %6171 = vmatpush2.msra.mxu0 0.0
      %6172 = vmatprep.subr.mxu0 0.0
      %6173 = vmatpush2.msra.mxu0 0.0
      %6174 = vmatprep.subr.mxu0 0.0
      %6175 = vmatpush2.msra.mxu0 0.0
      %6176 = vmatprep.mubr.f32.mxu0 0.0
      %6177 = vmatmul.mubr.f32.gmra.mxu0 %v6110
      %v6178 = vpop.f32.mrf.mxu0
      %v6179 = vadd.f32 %v6108, %v6178
      %v6180 = vpop.f32.mrf.mxu0
      %6181 = vdwg.mxu0
      %6182 = vmax.xlane.f32.xlu0 %v6179
      %v6183 = vpop.xlane.xlu0 %6182
      %vm6184 = vcmp.eq.f32.partialorder %v6179, %v6183
      %v6185 = vsel %vm6184, %v2610, 128
      %v6186 = vand.u32 %v6185, 65535
      %v6187 = vshra.s32 %v6185, 16
      %v6188 = vcvt.s32.f32 %v6186
      %v6189 = vcvt.s32.f32 %v6187
      %6190 = vmin.xlane.f32.xlu0 %v6189
      %v6191 = vpop.xlane.xlu0 %6190
      %vm6192 = vcmp.eq.f32.partialorder %v6189, %v6191
      %v6193 = vsel %vm6192, %v6188, inf
      %6194 = vmin.xlane.f32.xlu0 %v6193
      %v6195 = vpop.xlane.xlu0 %6194
      %v6196 = vcvt.f32.s32 %v6195
      %v6197 = vcvt.f32.s32 %v6191
      %v6198 = vshll.u32 %v6197, 16
      %v6199 = vadd.s32 %v6198, %v6196
      %vm6200 = vcmp.eq.s32.totalorder %v2610, %v6199
      %v6201 = vsel %vm6200, 1, 0
      %v6202 = vcvt.s32.f32 %v6201
      %6203 = vmatprep.subr.mxu0 0.0
      %6204 = vmatpush1.msra.mxu0 %v2603
      %6205 = vmatprep.subr.mxu0 0.0
      %6206 = vmatpush1.msra.mxu0 %v2602
      %6207 = vmatprep.subr.mxu0 0.0
      %6208 = vmatpush1.msra.mxu0 %v2601
      %6209 = vmatprep.subr.mxu0 0.0
      %6210 = vmatpush1.msra.mxu0 %v2600
      %6211 = vmatprep.subr.mxu0 0.0
      %6212 = vmatpush1.msra.mxu0 %v2599
      %6213 = vmatprep.subr.mxu0 0.0
      %6214 = vmatpush1.msra.mxu0 %v2598
      %6215 = vmatprep.subr.mxu0 0.0
      %6216 = vmatpush1.msra.mxu0 %v2597
      %6217 = vmatprep.subr.mxu0 0.0
      %6218 = vmatpush1.msra.mxu0 %v2596
      %6219 = vmatprep.subr.mxu0 0.0
      %6220 = vmatpush1.msra.mxu0 %v2595
      %6221 = vmatprep.subr.mxu0 0.0
      %6222 = vmatpush1.msra.mxu0 %v2594
      %6223 = vmatprep.subr.mxu0 0.0
      %6224 = vmatpush1.msra.mxu0 %v2593
      %6225 = vmatprep.subr.mxu0 0.0
      %6226 = vmatpush1.msra.mxu0 %v2592
      %6227 = vmatprep.subr.mxu0 0.0
      %6228 = vmatpush1.msra.mxu0 %v2591
      %6229 = vmatprep.subr.mxu0 0.0
      %6230 = vmatpush1.msra.mxu0 %v2590
      %6231 = vmatprep.subr.mxu0 0.0
      %6232 = vmatpush1.msra.mxu0 %v2589
      %6233 = vmatprep.subr.mxu0 0.0
      %6234 = vmatpush1.msra.mxu0 %v2588
      %6235 = vmatprep.subr.mxu0 0.0
      %6236 = vmatpush2.msra.mxu0 0.0
      %6237 = vmatprep.subr.mxu0 0.0
      %6238 = vmatpush2.msra.mxu0 0.0
      %6239 = vmatprep.subr.mxu0 0.0
      %6240 = vmatpush2.msra.mxu0 0.0
      %6241 = vmatprep.subr.mxu0 0.0
      %6242 = vmatpush2.msra.mxu0 0.0
      %6243 = vmatprep.subr.mxu0 0.0
      %6244 = vmatpush2.msra.mxu0 0.0
      %6245 = vmatprep.subr.mxu0 0.0
      %6246 = vmatpush2.msra.mxu0 0.0
      %6247 = vmatprep.subr.mxu0 0.0
      %6248 = vmatpush2.msra.mxu0 0.0
      %6249 = vmatprep.subr.mxu0 0.0
      %6250 = vmatpush2.msra.mxu0 0.0
      %6251 = vmatprep.subr.mxu0 0.0
      %6252 = vmatpush2.msra.mxu0 0.0
      %6253 = vmatprep.subr.mxu0 0.0
      %6254 = vmatpush2.msra.mxu0 0.0
      %6255 = vmatprep.subr.mxu0 0.0
      %6256 = vmatpush2.msra.mxu0 0.0
      %6257 = vmatprep.subr.mxu0 0.0
      %6258 = vmatpush2.msra.mxu0 0.0
      %6259 = vmatprep.subr.mxu0 0.0
      %6260 = vmatpush2.msra.mxu0 0.0
      %6261 = vmatprep.subr.mxu0 0.0
      %6262 = vmatpush2.msra.mxu0 0.0
      %6263 = vmatprep.subr.mxu0 0.0
      %6264 = vmatpush2.msra.mxu0 0.0
      %6265 = vmatprep.subr.mxu0 0.0
      %6266 = vmatpush2.msra.mxu0 0.0
      %6267 = vmatprep.mubr.f32.mxu0 0.0
      %6268 = vmatmul.mubr.f32.gmra.mxu0 %v6202
      %v6269 = vpop.f32.mrf.mxu0
      %v6270 = vadd.f32 0.0, %v6269
      %v6271 = vpop.f32.mrf.mxu0
      %6272 = vdwg.mxu0
      %v6274 = vlaneseq
      %v6275 = vshrl.u32 %v6274, 7
      %v6276 = vsub.s32 0, %v6275
      %v6277 = vrot.slane %v2578, %v6276
      %v6280 = vsel %vm91, %v6270, 0
      %6282 = vmatprep.subr.mxu0 0.0
      %6283 = vmatpush1.msra.mxu0 0.0
      %6284 = vmatprep.subr.mxu0 0.0
      %6285 = vmatpush1.msra.mxu0 0.0
      %6286 = vmatprep.subr.mxu0 0.0
      %6287 = vmatpush1.msra.mxu0 0.0
      %6288 = vmatprep.subr.mxu0 0.0
      %6289 = vmatpush1.msra.mxu0 0.0
      %6290 = vmatprep.subr.mxu0 0.0
      %6291 = vmatpush1.msra.mxu0 0.0
      %6292 = vmatprep.subr.mxu0 0.0
      %6293 = vmatpush1.msra.mxu0 0.0
      %6294 = vmatprep.subr.mxu0 0.0
      %6295 = vmatpush1.msra.mxu0 0.0
      %6296 = vmatprep.subr.mxu0 0.0
      %6297 = vmatpush1.msra.mxu0 0.0
      %6298 = vmatprep.subr.mxu0 0.0
      %6299 = vmatpush1.msra.mxu0 0.0
      %6300 = vmatprep.subr.mxu0 0.0
      %6301 = vmatpush1.msra.mxu0 0.0
      %6302 = vmatprep.subr.mxu0 0.0
      %6303 = vmatpush1.msra.mxu0 0.0
      %6304 = vmatprep.subr.mxu0 0.0
      %6305 = vmatpush1.msra.mxu0 0.0
      %6306 = vmatprep.subr.mxu0 0.0
      %6307 = vmatpush1.msra.mxu0 %v2573
      %6308 = vmatprep.subr.mxu0 0.0
      %6309 = vmatpush1.msra.mxu0 %v2572
      %6310 = vmatprep.subr.mxu0 0.0
      %6311 = vmatpush1.msra.mxu0 %v2571
      %6312 = vmatprep.subr.mxu0 0.0
      %6313 = vmatpush1.msra.mxu0 %v2570
      %6314 = vmatprep.subr.mxu0 0.0
      %6315 = vmatpush2.msra.mxu0 0.0
      %6316 = vmatprep.subr.mxu0 0.0
      %6317 = vmatpush2.msra.mxu0 0.0
      %6318 = vmatprep.subr.mxu0 0.0
      %6319 = vmatpush2.msra.mxu0 0.0
      %6320 = vmatprep.subr.mxu0 0.0
      %6321 = vmatpush2.msra.mxu0 0.0
      %6322 = vmatprep.subr.mxu0 0.0
      %6323 = vmatpush2.msra.mxu0 0.0
      %6324 = vmatprep.subr.mxu0 0.0
      %6325 = vmatpush2.msra.mxu0 0.0
      %6326 = vmatprep.subr.mxu0 0.0
      %6327 = vmatpush2.msra.mxu0 0.0
      %6328 = vmatprep.subr.mxu0 0.0
      %6329 = vmatpush2.msra.mxu0 0.0
      %6330 = vmatprep.subr.mxu0 0.0
      %6331 = vmatpush2.msra.mxu0 0.0
      %6332 = vmatprep.subr.mxu0 0.0
      %6333 = vmatpush2.msra.mxu0 0.0
      %6334 = vmatprep.subr.mxu0 0.0
      %6335 = vmatpush2.msra.mxu0 0.0
      %6336 = vmatprep.subr.mxu0 0.0
      %6337 = vmatpush2.msra.mxu0 0.0
      %6338 = vmatprep.subr.mxu0 0.0
      %6339 = vmatpush2.msra.mxu0 0.0
      %6340 = vmatprep.subr.mxu0 0.0
      %6341 = vmatpush2.msra.mxu0 0.0
      %6342 = vmatprep.subr.mxu0 0.0
      %6343 = vmatpush2.msra.mxu0 0.0
      %6344 = vmatprep.subr.mxu0 0.0
      %6345 = vmatpush2.msra.mxu0 0.0
      %6346 = vmatprep.mubr.f32.mxu0 0.0
      %6347 = vmatmul.mubr.f32.gmra.mxu0 %v6280
      %v6348 = vpop.f32.mrf.mxu0
      %v6349 = vadd.f32 %v6277, %v6348
      %v6350 = vpop.f32.mrf.mxu0
      %6351 = vdwg.mxu0
      %6352 = vst [vmem:[#allocation5] sm:$0xff] %v6349
    $region133: #{_seq2seq_jit.1} parent=1 // pred_fallthru
      _
    %v6353 = vld [vmem:[#allocation5] sm:$0xff]
    %6354 = vmatprep.subr.mxu0 0.0
    %6355 = vmatpush1.msra.mxu0 0.0
    %6356 = vmatprep.subr.mxu0 0.0
    %6357 = vmatpush1.msra.mxu0 0.0
    %6358 = vmatprep.subr.mxu0 0.0
    %6359 = vmatpush1.msra.mxu0 0.0
    %6360 = vmatprep.subr.mxu0 0.0
    %6361 = vmatpush1.msra.mxu0 0.0
    %6362 = vmatprep.subr.mxu0 0.0
    %6363 = vmatpush1.msra.mxu0 0.0
    %6364 = vmatprep.subr.mxu0 0.0
    %6365 = vmatpush1.msra.mxu0 0.0
    %6366 = vmatprep.subr.mxu0 0.0
    %6367 = vmatpush1.msra.mxu0 0.0
    %6368 = vmatprep.subr.mxu0 0.0
    %6369 = vmatpush1.msra.mxu0 0.0
    %6370 = vmatprep.subr.mxu0 0.0
    %6371 = vmatpush1.msra.mxu0 0.0
    %6372 = vmatprep.subr.mxu0 0.0
    %6373 = vmatpush1.msra.mxu0 0.0
    %6374 = vmatprep.subr.mxu0 0.0
    %6375 = vmatpush1.msra.mxu0 0.0
    %6376 = vmatprep.subr.mxu0 0.0
    %6377 = vmatpush1.msra.mxu0 0.0
    %6378 = vmatprep.subr.mxu0 0.0
    %6379 = vmatpush1.msra.mxu0 %v2577
    %6380 = vmatprep.subr.mxu0 0.0
    %6381 = vmatpush1.msra.mxu0 %v2576
    %6382 = vmatprep.subr.mxu0 0.0
    %6383 = vmatpush1.msra.mxu0 %v2575
    %6384 = vmatprep.subr.mxu0 0.0
    %6385 = vmatpush1.msra.mxu0 %v2574
    %6386 = vmatprep.subr.mxu0 0.0
    %6387 = vmatpush2.msra.mxu0 0.0
    %6388 = vmatprep.subr.mxu0 0.0
    %6389 = vmatpush2.msra.mxu0 0.0
    %6390 = vmatprep.subr.mxu0 0.0
    %6391 = vmatpush2.msra.mxu0 0.0
    %6392 = vmatprep.subr.mxu0 0.0
    %6393 = vmatpush2.msra.mxu0 0.0
    %6394 = vmatprep.subr.mxu0 0.0
    %6395 = vmatpush2.msra.mxu0 0.0
    %6396 = vmatprep.subr.mxu0 0.0
    %6397 = vmatpush2.msra.mxu0 0.0
    %6398 = vmatprep.subr.mxu0 0.0
    %6399 = vmatpush2.msra.mxu0 0.0
    %6400 = vmatprep.subr.mxu0 0.0
    %6401 = vmatpush2.msra.mxu0 0.0
    %6402 = vmatprep.subr.mxu0 0.0
    %6403 = vmatpush2.msra.mxu0 0.0
    %6404 = vmatprep.subr.mxu0 0.0
    %6405 = vmatpush2.msra.mxu0 0.0
    %6406 = vmatprep.subr.mxu0 0.0
    %6407 = vmatpush2.msra.mxu0 0.0
    %6408 = vmatprep.subr.mxu0 0.0
    %6409 = vmatpush2.msra.mxu0 0.0
    %6410 = vmatprep.subr.mxu0 0.0
    %6411 = vmatpush2.msra.mxu0 0.0
    %6412 = vmatprep.subr.mxu0 0.0
    %6413 = vmatpush2.msra.mxu0 0.0
    %6414 = vmatprep.subr.mxu0 0.0
    %6415 = vmatpush2.msra.mxu0 0.0
    %6416 = vmatprep.subr.mxu0 0.0
    %6417 = vmatpush2.msra.mxu0 0.0
    %6418 = vmatprep.mubr.f32.mxu0 0.0
    %6419 = vmatmul.mubr.f32.gmra.mxu0 %v5991
    %v6420 = vpop.f32.mrf.mxu0
    %v6421 = vadd.f32 0.0, %v6420
    %v6422 = vpop.f32.mrf.mxu0
    %6423 = vdwg.mxu0
    %v6424 = vadd.f32 %v6353, %v6421
    %v6425 = vxor.u32 %v6424, 2147483648
    %v6426 = vmul.f32 %v6425, 1.442695
    %v6427 = vpow.pop %v6426
    %v6428 = vadd.f32 %v6427, 1.0
    %v6429 = vrcp.pop %v6428
    %v6430 = vmul.f32 1.0, %v6429
    %v6431 = vtanh.pop %v6424
    %v6432 = vmul.f32 %v6430, %v5909
    %6434 = vrot.lane.b32.xlu0 %v6431, 64
    %v6435 = vpop.permute.xlu0 %6434
    %v6437 = vmul.f32 %v6430, %v6435
    %6439 = vrot.lane.b32.xlu0 %v6437, 32
    %v6440 = vpop.permute.xlu0 %6439
    %v6442 = vadd.f32 %v6432, %v6440
    %v6443 = vtanh.pop %v6442
    %6445 = vrot.lane.b32.xlu0 %v6443, 64
    %v6446 = vpop.permute.xlu0 %6445
    %v6448 = vmul.f32 %v6430, %v6446
    %v6449 = vsel %vm91, %v6090, 0
    %6451 = vmatprep.subr.mxu0 0.0
    %6452 = vmatpush1.msra.mxu0 0.0
    %6453 = vmatprep.subr.mxu0 0.0
    %6454 = vmatpush1.msra.mxu0 0.0
    %6455 = vmatprep.subr.mxu0 0.0
    %6456 = vmatpush1.msra.mxu0 0.0
    %6457 = vmatprep.subr.mxu0 0.0
    %6458 = vmatpush1.msra.mxu0 0.0
    %6459 = vmatprep.subr.mxu0 0.0
    %6460 = vmatpush1.msra.mxu0 0.0
    %6461 = vmatprep.subr.mxu0 0.0
    %6462 = vmatpush1.msra.mxu0 0.0
    %6463 = vmatprep.subr.mxu0 0.0
    %6464 = vmatpush1.msra.mxu0 0.0
    %6465 = vmatprep.subr.mxu0 0.0
    %6466 = vmatpush1.msra.mxu0 0.0
    %6467 = vmatprep.subr.mxu0 0.0
    %6468 = vmatpush1.msra.mxu0 0.0
    %6469 = vmatprep.subr.mxu0 0.0
    %6470 = vmatpush1.msra.mxu0 0.0
    %6471 = vmatprep.subr.mxu0 0.0
    %6472 = vmatpush1.msra.mxu0 0.0
    %6473 = vmatprep.subr.mxu0 0.0
    %6474 = vmatpush1.msra.mxu0 0.0
    %6475 = vmatprep.subr.mxu0 0.0
    %6476 = vmatpush1.msra.mxu0 %v2586
    %6477 = vmatprep.subr.mxu0 0.0
    %6478 = vmatpush1.msra.mxu0 %v2585
    %6479 = vmatprep.subr.mxu0 0.0
    %6480 = vmatpush1.msra.mxu0 %v2584
    %6481 = vmatprep.subr.mxu0 0.0
    %6482 = vmatpush1.msra.mxu0 %v2583
    %6483 = vmatprep.subr.mxu0 0.0
    %6484 = vmatpush2.msra.mxu0 0.0
    %6485 = vmatprep.subr.mxu0 0.0
    %6486 = vmatpush2.msra.mxu0 0.0
    %6487 = vmatprep.subr.mxu0 0.0
    %6488 = vmatpush2.msra.mxu0 0.0
    %6489 = vmatprep.subr.mxu0 0.0
    %6490 = vmatpush2.msra.mxu0 0.0
    %6491 = vmatprep.subr.mxu0 0.0
    %6492 = vmatpush2.msra.mxu0 0.0
    %6493 = vmatprep.subr.mxu0 0.0
    %6494 = vmatpush2.msra.mxu0 0.0
    %6495 = vmatprep.subr.mxu0 0.0
    %6496 = vmatpush2.msra.mxu0 0.0
    %6497 = vmatprep.subr.mxu0 0.0
    %6498 = vmatpush2.msra.mxu0 0.0
    %6499 = vmatprep.subr.mxu0 0.0
    %6500 = vmatpush2.msra.mxu0 0.0
    %6501 = vmatprep.subr.mxu0 0.0
    %6502 = vmatpush2.msra.mxu0 0.0
    %6503 = vmatprep.subr.mxu0 0.0
    %6504 = vmatpush2.msra.mxu0 0.0
    %6505 = vmatprep.subr.mxu0 0.0
    %6506 = vmatpush2.msra.mxu0 0.0
    %6507 = vmatprep.subr.mxu0 0.0
    %6508 = vmatpush2.msra.mxu0 0.0
    %6509 = vmatprep.subr.mxu0 0.0
    %6510 = vmatpush2.msra.mxu0 0.0
    %6511 = vmatprep.subr.mxu0 0.0
    %6512 = vmatpush2.msra.mxu0 0.0
    %6513 = vmatprep.subr.mxu0 0.0
    %6514 = vmatpush2.msra.mxu0 0.0
    %6515 = vmatprep.mubr.f32.mxu0 0.0
    %6516 = vmatmul.mubr.f32.gmra.mxu0 %v6449
    %v6517 = vpop.f32.mrf.mxu0
    %v6518 = vadd.f32 0.0, %v6517
    %v6519 = vpop.f32.mrf.mxu0
    %6520 = vdwg.mxu0
    %6522 = vrot.lane.b32.xlu0 %v6448, 32
    %v6523 = vpop.permute.xlu0 %6522
    %v6524 = vsel %vm91, %v6523, 0
    %6526 = vmatprep.subr.mxu0 0.0
    %6527 = vmatpush1.msra.mxu0 0.0
    %6528 = vmatprep.subr.mxu0 0.0
    %6529 = vmatpush1.msra.mxu0 0.0
    %6530 = vmatprep.subr.mxu0 0.0
    %6531 = vmatpush1.msra.mxu0 0.0
    %6532 = vmatprep.subr.mxu0 0.0
    %6533 = vmatpush1.msra.mxu0 0.0
    %6534 = vmatprep.subr.mxu0 0.0
    %6535 = vmatpush1.msra.mxu0 0.0
    %6536 = vmatprep.subr.mxu0 0.0
    %6537 = vmatpush1.msra.mxu0 0.0
    %6538 = vmatprep.subr.mxu0 0.0
    %6539 = vmatpush1.msra.mxu0 0.0
    %6540 = vmatprep.subr.mxu0 0.0
    %6541 = vmatpush1.msra.mxu0 0.0
    %6542 = vmatprep.subr.mxu0 0.0
    %6543 = vmatpush1.msra.mxu0 0.0
    %6544 = vmatprep.subr.mxu0 0.0
    %6545 = vmatpush1.msra.mxu0 0.0
    %6546 = vmatprep.subr.mxu0 0.0
    %6547 = vmatpush1.msra.mxu0 0.0
    %6548 = vmatprep.subr.mxu0 0.0
    %6549 = vmatpush1.msra.mxu0 0.0
    %6550 = vmatprep.subr.mxu0 0.0
    %6551 = vmatpush1.msra.mxu0 %v2582
    %6552 = vmatprep.subr.mxu0 0.0
    %6553 = vmatpush1.msra.mxu0 %v2581
    %6554 = vmatprep.subr.mxu0 0.0
    %6555 = vmatpush1.msra.mxu0 %v2580
    %6556 = vmatprep.subr.mxu0 0.0
    %6557 = vmatpush1.msra.mxu0 %v2579
    %6558 = vmatprep.subr.mxu0 0.0
    %6559 = vmatpush2.msra.mxu0 0.0
    %6560 = vmatprep.subr.mxu0 0.0
    %6561 = vmatpush2.msra.mxu0 0.0
    %6562 = vmatprep.subr.mxu0 0.0
    %6563 = vmatpush2.msra.mxu0 0.0
    %6564 = vmatprep.subr.mxu0 0.0
    %6565 = vmatpush2.msra.mxu0 0.0
    %6566 = vmatprep.subr.mxu0 0.0
    %6567 = vmatpush2.msra.mxu0 0.0
    %6568 = vmatprep.subr.mxu0 0.0
    %6569 = vmatpush2.msra.mxu0 0.0
    %6570 = vmatprep.subr.mxu0 0.0
    %6571 = vmatpush2.msra.mxu0 0.0
    %6572 = vmatprep.subr.mxu0 0.0
    %6573 = vmatpush2.msra.mxu0 0.0
    %6574 = vmatprep.subr.mxu0 0.0
    %6575 = vmatpush2.msra.mxu0 0.0
    %6576 = vmatprep.subr.mxu0 0.0
    %6577 = vmatpush2.msra.mxu0 0.0
    %6578 = vmatprep.subr.mxu0 0.0
    %6579 = vmatpush2.msra.mxu0 0.0
    %6580 = vmatprep.subr.mxu0 0.0
    %6581 = vmatpush2.msra.mxu0 0.0
    %6582 = vmatprep.subr.mxu0 0.0
    %6583 = vmatpush2.msra.mxu0 0.0
    %6584 = vmatprep.subr.mxu0 0.0
    %6585 = vmatpush2.msra.mxu0 0.0
    %6586 = vmatprep.subr.mxu0 0.0
    %6587 = vmatpush2.msra.mxu0 0.0
    %6588 = vmatprep.subr.mxu0 0.0
    %6589 = vmatpush2.msra.mxu0 0.0
    %6590 = vmatprep.mubr.f32.mxu0 0.0
    %6591 = vmatmul.mubr.f32.gmra.mxu0 %v6524
    %v6592 = vpop.f32.mrf.mxu0
    %v6593 = vadd.f32 %v6518, %v6592
    %v6594 = vpop.f32.mrf.mxu0
    %6595 = vdwg.mxu0
    %v6596 = vadd.f32 %v6593, %v2863
    %v6597 = vxor.u32 %v6596, 2147483648
    %v6598 = vmul.f32 %v6597, 1.442695
    %v6599 = vpow.pop %v6598
    %v6600 = vadd.f32 %v6599, 1.0
    %v6601 = vrcp.pop %v6600
    %v6602 = vmul.f32 1.0, %v6601
    %v6603 = vtanh.pop %v6596
    %v6604 = vmul.f32 %v6602, %v6081
    %6606 = vrot.lane.b32.xlu0 %v6603, 64
    %v6607 = vpop.permute.xlu0 %6606
    %v6609 = vmul.f32 %v6602, %v6607
    %6611 = vrot.lane.b32.xlu0 %v6609, 32
    %v6612 = vpop.permute.xlu0 %6611
    %v6614 = vadd.f32 %v6604, %v6612
    %v6615 = vtanh.pop %v6614
    %6617 = vrot.lane.b32.xlu0 %v6615, 64
    %v6618 = vpop.permute.xlu0 %6617
    %v6620 = vmul.f32 %v6602, %v6618
    %6622 = vrot.lane.b32.xlu0 %v6620, 32
    %v6623 = vpop.permute.xlu0 %6622
    %6625 = vst.msk [vmem:[#allocation4 + $0x38] sm:$0xff] %vm91, %v6623
    %v6626 = vld [vmem:[#allocation4] sm:$0xff]
    %v6627 = vld [vmem:[#allocation4 + $0x8] sm:$0xff]
    %v6628 = vld [vmem:[#allocation4 + $0x10] sm:$0xff]
    %v6629 = vld [vmem:[#allocation4 + $0x18] sm:$0xff]
    %v6630 = vld [vmem:[#allocation4 + $0x20] sm:$0xff]
    %v6631 = vld [vmem:[#allocation4 + $0x28] sm:$0xff]
    %v6632 = vld [vmem:[#allocation4 + $0x30] sm:$0xff]
    %v6633 = vld [vmem:[#allocation4 + $0x38] sm:$0xff]
    %v6635 = vlaneseq
    %v6636 = vshrl.u32 %v6635, 7
    %v6637 = vsub.s32 0, %v6636
    %v6638 = vrot.slane %v2608, %v6637
    %v6641 = vsel %vm91, %v6626, 0
    %v6644 = vsel %vm91, %v6627, 0
    %v6647 = vsel %vm91, %v6628, 0
    %v6650 = vsel %vm91, %v6629, 0
    %v6653 = vsel %vm91, %v6630, 0
    %v6656 = vsel %vm91, %v6631, 0
    %v6659 = vsel %vm91, %v6632, 0
    %v6662 = vsel %vm91, %v6633, 0
    %6664 = vmatprep.subr.mxu0 0.0
    %6665 = vmatpush1.msra.mxu0 0.0
    %6666 = vmatprep.subr.mxu0 0.0
    %6667 = vmatpush1.msra.mxu0 0.0
    %6668 = vmatprep.subr.mxu0 0.0
    %6669 = vmatpush1.msra.mxu0 0.0
    %6670 = vmatprep.subr.mxu0 0.0
    %6671 = vmatpush1.msra.mxu0 0.0
    %6672 = vmatprep.subr.mxu0 0.0
    %6673 = vmatpush1.msra.mxu0 0.0
    %6674 = vmatprep.subr.mxu0 0.0
    %6675 = vmatpush1.msra.mxu0 0.0
    %6676 = vmatprep.subr.mxu0 0.0
    %6677 = vmatpush1.msra.mxu0 0.0
    %6678 = vmatprep.subr.mxu0 0.0
    %6679 = vmatpush1.msra.mxu0 0.0
    %6680 = vmatprep.subr.mxu0 0.0
    %6681 = vmatpush1.msra.mxu0 0.0
    %6682 = vmatprep.subr.mxu0 0.0
    %6683 = vmatpush1.msra.mxu0 0.0
    %6684 = vmatprep.subr.mxu0 0.0
    %6685 = vmatpush1.msra.mxu0 0.0
    %6686 = vmatprep.subr.mxu0 0.0
    %6687 = vmatpush1.msra.mxu0 0.0
    %6688 = vmatprep.subr.mxu0 0.0
    %6689 = vmatpush1.msra.mxu0 %v2607
    %6690 = vmatprep.subr.mxu0 0.0
    %6691 = vmatpush1.msra.mxu0 %v2606
    %6692 = vmatprep.subr.mxu0 0.0
    %6693 = vmatpush1.msra.mxu0 %v2605
    %6694 = vmatprep.subr.mxu0 0.0
    %6695 = vmatpush1.msra.mxu0 %v2604
    %6696 = vmatprep.subr.mxu0 0.0
    %6697 = vmatpush2.msra.mxu0 0.0
    %6698 = vmatprep.subr.mxu0 0.0
    %6699 = vmatpush2.msra.mxu0 0.0
    %6700 = vmatprep.subr.mxu0 0.0
    %6701 = vmatpush2.msra.mxu0 0.0
    %6702 = vmatprep.subr.mxu0 0.0
    %6703 = vmatpush2.msra.mxu0 0.0
    %6704 = vmatprep.subr.mxu0 0.0
    %6705 = vmatpush2.msra.mxu0 0.0
    %6706 = vmatprep.subr.mxu0 0.0
    %6707 = vmatpush2.msra.mxu0 0.0
    %6708 = vmatprep.subr.mxu0 0.0
    %6709 = vmatpush2.msra.mxu0 0.0
    %6710 = vmatprep.subr.mxu0 0.0
    %6711 = vmatpush2.msra.mxu0 0.0
    %6712 = vmatprep.subr.mxu0 0.0
    %6713 = vmatpush2.msra.mxu0 0.0
    %6714 = vmatprep.subr.mxu0 0.0
    %6715 = vmatpush2.msra.mxu0 0.0
    %6716 = vmatprep.subr.mxu0 0.0
    %6717 = vmatpush2.msra.mxu0 0.0
    %6718 = vmatprep.subr.mxu0 0.0
    %6719 = vmatpush2.msra.mxu0 0.0
    %6720 = vmatprep.subr.mxu0 0.0
    %6721 = vmatpush2.msra.mxu0 0.0
    %6722 = vmatprep.subr.mxu0 0.0
    %6723 = vmatpush2.msra.mxu0 0.0
    %6724 = vmatprep.subr.mxu0 0.0
    %6725 = vmatpush2.msra.mxu0 0.0
    %6726 = vmatprep.subr.mxu0 0.0
    %6727 = vmatpush2.msra.mxu0 0.0
    %6728 = vmatprep.mubr.f32.mxu0 0.0
    %6729 = vmatmul.mubr.f32.gmra.mxu0 %v6641
    %v6730 = vpop.f32.mrf.mxu0
    %v6731 = vadd.f32 %v6638, %v6730
    %v6732 = vpop.f32.mrf.mxu0
    %6733 = vmatprep.mubr.f32.mxu0 0.0
    %6734 = vmatmul.mubr.f32.gmra.mxu0 %v6644
    %v6735 = vpop.f32.mrf.mxu0
    %v6736 = vadd.f32 %v6638, %v6735
    %v6737 = vpop.f32.mrf.mxu0
    %6738 = vmatprep.mubr.f32.mxu0 0.0
    %6739 = vmatmul.mubr.f32.gmra.mxu0 %v6647
    %v6740 = vpop.f32.mrf.mxu0
    %v6741 = vadd.f32 %v6638, %v6740
    %v6742 = vpop.f32.mrf.mxu0
    %6743 = vmatprep.mubr.f32.mxu0 0.0
    %6744 = vmatmul.mubr.f32.gmra.mxu0 %v6650
    %v6745 = vpop.f32.mrf.mxu0
    %v6746 = vadd.f32 %v6638, %v6745
    %v6747 = vpop.f32.mrf.mxu0
    %6748 = vmatprep.mubr.f32.mxu0 0.0
    %6749 = vmatmul.mubr.f32.gmra.mxu0 %v6653
    %v6750 = vpop.f32.mrf.mxu0
    %v6751 = vadd.f32 %v6638, %v6750
    %v6752 = vpop.f32.mrf.mxu0
    %6753 = vmatprep.mubr.f32.mxu0 0.0
    %6754 = vmatmul.mubr.f32.gmra.mxu0 %v6656
    %v6755 = vpop.f32.mrf.mxu0
    %v6756 = vadd.f32 %v6638, %v6755
    %v6757 = vpop.f32.mrf.mxu0
    %6758 = vmatprep.mubr.f32.mxu0 0.0
    %6759 = vmatmul.mubr.f32.gmra.mxu0 %v6659
    %v6760 = vpop.f32.mrf.mxu0
    %v6761 = vadd.f32 %v6638, %v6760
    %v6762 = vpop.f32.mrf.mxu0
    %6763 = vmatprep.mubr.f32.mxu0 0.0
    %6764 = vmatmul.mubr.f32.gmra.mxu0 %v6662
    %v6765 = vpop.f32.mrf.mxu0
    %v6766 = vadd.f32 %v6638, %v6765
    %v6767 = vpop.f32.mrf.mxu0
    %6768 = vdwg.mxu0
    %6769 = vst [vmem:[%s18] sm:$0xff] %v6731
    %6770 = vst [vmem:[%s18 + $0x8] sm:$0xff] %v6736
    %6771 = vst [vmem:[%s18 + $0x10] sm:$0xff] %v6741
    %6772 = vst [vmem:[%s18 + $0x18] sm:$0xff] %v6746
    %6773 = vst [vmem:[%s18 + $0x20] sm:$0xff] %v6751
    %6774 = vst [vmem:[%s18 + $0x28] sm:$0xff] %v6756
    %6775 = vst [vmem:[%s18 + $0x30] sm:$0xff] %v6761
    %6776 = vst [vmem:[%s18 + $0x38] sm:$0xff] %v6766
    // Predicated region
    $region134: #{_seq2seq_jit.1} parent=1 // pred_check
      _
    $region135: #{_seq2seq_jit.1} parent=1 // pred_check_branch
      %6778 = sbr.rel (0) target = $region137
    $region136: #{_seq2seq_jit.1} parent=1 // pred_region
      _
    $region137: #{_seq2seq_jit.1} parent=1 // pred_fallthru
      _
    // Predicated region
    $region138: #{_seq2seq_jit.1} parent=1 // pred_check
      _
    $region139: #{_seq2seq_jit.1} parent=1 // pred_check_branch
      %6780 = sbr.rel (0) target = $region141
    $region140: #{_seq2seq_jit.1} parent=1 // pred_region
      _
    $region141: #{_seq2seq_jit.1} parent=1 // pred_fallthru
      _
    %6781 = vsyncpa [#allocation7], 1

</llo_original>
